<compile_context>
chip_gen: v7x
topology: tpu7x:2x2x1
jax: 0.10.0
libtpu: 0.0.40
codegen_flags: <defaults>
</compile_context>

<pallas_src>
import math

import jax
import jax.numpy as jnp
from jax.experimental import pallas as pl
from jax.experimental.pallas import tpu as pltpu

# Spatial sizes: CIFAR-like 16x16 input -> 8x8 after the 2x2/2 max pool.
H1, W1 = 16, 16
H2, W2 = 8, 8
ROWS1 = H1 * W1            # 256 conv1 output positions per image
ROWS2 = H2 * W2            # 64 fire-block positions per image
K1 = 32                    # conv1 im2col depth (3*3*3 = 27, padded to 32)
PAD2 = 16                  # zero halo rows above/below each image's squeeze map
SPROWS = ROWS2 + 2 * PAD2  # 96 rows per image in the squeeze scratch


# ---------------------------------------------------------------------------
# Fused kernel: conv1 + ReLU + maxpool + fire1 + fire2 + fire3 (per B images)
# ---------------------------------------------------------------------------
def _squeezenet_head_kernel(
        xcol_ref, sel_ref, w1_ref, b1_ref,
        sq1_w_ref, sq1_b_ref, ex1_w_ref, ex1_b_ref,
        sq2_w_ref, sq2_b_ref, ex2_w_ref, ex2_b_ref,
        sq3_w_ref, sq3_b_ref, ex3_w_ref, ex3_b_ref,
        o_ref,
        sp16_ref, sp32_ref):
    bb = xcol_ref.shape[0]   # images per grid step (static)

    # Zero only the vertical-halo rows of the squeeze scratches; their interiors
    # are fully overwritten by every fire block.  Done every step so correctness
    # does not depend on how the parallel grid is sharded across TensorCores.
    for sp in (sp16_ref, sp32_ref):
        csq = sp.shape[-1]
        halo = jnp.zeros((bb, PAD2, csq), jnp.float32)
        sp[:, 0:PAD2, :] = halo
        sp[:, PAD2 + ROWS2:SPROWS, :] = halo

    # Tiny horizontal-edge masks (bb*64, 1) for the flattened-shift expand convs.
    w2_idx = jax.lax.broadcasted_iota(jnp.int32, (bb * ROWS2, 1), 0) % W2
    m_left = w2_idx == 0            # dw == -1 taps wrap to previous row -> zero
    m_right = w2_idx == (W2 - 1)    # dw == +1 taps wrap to next row     -> zero

    # ---- conv1 (single K=32 im2col matmul per image) + ReLU + fused maxpool ----
    # The pool is one precomputed 0/1 selection matmul per image (exact) followed
    # by 3 elementwise maxima; no per-step iota selector construction.
    pooled_parts = []
    for b in range(bb):
        c1 = jnp.dot(xcol_ref[b], w1_ref[...],
                     preferred_element_type=jnp.float32) + b1_ref[...]
        c1 = jnp.maximum(c1, 0.0)                                    # (256, 96) f32
        cand = jnp.dot(sel_ref[...], c1.astype(jnp.bfloat16),
                       preferred_element_type=jnp.float32)           # (4*64, 96)
        pooled_parts.append(
            jnp.maximum(jnp.maximum(cand[0:ROWS2], cand[ROWS2:2 * ROWS2]),
                        jnp.maximum(cand[2 * ROWS2:3 * ROWS2],
                                    cand[3 * ROWS2:4 * ROWS2])))
    pooled = jnp.concatenate(pooled_parts, axis=0)                   # (bb*64, 96)

    # ---- fire blocks: squeeze + merged (expand1x1 | expand3x3) expand stage ----
    def fire(x, sq_w_ref, sq_b_ref, ex_w_ref, ex_b_ref, sp_ref):
        csq = sp_ref.shape[-1]
        s = jnp.dot(x.astype(jnp.bfloat16), sq_w_ref[...],
                    preferred_element_type=jnp.float32) + sq_b_ref[...]
        s = jnp.maximum(s, 0.0)                                      # (bb*64, csq)
        sp_ref[:, PAD2:PAD2 + ROWS2, :] = s.reshape(bb, ROWS2, csq)  # interior only
        windows = []
        for kh in range(3):
            for kw in range(3):
                start = PAD2 + (kh - 1) * W2 + (kw - 1)
                win = sp_ref[:, pl.ds(start, ROWS2), :].reshape(bb * ROWS2, csq)
                if kw == 0:        # left tap wraps to previous row's last column
                    win = jnp.where(m_left, 0.0, win)
                elif kw == 2:      # right tap wraps to next row's first column
                    win = jnp.where(m_right, 0.0, win)
                windows.append(win)
        # One K = 9*csq matmul; expand1x1 is folded into the centre-tap weights.
        lhs = jnp.concatenate(windows, axis=-1).astype(jnp.bfloat16)
        out = jnp.dot(lhs, ex_w_ref[...],
                      preferred_element_type=jnp.float32) + ex_b_ref[...]
        return jnp.maximum(out, 0.0)                                 # (bb*64, Cout)

    x = fire(pooled, sq1_w_ref, sq1_b_ref, ex1_w_ref, ex1_b_ref, sp16_ref)
    x = fire(x, sq2_w_ref, sq2_b_ref, ex2_w_ref, ex2_b_ref, sp16_ref)
    x = fire(x, sq3_w_ref, sq3_b_ref, ex3_w_ref, ex3_b_ref, sp32_ref)
    o_ref[...] = x.reshape(bb, ROWS2, 256)


# ---------------------------------------------------------------------------
# Parameter preparation (done once, outside the hot path)
# ---------------------------------------------------------------------------
def prepare_params(p):
    """Re-layout the conv params into the fused-matmul form (bf16 weights)."""
    def combine_expand(e1_w, e1_b, e3_w, e3_b):
        csq, c1 = e1_w.shape
        c3 = e3_w.shape[-1]
        wc = jnp.zeros((9, csq, c1 + c3), jnp.float32)
        wc = wc.at[:, :, c1:].set(e3_w.reshape(9, csq, c3))   # 3x3 expand taps
        wc = wc.at[4, :, :c1].set(e1_w)                       # 1x1 expand = centre tap
        wc = wc.reshape(9 * csq, c1 + c3).astype(jnp.bfloat16)
        bc = jnp.concatenate([e1_b, e3_b]).reshape(1, c1 + c3)
        return wc, bc

    # conv1 as one im2col matmul: (kh, kw, cin, cout) -> (27, 96) -> pad K to 32.
    w1 = p["conv1_w"].reshape(27, 96)
    w1 = jnp.pad(w1, ((0, K1 - 27), (0, 0))).astype(jnp.bfloat16)
    b1 = p["conv1_b"].reshape(1, 96)

    # Precomputed 2x2/2 maxpool selector: row off*64 + r picks window candidate
    # `off` of pooled position r (exact 0/1 matrix, batch-invariant).
    r = jnp.arange(ROWS2)
    base = (r // W2) * (2 * W1) + (r % W2) * 2
    offs = jnp.array([0, 1, W1, W1 + 1])
    sel = jax.nn.one_hot((offs[:, None] + base[None, :]).reshape(4 * ROWS2),
                         ROWS1, dtype=jnp.bfloat16)

    ex1_w, ex1_b = combine_expand(p["f1_e1_w"], p["f1_e1_b"],
                                  p["f1_e3_w"], p["f1_e3_b"])
    ex2_w, ex2_b = combine_expand(p["f2_e1_w"], p["f2_e1_b"],
                                  p["f2_e3_w"], p["f2_e3_b"])
    ex3_w, ex3_b = combine_expand(p["f3_e1_w"], p["f3_e1_b"],
                                  p["f3_e3_w"], p["f3_e3_b"])
    bf16 = jnp.bfloat16
    return (sel, w1, b1,
            p["f1_sq_w"].astype(bf16), p["f1_sq_b"].reshape(1, 16), ex1_w, ex1_b,
            p["f2_sq_w"].astype(bf16), p["f2_sq_b"].reshape(1, 16), ex2_w, ex2_b,
            p["f3_sq_w"].astype(bf16), p["f3_sq_b"].reshape(1, 32), ex3_w, ex3_b)


# ---------------------------------------------------------------------------
# Forward pass (single pallas_call, B images per grid step)
# ---------------------------------------------------------------------------
def test_forward(x_nchw, prep, block_batch=4):
    (sel, w1, b1, sq1_w, sq1_b, ex1_w, ex1_b,
     sq2_w, sq2_b, ex2_w, ex2_b, sq3_w, sq3_b, ex3_w, ex3_b) = prep

    n = x_nchw.shape[0]
    bb = max(1, min(block_batch, n))
    n_pad = ((n + bb - 1) // bb) * bb

    # NCHW -> NHWC, pad batch to a block multiple, im2col for conv1 (tap-major,
    # channel-minor to match the (27,96) weight layout), pad K to 32 for aligned
    # rows, cast to bf16 for the MXU.
    x = jnp.transpose(x_nchw, (0, 2, 3, 1))
    x = jnp.pad(x, ((0, n_pad - n), (1, 1), (1, 1), (0, 0)))
    taps = [x[:, dh:dh + H1, dw:dw + W1, :] for dh in range(3) for dw in range(3)]
    xcol = jnp.concatenate(taps, axis=-1).reshape(n_pad, ROWS1, 27)
    xcol = jnp.pad(xcol, ((0, 0), (0, 0), (0, K1 - 27))).astype(jnp.bfloat16)

    def const2d(a):
        return pl.BlockSpec(a.shape, lambda i: (0, 0))

    out = pl.pallas_call(
        _squeezenet_head_kernel,
        out_shape=jax.ShapeDtypeStruct((n_pad, ROWS2, 256), jnp.float32),
        grid=(n_pad // bb,),
        in_specs=[
            pl.BlockSpec((bb, ROWS1, K1), lambda i: (i, 0, 0)),
            const2d(sel), const2d(w1), const2d(b1),
            const2d(sq1_w), const2d(sq1_b), const2d(ex1_w), const2d(ex1_b),
            const2d(sq2_w), const2d(sq2_b), const2d(ex2_w), const2d(ex2_b),
            const2d(sq3_w), const2d(sq3_b), const2d(ex3_w), const2d(ex3_b),
        ],
        out_specs=pl.BlockSpec((bb, ROWS2, 256), lambda i: (i, 0, 0)),
        scratch_shapes=[
            pltpu.VMEM((bb, SPROWS, 16), jnp.float32),   # padded squeeze (fire1/2)
            pltpu.VMEM((bb, SPROWS, 32), jnp.float32),   # padded squeeze (fire3)
        ],
        compiler_params=pltpu.CompilerParams(
            dimension_semantics=("parallel",)),
    )(xcol, sel, w1, b1, sq1_w, sq1_b, ex1_w, ex1_b,
      sq2_w, sq2_b, ex2_w, ex2_b, sq3_w, sq3_b, ex3_w, ex3_b)

    out = out[:n].reshape(n, H2, W2, 256)
    # TODO(synk): PyTorch forward() returns None (it only prints via printHead);
    # we return the post-fire3 feature map in NCHW and omit the print diagnostics.
    return jnp.transpose(out, (0, 3, 1, 2))


# ---------------------------------------------------------------------------
# Deterministic parameter init (kaiming_uniform-style, biases = 0)
# ---------------------------------------------------------------------------
def _kaiming_uniform(key, shape, fan_in):
    bound = math.sqrt(6.0 / fan_in)
    return jax.random.uniform(key, shape, jnp.float32, -bound, bound)


def init_params(key):
    ks = jax.random.split(key, 10)
    p = {}
    # features: Conv2d(3, 96, k=3, p=1)
    p["conv1_w"] = _kaiming_uniform(ks[0], (3, 3, 3, 96), 3 * 3 * 3)
    p["conv1_b"] = jnp.zeros((96,), jnp.float32)
    # fire1 (unrolled in Test): squeeze 96->16, expand1x1 16->64, expand3x3 16->64
    p["f1_sq_w"] = _kaiming_uniform(ks[1], (96, 16), 96)
    p["f1_sq_b"] = jnp.zeros((16,), jnp.float32)
    p["f1_e1_w"] = _kaiming_uniform(ks[2], (16, 64), 16)
    p["f1_e1_b"] = jnp.zeros((64,), jnp.float32)
    p["f1_e3_w"] = _kaiming_uniform(ks[3], (3, 3, 16, 64), 9 * 16)
    p["f1_e3_b"] = jnp.zeros((64,), jnp.float32)
    # fire2 = Fire(128, 16, 64, 64)
    p["f2_sq_w"] = _kaiming_uniform(ks[4], (128, 16), 128)
    p["f2_sq_b"] = jnp.zeros((16,), jnp.float32)
    p["f2_e1_w"] = _kaiming_uniform(ks[5], (16, 64), 16)
    p["f2_e1_b"] = jnp.zeros((64,), jnp.float32)
    p["f2_e3_w"] = _kaiming_uniform(ks[6], (3, 3, 16, 64), 9 * 16)
    p["f2_e3_b"] = jnp.zeros((64,), jnp.float32)
    # fire3 = Fire(128, 32, 128, 128)
    p["f3_sq_w"] = _kaiming_uniform(ks[7], (128, 32), 128)
    p["f3_sq_b"] = jnp.zeros((32,), jnp.float32)
    p["f3_e1_w"] = _kaiming_uniform(ks[8], (32, 128), 32)
    p["f3_e1_b"] = jnp.zeros((128,), jnp.float32)
    p["f3_e3_w"] = _kaiming_uniform(ks[9], (3, 3, 32, 128), 9 * 32)
    p["f3_e3_b"] = jnp.zeros((128,), jnp.float32)
    return p


if __name__ == "__main__":
    key = jax.random.PRNGKey(0)
    kx, kp = jax.random.split(key)
    x = jax.random.normal(kx, (8, 3, 16, 16), dtype=jnp.float32)  # small CIFAR-like
    params = init_params(kp)
    prep = prepare_params(params)       # one-time weight re-layout (outside jit)

    fwd = jax.jit(test_forward, static_argnames=("block_batch",))
    out = jax.block_until_ready(fwd(x, prep, block_batch=4))      # grid = (2,)

    assert out.shape == (8, 256, 8, 8), out.shape
    assert bool(jnp.all(out >= 0.0))    # every conv is followed by ReLU
    print("KERNEL_OK")
</pallas_src>

<mosaic_0001>
module attributes {stable_mosaic.version = 11 : i64} {
  func.func @_squeezenet_head_kernel(%arg0: i32, %arg1: memref<4x256x32xbf16, #tpu.memory_space<vmem>>, %arg2: memref<256x256xbf16, #tpu.memory_space<vmem>>, %arg3: memref<32x96xbf16, #tpu.memory_space<vmem>>, %arg4: memref<1x96xf32, #tpu.memory_space<vmem>>, %arg5: memref<96x16xbf16, #tpu.memory_space<vmem>>, %arg6: memref<1x16xf32, #tpu.memory_space<vmem>>, %arg7: memref<144x128xbf16, #tpu.memory_space<vmem>>, %arg8: memref<1x128xf32, #tpu.memory_space<vmem>>, %arg9: memref<128x16xbf16, #tpu.memory_space<vmem>>, %arg10: memref<1x16xf32, #tpu.memory_space<vmem>>, %arg11: memref<144x128xbf16, #tpu.memory_space<vmem>>, %arg12: memref<1x128xf32, #tpu.memory_space<vmem>>, %arg13: memref<128x32xbf16, #tpu.memory_space<vmem>>, %arg14: memref<1x32xf32, #tpu.memory_space<vmem>>, %arg15: memref<288x256xbf16, #tpu.memory_space<vmem>>, %arg16: memref<1x256xf32, #tpu.memory_space<vmem>>, %arg17: memref<4x64x256xf32, #tpu.memory_space<vmem>>, %arg18: memref<4x96x16xf32, #tpu.memory_space<vmem>>, %arg19: memref<4x96x32xf32, #tpu.memory_space<vmem>>) attributes {dimension_semantics = [#tpu.dimension_semantics<parallel>], iteration_bounds = array<i64: 2>, scalar_prefetch = 0 : i64, scratch_operands = 2 : i64, tpu.core_type = #tpu.core_type<tc>, window_params = [{transform_indices = @transform_0, window_bounds = array<i64: 4, 256, 32>}, {pipeline_mode = #tpu.pipeline_mode<synchronous>, transform_indices = @transform_1, window_bounds = array<i64: 256, 256>}, {pipeline_mode = #tpu.pipeline_mode<synchronous>, transform_indices = @transform_2, window_bounds = array<i64: 32, 96>}, {pipeline_mode = #tpu.pipeline_mode<synchronous>, transform_indices = @transform_3, window_bounds = array<i64: 1, 96>}, {pipeline_mode = #tpu.pipeline_mode<synchronous>, transform_indices = @transform_4, window_bounds = array<i64: 96, 16>}, {pipeline_mode = #tpu.pipeline_mode<synchronous>, transform_indices = @transform_5, window_bounds = array<i64: 1, 16>}, {pipeline_mode = #tpu.pipeline_mode<synchronous>, transform_indices = @transform_6, window_bounds = array<i64: 144, 128>}, {pipeline_mode = #tpu.pipeline_mode<synchronous>, transform_indices = @transform_7, window_bounds = array<i64: 1, 128>}, {pipeline_mode = #tpu.pipeline_mode<synchronous>, transform_indices = @transform_8, window_bounds = array<i64: 128, 16>}, {pipeline_mode = #tpu.pipeline_mode<synchronous>, transform_indices = @transform_9, window_bounds = array<i64: 1, 16>}, {pipeline_mode = #tpu.pipeline_mode<synchronous>, transform_indices = @transform_10, window_bounds = array<i64: 144, 128>}, {pipeline_mode = #tpu.pipeline_mode<synchronous>, transform_indices = @transform_11, window_bounds = array<i64: 1, 128>}, {pipeline_mode = #tpu.pipeline_mode<synchronous>, transform_indices = @transform_12, window_bounds = array<i64: 128, 32>}, {pipeline_mode = #tpu.pipeline_mode<synchronous>, transform_indices = @transform_13, window_bounds = array<i64: 1, 32>}, {pipeline_mode = #tpu.pipeline_mode<synchronous>, transform_indices = @transform_14, window_bounds = array<i64: 288, 256>}, {pipeline_mode = #tpu.pipeline_mode<synchronous>, transform_indices = @transform_15, window_bounds = array<i64: 1, 256>}, {transform_indices = @transform_16, window_bounds = array<i64: 4, 64, 256>}]} {
    %cst = arith.constant 0.000000e+00 : f32
    %0 = vector.broadcast %cst : f32 to vector<4x16x16xf32>
    %c0 = arith.constant 0 : index
    %c0_0 = arith.constant 0 : index
    %c0_1 = arith.constant 0 : index
    %1 = vector.load %arg18[%c0, %c0_0, %c0_1] : memref<4x96x16xf32, #tpu.memory_space<vmem>>, vector<4x16x16xf32>
    tpu.vector_store %arg18[%c0, %c0_0, %c0_1], %0 {strides = array<i32>} : memref<4x96x16xf32, #tpu.memory_space<vmem>>, vector<4x16x16xf32>,
    %c0_2 = arith.constant 0 : index
    %c80 = arith.constant 80 : index
    %c0_3 = arith.constant 0 : index
    %2 = vector.load %arg18[%c0_2, %c80, %c0_3] : memref<4x96x16xf32, #tpu.memory_space<vmem>>, vector<4x16x16xf32>
    tpu.vector_store %arg18[%c0_2, %c80, %c0_3], %0 {strides = array<i32>} : memref<4x96x16xf32, #tpu.memory_space<vmem>>, vector<4x16x16xf32>,
    %cst_4 = arith.constant 0.000000e+00 : f32
    %3 = vector.broadcast %cst_4 : f32 to vector<4x16x32xf32>
    %c0_5 = arith.constant 0 : index
    %c0_6 = arith.constant 0 : index
    %c0_7 = arith.constant 0 : index
    %4 = vector.load %arg19[%c0_5, %c0_6, %c0_7] : memref<4x96x32xf32, #tpu.memory_space<vmem>>, vector<4x16x32xf32>
    tpu.vector_store %arg19[%c0_5, %c0_6, %c0_7], %3 {strides = array<i32>} : memref<4x96x32xf32, #tpu.memory_space<vmem>>, vector<4x16x32xf32>,
    %c0_8 = arith.constant 0 : index
    %c80_9 = arith.constant 80 : index
    %c0_10 = arith.constant 0 : index
    %5 = vector.load %arg19[%c0_8, %c80_9, %c0_10] : memref<4x96x32xf32, #tpu.memory_space<vmem>>, vector<4x16x32xf32>
    tpu.vector_store %arg19[%c0_8, %c80_9, %c0_10], %3 {strides = array<i32>} : memref<4x96x32xf32, #tpu.memory_space<vmem>>, vector<4x16x32xf32>,
    %6 = tpu.iota {dimensions = array<i32: 0>} : vector<256x1xi32>
    %c8_i32 = arith.constant 8 : i32
    %c0_i32 = arith.constant 0 : i32
    %7 = arith.cmpi eq, %c8_i32, %c0_i32 : i32
    %c1_i32 = arith.constant 1 : i32
    %8 = arith.select %7, %c1_i32, %c8_i32 : i32
    %9 = vector.broadcast %8 : i32 to vector<256x1xi32>
    %10 = arith.remsi %6, %9 : vector<256x1xi32>
    %c0_i32_11 = arith.constant 0 : i32
    %11 = vector.broadcast %c0_i32_11 : i32 to vector<256x1xi32>
    %12 = arith.cmpi ne, %10, %11 : vector<256x1xi32>
    %c0_i32_12 = arith.constant 0 : i32
    %13 = vector.broadcast %c0_i32_12 : i32 to vector<256x1xi32>
    %14 = arith.cmpi slt, %10, %13 : vector<256x1xi32>
    %c0_i32_13 = arith.constant 0 : i32
    %15 = arith.cmpi slt, %8, %c0_i32_13 : i32
    %16 = vector.broadcast %15 : i1 to vector<256x1xi1>
    %17 = vector.broadcast %16 : vector<256x1xi1> to vector<256x1xi1>
    %18 = arith.xori %14, %17 : vector<256x1xi1>
    %19 = arith.andi %18, %12 : vector<256x1xi1>
    %20 = vector.broadcast %8 : i32 to vector<256x1xi32>
    %21 = arith.addi %10, %20 : vector<256x1xi32>
    %22 = arith.select %19, %21, %10 : vector<256x1xi1>, vector<256x1xi32>
    %c0_i32_14 = arith.constant 0 : i32
    %23 = vector.broadcast %c0_i32_14 : i32 to vector<256x1xi32>
    %24 = arith.cmpi eq, %22, %23 : vector<256x1xi32>
    %c7_i32 = arith.constant 7 : i32
    %25 = vector.broadcast %c7_i32 : i32 to vector<256x1xi32>
    %26 = arith.cmpi eq, %22, %25 : vector<256x1xi32>
    %c0_15 = arith.constant 0 : index
    %c0_16 = arith.constant 0 : index
    %c0_17 = arith.constant 0 : index
    %27 = vector.load %arg1[%c0_15, %c0_16, %c0_17] : memref<4x256x32xbf16, #tpu.memory_space<vmem>>, vector<1x256x32xbf16>
    %28 = vector.shape_cast %27 : vector<1x256x32xbf16> to vector<256x32xbf16>
    %c0_18 = arith.constant 0 : index
    %c0_19 = arith.constant 0 : index
    %29 = vector.load %arg3[%c0_18, %c0_19] : memref<32x96xbf16, #tpu.memory_space<vmem>>, vector<32x96xbf16>
    %cst_20 = arith.constant dense<0.000000e+00> : vector<256x96xf32>
    %30 = tpu.matmul %28, %29, %cst_20 {dimension_numbers = #tpu.dot_dimension_numbers<[1], [0], [0], [1], [0, 0, 1, 1], [], []>} : vector<256x32xbf16>, vector<32x96xbf16>, vector<256x96xf32> -> vector<256x96xf32>
    %c0_21 = arith.constant 0 : index
    %c0_22 = arith.constant 0 : index
    %31 = vector.load %arg4[%c0_21, %c0_22] : memref<1x96xf32, #tpu.memory_space<vmem>>, vector<1x96xf32>
    %32 = vector.broadcast %31 : vector<1x96xf32> to vector<256x96xf32>
    %33 = arith.addf %30, %32 : vector<256x96xf32>
    %cst_23 = arith.constant 0.000000e+00 : f32
    %34 = vector.broadcast %cst_23 : f32 to vector<256x96xf32>
    %35 = arith.maximumf %33, %34 : vector<256x96xf32>
    %c0_24 = arith.constant 0 : index
    %c0_25 = arith.constant 0 : index
    %36 = vector.load %arg2[%c0_24, %c0_25] : memref<256x256xbf16, #tpu.memory_space<vmem>>, vector<256x256xbf16>
    %37 = arith.truncf %35 : vector<256x96xf32> to vector<256x96xbf16>
    %cst_26 = arith.constant dense<0.000000e+00> : vector<256x96xf32>
    %38 = tpu.matmul %36, %37, %cst_26 {dimension_numbers = #tpu.dot_dimension_numbers<[1], [0], [0], [1], [0, 0, 1, 1], [], []>} : vector<256x256xbf16>, vector<256x96xbf16>, vector<256x96xf32> -> vector<256x96xf32>
    %39 = vector.extract_strided_slice %38 {offsets = [0, 0], sizes = [64, 96], strides = [1, 1]} : vector<256x96xf32> to vector<64x96xf32>
    %40 = vector.extract_strided_slice %38 {offsets = [64, 0], sizes = [64, 96], strides = [1, 1]} : vector<256x96xf32> to vector<64x96xf32>
    %41 = arith.maximumf %39, %40 : vector<64x96xf32>
    %42 = vector.extract_strided_slice %38 {offsets = [128, 0], sizes = [64, 96], strides = [1, 1]} : vector<256x96xf32> to vector<64x96xf32>
    %43 = vector.extract_strided_slice %38 {offsets = [192, 0], sizes = [64, 96], strides = [1, 1]} : vector<256x96xf32> to vector<64x96xf32>
    %44 = arith.maximumf %42, %43 : vector<64x96xf32>
    %45 = arith.maximumf %41, %44 : vector<64x96xf32>
    %c1 = arith.constant 1 : index
    %c0_27 = arith.constant 0 : index
    %c0_28 = arith.constant 0 : index
    %46 = vector.load %arg1[%c1, %c0_27, %c0_28] : memref<4x256x32xbf16, #tpu.memory_space<vmem>>, vector<1x256x32xbf16>
    %47 = vector.shape_cast %46 : vector<1x256x32xbf16> to vector<256x32xbf16>
    %c0_29 = arith.constant 0 : index
    %c0_30 = arith.constant 0 : index
    %48 = vector.load %arg3[%c0_29, %c0_30] : memref<32x96xbf16, #tpu.memory_space<vmem>>, vector<32x96xbf16>
    %cst_31 = arith.constant dense<0.000000e+00> : vector<256x96xf32>
    %49 = tpu.matmul %47, %48, %cst_31 {dimension_numbers = #tpu.dot_dimension_numbers<[1], [0], [0], [1], [0, 0, 1, 1], [], []>} : vector<256x32xbf16>, vector<32x96xbf16>, vector<256x96xf32> -> vector<256x96xf32>
    %c0_32 = arith.constant 0 : index
    %c0_33 = arith.constant 0 : index
    %50 = vector.load %arg4[%c0_32, %c0_33] : memref<1x96xf32, #tpu.memory_space<vmem>>, vector<1x96xf32>
    %51 = vector.broadcast %50 : vector<1x96xf32> to vector<256x96xf32>
    %52 = arith.addf %49, %51 : vector<256x96xf32>
    %cst_34 = arith.constant 0.000000e+00 : f32
    %53 = vector.broadcast %cst_34 : f32 to vector<256x96xf32>
    %54 = arith.maximumf %52, %53 : vector<256x96xf32>
    %c0_35 = arith.constant 0 : index
    %c0_36 = arith.constant 0 : index
    %55 = vector.load %arg2[%c0_35, %c0_36] : memref<256x256xbf16, #tpu.memory_space<vmem>>, vector<256x256xbf16>
    %56 = arith.truncf %54 : vector<256x96xf32> to vector<256x96xbf16>
    %cst_37 = arith.constant dense<0.000000e+00> : vector<256x96xf32>
    %57 = tpu.matmul %55, %56, %cst_37 {dimension_numbers = #tpu.dot_dimension_numbers<[1], [0], [0], [1], [0, 0, 1, 1], [], []>} : vector<256x256xbf16>, vector<256x96xbf16>, vector<256x96xf32> -> vector<256x96xf32>
    %58 = vector.extract_strided_slice %57 {offsets = [0, 0], sizes = [64, 96], strides = [1, 1]} : vector<256x96xf32> to vector<64x96xf32>
    %59 = vector.extract_strided_slice %57 {offsets = [64, 0], sizes = [64, 96], strides = [1, 1]} : vector<256x96xf32> to vector<64x96xf32>
    %60 = arith.maximumf %58, %59 : vector<64x96xf32>
    %61 = vector.extract_strided_slice %57 {offsets = [128, 0], sizes = [64, 96], strides = [1, 1]} : vector<256x96xf32> to vector<64x96xf32>
    %62 = vector.extract_strided_slice %57 {offsets = [192, 0], sizes = [64, 96], strides = [1, 1]} : vector<256x96xf32> to vector<64x96xf32>
    %63 = arith.maximumf %61, %62 : vector<64x96xf32>
    %64 = arith.maximumf %60, %63 : vector<64x96xf32>
    %c2 = arith.constant 2 : index
    %c0_38 = arith.constant 0 : index
    %c0_39 = arith.constant 0 : index
    %65 = vector.load %arg1[%c2, %c0_38, %c0_39] : memref<4x256x32xbf16, #tpu.memory_space<vmem>>, vector<1x256x32xbf16>
    %66 = vector.shape_cast %65 : vector<1x256x32xbf16> to vector<256x32xbf16>
    %c0_40 = arith.constant 0 : index
    %c0_41 = arith.constant 0 : index
    %67 = vector.load %arg3[%c0_40, %c0_41] : memref<32x96xbf16, #tpu.memory_space<vmem>>, vector<32x96xbf16>
    %cst_42 = arith.constant dense<0.000000e+00> : vector<256x96xf32>
    %68 = tpu.matmul %66, %67, %cst_42 {dimension_numbers = #tpu.dot_dimension_numbers<[1], [0], [0], [1], [0, 0, 1, 1], [], []>} : vector<256x32xbf16>, vector<32x96xbf16>, vector<256x96xf32> -> vector<256x96xf32>
    %c0_43 = arith.constant 0 : index
    %c0_44 = arith.constant 0 : index
    %69 = vector.load %arg4[%c0_43, %c0_44] : memref<1x96xf32, #tpu.memory_space<vmem>>, vector<1x96xf32>
    %70 = vector.broadcast %69 : vector<1x96xf32> to vector<256x96xf32>
    %71 = arith.addf %68, %70 : vector<256x96xf32>
    %cst_45 = arith.constant 0.000000e+00 : f32
    %72 = vector.broadcast %cst_45 : f32 to vector<256x96xf32>
    %73 = arith.maximumf %71, %72 : vector<256x96xf32>
    %c0_46 = arith.constant 0 : index
    %c0_47 = arith.constant 0 : index
    %74 = vector.load %arg2[%c0_46, %c0_47] : memref<256x256xbf16, #tpu.memory_space<vmem>>, vector<256x256xbf16>
    %75 = arith.truncf %73 : vector<256x96xf32> to vector<256x96xbf16>
    %cst_48 = arith.constant dense<0.000000e+00> : vector<256x96xf32>
    %76 = tpu.matmul %74, %75, %cst_48 {dimension_numbers = #tpu.dot_dimension_numbers<[1], [0], [0], [1], [0, 0, 1, 1], [], []>} : vector<256x256xbf16>, vector<256x96xbf16>, vector<256x96xf32> -> vector<256x96xf32>
    %77 = vector.extract_strided_slice %76 {offsets = [0, 0], sizes = [64, 96], strides = [1, 1]} : vector<256x96xf32> to vector<64x96xf32>
    %78 = vector.extract_strided_slice %76 {offsets = [64, 0], sizes = [64, 96], strides = [1, 1]} : vector<256x96xf32> to vector<64x96xf32>
    %79 = arith.maximumf %77, %78 : vector<64x96xf32>
    %80 = vector.extract_strided_slice %76 {offsets = [128, 0], sizes = [64, 96], strides = [1, 1]} : vector<256x96xf32> to vector<64x96xf32>
    %81 = vector.extract_strided_slice %76 {offsets = [192, 0], sizes = [64, 96], strides = [1, 1]} : vector<256x96xf32> to vector<64x96xf32>
    %82 = arith.maximumf %80, %81 : vector<64x96xf32>
    %83 = arith.maximumf %79, %82 : vector<64x96xf32>
    %c3 = arith.constant 3 : index
    %c0_49 = arith.constant 0 : index
    %c0_50 = arith.constant 0 : index
    %84 = vector.load %arg1[%c3, %c0_49, %c0_50] : memref<4x256x32xbf16, #tpu.memory_space<vmem>>, vector<1x256x32xbf16>
    %85 = vector.shape_cast %84 : vector<1x256x32xbf16> to vector<256x32xbf16>
    %c0_51 = arith.constant 0 : index
    %c0_52 = arith.constant 0 : index
    %86 = vector.load %arg3[%c0_51, %c0_52] : memref<32x96xbf16, #tpu.memory_space<vmem>>, vector<32x96xbf16>
    %cst_53 = arith.constant dense<0.000000e+00> : vector<256x96xf32>
    %87 = tpu.matmul %85, %86, %cst_53 {dimension_numbers = #tpu.dot_dimension_numbers<[1], [0], [0], [1], [0, 0, 1, 1], [], []>} : vector<256x32xbf16>, vector<32x96xbf16>, vector<256x96xf32> -> vector<256x96xf32>
    %c0_54 = arith.constant 0 : index
    %c0_55 = arith.constant 0 : index
    %88 = vector.load %arg4[%c0_54, %c0_55] : memref<1x96xf32, #tpu.memory_space<vmem>>, vector<1x96xf32>
    %89 = vector.broadcast %88 : vector<1x96xf32> to vector<256x96xf32>
    %90 = arith.addf %87, %89 : vector<256x96xf32>
    %cst_56 = arith.constant 0.000000e+00 : f32
    %91 = vector.broadcast %cst_56 : f32 to vector<256x96xf32>
    %92 = arith.maximumf %90, %91 : vector<256x96xf32>
    %c0_57 = arith.constant 0 : index
    %c0_58 = arith.constant 0 : index
    %93 = vector.load %arg2[%c0_57, %c0_58] : memref<256x256xbf16, #tpu.memory_space<vmem>>, vector<256x256xbf16>
    %94 = arith.truncf %92 : vector<256x96xf32> to vector<256x96xbf16>
    %cst_59 = arith.constant dense<0.000000e+00> : vector<256x96xf32>
    %95 = tpu.matmul %93, %94, %cst_59 {dimension_numbers = #tpu.dot_dimension_numbers<[1], [0], [0], [1], [0, 0, 1, 1], [], []>} : vector<256x256xbf16>, vector<256x96xbf16>, vector<256x96xf32> -> vector<256x96xf32>
    %96 = vector.extract_strided_slice %95 {offsets = [0, 0], sizes = [64, 96], strides = [1, 1]} : vector<256x96xf32> to vector<64x96xf32>
    %97 = vector.extract_strided_slice %95 {offsets = [64, 0], sizes = [64, 96], strides = [1, 1]} : vector<256x96xf32> to vector<64x96xf32>
    %98 = arith.maximumf %96, %97 : vector<64x96xf32>
    %99 = vector.extract_strided_slice %95 {offsets = [128, 0], sizes = [64, 96], strides = [1, 1]} : vector<256x96xf32> to vector<64x96xf32>
    %100 = vector.extract_strided_slice %95 {offsets = [192, 0], sizes = [64, 96], strides = [1, 1]} : vector<256x96xf32> to vector<64x96xf32>
    %101 = arith.maximumf %99, %100 : vector<64x96xf32>
    %102 = arith.maximumf %98, %101 : vector<64x96xf32>
    %103 = tpu.concatenate %45, %64, %83, %102 in 0 : vector<64x96xf32>, vector<64x96xf32>, vector<64x96xf32>, vector<64x96xf32> -> vector<256x96xf32>
    %104 = arith.truncf %103 : vector<256x96xf32> to vector<256x96xbf16>
    %c0_60 = arith.constant 0 : index
    %c0_61 = arith.constant 0 : index
    %105 = vector.load %arg5[%c0_60, %c0_61] : memref<96x16xbf16, #tpu.memory_space<vmem>>, vector<96x16xbf16>
    %cst_62 = arith.constant dense<0.000000e+00> : vector<256x16xf32>
    %106 = tpu.matmul %104, %105, %cst_62 {dimension_numbers = #tpu.dot_dimension_numbers<[1], [0], [0], [1], [0, 0, 1, 1], [], []>} : vector<256x96xbf16>, vector<96x16xbf16>, vector<256x16xf32> -> vector<256x16xf32>
    %c0_63 = arith.constant 0 : index
    %c0_64 = arith.constant 0 : index
    %107 = vector.load %arg6[%c0_63, %c0_64] : memref<1x16xf32, #tpu.memory_space<vmem>>, vector<1x16xf32>
    %108 = vector.broadcast %107 : vector<1x16xf32> to vector<256x16xf32>
    %109 = arith.addf %106, %108 : vector<256x16xf32>
    %cst_65 = arith.constant 0.000000e+00 : f32
    %110 = vector.broadcast %cst_65 : f32 to vector<256x16xf32>
    %111 = arith.maximumf %109, %110 : vector<256x16xf32>
    %112 = vector.shape_cast %111 : vector<256x16xf32> to vector<4x64x16xf32>
    %c0_66 = arith.constant 0 : index
    %c16 = arith.constant 16 : index
    %c0_67 = arith.constant 0 : index
    %113 = vector.load %arg18[%c0_66, %c16, %c0_67] : memref<4x96x16xf32, #tpu.memory_space<vmem>>, vector<4x64x16xf32>
    tpu.vector_store %arg18[%c0_66, %c16, %c0_67], %112 {strides = array<i32>} : memref<4x96x16xf32, #tpu.memory_space<vmem>>, vector<4x64x16xf32>,
    %c0_68 = arith.constant 0 : index
    %c7 = arith.constant 7 : index
    %c0_69 = arith.constant 0 : index
    %114 = vector.load %arg18[%c0_68, %c7, %c0_69] : memref<4x96x16xf32, #tpu.memory_space<vmem>>, vector<4x64x16xf32>
    %115 = vector.shape_cast %114 : vector<4x64x16xf32> to vector<256x16xf32>
    %cst_70 = arith.constant 0.000000e+00 : f32
    %116 = vector.shape_cast %24 : vector<256x1xi1> to vector<256x1xi1>
    %117 = vector.broadcast %116 : vector<256x1xi1> to vector<256x16xi1>
    %118 = vector.broadcast %cst_70 : f32 to vector<256x16xf32>
    %119 = arith.select %117, %118, %115 : vector<256x16xi1>, vector<256x16xf32>
    %c0_71 = arith.constant 0 : index
    %c8 = arith.constant 8 : index
    %c0_72 = arith.constant 0 : index
    %120 = vector.load %arg18[%c0_71, %c8, %c0_72] : memref<4x96x16xf32, #tpu.memory_space<vmem>>, vector<4x64x16xf32>
    %121 = vector.shape_cast %120 : vector<4x64x16xf32> to vector<256x16xf32>
    %c0_73 = arith.constant 0 : index
    %c9 = arith.constant 9 : index
    %c0_74 = arith.constant 0 : index
    %122 = vector.load %arg18[%c0_73, %c9, %c0_74] : memref<4x96x16xf32, #tpu.memory_space<vmem>>, vector<4x64x16xf32>
    %123 = vector.shape_cast %122 : vector<4x64x16xf32> to vector<256x16xf32>
    %cst_75 = arith.constant 0.000000e+00 : f32
    %124 = vector.shape_cast %26 : vector<256x1xi1> to vector<256x1xi1>
    %125 = vector.broadcast %124 : vector<256x1xi1> to vector<256x16xi1>
    %126 = vector.broadcast %cst_75 : f32 to vector<256x16xf32>
    %127 = arith.select %125, %126, %123 : vector<256x16xi1>, vector<256x16xf32>
    %c0_76 = arith.constant 0 : index
    %c15 = arith.constant 15 : index
    %c0_77 = arith.constant 0 : index
    %128 = vector.load %arg18[%c0_76, %c15, %c0_77] : memref<4x96x16xf32, #tpu.memory_space<vmem>>, vector<4x64x16xf32>
    %129 = vector.shape_cast %128 : vector<4x64x16xf32> to vector<256x16xf32>
    %cst_78 = arith.constant 0.000000e+00 : f32
    %130 = vector.shape_cast %24 : vector<256x1xi1> to vector<256x1xi1>
    %131 = vector.broadcast %130 : vector<256x1xi1> to vector<256x16xi1>
    %132 = vector.broadcast %cst_78 : f32 to vector<256x16xf32>
    %133 = arith.select %131, %132, %129 : vector<256x16xi1>, vector<256x16xf32>
    %c0_79 = arith.constant 0 : index
    %c16_80 = arith.constant 16 : index
    %c0_81 = arith.constant 0 : index
    %134 = vector.load %arg18[%c0_79, %c16_80, %c0_81] : memref<4x96x16xf32, #tpu.memory_space<vmem>>, vector<4x64x16xf32>
    %135 = vector.shape_cast %134 : vector<4x64x16xf32> to vector<256x16xf32>
    %c0_82 = arith.constant 0 : index
    %c17 = arith.constant 17 : index
    %c0_83 = arith.constant 0 : index
    %136 = vector.load %arg18[%c0_82, %c17, %c0_83] : memref<4x96x16xf32, #tpu.memory_space<vmem>>, vector<4x64x16xf32>
    %137 = vector.shape_cast %136 : vector<4x64x16xf32> to vector<256x16xf32>
    %cst_84 = arith.constant 0.000000e+00 : f32
    %138 = vector.shape_cast %26 : vector<256x1xi1> to vector<256x1xi1>
    %139 = vector.broadcast %138 : vector<256x1xi1> to vector<256x16xi1>
    %140 = vector.broadcast %cst_84 : f32 to vector<256x16xf32>
    %141 = arith.select %139, %140, %137 : vector<256x16xi1>, vector<256x16xf32>
    %c0_85 = arith.constant 0 : index
    %c23 = arith.constant 23 : index
    %c0_86 = arith.constant 0 : index
    %142 = vector.load %arg18[%c0_85, %c23, %c0_86] : memref<4x96x16xf32, #tpu.memory_space<vmem>>, vector<4x64x16xf32>
    %143 = vector.shape_cast %142 : vector<4x64x16xf32> to vector<256x16xf32>
    %cst_87 = arith.constant 0.000000e+00 : f32
    %144 = vector.shape_cast %24 : vector<256x1xi1> to vector<256x1xi1>
    %145 = vector.broadcast %144 : vector<256x1xi1> to vector<256x16xi1>
    %146 = vector.broadcast %cst_87 : f32 to vector<256x16xf32>
    %147 = arith.select %145, %146, %143 : vector<256x16xi1>, vector<256x16xf32>
    %c0_88 = arith.constant 0 : index
    %c24 = arith.constant 24 : index
    %c0_89 = arith.constant 0 : index
    %148 = vector.load %arg18[%c0_88, %c24, %c0_89] : memref<4x96x16xf32, #tpu.memory_space<vmem>>, vector<4x64x16xf32>
    %149 = vector.shape_cast %148 : vector<4x64x16xf32> to vector<256x16xf32>
    %c0_90 = arith.constant 0 : index
    %c25 = arith.constant 25 : index
    %c0_91 = arith.constant 0 : index
    %150 = vector.load %arg18[%c0_90, %c25, %c0_91] : memref<4x96x16xf32, #tpu.memory_space<vmem>>, vector<4x64x16xf32>
    %151 = vector.shape_cast %150 : vector<4x64x16xf32> to vector<256x16xf32>
    %cst_92 = arith.constant 0.000000e+00 : f32
    %152 = vector.shape_cast %26 : vector<256x1xi1> to vector<256x1xi1>
    %153 = vector.broadcast %152 : vector<256x1xi1> to vector<256x16xi1>
    %154 = vector.broadcast %cst_92 : f32 to vector<256x16xf32>
    %155 = arith.select %153, %154, %151 : vector<256x16xi1>, vector<256x16xf32>
    %156 = tpu.concatenate %119, %121, %127, %133, %135, %141, %147, %149, %155 in 1 : vector<256x16xf32>, vector<256x16xf32>, vector<256x16xf32>, vector<256x16xf32>, vector<256x16xf32>, vector<256x16xf32>, vector<256x16xf32>, vector<256x16xf32>, vector<256x16xf32> -> vector<256x144xf32>
    %157 = arith.truncf %156 : vector<256x144xf32> to vector<256x144xbf16>
    %c0_93 = arith.constant 0 : index
    %c0_94 = arith.constant 0 : index
    %158 = vector.load %arg7[%c0_93, %c0_94] : memref<144x128xbf16, #tpu.memory_space<vmem>>, vector<144x128xbf16>
    %cst_95 = arith.constant dense<0.000000e+00> : vector<256x128xf32>
    %159 = tpu.matmul %157, %158, %cst_95 {dimension_numbers = #tpu.dot_dimension_numbers<[1], [0], [0], [1], [0, 0, 1, 1], [], []>} : vector<256x144xbf16>, vector<144x128xbf16>, vector<256x128xf32> -> vector<256x128xf32>
    %c0_96 = arith.constant 0 : index
    %c0_97 = arith.constant 0 : index
    %160 = vector.load %arg8[%c0_96, %c0_97] : memref<1x128xf32, #tpu.memory_space<vmem>>, vector<1x128xf32>
    %161 = vector.broadcast %160 : vector<1x128xf32> to vector<256x128xf32>
    %162 = arith.addf %159, %161 : vector<256x128xf32>
    %cst_98 = arith.constant 0.000000e+00 : f32
    %163 = vector.broadcast %cst_98 : f32 to vector<256x128xf32>
    %164 = arith.maximumf %162, %163 : vector<256x128xf32>
    %165 = arith.truncf %164 : vector<256x128xf32> to vector<256x128xbf16>
    %c0_99 = arith.constant 0 : index
    %c0_100 = arith.constant 0 : index
    %166 = vector.load %arg9[%c0_99, %c0_100] : memref<128x16xbf16, #tpu.memory_space<vmem>>, vector<128x16xbf16>
    %cst_101 = arith.constant dense<0.000000e+00> : vector<256x16xf32>
    %167 = tpu.matmul %165, %166, %cst_101 {dimension_numbers = #tpu.dot_dimension_numbers<[1], [0], [0], [1], [0, 0, 1, 1], [], []>} : vector<256x128xbf16>, vector<128x16xbf16>, vector<256x16xf32> -> vector<256x16xf32>
    %c0_102 = arith.constant 0 : index
    %c0_103 = arith.constant 0 : index
    %168 = vector.load %arg10[%c0_102, %c0_103] : memref<1x16xf32, #tpu.memory_space<vmem>>, vector<1x16xf32>
    %169 = vector.broadcast %168 : vector<1x16xf32> to vector<256x16xf32>
    %170 = arith.addf %167, %169 : vector<256x16xf32>
    %cst_104 = arith.constant 0.000000e+00 : f32
    %171 = vector.broadcast %cst_104 : f32 to vector<256x16xf32>
    %172 = arith.maximumf %170, %171 : vector<256x16xf32>
    %173 = vector.shape_cast %172 : vector<256x16xf32> to vector<4x64x16xf32>
    %c0_105 = arith.constant 0 : index
    %c16_106 = arith.constant 16 : index
    %c0_107 = arith.constant 0 : index
    %174 = vector.load %arg18[%c0_105, %c16_106, %c0_107] : memref<4x96x16xf32, #tpu.memory_space<vmem>>, vector<4x64x16xf32>
    tpu.vector_store %arg18[%c0_105, %c16_106, %c0_107], %173 {strides = array<i32>} : memref<4x96x16xf32, #tpu.memory_space<vmem>>, vector<4x64x16xf32>,
    %c0_108 = arith.constant 0 : index
    %c7_109 = arith.constant 7 : index
    %c0_110 = arith.constant 0 : index
    %175 = vector.load %arg18[%c0_108, %c7_109, %c0_110] : memref<4x96x16xf32, #tpu.memory_space<vmem>>, vector<4x64x16xf32>
    %176 = vector.shape_cast %175 : vector<4x64x16xf32> to vector<256x16xf32>
    %cst_111 = arith.constant 0.000000e+00 : f32
    %177 = vector.shape_cast %24 : vector<256x1xi1> to vector<256x1xi1>
    %178 = vector.broadcast %177 : vector<256x1xi1> to vector<256x16xi1>
    %179 = vector.broadcast %cst_111 : f32 to vector<256x16xf32>
    %180 = arith.select %178, %179, %176 : vector<256x16xi1>, vector<256x16xf32>
    %c0_112 = arith.constant 0 : index
    %c8_113 = arith.constant 8 : index
    %c0_114 = arith.constant 0 : index
    %181 = vector.load %arg18[%c0_112, %c8_113, %c0_114] : memref<4x96x16xf32, #tpu.memory_space<vmem>>, vector<4x64x16xf32>
    %182 = vector.shape_cast %181 : vector<4x64x16xf32> to vector<256x16xf32>
    %c0_115 = arith.constant 0 : index
    %c9_116 = arith.constant 9 : index
    %c0_117 = arith.constant 0 : index
    %183 = vector.load %arg18[%c0_115, %c9_116, %c0_117] : memref<4x96x16xf32, #tpu.memory_space<vmem>>, vector<4x64x16xf32>
    %184 = vector.shape_cast %183 : vector<4x64x16xf32> to vector<256x16xf32>
    %cst_118 = arith.constant 0.000000e+00 : f32
    %185 = vector.shape_cast %26 : vector<256x1xi1> to vector<256x1xi1>
    %186 = vector.broadcast %185 : vector<256x1xi1> to vector<256x16xi1>
    %187 = vector.broadcast %cst_118 : f32 to vector<256x16xf32>
    %188 = arith.select %186, %187, %184 : vector<256x16xi1>, vector<256x16xf32>
    %c0_119 = arith.constant 0 : index
    %c15_120 = arith.constant 15 : index
    %c0_121 = arith.constant 0 : index
    %189 = vector.load %arg18[%c0_119, %c15_120, %c0_121] : memref<4x96x16xf32, #tpu.memory_space<vmem>>, vector<4x64x16xf32>
    %190 = vector.shape_cast %189 : vector<4x64x16xf32> to vector<256x16xf32>
    %cst_122 = arith.constant 0.000000e+00 : f32
    %191 = vector.shape_cast %24 : vector<256x1xi1> to vector<256x1xi1>
    %192 = vector.broadcast %191 : vector<256x1xi1> to vector<256x16xi1>
    %193 = vector.broadcast %cst_122 : f32 to vector<256x16xf32>
    %194 = arith.select %192, %193, %190 : vector<256x16xi1>, vector<256x16xf32>
    %c0_123 = arith.constant 0 : index
    %c16_124 = arith.constant 16 : index
    %c0_125 = arith.constant 0 : index
    %195 = vector.load %arg18[%c0_123, %c16_124, %c0_125] : memref<4x96x16xf32, #tpu.memory_space<vmem>>, vector<4x64x16xf32>
    %196 = vector.shape_cast %195 : vector<4x64x16xf32> to vector<256x16xf32>
    %c0_126 = arith.constant 0 : index
    %c17_127 = arith.constant 17 : index
    %c0_128 = arith.constant 0 : index
    %197 = vector.load %arg18[%c0_126, %c17_127, %c0_128] : memref<4x96x16xf32, #tpu.memory_space<vmem>>, vector<4x64x16xf32>
    %198 = vector.shape_cast %197 : vector<4x64x16xf32> to vector<256x16xf32>
    %cst_129 = arith.constant 0.000000e+00 : f32
    %199 = vector.shape_cast %26 : vector<256x1xi1> to vector<256x1xi1>
    %200 = vector.broadcast %199 : vector<256x1xi1> to vector<256x16xi1>
    %201 = vector.broadcast %cst_129 : f32 to vector<256x16xf32>
    %202 = arith.select %200, %201, %198 : vector<256x16xi1>, vector<256x16xf32>
    %c0_130 = arith.constant 0 : index
    %c23_131 = arith.constant 23 : index
    %c0_132 = arith.constant 0 : index
    %203 = vector.load %arg18[%c0_130, %c23_131, %c0_132] : memref<4x96x16xf32, #tpu.memory_space<vmem>>, vector<4x64x16xf32>
    %204 = vector.shape_cast %203 : vector<4x64x16xf32> to vector<256x16xf32>
    %cst_133 = arith.constant 0.000000e+00 : f32
    %205 = vector.shape_cast %24 : vector<256x1xi1> to vector<256x1xi1>
    %206 = vector.broadcast %205 : vector<256x1xi1> to vector<256x16xi1>
    %207 = vector.broadcast %cst_133 : f32 to vector<256x16xf32>
    %208 = arith.select %206, %207, %204 : vector<256x16xi1>, vector<256x16xf32>
    %c0_134 = arith.constant 0 : index
    %c24_135 = arith.constant 24 : index
    %c0_136 = arith.constant 0 : index
    %209 = vector.load %arg18[%c0_134, %c24_135, %c0_136] : memref<4x96x16xf32, #tpu.memory_space<vmem>>, vector<4x64x16xf32>
    %210 = vector.shape_cast %209 : vector<4x64x16xf32> to vector<256x16xf32>
    %c0_137 = arith.constant 0 : index
    %c25_138 = arith.constant 25 : index
    %c0_139 = arith.constant 0 : index
    %211 = vector.load %arg18[%c0_137, %c25_138, %c0_139] : memref<4x96x16xf32, #tpu.memory_space<vmem>>, vector<4x64x16xf32>
    %212 = vector.shape_cast %211 : vector<4x64x16xf32> to vector<256x16xf32>
    %cst_140 = arith.constant 0.000000e+00 : f32
    %213 = vector.shape_cast %26 : vector<256x1xi1> to vector<256x1xi1>
    %214 = vector.broadcast %213 : vector<256x1xi1> to vector<256x16xi1>
    %215 = vector.broadcast %cst_140 : f32 to vector<256x16xf32>
    %216 = arith.select %214, %215, %212 : vector<256x16xi1>, vector<256x16xf32>
    %217 = tpu.concatenate %180, %182, %188, %194, %196, %202, %208, %210, %216 in 1 : vector<256x16xf32>, vector<256x16xf32>, vector<256x16xf32>, vector<256x16xf32>, vector<256x16xf32>, vector<256x16xf32>, vector<256x16xf32>, vector<256x16xf32>, vector<256x16xf32> -> vector<256x144xf32>
    %218 = arith.truncf %217 : vector<256x144xf32> to vector<256x144xbf16>
    %c0_141 = arith.constant 0 : index
    %c0_142 = arith.constant 0 : index
    %219 = vector.load %arg11[%c0_141, %c0_142] : memref<144x128xbf16, #tpu.memory_space<vmem>>, vector<144x128xbf16>
    %cst_143 = arith.constant dense<0.000000e+00> : vector<256x128xf32>
    %220 = tpu.matmul %218, %219, %cst_143 {dimension_numbers = #tpu.dot_dimension_numbers<[1], [0], [0], [1], [0, 0, 1, 1], [], []>} : vector<256x144xbf16>, vector<144x128xbf16>, vector<256x128xf32> -> vector<256x128xf32>
    %c0_144 = arith.constant 0 : index
    %c0_145 = arith.constant 0 : index
    %221 = vector.load %arg12[%c0_144, %c0_145] : memref<1x128xf32, #tpu.memory_space<vmem>>, vector<1x128xf32>
    %222 = vector.broadcast %221 : vector<1x128xf32> to vector<256x128xf32>
    %223 = arith.addf %220, %222 : vector<256x128xf32>
    %cst_146 = arith.constant 0.000000e+00 : f32
    %224 = vector.broadcast %cst_146 : f32 to vector<256x128xf32>
    %225 = arith.maximumf %223, %224 : vector<256x128xf32>
    %226 = arith.truncf %225 : vector<256x128xf32> to vector<256x128xbf16>
    %c0_147 = arith.constant 0 : index
    %c0_148 = arith.constant 0 : index
    %227 = vector.load %arg13[%c0_147, %c0_148] : memref<128x32xbf16, #tpu.memory_space<vmem>>, vector<128x32xbf16>
    %cst_149 = arith.constant dense<0.000000e+00> : vector<256x32xf32>
    %228 = tpu.matmul %226, %227, %cst_149 {dimension_numbers = #tpu.dot_dimension_numbers<[1], [0], [0], [1], [0, 0, 1, 1], [], []>} : vector<256x128xbf16>, vector<128x32xbf16>, vector<256x32xf32> -> vector<256x32xf32>
    %c0_150 = arith.constant 0 : index
    %c0_151 = arith.constant 0 : index
    %229 = vector.load %arg14[%c0_150, %c0_151] : memref<1x32xf32, #tpu.memory_space<vmem>>, vector<1x32xf32>
    %230 = vector.broadcast %229 : vector<1x32xf32> to vector<256x32xf32>
    %231 = arith.addf %228, %230 : vector<256x32xf32>
    %cst_152 = arith.constant 0.000000e+00 : f32
    %232 = vector.broadcast %cst_152 : f32 to vector<256x32xf32>
    %233 = arith.maximumf %231, %232 : vector<256x32xf32>
    %234 = vector.shape_cast %233 : vector<256x32xf32> to vector<4x64x32xf32>
    %c0_153 = arith.constant 0 : index
    %c16_154 = arith.constant 16 : index
    %c0_155 = arith.constant 0 : index
    %235 = vector.load %arg19[%c0_153, %c16_154, %c0_155] : memref<4x96x32xf32, #tpu.memory_space<vmem>>, vector<4x64x32xf32>
    tpu.vector_store %arg19[%c0_153, %c16_154, %c0_155], %234 {strides = array<i32>} : memref<4x96x32xf32, #tpu.memory_space<vmem>>, vector<4x64x32xf32>,
    %c0_156 = arith.constant 0 : index
    %c7_157 = arith.constant 7 : index
    %c0_158 = arith.constant 0 : index
    %236 = vector.load %arg19[%c0_156, %c7_157, %c0_158] : memref<4x96x32xf32, #tpu.memory_space<vmem>>, vector<4x64x32xf32>
    %237 = vector.shape_cast %236 : vector<4x64x32xf32> to vector<256x32xf32>
    %cst_159 = arith.constant 0.000000e+00 : f32
    %238 = vector.shape_cast %24 : vector<256x1xi1> to vector<256x1xi1>
    %239 = vector.broadcast %238 : vector<256x1xi1> to vector<256x32xi1>
    %240 = vector.broadcast %cst_159 : f32 to vector<256x32xf32>
    %241 = arith.select %239, %240, %237 : vector<256x32xi1>, vector<256x32xf32>
    %c0_160 = arith.constant 0 : index
    %c8_161 = arith.constant 8 : index
    %c0_162 = arith.constant 0 : index
    %242 = vector.load %arg19[%c0_160, %c8_161, %c0_162] : memref<4x96x32xf32, #tpu.memory_space<vmem>>, vector<4x64x32xf32>
    %243 = vector.shape_cast %242 : vector<4x64x32xf32> to vector<256x32xf32>
    %c0_163 = arith.constant 0 : index
    %c9_164 = arith.constant 9 : index
    %c0_165 = arith.constant 0 : index
    %244 = vector.load %arg19[%c0_163, %c9_164, %c0_165] : memref<4x96x32xf32, #tpu.memory_space<vmem>>, vector<4x64x32xf32>
    %245 = vector.shape_cast %244 : vector<4x64x32xf32> to vector<256x32xf32>
    %cst_166 = arith.constant 0.000000e+00 : f32
    %246 = vector.shape_cast %26 : vector<256x1xi1> to vector<256x1xi1>
    %247 = vector.broadcast %246 : vector<256x1xi1> to vector<256x32xi1>
    %248 = vector.broadcast %cst_166 : f32 to vector<256x32xf32>
    %249 = arith.select %247, %248, %245 : vector<256x32xi1>, vector<256x32xf32>
    %c0_167 = arith.constant 0 : index
    %c15_168 = arith.constant 15 : index
    %c0_169 = arith.constant 0 : index
    %250 = vector.load %arg19[%c0_167, %c15_168, %c0_169] : memref<4x96x32xf32, #tpu.memory_space<vmem>>, vector<4x64x32xf32>
    %251 = vector.shape_cast %250 : vector<4x64x32xf32> to vector<256x32xf32>
    %cst_170 = arith.constant 0.000000e+00 : f32
    %252 = vector.shape_cast %24 : vector<256x1xi1> to vector<256x1xi1>
    %253 = vector.broadcast %252 : vector<256x1xi1> to vector<256x32xi1>
    %254 = vector.broadcast %cst_170 : f32 to vector<256x32xf32>
    %255 = arith.select %253, %254, %251 : vector<256x32xi1>, vector<256x32xf32>
    %c0_171 = arith.constant 0 : index
    %c16_172 = arith.constant 16 : index
    %c0_173 = arith.constant 0 : index
    %256 = vector.load %arg19[%c0_171, %c16_172, %c0_173] : memref<4x96x32xf32, #tpu.memory_space<vmem>>, vector<4x64x32xf32>
    %257 = vector.shape_cast %256 : vector<4x64x32xf32> to vector<256x32xf32>
    %c0_174 = arith.constant 0 : index
    %c17_175 = arith.constant 17 : index
    %c0_176 = arith.constant 0 : index
    %258 = vector.load %arg19[%c0_174, %c17_175, %c0_176] : memref<4x96x32xf32, #tpu.memory_space<vmem>>, vector<4x64x32xf32>
    %259 = vector.shape_cast %258 : vector<4x64x32xf32> to vector<256x32xf32>
    %cst_177 = arith.constant 0.000000e+00 : f32
    %260 = vector.shape_cast %26 : vector<256x1xi1> to vector<256x1xi1>
    %261 = vector.broadcast %260 : vector<256x1xi1> to vector<256x32xi1>
    %262 = vector.broadcast %cst_177 : f32 to vector<256x32xf32>
    %263 = arith.select %261, %262, %259 : vector<256x32xi1>, vector<256x32xf32>
    %c0_178 = arith.constant 0 : index
    %c23_179 = arith.constant 23 : index
    %c0_180 = arith.constant 0 : index
    %264 = vector.load %arg19[%c0_178, %c23_179, %c0_180] : memref<4x96x32xf32, #tpu.memory_space<vmem>>, vector<4x64x32xf32>
    %265 = vector.shape_cast %264 : vector<4x64x32xf32> to vector<256x32xf32>
    %cst_181 = arith.constant 0.000000e+00 : f32
    %266 = vector.shape_cast %24 : vector<256x1xi1> to vector<256x1xi1>
    %267 = vector.broadcast %266 : vector<256x1xi1> to vector<256x32xi1>
    %268 = vector.broadcast %cst_181 : f32 to vector<256x32xf32>
    %269 = arith.select %267, %268, %265 : vector<256x32xi1>, vector<256x32xf32>
    %c0_182 = arith.constant 0 : index
    %c24_183 = arith.constant 24 : index
    %c0_184 = arith.constant 0 : index
    %270 = vector.load %arg19[%c0_182, %c24_183, %c0_184] : memref<4x96x32xf32, #tpu.memory_space<vmem>>, vector<4x64x32xf32>
    %271 = vector.shape_cast %270 : vector<4x64x32xf32> to vector<256x32xf32>
    %c0_185 = arith.constant 0 : index
    %c25_186 = arith.constant 25 : index
    %c0_187 = arith.constant 0 : index
    %272 = vector.load %arg19[%c0_185, %c25_186, %c0_187] : memref<4x96x32xf32, #tpu.memory_space<vmem>>, vector<4x64x32xf32>
    %273 = vector.shape_cast %272 : vector<4x64x32xf32> to vector<256x32xf32>
    %cst_188 = arith.constant 0.000000e+00 : f32
    %274 = vector.shape_cast %26 : vector<256x1xi1> to vector<256x1xi1>
    %275 = vector.broadcast %274 : vector<256x1xi1> to vector<256x32xi1>
    %276 = vector.broadcast %cst_188 : f32 to vector<256x32xf32>
    %277 = arith.select %275, %276, %273 : vector<256x32xi1>, vector<256x32xf32>
    %278 = tpu.concatenate %241, %243, %249, %255, %257, %263, %269, %271, %277 in 1 : vector<256x32xf32>, vector<256x32xf32>, vector<256x32xf32>, vector<256x32xf32>, vector<256x32xf32>, vector<256x32xf32>, vector<256x32xf32>, vector<256x32xf32>, vector<256x32xf32> -> vector<256x288xf32>
    %279 = arith.truncf %278 : vector<256x288xf32> to vector<256x288xbf16>
    %c0_189 = arith.constant 0 : index
    %c0_190 = arith.constant 0 : index
    %280 = vector.load %arg15[%c0_189, %c0_190] : memref<288x256xbf16, #tpu.memory_space<vmem>>, vector<288x256xbf16>
    %cst_191 = arith.constant dense<0.000000e+00> : vector<256x256xf32>
    %281 = tpu.matmul %279, %280, %cst_191 {dimension_numbers = #tpu.dot_dimension_numbers<[1], [0], [0], [1], [0, 0, 1, 1], [], []>} : vector<256x288xbf16>, vector<288x256xbf16>, vector<256x256xf32> -> vector<256x256xf32>
    %c0_192 = arith.constant 0 : index
    %c0_193 = arith.constant 0 : index
    %282 = vector.load %arg16[%c0_192, %c0_193] : memref<1x256xf32, #tpu.memory_space<vmem>>, vector<1x256xf32>
    %283 = vector.broadcast %282 : vector<1x256xf32> to vector<256x256xf32>
    %284 = arith.addf %281, %283 : vector<256x256xf32>
    %cst_194 = arith.constant 0.000000e+00 : f32
    %285 = vector.broadcast %cst_194 : f32 to vector<256x256xf32>
    %286 = arith.maximumf %284, %285 : vector<256x256xf32>
    %287 = vector.shape_cast %286 : vector<256x256xf32> to vector<4x64x256xf32>
    %c0_195 = arith.constant 0 : index
    %c0_196 = arith.constant 0 : index
    %c0_197 = arith.constant 0 : index
    %288 = vector.load %arg17[%c0_195, %c0_196, %c0_197] : memref<4x64x256xf32, #tpu.memory_space<vmem>>, vector<4x64x256xf32>
    tpu.vector_store %arg17[%c0_195, %c0_196, %c0_197], %287 {strides = array<i32>} : memref<4x64x256xf32, #tpu.memory_space<vmem>>, vector<4x64x256xf32>,
    return
  }
  func.func @transform_0(%arg0: i32) -> (i32, i32, i32) {
    %c0_i32 = arith.constant 0 : i32
    %c0_i32_0 = arith.constant 0 : i32
    %c0_i32_1 = arith.constant 0 : i32
    return %arg0, %c0_i32, %c0_i32_0 : i32, i32, i32
  }
  func.func @transform_1(%arg0: i32) -> (i32, i32) {
    %c0_i32 = arith.constant 0 : i32
    %c0_i32_0 = arith.constant 0 : i32
    %c0_i32_1 = arith.constant 0 : i32
    return %c0_i32, %c0_i32_0 : i32, i32
  }
  func.func @transform_2(%arg0: i32) -> (i32, i32) {
    %c0_i32 = arith.constant 0 : i32
    %c0_i32_0 = arith.constant 0 : i32
    %c0_i32_1 = arith.constant 0 : i32
    return %c0_i32, %c0_i32_0 : i32, i32
  }
  func.func @transform_3(%arg0: i32) -> (i32, i32) {
    %c0_i32 = arith.constant 0 : i32
    %c0_i32_0 = arith.constant 0 : i32
    %c0_i32_1 = arith.constant 0 : i32
    return %c0_i32, %c0_i32_0 : i32, i32
  }
  func.func @transform_4(%arg0: i32) -> (i32, i32) {
    %c0_i32 = arith.constant 0 : i32
    %c0_i32_0 = arith.constant 0 : i32
    %c0_i32_1 = arith.constant 0 : i32
    return %c0_i32, %c0_i32_0 : i32, i32
  }
  func.func @transform_5(%arg0: i32) -> (i32, i32) {
    %c0_i32 = arith.constant 0 : i32
    %c0_i32_0 = arith.constant 0 : i32
    %c0_i32_1 = arith.constant 0 : i32
    return %c0_i32, %c0_i32_0 : i32, i32
  }
  func.func @transform_6(%arg0: i32) -> (i32, i32) {
    %c0_i32 = arith.constant 0 : i32
    %c0_i32_0 = arith.constant 0 : i32
    %c0_i32_1 = arith.constant 0 : i32
    return %c0_i32, %c0_i32_0 : i32, i32
  }
  func.func @transform_7(%arg0: i32) -> (i32, i32) {
    %c0_i32 = arith.constant 0 : i32
    %c0_i32_0 = arith.constant 0 : i32
    %c0_i32_1 = arith.constant 0 : i32
    return %c0_i32, %c0_i32_0 : i32, i32
  }
  func.func @transform_8(%arg0: i32) -> (i32, i32) {
    %c0_i32 = arith.constant 0 : i32
    %c0_i32_0 = arith.constant 0 : i32
    %c0_i32_1 = arith.constant 0 : i32
    return %c0_i32, %c0_i32_0 : i32, i32
  }
  func.func @transform_9(%arg0: i32) -> (i32, i32) {
    %c0_i32 = arith.constant 0 : i32
    %c0_i32_0 = arith.constant 0 : i32
    %c0_i32_1 = arith.constant 0 : i32
    return %c0_i32, %c0_i32_0 : i32, i32
  }
  func.func @transform_10(%arg0: i32) -> (i32, i32) {
    %c0_i32 = arith.constant 0 : i32
    %c0_i32_0 = arith.constant 0 : i32
    %c0_i32_1 = arith.constant 0 : i32
    return %c0_i32, %c0_i32_0 : i32, i32
  }
  func.func @transform_11(%arg0: i32) -> (i32, i32) {
    %c0_i32 = arith.constant 0 : i32
    %c0_i32_0 = arith.constant 0 : i32
    %c0_i32_1 = arith.constant 0 : i32
    return %c0_i32, %c0_i32_0 : i32, i32
  }
  func.func @transform_12(%arg0: i32) -> (i32, i32) {
    %c0_i32 = arith.constant 0 : i32
    %c0_i32_0 = arith.constant 0 : i32
    %c0_i32_1 = arith.constant 0 : i32
    return %c0_i32, %c0_i32_0 : i32, i32
  }
  func.func @transform_13(%arg0: i32) -> (i32, i32) {
    %c0_i32 = arith.constant 0 : i32
    %c0_i32_0 = arith.constant 0 : i32
    %c0_i32_1 = arith.constant 0 : i32
    return %c0_i32, %c0_i32_0 : i32, i32
  }
  func.func @transform_14(%arg0: i32) -> (i32, i32) {
    %c0_i32 = arith.constant 0 : i32
    %c0_i32_0 = arith.constant 0 : i32
    %c0_i32_1 = arith.constant 0 : i32
    return %c0_i32, %c0_i32_0 : i32, i32
  }
  func.func @transform_15(%arg0: i32) -> (i32, i32) {
    %c0_i32 = arith.constant 0 : i32
    %c0_i32_0 = arith.constant 0 : i32
    %c0_i32_1 = arith.constant 0 : i32
    return %c0_i32, %c0_i32_0 : i32, i32
  }
  func.func @transform_16(%arg0: i32) -> (i32, i32, i32) {
    %c0_i32 = arith.constant 0 : i32
    %c0_i32_0 = arith.constant 0 : i32
    %c0_i32_1 = arith.constant 0 : i32
    return %arg0, %c0_i32, %c0_i32_0 : i32, i32, i32
  }
}

</mosaic_0001>

<llo_original>
// kernel: test_forward.1
$region0: #{test_forward.1}
  #allocation0 [shape = 'u32[]', space=smem, size = 0x4, offset = 0x4, fixed_abs, tag = 'smem constant byte address 0x4 - core index']
  #allocation1 [shape = 'u32[144,128]{1,0:T(1,128)}', space=vmem, size = 0x12000, scoped, tag = 'internal scratch']
  #allocation2 [shape = 'f32[4,96,16]{2,1,0:T(8,128)}', space=vmem, size = 0x30000, scoped, tag = 'scratch operand']
  #allocation3 [shape = 'f32[4,96,32]{2,1,0:T(8,128)}', space=vmem, size = 0x30000, scoped, tag = 'scratch operand']
  %s0 = inlined_call_operand.vmem [shape: bf16[8,256,32], index: 0, kind: input, shape index: {}]
  %s1 = inlined_call_operand.vmem [shape: bf16[256,256], index: 1, kind: input, shape index: {}]
  %s2 = inlined_call_operand.vmem [shape: bf16[32,96], index: 2, kind: input, shape index: {}]
  %s3 = inlined_call_operand.vmem [shape: f32[1,96], index: 3, kind: input, shape index: {}]
  %s4 = inlined_call_operand.vmem [shape: bf16[96,16], index: 4, kind: input, shape index: {}]
  %s5 = inlined_call_operand.vmem [shape: f32[1,16], index: 5, kind: input, shape index: {}]
  %s6 = inlined_call_operand.vmem [shape: bf16[144,128], index: 6, kind: input, shape index: {}]
  %s7 = inlined_call_operand.vmem [shape: f32[1,128], index: 7, kind: input, shape index: {}]
  %s8 = inlined_call_operand.vmem [shape: bf16[128,16], index: 8, kind: input, shape index: {}]
  %s9 = inlined_call_operand.vmem [shape: f32[1,16], index: 9, kind: input, shape index: {}]
  %s10 = inlined_call_operand.vmem [shape: bf16[144,128], index: 10, kind: input, shape index: {}]
  %s11 = inlined_call_operand.vmem [shape: f32[1,128], index: 11, kind: input, shape index: {}]
  %s12 = inlined_call_operand.vmem [shape: bf16[128,32], index: 12, kind: input, shape index: {}]
  %s13 = inlined_call_operand.vmem [shape: f32[1,32], index: 13, kind: input, shape index: {}]
  %s14 = inlined_call_operand.vmem [shape: bf16[288,256], index: 14, kind: input, shape index: {}]
  %s15 = inlined_call_operand.vmem [shape: f32[1,256], index: 15, kind: input, shape index: {}]
  %s16 = inlined_call_operand.hbm [shape: f32[8,64,256], index: 16, kind: output, shape index: {}]
  %s17 = sld [smem:[#allocation0]]
  $region97: #{test_forward.1} parent=0
    _
  %s19 = ssub.s32 1, %s17
  %s20 = scalar_select 0, %s19, %s17
  $region1: #{test_forward.1} parent=0
    #allocation4 [shape = 'u8[524288]{0}', space=vmem, size = 0x80000, scoped, tag = 'output window, operand 0']
    #allocation5 [shape = 's32[2]{0}', space=sflag, size = 0x8, scoped, tag = 'scoped memory for test_forward.1']
    %21 = vsyncpa [#allocation5], 0
    %s22 = scalar_lea.sflag [#allocation5], 1
    %23 = vsyncpa %s22, 0
    loop: start=0, step=1, limit=4
    $region2: #{test_forward.1} parent=1 // loop_pre_header
      _
    $region3: #{test_forward.1} parent=1 // loop_header
      %s25 = sphi 0, %s29
      %p26 = scmp.ge.s32.totalorder %s25, 4
      %s35 = sphi 0, %s37
      %s38 = sphi 0, %s35
      %s39 = sphi 0, %s38
      %s55 = sphi 0, %s39
      %s59 = sphi 0, %s59
      %s61 = sphi 0, %s59
      %s62 = sphi 0, %s61
      %s76 = sphi 0, %s62
      %s80 = sphi 0, %s80
      %s82 = sphi 0, %s80
      %s83 = sphi 0, %s82
      %s97 = sphi 0, %s83
      %s101 = sphi 0, %s101
      %s103 = sphi 0, %s101
      %s104 = sphi 0, %s103
      %s118 = sphi 0, %s104
      %s122 = sphi 0, %s122
      %s124 = sphi 0, %s122
      %s125 = sphi 0, %s124
      %s139 = sphi 0, %s125
      %s143 = sphi 0, %s143
      %s145 = sphi 0, %s143
      %s146 = sphi 0, %s145
      %s160 = sphi 0, %s146
      %s164 = sphi 0, %s164
      %s166 = sphi 0, %s164
      %s167 = sphi 0, %s166
      %s181 = sphi 0, %s167
      %s185 = sphi 0, %s185
      %s187 = sphi 0, %s185
      %s188 = sphi 0, %s187
      %s202 = sphi 0, %s188
      %s206 = sphi 0, %s206
      %s208 = sphi 0, %s206
      %s209 = sphi 0, %s208
      %s223 = sphi 0, %s209
      %s227 = sphi 0, %s227
      %s229 = sphi 0, %s227
      %s230 = sphi 0, %s229
      %s244 = sphi 0, %s230
      %s248 = sphi 0, %s248
      %s250 = sphi 0, %s248
      %s251 = sphi 0, %s250
      %s265 = sphi 0, %s251
      %s269 = sphi 0, %s269
      %s271 = sphi 0, %s269
      %s272 = sphi 0, %s271
      %s286 = sphi 0, %s272
      %s290 = sphi 0, %s290
      %s292 = sphi 0, %s290
      %s293 = sphi 0, %s292
      %s307 = sphi 0, %s293
      %s311 = sphi 0, %s311
      %s313 = sphi 0, %s311
      %s314 = sphi 0, %s313
      %s328 = sphi 0, %s314
      %s332 = sphi 0, %s332
      %s334 = sphi 0, %s332
      %s335 = sphi 0, %s334
      %s349 = sphi 0, %s335
      %s353 = sphi 0, %s353
      %s355 = sphi 0, %s353
      %s356 = sphi 0, %s355
      %s370 = sphi 0, %s356
      %s376 = sphi 0, %s378
      %s379 = sphi 0, %s376
      %s380 = sphi 0, %s379
      %s396 = sphi 0, %s380
    $region4: #{test_forward.1} parent=1 // loop_header_branch
      %28 = sbr.rel (%p26) target = $region8
    $region5: #{test_forward.1} parent=1 // loop_body
      %s30 = ssub.s32 %s25, 1
      %s31 = ssub.s32 %s25, 2
      %s32 = sadd.s32 %s25, 1
      %s33 = ssub.s32 %s25, %s32
      %p34 = scmp.eq.s32.totalorder %s33, 0
      %s36 = sadd.s32 %s35, 1
      %s37 = scalar_select %p34, %s35, %s36
      %p40 = pneg %p34
      %p41 = scmp.eq.s32.totalorder %s25, 1
      %p42 = por %p40, %p41
      %p43 = scmp.ne.s32.totalorder %s35, %s38
      %p44 = scmp.eq.s32.totalorder %s25, 0
      %p45 = por %p43, %p44
      %p46 = scmp.ne.s32.totalorder %s35, %s38
      %p47 = scmp.eq.s32.totalorder %s30, 1
      %p48 = por %p46, %p47
      %p49 = scmp.ne.s32.totalorder %s38, %s39
      %p50 = scmp.eq.s32.totalorder %s30, 0
      %p51 = por %p49, %p50
      %p52 = scmp.ne.s32.totalorder %s38, %s39
      %p53 = scmp.eq.s32.totalorder %s31, 1
      %p54 = por %p52, %p53
      %p56 = scmp.ne.s32.totalorder %s39, %s55
      %p57 = scmp.eq.s32.totalorder %s31, 0
      %p58 = por %p56, %p57
      %s60 = sadd.s32 %s59, 1
      %p63 = scmp.eq.s32.totalorder %s25, 1
      %p64 = scmp.ne.s32.totalorder %s59, %s61
      %p65 = scmp.eq.s32.totalorder %s25, 0
      %p66 = por %p64, %p65
      %p67 = scmp.ne.s32.totalorder %s59, %s61
      %p68 = scmp.eq.s32.totalorder %s30, 1
      %p69 = por %p67, %p68
      %p70 = scmp.ne.s32.totalorder %s61, %s62
      %p71 = scmp.eq.s32.totalorder %s30, 0
      %p72 = por %p70, %p71
      %p73 = scmp.ne.s32.totalorder %s61, %s62
      %p74 = scmp.eq.s32.totalorder %s31, 1
      %p75 = por %p73, %p74
      %p77 = scmp.ne.s32.totalorder %s62, %s76
      %p78 = scmp.eq.s32.totalorder %s31, 0
      %p79 = por %p77, %p78
      %s81 = sadd.s32 %s80, 1
      %p84 = scmp.eq.s32.totalorder %s25, 1
      %p85 = scmp.ne.s32.totalorder %s80, %s82
      %p86 = scmp.eq.s32.totalorder %s25, 0
      %p87 = por %p85, %p86
      %p88 = scmp.ne.s32.totalorder %s80, %s82
      %p89 = scmp.eq.s32.totalorder %s30, 1
      %p90 = por %p88, %p89
      %p91 = scmp.ne.s32.totalorder %s82, %s83
      %p92 = scmp.eq.s32.totalorder %s30, 0
      %p93 = por %p91, %p92
      %p94 = scmp.ne.s32.totalorder %s82, %s83
      %p95 = scmp.eq.s32.totalorder %s31, 1
      %p96 = por %p94, %p95
      %p98 = scmp.ne.s32.totalorder %s83, %s97
      %p99 = scmp.eq.s32.totalorder %s31, 0
      %p100 = por %p98, %p99
      %s102 = sadd.s32 %s101, 1
      %p105 = scmp.eq.s32.totalorder %s25, 1
      %p106 = scmp.ne.s32.totalorder %s101, %s103
      %p107 = scmp.eq.s32.totalorder %s25, 0
      %p108 = por %p106, %p107
      %p109 = scmp.ne.s32.totalorder %s101, %s103
      %p110 = scmp.eq.s32.totalorder %s30, 1
      %p111 = por %p109, %p110
      %p112 = scmp.ne.s32.totalorder %s103, %s104
      %p113 = scmp.eq.s32.totalorder %s30, 0
      %p114 = por %p112, %p113
      %p115 = scmp.ne.s32.totalorder %s103, %s104
      %p116 = scmp.eq.s32.totalorder %s31, 1
      %p117 = por %p115, %p116
      %p119 = scmp.ne.s32.totalorder %s104, %s118
      %p120 = scmp.eq.s32.totalorder %s31, 0
      %p121 = por %p119, %p120
      %s123 = sadd.s32 %s122, 1
      %p126 = scmp.eq.s32.totalorder %s25, 1
      %p127 = scmp.ne.s32.totalorder %s122, %s124
      %p128 = scmp.eq.s32.totalorder %s25, 0
      %p129 = por %p127, %p128
      %p130 = scmp.ne.s32.totalorder %s122, %s124
      %p131 = scmp.eq.s32.totalorder %s30, 1
      %p132 = por %p130, %p131
      %p133 = scmp.ne.s32.totalorder %s124, %s125
      %p134 = scmp.eq.s32.totalorder %s30, 0
      %p135 = por %p133, %p134
      %p136 = scmp.ne.s32.totalorder %s124, %s125
      %p137 = scmp.eq.s32.totalorder %s31, 1
      %p138 = por %p136, %p137
      %p140 = scmp.ne.s32.totalorder %s125, %s139
      %p141 = scmp.eq.s32.totalorder %s31, 0
      %p142 = por %p140, %p141
      %s144 = sadd.s32 %s143, 1
      %p147 = scmp.eq.s32.totalorder %s25, 1
      %p148 = scmp.ne.s32.totalorder %s143, %s145
      %p149 = scmp.eq.s32.totalorder %s25, 0
      %p150 = por %p148, %p149
      %p151 = scmp.ne.s32.totalorder %s143, %s145
      %p152 = scmp.eq.s32.totalorder %s30, 1
      %p153 = por %p151, %p152
      %p154 = scmp.ne.s32.totalorder %s145, %s146
      %p155 = scmp.eq.s32.totalorder %s30, 0
      %p156 = por %p154, %p155
      %p157 = scmp.ne.s32.totalorder %s145, %s146
      %p158 = scmp.eq.s32.totalorder %s31, 1
      %p159 = por %p157, %p158
      %p161 = scmp.ne.s32.totalorder %s146, %s160
      %p162 = scmp.eq.s32.totalorder %s31, 0
      %p163 = por %p161, %p162
      %s165 = sadd.s32 %s164, 1
      %p168 = scmp.eq.s32.totalorder %s25, 1
      %p169 = scmp.ne.s32.totalorder %s164, %s166
      %p170 = scmp.eq.s32.totalorder %s25, 0
      %p171 = por %p169, %p170
      %p172 = scmp.ne.s32.totalorder %s164, %s166
      %p173 = scmp.eq.s32.totalorder %s30, 1
      %p174 = por %p172, %p173
      %p175 = scmp.ne.s32.totalorder %s166, %s167
      %p176 = scmp.eq.s32.totalorder %s30, 0
      %p177 = por %p175, %p176
      %p178 = scmp.ne.s32.totalorder %s166, %s167
      %p179 = scmp.eq.s32.totalorder %s31, 1
      %p180 = por %p178, %p179
      %p182 = scmp.ne.s32.totalorder %s167, %s181
      %p183 = scmp.eq.s32.totalorder %s31, 0
      %p184 = por %p182, %p183
      %s186 = sadd.s32 %s185, 1
      %p189 = scmp.eq.s32.totalorder %s25, 1
      %p190 = scmp.ne.s32.totalorder %s185, %s187
      %p191 = scmp.eq.s32.totalorder %s25, 0
      %p192 = por %p190, %p191
      %p193 = scmp.ne.s32.totalorder %s185, %s187
      %p194 = scmp.eq.s32.totalorder %s30, 1
      %p195 = por %p193, %p194
      %p196 = scmp.ne.s32.totalorder %s187, %s188
      %p197 = scmp.eq.s32.totalorder %s30, 0
      %p198 = por %p196, %p197
      %p199 = scmp.ne.s32.totalorder %s187, %s188
      %p200 = scmp.eq.s32.totalorder %s31, 1
      %p201 = por %p199, %p200
      %p203 = scmp.ne.s32.totalorder %s188, %s202
      %p204 = scmp.eq.s32.totalorder %s31, 0
      %p205 = por %p203, %p204
      %s207 = sadd.s32 %s206, 1
      %p210 = scmp.eq.s32.totalorder %s25, 1
      %p211 = scmp.ne.s32.totalorder %s206, %s208
      %p212 = scmp.eq.s32.totalorder %s25, 0
      %p213 = por %p211, %p212
      %p214 = scmp.ne.s32.totalorder %s206, %s208
      %p215 = scmp.eq.s32.totalorder %s30, 1
      %p216 = por %p214, %p215
      %p217 = scmp.ne.s32.totalorder %s208, %s209
      %p218 = scmp.eq.s32.totalorder %s30, 0
      %p219 = por %p217, %p218
      %p220 = scmp.ne.s32.totalorder %s208, %s209
      %p221 = scmp.eq.s32.totalorder %s31, 1
      %p222 = por %p220, %p221
      %p224 = scmp.ne.s32.totalorder %s209, %s223
      %p225 = scmp.eq.s32.totalorder %s31, 0
      %p226 = por %p224, %p225
      %s228 = sadd.s32 %s227, 1
      %p231 = scmp.eq.s32.totalorder %s25, 1
      %p232 = scmp.ne.s32.totalorder %s227, %s229
      %p233 = scmp.eq.s32.totalorder %s25, 0
      %p234 = por %p232, %p233
      %p235 = scmp.ne.s32.totalorder %s227, %s229
      %p236 = scmp.eq.s32.totalorder %s30, 1
      %p237 = por %p235, %p236
      %p238 = scmp.ne.s32.totalorder %s229, %s230
      %p239 = scmp.eq.s32.totalorder %s30, 0
      %p240 = por %p238, %p239
      %p241 = scmp.ne.s32.totalorder %s229, %s230
      %p242 = scmp.eq.s32.totalorder %s31, 1
      %p243 = por %p241, %p242
      %p245 = scmp.ne.s32.totalorder %s230, %s244
      %p246 = scmp.eq.s32.totalorder %s31, 0
      %p247 = por %p245, %p246
      %s249 = sadd.s32 %s248, 1
      %p252 = scmp.eq.s32.totalorder %s25, 1
      %p253 = scmp.ne.s32.totalorder %s248, %s250
      %p254 = scmp.eq.s32.totalorder %s25, 0
      %p255 = por %p253, %p254
      %p256 = scmp.ne.s32.totalorder %s248, %s250
      %p257 = scmp.eq.s32.totalorder %s30, 1
      %p258 = por %p256, %p257
      %p259 = scmp.ne.s32.totalorder %s250, %s251
      %p260 = scmp.eq.s32.totalorder %s30, 0
      %p261 = por %p259, %p260
      %p262 = scmp.ne.s32.totalorder %s250, %s251
      %p263 = scmp.eq.s32.totalorder %s31, 1
      %p264 = por %p262, %p263
      %p266 = scmp.ne.s32.totalorder %s251, %s265
      %p267 = scmp.eq.s32.totalorder %s31, 0
      %p268 = por %p266, %p267
      %s270 = sadd.s32 %s269, 1
      %p273 = scmp.eq.s32.totalorder %s25, 1
      %p274 = scmp.ne.s32.totalorder %s269, %s271
      %p275 = scmp.eq.s32.totalorder %s25, 0
      %p276 = por %p274, %p275
      %p277 = scmp.ne.s32.totalorder %s269, %s271
      %p278 = scmp.eq.s32.totalorder %s30, 1
      %p279 = por %p277, %p278
      %p280 = scmp.ne.s32.totalorder %s271, %s272
      %p281 = scmp.eq.s32.totalorder %s30, 0
      %p282 = por %p280, %p281
      %p283 = scmp.ne.s32.totalorder %s271, %s272
      %p284 = scmp.eq.s32.totalorder %s31, 1
      %p285 = por %p283, %p284
      %p287 = scmp.ne.s32.totalorder %s272, %s286
      %p288 = scmp.eq.s32.totalorder %s31, 0
      %p289 = por %p287, %p288
      %s291 = sadd.s32 %s290, 1
      %p294 = scmp.eq.s32.totalorder %s25, 1
      %p295 = scmp.ne.s32.totalorder %s290, %s292
      %p296 = scmp.eq.s32.totalorder %s25, 0
      %p297 = por %p295, %p296
      %p298 = scmp.ne.s32.totalorder %s290, %s292
      %p299 = scmp.eq.s32.totalorder %s30, 1
      %p300 = por %p298, %p299
      %p301 = scmp.ne.s32.totalorder %s292, %s293
      %p302 = scmp.eq.s32.totalorder %s30, 0
      %p303 = por %p301, %p302
      %p304 = scmp.ne.s32.totalorder %s292, %s293
      %p305 = scmp.eq.s32.totalorder %s31, 1
      %p306 = por %p304, %p305
      %p308 = scmp.ne.s32.totalorder %s293, %s307
      %p309 = scmp.eq.s32.totalorder %s31, 0
      %p310 = por %p308, %p309
      %s312 = sadd.s32 %s311, 1
      %p315 = scmp.eq.s32.totalorder %s25, 1
      %p316 = scmp.ne.s32.totalorder %s311, %s313
      %p317 = scmp.eq.s32.totalorder %s25, 0
      %p318 = por %p316, %p317
      %p319 = scmp.ne.s32.totalorder %s311, %s313
      %p320 = scmp.eq.s32.totalorder %s30, 1
      %p321 = por %p319, %p320
      %p322 = scmp.ne.s32.totalorder %s313, %s314
      %p323 = scmp.eq.s32.totalorder %s30, 0
      %p324 = por %p322, %p323
      %p325 = scmp.ne.s32.totalorder %s313, %s314
      %p326 = scmp.eq.s32.totalorder %s31, 1
      %p327 = por %p325, %p326
      %p329 = scmp.ne.s32.totalorder %s314, %s328
      %p330 = scmp.eq.s32.totalorder %s31, 0
      %p331 = por %p329, %p330
      %s333 = sadd.s32 %s332, 1
      %p336 = scmp.eq.s32.totalorder %s25, 1
      %p337 = scmp.ne.s32.totalorder %s332, %s334
      %p338 = scmp.eq.s32.totalorder %s25, 0
      %p339 = por %p337, %p338
      %p340 = scmp.ne.s32.totalorder %s332, %s334
      %p341 = scmp.eq.s32.totalorder %s30, 1
      %p342 = por %p340, %p341
      %p343 = scmp.ne.s32.totalorder %s334, %s335
      %p344 = scmp.eq.s32.totalorder %s30, 0
      %p345 = por %p343, %p344
      %p346 = scmp.ne.s32.totalorder %s334, %s335
      %p347 = scmp.eq.s32.totalorder %s31, 1
      %p348 = por %p346, %p347
      %p350 = scmp.ne.s32.totalorder %s335, %s349
      %p351 = scmp.eq.s32.totalorder %s31, 0
      %p352 = por %p350, %p351
      %s354 = sadd.s32 %s353, 1
      %p357 = scmp.eq.s32.totalorder %s25, 1
      %p358 = scmp.ne.s32.totalorder %s353, %s355
      %p359 = scmp.eq.s32.totalorder %s25, 0
      %p360 = por %p358, %p359
      %p361 = scmp.ne.s32.totalorder %s353, %s355
      %p362 = scmp.eq.s32.totalorder %s30, 1
      %p363 = por %p361, %p362
      %p364 = scmp.ne.s32.totalorder %s355, %s356
      %p365 = scmp.eq.s32.totalorder %s30, 0
      %p366 = por %p364, %p365
      %p367 = scmp.ne.s32.totalorder %s355, %s356
      %p368 = scmp.eq.s32.totalorder %s31, 1
      %p369 = por %p367, %p368
      %p371 = scmp.ne.s32.totalorder %s356, %s370
      %p372 = scmp.eq.s32.totalorder %s31, 0
      %p373 = por %p371, %p372
      %s374 = ssub.s32 %s25, %s32
      %p375 = scmp.eq.s32.totalorder %s374, 0
      %s377 = sadd.s32 %s376, 1
      %s378 = scalar_select %p375, %s376, %s377
      %p381 = pneg %p375
      %p382 = scmp.eq.s32.totalorder %s25, 1
      %p383 = por %p381, %p382
      %p384 = scmp.ne.s32.totalorder %s376, %s379
      %p385 = scmp.eq.s32.totalorder %s25, 0
      %p386 = por %p384, %p385
      %p387 = scmp.ne.s32.totalorder %s376, %s379
      %p388 = scmp.eq.s32.totalorder %s30, 1
      %p389 = por %p387, %p388
      %p390 = scmp.ne.s32.totalorder %s379, %s380
      %p391 = scmp.eq.s32.totalorder %s30, 0
      %p392 = por %p390, %p391
      %p393 = scmp.ne.s32.totalorder %s379, %s380
      %p394 = scmp.eq.s32.totalorder %s31, 1
      %p395 = por %p393, %p394
      %p397 = scmp.ne.s32.totalorder %s380, %s396
      %p398 = scmp.eq.s32.totalorder %s31, 0
      %p399 = por %p397, %p398
      %p400 = scmp.le.s32.totalorder 1, %s25
      %p401 = scmp.lt.s32.totalorder %s25, 3
      %p402 = pnand %p400, %p401
      %p403 = pneg %p402
      // Predicated region
      $region9: #{test_forward.1} parent=5 // pred_check
        _
      $region10: #{test_forward.1} parent=5 // pred_check_branch
        %405 = sbr.rel (%p402) target = $region12
      $region11: #{test_forward.1} parent=5 // pred_region
        %s406 = ssub.s32 %s25, 1
        // Predicated region
        $region13: #{test_forward.1} parent=11 // pred_check
          %p407 = pneg %p72
        $region14: #{test_forward.1} parent=11 // pred_check_branch
          %409 = sbr.rel (%p407) target = $region16
        $region15: #{test_forward.1} parent=11 // pred_region
          _
        $region16: #{test_forward.1} parent=11 // pred_fallthru
          _
        // Predicated region
        $region17: #{test_forward.1} parent=11 // pred_check
          %p410 = pneg %p93
        $region18: #{test_forward.1} parent=11 // pred_check_branch
          %412 = sbr.rel (%p410) target = $region20
        $region19: #{test_forward.1} parent=11 // pred_region
          _
        $region20: #{test_forward.1} parent=11 // pred_fallthru
          _
        // Predicated region
        $region21: #{test_forward.1} parent=11 // pred_check
          %p413 = pneg %p114
        $region22: #{test_forward.1} parent=11 // pred_check_branch
          %415 = sbr.rel (%p413) target = $region24
        $region23: #{test_forward.1} parent=11 // pred_region
          _
        $region24: #{test_forward.1} parent=11 // pred_fallthru
          _
        // Predicated region
        $region25: #{test_forward.1} parent=11 // pred_check
          %p416 = pneg %p135
        $region26: #{test_forward.1} parent=11 // pred_check_branch
          %418 = sbr.rel (%p416) target = $region28
        $region27: #{test_forward.1} parent=11 // pred_region
          _
        $region28: #{test_forward.1} parent=11 // pred_fallthru
          _
        // Predicated region
        $region29: #{test_forward.1} parent=11 // pred_check
          %p419 = pneg %p156
        $region30: #{test_forward.1} parent=11 // pred_check_branch
          %421 = sbr.rel (%p419) target = $region32
        $region31: #{test_forward.1} parent=11 // pred_region
          _
        $region32: #{test_forward.1} parent=11 // pred_fallthru
          _
        // Predicated region
        $region33: #{test_forward.1} parent=11 // pred_check
          %p422 = pneg %p177
        $region34: #{test_forward.1} parent=11 // pred_check_branch
          %424 = sbr.rel (%p422) target = $region36
        $region35: #{test_forward.1} parent=11 // pred_region
          _
        $region36: #{test_forward.1} parent=11 // pred_fallthru
          _
        // Predicated region
        $region37: #{test_forward.1} parent=11 // pred_check
          %p425 = pneg %p198
        $region38: #{test_forward.1} parent=11 // pred_check_branch
          %427 = sbr.rel (%p425) target = $region40
        $region39: #{test_forward.1} parent=11 // pred_region
          _
        $region40: #{test_forward.1} parent=11 // pred_fallthru
          _
        // Predicated region
        $region41: #{test_forward.1} parent=11 // pred_check
          %p428 = pneg %p219
        $region42: #{test_forward.1} parent=11 // pred_check_branch
          %430 = sbr.rel (%p428) target = $region44
        $region43: #{test_forward.1} parent=11 // pred_region
          _
        $region44: #{test_forward.1} parent=11 // pred_fallthru
          _
        // Predicated region
        $region45: #{test_forward.1} parent=11 // pred_check
          %p431 = pneg %p240
        $region46: #{test_forward.1} parent=11 // pred_check_branch
          %433 = sbr.rel (%p431) target = $region48
        $region47: #{test_forward.1} parent=11 // pred_region
          _
        $region48: #{test_forward.1} parent=11 // pred_fallthru
          _
        // Predicated region
        $region49: #{test_forward.1} parent=11 // pred_check
          %p434 = pneg %p261
        $region50: #{test_forward.1} parent=11 // pred_check_branch
          %436 = sbr.rel (%p434) target = $region52
        $region51: #{test_forward.1} parent=11 // pred_region
          _
        $region52: #{test_forward.1} parent=11 // pred_fallthru
          _
        // Predicated region
        $region53: #{test_forward.1} parent=11 // pred_check
          %p437 = pneg %p282
        $region54: #{test_forward.1} parent=11 // pred_check_branch
          %439 = sbr.rel (%p437) target = $region56
        $region55: #{test_forward.1} parent=11 // pred_region
          _
        $region56: #{test_forward.1} parent=11 // pred_fallthru
          _
        // Predicated region
        $region57: #{test_forward.1} parent=11 // pred_check
          %p440 = pneg %p303
        $region58: #{test_forward.1} parent=11 // pred_check_branch
          %442 = sbr.rel (%p440) target = $region60
        $region59: #{test_forward.1} parent=11 // pred_region
          _
        $region60: #{test_forward.1} parent=11 // pred_fallthru
          _
        // Predicated region
        $region61: #{test_forward.1} parent=11 // pred_check
          %p443 = pneg %p324
        $region62: #{test_forward.1} parent=11 // pred_check_branch
          %445 = sbr.rel (%p443) target = $region64
        $region63: #{test_forward.1} parent=11 // pred_region
          _
        $region64: #{test_forward.1} parent=11 // pred_fallthru
          _
        // Predicated region
        $region65: #{test_forward.1} parent=11 // pred_check
          %p446 = pneg %p345
        $region66: #{test_forward.1} parent=11 // pred_check_branch
          %448 = sbr.rel (%p446) target = $region68
        $region67: #{test_forward.1} parent=11 // pred_region
          _
        $region68: #{test_forward.1} parent=11 // pred_fallthru
          _
        // Predicated region
        $region69: #{test_forward.1} parent=11 // pred_check
          %p449 = pneg %p366
        $region70: #{test_forward.1} parent=11 // pred_check_branch
          %451 = sbr.rel (%p449) target = $region72
        $region71: #{test_forward.1} parent=11 // pred_region
          _
        $region72: #{test_forward.1} parent=11 // pred_fallthru
          _
      $region12: #{test_forward.1} parent=5 // pred_fallthru
        _
      %p452 = scmp.lt.s32.totalorder %s25, 2
      // Predicated region
      $region73: #{test_forward.1} parent=5 // pred_check
        %p453 = pneg %p452
      $region74: #{test_forward.1} parent=5 // pred_check_branch
        %455 = sbr.rel (%p453) target = $region76
      $region75: #{test_forward.1} parent=5 // pred_region
        // Predicated region
        $region77: #{test_forward.1} parent=75 // pred_check
          %p456 = pneg %p45
        $region78: #{test_forward.1} parent=75 // pred_check_branch
          %458 = sbr.rel (%p456) target = $region80
        $region79: #{test_forward.1} parent=75 // pred_region
          %s459 = smul.u32 4, %s25
          %p460 = scmp.lt.s32.totalorder %s459, 7
          %s461 = scalar_select %p460, %s459, 7
          %s462 = smul.addr %s461, 32
          %s463 = smul.addr %s462, 4
          %s464 = scalar_lea.vmem %s0, %s463
          %s465 = smul.u32 4, %s25
        $region80: #{test_forward.1} parent=75 // pred_fallthru
          _
      $region76: #{test_forward.1} parent=5 // pred_fallthru
        _
      %p466 = scmp.le.s32.totalorder 1, %s25
      %p467 = scmp.lt.s32.totalorder %s25, 3
      %p468 = pnand %p466, %p467
      %p469 = pneg %p468
      // Predicated region
      $region81: #{test_forward.1} parent=5 // pred_check
        _
      $region82: #{test_forward.1} parent=5 // pred_check_branch
        %471 = sbr.rel (%p468) target = $region84
      $region83: #{test_forward.1} parent=5 // pred_region
        %s472 = ssub.s32 %s25, 1
        %s473 = smul.u32 4, %s30
        %p474 = scmp.lt.s32.totalorder %s473, 7
        %s475 = scalar_select %p474, %s473, 7
        %s476 = smul.addr %s475, 32
        %s477 = smul.addr %s476, 4
        %s478 = scalar_lea.vmem %s0, %s477
        %p479 = pneg %p51
        %p480 = pneg %p48
        %p481 = pneg %p72
        %p482 = pneg %p69
        %p483 = pneg %p93
        %p484 = pneg %p90
        %p485 = pneg %p114
        %p486 = pneg %p111
        %p487 = pneg %p135
        %p488 = pneg %p132
        %p489 = pneg %p156
        %p490 = pneg %p153
        %p491 = pneg %p177
        %p492 = pneg %p174
        %p493 = pneg %p198
        %p494 = pneg %p195
        %p495 = pneg %p219
        %p496 = pneg %p216
        %p497 = pneg %p240
        %p498 = pneg %p237
        %p499 = pneg %p261
        %p500 = pneg %p258
        %p501 = pneg %p282
        %p502 = pneg %p279
        %p503 = pneg %p303
        %p504 = pneg %p300
        %p505 = pneg %p324
        %p506 = pneg %p321
        %p507 = pneg %p345
        %p508 = pneg %p342
        %p509 = pneg %p366
        %p510 = pneg %p363
        %p511 = pneg %p392
        %p512 = pneg %p389
        %s513 = sand.u32 %s379, 1
        %s514 = scalar_lea.sflag [#allocation5], %s513
        %s515 = sand.u32 %s379, 1
        %s516 = smul.addr %s515, 512
        %s517 = scalar_lea.vmem [#allocation4], %s516
        %s518 = smul.u32 4, %s30
        %p519 = scmp.lt.s32.totalorder %s518, 7
        %s520 = scalar_select %p519, %s518, 7
        %s521 = smul.addr %s520, 32
        %s522 = smul.addr %s521, 4
        %s523 = scalar_lea.vmem %s0, %s522
        %s524 = smul.u32 4, %s30
        %s525 = smul.u32 4, %s30
        %vm527 = vcmask 130048
        %528 = vst.msk [vmem:[#allocation2] sm:$0xff] %vm527, 0.0
        %529 = vst.msk [vmem:[#allocation2 + $0x8] sm:$0xff] %vm527, 0.0
        %530 = vst.msk [vmem:[#allocation2 + $0x60] sm:$0xff] %vm527, 0.0
        %531 = vst.msk [vmem:[#allocation2 + $0x68] sm:$0xff] %vm527, 0.0
        %532 = vst.msk [vmem:[#allocation2 + $0xc0] sm:$0xff] %vm527, 0.0
        %533 = vst.msk [vmem:[#allocation2 + $0xc8] sm:$0xff] %vm527, 0.0
        %534 = vst.msk [vmem:[#allocation2 + $0x120] sm:$0xff] %vm527, 0.0
        %535 = vst.msk [vmem:[#allocation2 + $0x128] sm:$0xff] %vm527, 0.0
        %536 = vst.msk [vmem:[#allocation2 + $0x50] sm:$0xff] %vm527, 0.0
        %537 = vst.msk [vmem:[#allocation2 + $0x58] sm:$0xff] %vm527, 0.0
        %538 = vst.msk [vmem:[#allocation2 + $0xb0] sm:$0xff] %vm527, 0.0
        %539 = vst.msk [vmem:[#allocation2 + $0xb8] sm:$0xff] %vm527, 0.0
        %540 = vst.msk [vmem:[#allocation2 + $0x110] sm:$0xff] %vm527, 0.0
        %541 = vst.msk [vmem:[#allocation2 + $0x118] sm:$0xff] %vm527, 0.0
        %542 = vst.msk [vmem:[#allocation2 + $0x170] sm:$0xff] %vm527, 0.0
        %543 = vst.msk [vmem:[#allocation2 + $0x178] sm:$0xff] %vm527, 0.0
        %vm544 = vcmask 261120
        %545 = vst.msk [vmem:[#allocation3] sm:$0xff] %vm544, 0.0
        %546 = vst.msk [vmem:[#allocation3 + $0x8] sm:$0xff] %vm544, 0.0
        %547 = vst.msk [vmem:[#allocation3 + $0x60] sm:$0xff] %vm544, 0.0
        %548 = vst.msk [vmem:[#allocation3 + $0x68] sm:$0xff] %vm544, 0.0
        %549 = vst.msk [vmem:[#allocation3 + $0xc0] sm:$0xff] %vm544, 0.0
        %550 = vst.msk [vmem:[#allocation3 + $0xc8] sm:$0xff] %vm544, 0.0
        %551 = vst.msk [vmem:[#allocation3 + $0x120] sm:$0xff] %vm544, 0.0
        %552 = vst.msk [vmem:[#allocation3 + $0x128] sm:$0xff] %vm544, 0.0
        %553 = vst.msk [vmem:[#allocation3 + $0x50] sm:$0xff] %vm544, 0.0
        %554 = vst.msk [vmem:[#allocation3 + $0x58] sm:$0xff] %vm544, 0.0
        %555 = vst.msk [vmem:[#allocation3 + $0xb0] sm:$0xff] %vm544, 0.0
        %556 = vst.msk [vmem:[#allocation3 + $0xb8] sm:$0xff] %vm544, 0.0
        %557 = vst.msk [vmem:[#allocation3 + $0x110] sm:$0xff] %vm544, 0.0
        %558 = vst.msk [vmem:[#allocation3 + $0x118] sm:$0xff] %vm544, 0.0
        %559 = vst.msk [vmem:[#allocation3 + $0x170] sm:$0xff] %vm544, 0.0
        %560 = vst.msk [vmem:[#allocation3 + $0x178] sm:$0xff] %vm544, 0.0
        %v561 = vlaneseq
        %v562 = vshrl.u32 %v561, 7
        %v563 = vadd.s32 %v562, 8
        %v564 = vadd.s32 %v562, 16
        %v565 = vadd.s32 %v562, 24
        %v566 = vadd.s32 %v562, 32
        %v567 = vadd.s32 %v562, 40
        %v568 = vadd.s32 %v562, 48
        %v569 = vadd.s32 %v562, 56
        %v570 = vadd.s32 %v562, 64
        %v571 = vadd.s32 %v562, 72
        %v572 = vadd.s32 %v562, 80
        %v573 = vadd.s32 %v562, 88
        %v574 = vadd.s32 %v562, 96
        %v575 = vadd.s32 %v562, 104
        %v576 = vadd.s32 %v562, 112
        %v577 = vadd.s32 %v562, 120
        %v578 = vadd.s32 %v562, 128
        %v579 = vadd.s32 %v562, 136
        %v580 = vadd.s32 %v562, 144
        %v581 = vadd.s32 %v562, 152
        %v582 = vadd.s32 %v562, 160
        %v583 = vadd.s32 %v562, 168
        %v584 = vadd.s32 %v562, 176
        %v585 = vadd.s32 %v562, 184
        %v586 = vadd.s32 %v562, 192
        %v587 = vadd.s32 %v562, 200
        %v588 = vadd.s32 %v562, 208
        %v589 = vadd.s32 %v562, 216
        %v590 = vadd.s32 %v562, 224
        %v591 = vadd.s32 %v562, 232
        %v592 = vadd.s32 %v562, 240
        %v593 = vadd.s32 %v562, 248
        %vm594 = vcmp.lt.s32.totalorder %v562, 0
        %v595 = vsub.s32 0, %v562
        %v596 = vsel %vm594, %v595, %v562
        %v597 = vshrl.u32 %v596, 3
        %v598 = vand.u32 %v596, 7
        %v599 = vsub.s32 0, %v598
        %v600 = vsel %vm594, %v599, %v598
        %vm601 = vcmp.lt.s32.totalorder %v563, 0
        %v602 = vsub.s32 0, %v563
        %v603 = vsel %vm601, %v602, %v563
        %v604 = vshrl.u32 %v603, 3
        %v605 = vand.u32 %v603, 7
        %v606 = vsub.s32 0, %v605
        %v607 = vsel %vm601, %v606, %v605
        %vm608 = vcmp.lt.s32.totalorder %v564, 0
        %v609 = vsub.s32 0, %v564
        %v610 = vsel %vm608, %v609, %v564
        %v611 = vshrl.u32 %v610, 3
        %v612 = vand.u32 %v610, 7
        %v613 = vsub.s32 0, %v612
        %v614 = vsel %vm608, %v613, %v612
        %vm615 = vcmp.lt.s32.totalorder %v565, 0
        %v616 = vsub.s32 0, %v565
        %v617 = vsel %vm615, %v616, %v565
        %v618 = vshrl.u32 %v617, 3
        %v619 = vand.u32 %v617, 7
        %v620 = vsub.s32 0, %v619
        %v621 = vsel %vm615, %v620, %v619
        %vm622 = vcmp.lt.s32.totalorder %v566, 0
        %v623 = vsub.s32 0, %v566
        %v624 = vsel %vm622, %v623, %v566
        %v625 = vshrl.u32 %v624, 3
        %v626 = vand.u32 %v624, 7
        %v627 = vsub.s32 0, %v626
        %v628 = vsel %vm622, %v627, %v626
        %vm629 = vcmp.lt.s32.totalorder %v567, 0
        %v630 = vsub.s32 0, %v567
        %v631 = vsel %vm629, %v630, %v567
        %v632 = vshrl.u32 %v631, 3
        %v633 = vand.u32 %v631, 7
        %v634 = vsub.s32 0, %v633
        %v635 = vsel %vm629, %v634, %v633
        %vm636 = vcmp.lt.s32.totalorder %v568, 0
        %v637 = vsub.s32 0, %v568
        %v638 = vsel %vm636, %v637, %v568
        %v639 = vshrl.u32 %v638, 3
        %v640 = vand.u32 %v638, 7
        %v641 = vsub.s32 0, %v640
        %v642 = vsel %vm636, %v641, %v640
        %vm643 = vcmp.lt.s32.totalorder %v569, 0
        %v644 = vsub.s32 0, %v569
        %v645 = vsel %vm643, %v644, %v569
        %v646 = vshrl.u32 %v645, 3
        %v647 = vand.u32 %v645, 7
        %v648 = vsub.s32 0, %v647
        %v649 = vsel %vm643, %v648, %v647
        %vm650 = vcmp.lt.s32.totalorder %v570, 0
        %v651 = vsub.s32 0, %v570
        %v652 = vsel %vm650, %v651, %v570
        %v653 = vshrl.u32 %v652, 3
        %v654 = vand.u32 %v652, 7
        %v655 = vsub.s32 0, %v654
        %v656 = vsel %vm650, %v655, %v654
        %vm657 = vcmp.lt.s32.totalorder %v571, 0
        %v658 = vsub.s32 0, %v571
        %v659 = vsel %vm657, %v658, %v571
        %v660 = vshrl.u32 %v659, 3
        %v661 = vand.u32 %v659, 7
        %v662 = vsub.s32 0, %v661
        %v663 = vsel %vm657, %v662, %v661
        %vm664 = vcmp.lt.s32.totalorder %v572, 0
        %v665 = vsub.s32 0, %v572
        %v666 = vsel %vm664, %v665, %v572
        %v667 = vshrl.u32 %v666, 3
        %v668 = vand.u32 %v666, 7
        %v669 = vsub.s32 0, %v668
        %v670 = vsel %vm664, %v669, %v668
        %vm671 = vcmp.lt.s32.totalorder %v573, 0
        %v672 = vsub.s32 0, %v573
        %v673 = vsel %vm671, %v672, %v573
        %v674 = vshrl.u32 %v673, 3
        %v675 = vand.u32 %v673, 7
        %v676 = vsub.s32 0, %v675
        %v677 = vsel %vm671, %v676, %v675
        %vm678 = vcmp.lt.s32.totalorder %v574, 0
        %v679 = vsub.s32 0, %v574
        %v680 = vsel %vm678, %v679, %v574
        %v681 = vshrl.u32 %v680, 3
        %v682 = vand.u32 %v680, 7
        %v683 = vsub.s32 0, %v682
        %v684 = vsel %vm678, %v683, %v682
        %vm685 = vcmp.lt.s32.totalorder %v575, 0
        %v686 = vsub.s32 0, %v575
        %v687 = vsel %vm685, %v686, %v575
        %v688 = vshrl.u32 %v687, 3
        %v689 = vand.u32 %v687, 7
        %v690 = vsub.s32 0, %v689
        %v691 = vsel %vm685, %v690, %v689
        %vm692 = vcmp.lt.s32.totalorder %v576, 0
        %v693 = vsub.s32 0, %v576
        %v694 = vsel %vm692, %v693, %v576
        %v695 = vshrl.u32 %v694, 3
        %v696 = vand.u32 %v694, 7
        %v697 = vsub.s32 0, %v696
        %v698 = vsel %vm692, %v697, %v696
        %vm699 = vcmp.lt.s32.totalorder %v577, 0
        %v700 = vsub.s32 0, %v577
        %v701 = vsel %vm699, %v700, %v577
        %v702 = vshrl.u32 %v701, 3
        %v703 = vand.u32 %v701, 7
        %v704 = vsub.s32 0, %v703
        %v705 = vsel %vm699, %v704, %v703
        %vm706 = vcmp.lt.s32.totalorder %v578, 0
        %v707 = vsub.s32 0, %v578
        %v708 = vsel %vm706, %v707, %v578
        %v709 = vshrl.u32 %v708, 3
        %v710 = vand.u32 %v708, 7
        %v711 = vsub.s32 0, %v710
        %v712 = vsel %vm706, %v711, %v710
        %vm713 = vcmp.lt.s32.totalorder %v579, 0
        %v714 = vsub.s32 0, %v579
        %v715 = vsel %vm713, %v714, %v579
        %v716 = vshrl.u32 %v715, 3
        %v717 = vand.u32 %v715, 7
        %v718 = vsub.s32 0, %v717
        %v719 = vsel %vm713, %v718, %v717
        %vm720 = vcmp.lt.s32.totalorder %v580, 0
        %v721 = vsub.s32 0, %v580
        %v722 = vsel %vm720, %v721, %v580
        %v723 = vshrl.u32 %v722, 3
        %v724 = vand.u32 %v722, 7
        %v725 = vsub.s32 0, %v724
        %v726 = vsel %vm720, %v725, %v724
        %vm727 = vcmp.lt.s32.totalorder %v581, 0
        %v728 = vsub.s32 0, %v581
        %v729 = vsel %vm727, %v728, %v581
        %v730 = vshrl.u32 %v729, 3
        %v731 = vand.u32 %v729, 7
        %v732 = vsub.s32 0, %v731
        %v733 = vsel %vm727, %v732, %v731
        %vm734 = vcmp.lt.s32.totalorder %v582, 0
        %v735 = vsub.s32 0, %v582
        %v736 = vsel %vm734, %v735, %v582
        %v737 = vshrl.u32 %v736, 3
        %v738 = vand.u32 %v736, 7
        %v739 = vsub.s32 0, %v738
        %v740 = vsel %vm734, %v739, %v738
        %vm741 = vcmp.lt.s32.totalorder %v583, 0
        %v742 = vsub.s32 0, %v583
        %v743 = vsel %vm741, %v742, %v583
        %v744 = vshrl.u32 %v743, 3
        %v745 = vand.u32 %v743, 7
        %v746 = vsub.s32 0, %v745
        %v747 = vsel %vm741, %v746, %v745
        %vm748 = vcmp.lt.s32.totalorder %v584, 0
        %v749 = vsub.s32 0, %v584
        %v750 = vsel %vm748, %v749, %v584
        %v751 = vshrl.u32 %v750, 3
        %v752 = vand.u32 %v750, 7
        %v753 = vsub.s32 0, %v752
        %v754 = vsel %vm748, %v753, %v752
        %vm755 = vcmp.lt.s32.totalorder %v585, 0
        %v756 = vsub.s32 0, %v585
        %v757 = vsel %vm755, %v756, %v585
        %v758 = vshrl.u32 %v757, 3
        %v759 = vand.u32 %v757, 7
        %v760 = vsub.s32 0, %v759
        %v761 = vsel %vm755, %v760, %v759
        %vm762 = vcmp.lt.s32.totalorder %v586, 0
        %v763 = vsub.s32 0, %v586
        %v764 = vsel %vm762, %v763, %v586
        %v765 = vshrl.u32 %v764, 3
        %v766 = vand.u32 %v764, 7
        %v767 = vsub.s32 0, %v766
        %v768 = vsel %vm762, %v767, %v766
        %vm769 = vcmp.lt.s32.totalorder %v587, 0
        %v770 = vsub.s32 0, %v587
        %v771 = vsel %vm769, %v770, %v587
        %v772 = vshrl.u32 %v771, 3
        %v773 = vand.u32 %v771, 7
        %v774 = vsub.s32 0, %v773
        %v775 = vsel %vm769, %v774, %v773
        %vm776 = vcmp.lt.s32.totalorder %v588, 0
        %v777 = vsub.s32 0, %v588
        %v778 = vsel %vm776, %v777, %v588
        %v779 = vshrl.u32 %v778, 3
        %v780 = vand.u32 %v778, 7
        %v781 = vsub.s32 0, %v780
        %v782 = vsel %vm776, %v781, %v780
        %vm783 = vcmp.lt.s32.totalorder %v589, 0
        %v784 = vsub.s32 0, %v589
        %v785 = vsel %vm783, %v784, %v589
        %v786 = vshrl.u32 %v785, 3
        %v787 = vand.u32 %v785, 7
        %v788 = vsub.s32 0, %v787
        %v789 = vsel %vm783, %v788, %v787
        %vm790 = vcmp.lt.s32.totalorder %v590, 0
        %v791 = vsub.s32 0, %v590
        %v792 = vsel %vm790, %v791, %v590
        %v793 = vshrl.u32 %v792, 3
        %v794 = vand.u32 %v792, 7
        %v795 = vsub.s32 0, %v794
        %v796 = vsel %vm790, %v795, %v794
        %vm797 = vcmp.lt.s32.totalorder %v591, 0
        %v798 = vsub.s32 0, %v591
        %v799 = vsel %vm797, %v798, %v591
        %v800 = vshrl.u32 %v799, 3
        %v801 = vand.u32 %v799, 7
        %v802 = vsub.s32 0, %v801
        %v803 = vsel %vm797, %v802, %v801
        %vm804 = vcmp.lt.s32.totalorder %v592, 0
        %v805 = vsub.s32 0, %v592
        %v806 = vsel %vm804, %v805, %v592
        %v807 = vshrl.u32 %v806, 3
        %v808 = vand.u32 %v806, 7
        %v809 = vsub.s32 0, %v808
        %v810 = vsel %vm804, %v809, %v808
        %vm811 = vcmp.lt.s32.totalorder %v593, 0
        %v812 = vsub.s32 0, %v593
        %v813 = vsel %vm811, %v812, %v593
        %v814 = vshrl.u32 %v813, 3
        %v815 = vand.u32 %v813, 7
        %v816 = vsub.s32 0, %v815
        %v817 = vsel %vm811, %v816, %v815
        %vm818 = vcmp.ne.s32.totalorder %v600, 0
        %vm819 = vcmp.ne.s32.totalorder %v607, 0
        %vm820 = vcmp.ne.s32.totalorder %v614, 0
        %vm821 = vcmp.ne.s32.totalorder %v621, 0
        %vm822 = vcmp.ne.s32.totalorder %v628, 0
        %vm823 = vcmp.ne.s32.totalorder %v635, 0
        %vm824 = vcmp.ne.s32.totalorder %v642, 0
        %vm825 = vcmp.ne.s32.totalorder %v649, 0
        %vm826 = vcmp.ne.s32.totalorder %v656, 0
        %vm827 = vcmp.ne.s32.totalorder %v663, 0
        %vm828 = vcmp.ne.s32.totalorder %v670, 0
        %vm829 = vcmp.ne.s32.totalorder %v677, 0
        %vm830 = vcmp.ne.s32.totalorder %v684, 0
        %vm831 = vcmp.ne.s32.totalorder %v691, 0
        %vm832 = vcmp.ne.s32.totalorder %v698, 0
        %vm833 = vcmp.ne.s32.totalorder %v705, 0
        %vm834 = vcmp.ne.s32.totalorder %v712, 0
        %vm835 = vcmp.ne.s32.totalorder %v719, 0
        %vm836 = vcmp.ne.s32.totalorder %v726, 0
        %vm837 = vcmp.ne.s32.totalorder %v733, 0
        %vm838 = vcmp.ne.s32.totalorder %v740, 0
        %vm839 = vcmp.ne.s32.totalorder %v747, 0
        %vm840 = vcmp.ne.s32.totalorder %v754, 0
        %vm841 = vcmp.ne.s32.totalorder %v761, 0
        %vm842 = vcmp.ne.s32.totalorder %v768, 0
        %vm843 = vcmp.ne.s32.totalorder %v775, 0
        %vm844 = vcmp.ne.s32.totalorder %v782, 0
        %vm845 = vcmp.ne.s32.totalorder %v789, 0
        %vm846 = vcmp.ne.s32.totalorder %v796, 0
        %vm847 = vcmp.ne.s32.totalorder %v803, 0
        %vm848 = vcmp.ne.s32.totalorder %v810, 0
        %vm849 = vcmp.ne.s32.totalorder %v817, 0
        %vm850 = vcmp.lt.s32.totalorder %v600, 0
        %vm851 = vcmp.lt.s32.totalorder %v607, 0
        %vm852 = vcmp.lt.s32.totalorder %v614, 0
        %vm853 = vcmp.lt.s32.totalorder %v621, 0
        %vm854 = vcmp.lt.s32.totalorder %v628, 0
        %vm855 = vcmp.lt.s32.totalorder %v635, 0
        %vm856 = vcmp.lt.s32.totalorder %v642, 0
        %vm857 = vcmp.lt.s32.totalorder %v649, 0
        %vm858 = vcmp.lt.s32.totalorder %v656, 0
        %vm859 = vcmp.lt.s32.totalorder %v663, 0
        %vm860 = vcmp.lt.s32.totalorder %v670, 0
        %vm861 = vcmp.lt.s32.totalorder %v677, 0
        %vm862 = vcmp.lt.s32.totalorder %v684, 0
        %vm863 = vcmp.lt.s32.totalorder %v691, 0
        %vm864 = vcmp.lt.s32.totalorder %v698, 0
        %vm865 = vcmp.lt.s32.totalorder %v705, 0
        %vm866 = vcmp.lt.s32.totalorder %v712, 0
        %vm867 = vcmp.lt.s32.totalorder %v719, 0
        %vm868 = vcmp.lt.s32.totalorder %v726, 0
        %vm869 = vcmp.lt.s32.totalorder %v733, 0
        %vm870 = vcmp.lt.s32.totalorder %v740, 0
        %vm871 = vcmp.lt.s32.totalorder %v747, 0
        %vm872 = vcmp.lt.s32.totalorder %v754, 0
        %vm873 = vcmp.lt.s32.totalorder %v761, 0
        %vm874 = vcmp.lt.s32.totalorder %v768, 0
        %vm875 = vcmp.lt.s32.totalorder %v775, 0
        %vm876 = vcmp.lt.s32.totalorder %v782, 0
        %vm877 = vcmp.lt.s32.totalorder %v789, 0
        %vm878 = vcmp.lt.s32.totalorder %v796, 0
        %vm879 = vcmp.lt.s32.totalorder %v803, 0
        %vm880 = vcmp.lt.s32.totalorder %v810, 0
        %vm881 = vcmp.lt.s32.totalorder %v817, 0
        %vm882 = vmand %vm850, %vm818
        %vm883 = vmand %vm851, %vm819
        %vm884 = vmand %vm852, %vm820
        %vm885 = vmand %vm853, %vm821
        %vm886 = vmand %vm854, %vm822
        %vm887 = vmand %vm855, %vm823
        %vm888 = vmand %vm856, %vm824
        %vm889 = vmand %vm857, %vm825
        %vm890 = vmand %vm858, %vm826
        %vm891 = vmand %vm859, %vm827
        %vm892 = vmand %vm860, %vm828
        %vm893 = vmand %vm861, %vm829
        %vm894 = vmand %vm862, %vm830
        %vm895 = vmand %vm863, %vm831
        %vm896 = vmand %vm864, %vm832
        %vm897 = vmand %vm865, %vm833
        %vm898 = vmand %vm866, %vm834
        %vm899 = vmand %vm867, %vm835
        %vm900 = vmand %vm868, %vm836
        %vm901 = vmand %vm869, %vm837
        %vm902 = vmand %vm870, %vm838
        %vm903 = vmand %vm871, %vm839
        %vm904 = vmand %vm872, %vm840
        %vm905 = vmand %vm873, %vm841
        %vm906 = vmand %vm874, %vm842
        %vm907 = vmand %vm875, %vm843
        %vm908 = vmand %vm876, %vm844
        %vm909 = vmand %vm877, %vm845
        %vm910 = vmand %vm878, %vm846
        %vm911 = vmand %vm879, %vm847
        %vm912 = vmand %vm880, %vm848
        %vm913 = vmand %vm881, %vm849
        %v914 = vadd.s32 %v600, 8
        %v915 = vadd.s32 %v607, 8
        %v916 = vadd.s32 %v614, 8
        %v917 = vadd.s32 %v621, 8
        %v918 = vadd.s32 %v628, 8
        %v919 = vadd.s32 %v635, 8
        %v920 = vadd.s32 %v642, 8
        %v921 = vadd.s32 %v649, 8
        %v922 = vadd.s32 %v656, 8
        %v923 = vadd.s32 %v663, 8
        %v924 = vadd.s32 %v670, 8
        %v925 = vadd.s32 %v677, 8
        %v926 = vadd.s32 %v684, 8
        %v927 = vadd.s32 %v691, 8
        %v928 = vadd.s32 %v698, 8
        %v929 = vadd.s32 %v705, 8
        %v930 = vadd.s32 %v712, 8
        %v931 = vadd.s32 %v719, 8
        %v932 = vadd.s32 %v726, 8
        %v933 = vadd.s32 %v733, 8
        %v934 = vadd.s32 %v740, 8
        %v935 = vadd.s32 %v747, 8
        %v936 = vadd.s32 %v754, 8
        %v937 = vadd.s32 %v761, 8
        %v938 = vadd.s32 %v768, 8
        %v939 = vadd.s32 %v775, 8
        %v940 = vadd.s32 %v782, 8
        %v941 = vadd.s32 %v789, 8
        %v942 = vadd.s32 %v796, 8
        %v943 = vadd.s32 %v803, 8
        %v944 = vadd.s32 %v810, 8
        %v945 = vadd.s32 %v817, 8
        %v946 = vsel %vm882, %v914, %v600
        %v947 = vsel %vm883, %v915, %v607
        %v948 = vsel %vm884, %v916, %v614
        %v949 = vsel %vm885, %v917, %v621
        %v950 = vsel %vm886, %v918, %v628
        %v951 = vsel %vm887, %v919, %v635
        %v952 = vsel %vm888, %v920, %v642
        %v953 = vsel %vm889, %v921, %v649
        %v954 = vsel %vm890, %v922, %v656
        %v955 = vsel %vm891, %v923, %v663
        %v956 = vsel %vm892, %v924, %v670
        %v957 = vsel %vm893, %v925, %v677
        %v958 = vsel %vm894, %v926, %v684
        %v959 = vsel %vm895, %v927, %v691
        %v960 = vsel %vm896, %v928, %v698
        %v961 = vsel %vm897, %v929, %v705
        %v962 = vsel %vm898, %v930, %v712
        %v963 = vsel %vm899, %v931, %v719
        %v964 = vsel %vm900, %v932, %v726
        %v965 = vsel %vm901, %v933, %v733
        %v966 = vsel %vm902, %v934, %v740
        %v967 = vsel %vm903, %v935, %v747
        %v968 = vsel %vm904, %v936, %v754
        %v969 = vsel %vm905, %v937, %v761
        %v970 = vsel %vm906, %v938, %v768
        %v971 = vsel %vm907, %v939, %v775
        %v972 = vsel %vm908, %v940, %v782
        %v973 = vsel %vm909, %v941, %v789
        %v974 = vsel %vm910, %v942, %v796
        %v975 = vsel %vm911, %v943, %v803
        %v976 = vsel %vm912, %v944, %v810
        %v977 = vsel %vm913, %v945, %v817
        %vm978 = vcmp.eq.s32.totalorder %v946, 0
        %vm979 = vcmp.eq.s32.totalorder %v947, 0
        %vm980 = vcmp.eq.s32.totalorder %v948, 0
        %vm981 = vcmp.eq.s32.totalorder %v949, 0
        %vm982 = vcmp.eq.s32.totalorder %v950, 0
        %vm983 = vcmp.eq.s32.totalorder %v951, 0
        %vm984 = vcmp.eq.s32.totalorder %v952, 0
        %vm985 = vcmp.eq.s32.totalorder %v953, 0
        %vm986 = vcmp.eq.s32.totalorder %v954, 0
        %vm987 = vcmp.eq.s32.totalorder %v955, 0
        %vm988 = vcmp.eq.s32.totalorder %v956, 0
        %vm989 = vcmp.eq.s32.totalorder %v957, 0
        %vm990 = vcmp.eq.s32.totalorder %v958, 0
        %vm991 = vcmp.eq.s32.totalorder %v959, 0
        %vm992 = vcmp.eq.s32.totalorder %v960, 0
        %vm993 = vcmp.eq.s32.totalorder %v961, 0
        %vm994 = vcmp.eq.s32.totalorder %v962, 0
        %vm995 = vcmp.eq.s32.totalorder %v963, 0
        %vm996 = vcmp.eq.s32.totalorder %v964, 0
        %vm997 = vcmp.eq.s32.totalorder %v965, 0
        %vm998 = vcmp.eq.s32.totalorder %v966, 0
        %vm999 = vcmp.eq.s32.totalorder %v967, 0
        %vm1000 = vcmp.eq.s32.totalorder %v968, 0
        %vm1001 = vcmp.eq.s32.totalorder %v969, 0
        %vm1002 = vcmp.eq.s32.totalorder %v970, 0
        %vm1003 = vcmp.eq.s32.totalorder %v971, 0
        %vm1004 = vcmp.eq.s32.totalorder %v972, 0
        %vm1005 = vcmp.eq.s32.totalorder %v973, 0
        %vm1006 = vcmp.eq.s32.totalorder %v974, 0
        %vm1007 = vcmp.eq.s32.totalorder %v975, 0
        %vm1008 = vcmp.eq.s32.totalorder %v976, 0
        %vm1009 = vcmp.eq.s32.totalorder %v977, 0
        %vm1010 = vcmp.eq.s32.totalorder %v946, 7
        %vm1011 = vcmp.eq.s32.totalorder %v947, 7
        %vm1012 = vcmp.eq.s32.totalorder %v948, 7
        %vm1013 = vcmp.eq.s32.totalorder %v949, 7
        %vm1014 = vcmp.eq.s32.totalorder %v950, 7
        %vm1015 = vcmp.eq.s32.totalorder %v951, 7
        %vm1016 = vcmp.eq.s32.totalorder %v952, 7
        %vm1017 = vcmp.eq.s32.totalorder %v953, 7
        %vm1018 = vcmp.eq.s32.totalorder %v954, 7
        %vm1019 = vcmp.eq.s32.totalorder %v955, 7
        %vm1020 = vcmp.eq.s32.totalorder %v956, 7
        %vm1021 = vcmp.eq.s32.totalorder %v957, 7
        %vm1022 = vcmp.eq.s32.totalorder %v958, 7
        %vm1023 = vcmp.eq.s32.totalorder %v959, 7
        %vm1024 = vcmp.eq.s32.totalorder %v960, 7
        %vm1025 = vcmp.eq.s32.totalorder %v961, 7
        %vm1026 = vcmp.eq.s32.totalorder %v962, 7
        %vm1027 = vcmp.eq.s32.totalorder %v963, 7
        %vm1028 = vcmp.eq.s32.totalorder %v964, 7
        %vm1029 = vcmp.eq.s32.totalorder %v965, 7
        %vm1030 = vcmp.eq.s32.totalorder %v966, 7
        %vm1031 = vcmp.eq.s32.totalorder %v967, 7
        %vm1032 = vcmp.eq.s32.totalorder %v968, 7
        %vm1033 = vcmp.eq.s32.totalorder %v969, 7
        %vm1034 = vcmp.eq.s32.totalorder %v970, 7
        %vm1035 = vcmp.eq.s32.totalorder %v971, 7
        %vm1036 = vcmp.eq.s32.totalorder %v972, 7
        %vm1037 = vcmp.eq.s32.totalorder %v973, 7
        %vm1038 = vcmp.eq.s32.totalorder %v974, 7
        %vm1039 = vcmp.eq.s32.totalorder %v975, 7
        %vm1040 = vcmp.eq.s32.totalorder %v976, 7
        %vm1041 = vcmp.eq.s32.totalorder %v977, 7
        %v1042 = vld [vmem:[%s523] sm:$0xf]
        %v1043 = vld [vmem:[%s523 + $0x4] sm:$0xf]
        %v1044 = vld [vmem:[%s523 + $0x8] sm:$0xf]
        %v1045 = vld [vmem:[%s523 + $0xc] sm:$0xf]
        %v1046 = vld [vmem:[%s523 + $0x10] sm:$0xf]
        %v1047 = vld [vmem:[%s523 + $0x14] sm:$0xf]
        %v1048 = vld [vmem:[%s523 + $0x18] sm:$0xf]
        %v1049 = vld [vmem:[%s523 + $0x1c] sm:$0xf]
        %v1050 = vld [vmem:[%s523 + $0x20] sm:$0xf]
        %v1051 = vld [vmem:[%s523 + $0x24] sm:$0xf]
        %v1052 = vld [vmem:[%s523 + $0x28] sm:$0xf]
        %v1053 = vld [vmem:[%s523 + $0x2c] sm:$0xf]
        %v1054 = vld [vmem:[%s523 + $0x30] sm:$0xf]
        %v1055 = vld [vmem:[%s523 + $0x34] sm:$0xf]
        %v1056 = vld [vmem:[%s523 + $0x38] sm:$0xf]
        %v1057 = vld [vmem:[%s523 + $0x3c] sm:$0xf]
        %v1058 = vld [vmem:[%s523 + $0x40] sm:$0xf]
        %v1059 = vld [vmem:[%s523 + $0x44] sm:$0xf]
        %v1060 = vld [vmem:[%s523 + $0x48] sm:$0xf]
        %v1061 = vld [vmem:[%s523 + $0x4c] sm:$0xf]
        %v1062 = vld [vmem:[%s523 + $0x50] sm:$0xf]
        %v1063 = vld [vmem:[%s523 + $0x54] sm:$0xf]
        %v1064 = vld [vmem:[%s523 + $0x58] sm:$0xf]
        %v1065 = vld [vmem:[%s523 + $0x5c] sm:$0xf]
        %v1066 = vld [vmem:[%s523 + $0x60] sm:$0xf]
        %v1067 = vld [vmem:[%s523 + $0x64] sm:$0xf]
        %v1068 = vld [vmem:[%s523 + $0x68] sm:$0xf]
        %v1069 = vld [vmem:[%s523 + $0x6c] sm:$0xf]
        %v1070 = vld [vmem:[%s523 + $0x70] sm:$0xf]
        %v1071 = vld [vmem:[%s523 + $0x74] sm:$0xf]
        %v1072 = vld [vmem:[%s523 + $0x78] sm:$0xf]
        %v1073 = vld [vmem:[%s523 + $0x7c] sm:$0xf]
        %v1074 = vld [vmem:[%s2] sm:$0xf]
        %v1075 = vld [vmem:[%s2 + $0x4] sm:$0xf]
        %v1076 = vld [vmem:[%s2 + $0x8] sm:$0xf]
        %v1077 = vld [vmem:[%s2 + $0xc] sm:$0xf]
        %v1078 = vld [vmem:[%s3] sm:$0x1]
        %v1080 = vlaneseq
        %v1081 = vshrl.u32 %v1080, 7
        %v1082 = vsub.s32 0, %v1081
        %v1083 = vrot.slane %v1078, %v1082
        %v1117 = vunpack.c.l.b16 %v1042
        %v1118 = vunpack.c.l.b16 %v1043
        %v1119 = vunpack.c.l.b16 %v1044
        %v1120 = vunpack.c.l.b16 %v1045
        %v1121 = vunpack.c.l.b16 %v1046
        %v1122 = vunpack.c.l.b16 %v1047
        %v1123 = vunpack.c.l.b16 %v1048
        %v1124 = vunpack.c.l.b16 %v1049
        %v1125 = vunpack.c.l.b16 %v1050
        %v1126 = vunpack.c.l.b16 %v1051
        %v1127 = vunpack.c.l.b16 %v1052
        %v1128 = vunpack.c.l.b16 %v1053
        %v1129 = vunpack.c.l.b16 %v1054
        %v1130 = vunpack.c.l.b16 %v1055
        %v1131 = vunpack.c.l.b16 %v1056
        %v1132 = vunpack.c.l.b16 %v1057
        %v1133 = vunpack.c.l.b16 %v1058
        %v1134 = vunpack.c.l.b16 %v1059
        %v1135 = vunpack.c.l.b16 %v1060
        %v1136 = vunpack.c.l.b16 %v1061
        %v1137 = vunpack.c.l.b16 %v1062
        %v1138 = vunpack.c.l.b16 %v1063
        %v1139 = vunpack.c.l.b16 %v1064
        %v1140 = vunpack.c.l.b16 %v1065
        %v1141 = vunpack.c.l.b16 %v1066
        %v1142 = vunpack.c.l.b16 %v1067
        %v1143 = vunpack.c.l.b16 %v1068
        %v1144 = vunpack.c.l.b16 %v1069
        %v1145 = vunpack.c.l.b16 %v1070
        %v1146 = vunpack.c.l.b16 %v1071
        %v1147 = vunpack.c.l.b16 %v1072
        %v1148 = vunpack.c.l.b16 %v1073
        %v1149 = vpack.c.b16 %v1118, %v1117
        %v1150 = vpack.c.b16 %v1120, %v1119
        %v1151 = vpack.c.b16 %v1122, %v1121
        %v1152 = vpack.c.b16 %v1124, %v1123
        %v1153 = vpack.c.b16 %v1126, %v1125
        %v1154 = vpack.c.b16 %v1128, %v1127
        %v1155 = vpack.c.b16 %v1130, %v1129
        %v1156 = vpack.c.b16 %v1132, %v1131
        %v1157 = vpack.c.b16 %v1134, %v1133
        %v1158 = vpack.c.b16 %v1136, %v1135
        %v1159 = vpack.c.b16 %v1138, %v1137
        %v1160 = vpack.c.b16 %v1140, %v1139
        %v1161 = vpack.c.b16 %v1142, %v1141
        %v1162 = vpack.c.b16 %v1144, %v1143
        %v1163 = vpack.c.b16 %v1146, %v1145
        %v1164 = vpack.c.b16 %v1148, %v1147
        %v1169 = vunpack.c.l.b16 %v1074
        %v1170 = vunpack.c.l.b16 %v1075
        %v1171 = vunpack.c.l.b16 %v1076
        %v1172 = vunpack.c.l.b16 %v1077
        %v1173 = vpack.c.b16 %v1170, %v1169
        %v1174 = vpack.c.b16 %v1172, %v1171
        %v1178 = vsel %vm544, %v1149, 0
        %v1181 = vsel %vm544, %v1150, 0
        %v1184 = vsel %vm544, %v1151, 0
        %v1187 = vsel %vm544, %v1152, 0
        %v1190 = vsel %vm544, %v1153, 0
        %v1193 = vsel %vm544, %v1154, 0
        %v1196 = vsel %vm544, %v1155, 0
        %v1199 = vsel %vm544, %v1156, 0
        %v1202 = vsel %vm544, %v1157, 0
        %v1205 = vsel %vm544, %v1158, 0
        %v1208 = vsel %vm544, %v1159, 0
        %v1211 = vsel %vm544, %v1160, 0
        %v1214 = vsel %vm544, %v1161, 0
        %v1217 = vsel %vm544, %v1162, 0
        %v1220 = vsel %vm544, %v1163, 0
        %v1223 = vsel %vm544, %v1164, 0
        %1225 = vmatprep.subr.bf16.mxu0 0
        %1226 = vmatpush1.bf16.msra.mxu0 %v1173
        %1227 = vmatprep.subr.bf16.mxu0 0
        %1228 = vmatpush1.bf16.msra.mxu0 %v1174
        %1229 = vmatprep.subr.bf16.mxu0 0
        %1230 = vmatpush1.bf16.msra.mxu0 0
        %1231 = vmatprep.subr.bf16.mxu0 0
        %1232 = vmatpush1.bf16.msra.mxu0 0
        %1233 = vmatprep.subr.bf16.mxu0 0
        %1234 = vmatpush1.bf16.msra.mxu0 0
        %1235 = vmatprep.subr.bf16.mxu0 0
        %1236 = vmatpush1.bf16.msra.mxu0 0
        %1237 = vmatprep.subr.bf16.mxu0 0
        %1238 = vmatpush1.bf16.msra.mxu0 0
        %1239 = vmatprep.subr.bf16.mxu0 0
        %1240 = vmatpush1.bf16.msra.mxu0 0
        %1241 = vmatprep.subr.bf16.mxu0 0
        %1242 = vmatpush1.bf16.msra.mxu0 0
        %1243 = vmatprep.subr.bf16.mxu0 0
        %1244 = vmatpush1.bf16.msra.mxu0 0
        %1245 = vmatprep.subr.bf16.mxu0 0
        %1246 = vmatpush1.bf16.msra.mxu0 0
        %1247 = vmatprep.subr.bf16.mxu0 0
        %1248 = vmatpush1.bf16.msra.mxu0 0
        %1249 = vmatprep.subr.bf16.mxu0 0
        %1250 = vmatpush1.bf16.msra.mxu0 0
        %1251 = vmatprep.subr.bf16.mxu0 0
        %1252 = vmatpush1.bf16.msra.mxu0 0
        %1253 = vmatprep.subr.bf16.mxu0 0
        %1254 = vmatpush1.bf16.msra.mxu0 0
        %1255 = vmatprep.subr.bf16.mxu0 0
        %1256 = vmatpush1.bf16.msra.mxu0 0
        %1257 = vmatprep.mubr.bf16.mxu0 0
        %1258 = vmatmul.mubr.bf16.gmra.mrb[0].mxu0 %v1178
        %v1259 = vpop.f32.mrb[0].mxu0
        %v1260 = vadd.f32 %v1083, %v1259
        %v1261 = vpop.f32.mrb[0].mxu0
        %v1262 = vpop.f32.mrb[0].mxu0
        %v1263 = vadd.f32 %v1083, %v1262
        %v1264 = vpop.f32.mrb[0].mxu0
        %1265 = vmatprep.mubr.bf16.mxu0 0
        %1266 = vmatmul.mubr.bf16.gmra.mrb[0].mxu0 %v1181
        %v1267 = vpop.f32.mrb[0].mxu0
        %v1268 = vadd.f32 %v1083, %v1267
        %v1269 = vpop.f32.mrb[0].mxu0
        %v1270 = vpop.f32.mrb[0].mxu0
        %v1271 = vadd.f32 %v1083, %v1270
        %v1272 = vpop.f32.mrb[0].mxu0
        %1273 = vmatprep.mubr.bf16.mxu0 0
        %1274 = vmatmul.mubr.bf16.gmra.mrb[0].mxu0 %v1184
        %v1275 = vpop.f32.mrb[0].mxu0
        %v1276 = vadd.f32 %v1083, %v1275
        %v1277 = vpop.f32.mrb[0].mxu0
        %v1278 = vpop.f32.mrb[0].mxu0
        %v1279 = vadd.f32 %v1083, %v1278
        %v1280 = vpop.f32.mrb[0].mxu0
        %1281 = vmatprep.mubr.bf16.mxu0 0
        %1282 = vmatmul.mubr.bf16.gmra.mrb[0].mxu0 %v1187
        %v1283 = vpop.f32.mrb[0].mxu0
        %v1284 = vadd.f32 %v1083, %v1283
        %v1285 = vpop.f32.mrb[0].mxu0
        %v1286 = vpop.f32.mrb[0].mxu0
        %v1287 = vadd.f32 %v1083, %v1286
        %v1288 = vpop.f32.mrb[0].mxu0
        %1289 = vmatprep.mubr.bf16.mxu0 0
        %1290 = vmatmul.mubr.bf16.gmra.mrb[0].mxu0 %v1190
        %v1291 = vpop.f32.mrb[0].mxu0
        %v1292 = vadd.f32 %v1083, %v1291
        %v1293 = vpop.f32.mrb[0].mxu0
        %v1294 = vpop.f32.mrb[0].mxu0
        %v1295 = vadd.f32 %v1083, %v1294
        %v1296 = vpop.f32.mrb[0].mxu0
        %1297 = vmatprep.mubr.bf16.mxu0 0
        %1298 = vmatmul.mubr.bf16.gmra.mrb[0].mxu0 %v1193
        %v1299 = vpop.f32.mrb[0].mxu0
        %v1300 = vadd.f32 %v1083, %v1299
        %v1301 = vpop.f32.mrb[0].mxu0
        %v1302 = vpop.f32.mrb[0].mxu0
        %v1303 = vadd.f32 %v1083, %v1302
        %v1304 = vpop.f32.mrb[0].mxu0
        %1305 = vmatprep.mubr.bf16.mxu0 0
        %1306 = vmatmul.mubr.bf16.gmra.mrb[0].mxu0 %v1196
        %v1307 = vpop.f32.mrb[0].mxu0
        %v1308 = vadd.f32 %v1083, %v1307
        %v1309 = vpop.f32.mrb[0].mxu0
        %v1310 = vpop.f32.mrb[0].mxu0
        %v1311 = vadd.f32 %v1083, %v1310
        %v1312 = vpop.f32.mrb[0].mxu0
        %1313 = vmatprep.mubr.bf16.mxu0 0
        %1314 = vmatmul.mubr.bf16.gmra.mrb[0].mxu0 %v1199
        %v1315 = vpop.f32.mrb[0].mxu0
        %v1316 = vadd.f32 %v1083, %v1315
        %v1317 = vpop.f32.mrb[0].mxu0
        %v1318 = vpop.f32.mrb[0].mxu0
        %v1319 = vadd.f32 %v1083, %v1318
        %v1320 = vpop.f32.mrb[0].mxu0
        %1321 = vmatprep.mubr.bf16.mxu0 0
        %1322 = vmatmul.mubr.bf16.gmra.mrb[0].mxu0 %v1202
        %v1323 = vpop.f32.mrb[0].mxu0
        %v1324 = vadd.f32 %v1083, %v1323
        %v1325 = vpop.f32.mrb[0].mxu0
        %v1326 = vpop.f32.mrb[0].mxu0
        %v1327 = vadd.f32 %v1083, %v1326
        %v1328 = vpop.f32.mrb[0].mxu0
        %1329 = vmatprep.mubr.bf16.mxu0 0
        %1330 = vmatmul.mubr.bf16.gmra.mrb[0].mxu0 %v1205
        %v1331 = vpop.f32.mrb[0].mxu0
        %v1332 = vadd.f32 %v1083, %v1331
        %v1333 = vpop.f32.mrb[0].mxu0
        %v1334 = vpop.f32.mrb[0].mxu0
        %v1335 = vadd.f32 %v1083, %v1334
        %v1336 = vpop.f32.mrb[0].mxu0
        %1337 = vmatprep.mubr.bf16.mxu0 0
        %1338 = vmatmul.mubr.bf16.gmra.mrb[0].mxu0 %v1208
        %v1339 = vpop.f32.mrb[0].mxu0
        %v1340 = vadd.f32 %v1083, %v1339
        %v1341 = vpop.f32.mrb[0].mxu0
        %v1342 = vpop.f32.mrb[0].mxu0
        %v1343 = vadd.f32 %v1083, %v1342
        %v1344 = vpop.f32.mrb[0].mxu0
        %1345 = vmatprep.mubr.bf16.mxu0 0
        %1346 = vmatmul.mubr.bf16.gmra.mrb[0].mxu0 %v1211
        %v1347 = vpop.f32.mrb[0].mxu0
        %v1348 = vadd.f32 %v1083, %v1347
        %v1349 = vpop.f32.mrb[0].mxu0
        %v1350 = vpop.f32.mrb[0].mxu0
        %v1351 = vadd.f32 %v1083, %v1350
        %v1352 = vpop.f32.mrb[0].mxu0
        %1353 = vmatprep.mubr.bf16.mxu0 0
        %1354 = vmatmul.mubr.bf16.gmra.mrb[0].mxu0 %v1214
        %v1355 = vpop.f32.mrb[0].mxu0
        %v1356 = vadd.f32 %v1083, %v1355
        %v1357 = vpop.f32.mrb[0].mxu0
        %v1358 = vpop.f32.mrb[0].mxu0
        %v1359 = vadd.f32 %v1083, %v1358
        %v1360 = vpop.f32.mrb[0].mxu0
        %1361 = vmatprep.mubr.bf16.mxu0 0
        %1362 = vmatmul.mubr.bf16.gmra.mrb[0].mxu0 %v1217
        %v1363 = vpop.f32.mrb[0].mxu0
        %v1364 = vadd.f32 %v1083, %v1363
        %v1365 = vpop.f32.mrb[0].mxu0
        %v1366 = vpop.f32.mrb[0].mxu0
        %v1367 = vadd.f32 %v1083, %v1366
        %v1368 = vpop.f32.mrb[0].mxu0
        %1369 = vmatprep.mubr.bf16.mxu0 0
        %1370 = vmatmul.mubr.bf16.gmra.mrb[0].mxu0 %v1220
        %v1371 = vpop.f32.mrb[0].mxu0
        %v1372 = vadd.f32 %v1083, %v1371
        %v1373 = vpop.f32.mrb[0].mxu0
        %v1374 = vpop.f32.mrb[0].mxu0
        %v1375 = vadd.f32 %v1083, %v1374
        %v1376 = vpop.f32.mrb[0].mxu0
        %1377 = vmatprep.mubr.bf16.mxu0 0
        %1378 = vmatmul.mubr.bf16.gmra.mrb[0].mxu0 %v1223
        %v1379 = vpop.f32.mrb[0].mxu0
        %v1380 = vadd.f32 %v1083, %v1379
        %v1381 = vpop.f32.mrb[0].mxu0
        %v1382 = vpop.f32.mrb[0].mxu0
        %v1383 = vadd.f32 %v1083, %v1382
        %v1384 = vpop.f32.mrb[0].mxu0
        %1385 = vdwg.mxu0
        %v1386 = vmax.f32 %v1260, 0.0
        %v1387 = vmax.f32 %v1263, 0.0
        %v1388 = vmax.f32 %v1268, 0.0
        %v1389 = vmax.f32 %v1271, 0.0
        %v1390 = vmax.f32 %v1276, 0.0
        %v1391 = vmax.f32 %v1279, 0.0
        %v1392 = vmax.f32 %v1284, 0.0
        %v1393 = vmax.f32 %v1287, 0.0
        %v1394 = vmax.f32 %v1292, 0.0
        %v1395 = vmax.f32 %v1295, 0.0
        %v1396 = vmax.f32 %v1300, 0.0
        %v1397 = vmax.f32 %v1303, 0.0
        %v1398 = vmax.f32 %v1308, 0.0
        %v1399 = vmax.f32 %v1311, 0.0
        %v1400 = vmax.f32 %v1316, 0.0
        %v1401 = vmax.f32 %v1319, 0.0
        %v1402 = vmax.f32 %v1324, 0.0
        %v1403 = vmax.f32 %v1327, 0.0
        %v1404 = vmax.f32 %v1332, 0.0
        %v1405 = vmax.f32 %v1335, 0.0
        %v1406 = vmax.f32 %v1340, 0.0
        %v1407 = vmax.f32 %v1343, 0.0
        %v1408 = vmax.f32 %v1348, 0.0
        %v1409 = vmax.f32 %v1351, 0.0
        %v1410 = vmax.f32 %v1356, 0.0
        %v1411 = vmax.f32 %v1359, 0.0
        %v1412 = vmax.f32 %v1364, 0.0
        %v1413 = vmax.f32 %v1367, 0.0
        %v1414 = vmax.f32 %v1372, 0.0
        %v1415 = vmax.f32 %v1375, 0.0
        %v1416 = vmax.f32 %v1380, 0.0
        %v1417 = vmax.f32 %v1383, 0.0
        %v1418 = vld [vmem:[%s1] sm:$0xff]
        %v1419 = vld [vmem:[%s1 + $0x8] sm:$0xff]
        %v1420 = vld [vmem:[%s1 + $0x10] sm:$0xff]
        %v1421 = vld [vmem:[%s1 + $0x18] sm:$0xff]
        %v1422 = vld [vmem:[%s1 + $0x20] sm:$0xff]
        %v1423 = vld [vmem:[%s1 + $0x28] sm:$0xff]
        %v1424 = vld [vmem:[%s1 + $0x30] sm:$0xff]
        %v1425 = vld [vmem:[%s1 + $0x38] sm:$0xff]
        %v1426 = vld [vmem:[%s1 + $0x40] sm:$0xff]
        %v1427 = vld [vmem:[%s1 + $0x48] sm:$0xff]
        %v1428 = vld [vmem:[%s1 + $0x50] sm:$0xff]
        %v1429 = vld [vmem:[%s1 + $0x58] sm:$0xff]
        %v1430 = vld [vmem:[%s1 + $0x60] sm:$0xff]
        %v1431 = vld [vmem:[%s1 + $0x68] sm:$0xff]
        %v1432 = vld [vmem:[%s1 + $0x70] sm:$0xff]
        %v1433 = vld [vmem:[%s1 + $0x78] sm:$0xff]
        %v1434 = vld [vmem:[%s1 + $0x80] sm:$0xff]
        %v1435 = vld [vmem:[%s1 + $0x88] sm:$0xff]
        %v1436 = vld [vmem:[%s1 + $0x90] sm:$0xff]
        %v1437 = vld [vmem:[%s1 + $0x98] sm:$0xff]
        %v1438 = vld [vmem:[%s1 + $0xa0] sm:$0xff]
        %v1439 = vld [vmem:[%s1 + $0xa8] sm:$0xff]
        %v1440 = vld [vmem:[%s1 + $0xb0] sm:$0xff]
        %v1441 = vld [vmem:[%s1 + $0xb8] sm:$0xff]
        %v1442 = vld [vmem:[%s1 + $0xc0] sm:$0xff]
        %v1443 = vld [vmem:[%s1 + $0xc8] sm:$0xff]
        %v1444 = vld [vmem:[%s1 + $0xd0] sm:$0xff]
        %v1445 = vld [vmem:[%s1 + $0xd8] sm:$0xff]
        %v1446 = vld [vmem:[%s1 + $0xe0] sm:$0xff]
        %v1447 = vld [vmem:[%s1 + $0xe8] sm:$0xff]
        %v1448 = vld [vmem:[%s1 + $0xf0] sm:$0xff]
        %v1449 = vld [vmem:[%s1 + $0xf8] sm:$0xff]
        %v1450 = vpack.c.bf16 %v1387, %v1386
        %v1451 = vpack.c.bf16 %v1389, %v1388
        %v1452 = vpack.c.bf16 %v1391, %v1390
        %v1453 = vpack.c.bf16 %v1393, %v1392
        %v1454 = vpack.c.bf16 %v1395, %v1394
        %v1455 = vpack.c.bf16 %v1397, %v1396
        %v1456 = vpack.c.bf16 %v1399, %v1398
        %v1457 = vpack.c.bf16 %v1401, %v1400
        %v1458 = vpack.c.bf16 %v1403, %v1402
        %v1459 = vpack.c.bf16 %v1405, %v1404
        %v1460 = vpack.c.bf16 %v1407, %v1406
        %v1461 = vpack.c.bf16 %v1409, %v1408
        %v1462 = vpack.c.bf16 %v1411, %v1410
        %v1463 = vpack.c.bf16 %v1413, %v1412
        %v1464 = vpack.c.bf16 %v1415, %v1414
        %v1465 = vpack.c.bf16 %v1417, %v1416
        %v1498 = vunpack.c.l.b16 %v1418
        %v1499 = vunpack.c.h.b16 %v1418
        %v1500 = vunpack.c.l.b16 %v1419
        %v1501 = vunpack.c.h.b16 %v1419
        %v1502 = vunpack.c.l.b16 %v1420
        %v1503 = vunpack.c.h.b16 %v1420
        %v1504 = vunpack.c.l.b16 %v1421
        %v1505 = vunpack.c.h.b16 %v1421
        %v1506 = vunpack.c.l.b16 %v1422
        %v1507 = vunpack.c.h.b16 %v1422
        %v1508 = vunpack.c.l.b16 %v1423
        %v1509 = vunpack.c.h.b16 %v1423
        %v1510 = vunpack.c.l.b16 %v1424
        %v1511 = vunpack.c.h.b16 %v1424
        %v1512 = vunpack.c.l.b16 %v1425
        %v1513 = vunpack.c.h.b16 %v1425
        %v1514 = vunpack.c.l.b16 %v1426
        %v1515 = vunpack.c.h.b16 %v1426
        %v1516 = vunpack.c.l.b16 %v1427
        %v1517 = vunpack.c.h.b16 %v1427
        %v1518 = vunpack.c.l.b16 %v1428
        %v1519 = vunpack.c.h.b16 %v1428
        %v1520 = vunpack.c.l.b16 %v1429
        %v1521 = vunpack.c.h.b16 %v1429
        %v1522 = vunpack.c.l.b16 %v1430
        %v1523 = vunpack.c.h.b16 %v1430
        %v1524 = vunpack.c.l.b16 %v1431
        %v1525 = vunpack.c.h.b16 %v1431
        %v1526 = vunpack.c.l.b16 %v1432
        %v1527 = vunpack.c.h.b16 %v1432
        %v1528 = vunpack.c.l.b16 %v1433
        %v1529 = vunpack.c.h.b16 %v1433
        %v1530 = vunpack.c.l.b16 %v1434
        %v1531 = vunpack.c.h.b16 %v1434
        %v1532 = vunpack.c.l.b16 %v1435
        %v1533 = vunpack.c.h.b16 %v1435
        %v1534 = vunpack.c.l.b16 %v1436
        %v1535 = vunpack.c.h.b16 %v1436
        %v1536 = vunpack.c.l.b16 %v1437
        %v1537 = vunpack.c.h.b16 %v1437
        %v1538 = vunpack.c.l.b16 %v1438
        %v1539 = vunpack.c.h.b16 %v1438
        %v1540 = vunpack.c.l.b16 %v1439
        %v1541 = vunpack.c.h.b16 %v1439
        %v1542 = vunpack.c.l.b16 %v1440
        %v1543 = vunpack.c.h.b16 %v1440
        %v1544 = vunpack.c.l.b16 %v1441
        %v1545 = vunpack.c.h.b16 %v1441
        %v1546 = vunpack.c.l.b16 %v1442
        %v1547 = vunpack.c.h.b16 %v1442
        %v1548 = vunpack.c.l.b16 %v1443
        %v1549 = vunpack.c.h.b16 %v1443
        %v1550 = vunpack.c.l.b16 %v1444
        %v1551 = vunpack.c.h.b16 %v1444
        %v1552 = vunpack.c.l.b16 %v1445
        %v1553 = vunpack.c.h.b16 %v1445
        %v1554 = vunpack.c.l.b16 %v1446
        %v1555 = vunpack.c.h.b16 %v1446
        %v1556 = vunpack.c.l.b16 %v1447
        %v1557 = vunpack.c.h.b16 %v1447
        %v1558 = vunpack.c.l.b16 %v1448
        %v1559 = vunpack.c.h.b16 %v1448
        %v1560 = vunpack.c.l.b16 %v1449
        %v1561 = vunpack.c.h.b16 %v1449
        %v1562 = vpack.c.b16 %v1500, %v1498
        %v1563 = vpack.c.b16 %v1501, %v1499
        %v1564 = vpack.c.b16 %v1504, %v1502
        %v1565 = vpack.c.b16 %v1505, %v1503
        %v1566 = vpack.c.b16 %v1508, %v1506
        %v1567 = vpack.c.b16 %v1509, %v1507
        %v1568 = vpack.c.b16 %v1512, %v1510
        %v1569 = vpack.c.b16 %v1513, %v1511
        %v1570 = vpack.c.b16 %v1516, %v1514
        %v1571 = vpack.c.b16 %v1517, %v1515
        %v1572 = vpack.c.b16 %v1520, %v1518
        %v1573 = vpack.c.b16 %v1521, %v1519
        %v1574 = vpack.c.b16 %v1524, %v1522
        %v1575 = vpack.c.b16 %v1525, %v1523
        %v1576 = vpack.c.b16 %v1528, %v1526
        %v1577 = vpack.c.b16 %v1529, %v1527
        %v1578 = vpack.c.b16 %v1532, %v1530
        %v1579 = vpack.c.b16 %v1533, %v1531
        %v1580 = vpack.c.b16 %v1536, %v1534
        %v1581 = vpack.c.b16 %v1537, %v1535
        %v1582 = vpack.c.b16 %v1540, %v1538
        %v1583 = vpack.c.b16 %v1541, %v1539
        %v1584 = vpack.c.b16 %v1544, %v1542
        %v1585 = vpack.c.b16 %v1545, %v1543
        %v1586 = vpack.c.b16 %v1548, %v1546
        %v1587 = vpack.c.b16 %v1549, %v1547
        %v1588 = vpack.c.b16 %v1552, %v1550
        %v1589 = vpack.c.b16 %v1553, %v1551
        %v1590 = vpack.c.b16 %v1556, %v1554
        %v1591 = vpack.c.b16 %v1557, %v1555
        %v1592 = vpack.c.b16 %v1560, %v1558
        %v1593 = vpack.c.b16 %v1561, %v1559
        %1626 = vmatprep.subr.bf16.mxu0 0
        %1627 = vmatpush1.bf16.msra.mxu0 %v1450
        %1628 = vmatprep.subr.bf16.mxu0 0
        %1629 = vmatpush1.bf16.msra.mxu0 %v1451
        %1630 = vmatprep.subr.bf16.mxu0 0
        %1631 = vmatpush1.bf16.msra.mxu0 %v1452
        %1632 = vmatprep.subr.bf16.mxu0 0
        %1633 = vmatpush1.bf16.msra.mxu0 %v1453
        %1634 = vmatprep.subr.bf16.mxu0 0
        %1635 = vmatpush1.bf16.msra.mxu0 %v1454
        %1636 = vmatprep.subr.bf16.mxu0 0
        %1637 = vmatpush1.bf16.msra.mxu0 %v1455
        %1638 = vmatprep.subr.bf16.mxu0 0
        %1639 = vmatpush1.bf16.msra.mxu0 %v1456
        %1640 = vmatprep.subr.bf16.mxu0 0
        %1641 = vmatpush1.bf16.msra.mxu0 %v1457
        %1642 = vmatprep.subr.bf16.mxu0 0
        %1643 = vmatpush1.bf16.msra.mxu0 %v1458
        %1644 = vmatprep.subr.bf16.mxu0 0
        %1645 = vmatpush1.bf16.msra.mxu0 %v1459
        %1646 = vmatprep.subr.bf16.mxu0 0
        %1647 = vmatpush1.bf16.msra.mxu0 %v1460
        %1648 = vmatprep.subr.bf16.mxu0 0
        %1649 = vmatpush1.bf16.msra.mxu0 %v1461
        %1650 = vmatprep.subr.bf16.mxu0 0
        %1651 = vmatpush1.bf16.msra.mxu0 %v1462
        %1652 = vmatprep.subr.bf16.mxu0 0
        %1653 = vmatpush1.bf16.msra.mxu0 %v1463
        %1654 = vmatprep.subr.bf16.mxu0 0
        %1655 = vmatpush1.bf16.msra.mxu0 %v1464
        %1656 = vmatprep.subr.bf16.mxu0 0
        %1657 = vmatpush1.bf16.msra.mxu0 %v1465
        %1658 = vmatprep.mubr.bf16.mxu0 %v1563
        %1659 = vmatmul.mubr.bf16.gmra.mrb[0].mxu0 %v1562
        %v1660 = vpop.f32.mrb[0].mxu0
        %v1661 = vadd.f32 0.0, %v1660
        %v1662 = vpop.f32.mrb[0].mxu0
        %v1663 = vpop.f32.mrb[0].mxu0
        %v1664 = vadd.f32 0.0, %v1663
        %v1665 = vpop.f32.mrb[0].mxu0
        %1666 = vmatprep.mubr.bf16.mxu0 %v1565
        %1667 = vmatmul.mubr.bf16.gmra.mrb[0].mxu0 %v1564
        %v1668 = vpop.f32.mrb[0].mxu0
        %v1669 = vadd.f32 0.0, %v1668
        %v1670 = vpop.f32.mrb[0].mxu0
        %v1671 = vpop.f32.mrb[0].mxu0
        %v1672 = vadd.f32 0.0, %v1671
        %v1673 = vpop.f32.mrb[0].mxu0
        %1674 = vmatprep.mubr.bf16.mxu0 %v1567
        %1675 = vmatmul.mubr.bf16.gmra.mrb[0].mxu0 %v1566
        %v1676 = vpop.f32.mrb[0].mxu0
        %v1677 = vadd.f32 0.0, %v1676
        %v1678 = vpop.f32.mrb[0].mxu0
        %v1679 = vpop.f32.mrb[0].mxu0
        %v1680 = vadd.f32 0.0, %v1679
        %v1681 = vpop.f32.mrb[0].mxu0
        %1682 = vmatprep.mubr.bf16.mxu0 %v1569
        %1683 = vmatmul.mubr.bf16.gmra.mrb[0].mxu0 %v1568
        %v1684 = vpop.f32.mrb[0].mxu0
        %v1685 = vadd.f32 0.0, %v1684
        %v1686 = vpop.f32.mrb[0].mxu0
        %v1687 = vpop.f32.mrb[0].mxu0
        %v1688 = vadd.f32 0.0, %v1687
        %v1689 = vpop.f32.mrb[0].mxu0
        %1690 = vmatprep.mubr.bf16.mxu0 %v1571
        %1691 = vmatmul.mubr.bf16.gmra.mrb[0].mxu0 %v1570
        %v1692 = vpop.f32.mrb[0].mxu0
        %v1693 = vadd.f32 0.0, %v1692
        %v1694 = vpop.f32.mrb[0].mxu0
        %v1695 = vpop.f32.mrb[0].mxu0
        %v1696 = vadd.f32 0.0, %v1695
        %v1697 = vpop.f32.mrb[0].mxu0
        %1698 = vmatprep.mubr.bf16.mxu0 %v1573
        %1699 = vmatmul.mubr.bf16.gmra.mrb[0].mxu0 %v1572
        %v1700 = vpop.f32.mrb[0].mxu0
        %v1701 = vadd.f32 0.0, %v1700
        %v1702 = vpop.f32.mrb[0].mxu0
        %v1703 = vpop.f32.mrb[0].mxu0
        %v1704 = vadd.f32 0.0, %v1703
        %v1705 = vpop.f32.mrb[0].mxu0
        %1706 = vmatprep.mubr.bf16.mxu0 %v1575
        %1707 = vmatmul.mubr.bf16.gmra.mrb[0].mxu0 %v1574
        %v1708 = vpop.f32.mrb[0].mxu0
        %v1709 = vadd.f32 0.0, %v1708
        %v1710 = vpop.f32.mrb[0].mxu0
        %v1711 = vpop.f32.mrb[0].mxu0
        %v1712 = vadd.f32 0.0, %v1711
        %v1713 = vpop.f32.mrb[0].mxu0
        %1714 = vmatprep.mubr.bf16.mxu0 %v1577
        %1715 = vmatmul.mubr.bf16.gmra.mrb[0].mxu0 %v1576
        %v1716 = vpop.f32.mrb[0].mxu0
        %v1717 = vadd.f32 0.0, %v1716
        %v1718 = vpop.f32.mrb[0].mxu0
        %v1719 = vpop.f32.mrb[0].mxu0
        %v1720 = vadd.f32 0.0, %v1719
        %v1721 = vpop.f32.mrb[0].mxu0
        %1722 = vmatprep.mubr.bf16.mxu0 %v1579
        %1723 = vmatmul.mubr.bf16.gmra.mrb[0].mxu0 %v1578
        %v1724 = vpop.f32.mrb[0].mxu0
        %v1725 = vadd.f32 0.0, %v1724
        %v1726 = vpop.f32.mrb[0].mxu0
        %v1727 = vpop.f32.mrb[0].mxu0
        %v1728 = vadd.f32 0.0, %v1727
        %v1729 = vpop.f32.mrb[0].mxu0
        %1730 = vmatprep.mubr.bf16.mxu0 %v1581
        %1731 = vmatmul.mubr.bf16.gmra.mrb[0].mxu0 %v1580
        %v1732 = vpop.f32.mrb[0].mxu0
        %v1733 = vadd.f32 0.0, %v1732
        %v1734 = vpop.f32.mrb[0].mxu0
        %v1735 = vpop.f32.mrb[0].mxu0
        %v1736 = vadd.f32 0.0, %v1735
        %v1737 = vpop.f32.mrb[0].mxu0
        %1738 = vmatprep.mubr.bf16.mxu0 %v1583
        %1739 = vmatmul.mubr.bf16.gmra.mrb[0].mxu0 %v1582
        %v1740 = vpop.f32.mrb[0].mxu0
        %v1741 = vadd.f32 0.0, %v1740
        %v1742 = vpop.f32.mrb[0].mxu0
        %v1743 = vpop.f32.mrb[0].mxu0
        %v1744 = vadd.f32 0.0, %v1743
        %v1745 = vpop.f32.mrb[0].mxu0
        %1746 = vmatprep.mubr.bf16.mxu0 %v1585
        %1747 = vmatmul.mubr.bf16.gmra.mrb[0].mxu0 %v1584
        %v1748 = vpop.f32.mrb[0].mxu0
        %v1749 = vadd.f32 0.0, %v1748
        %v1750 = vpop.f32.mrb[0].mxu0
        %v1751 = vpop.f32.mrb[0].mxu0
        %v1752 = vadd.f32 0.0, %v1751
        %v1753 = vpop.f32.mrb[0].mxu0
        %1754 = vmatprep.mubr.bf16.mxu0 %v1587
        %1755 = vmatmul.mubr.bf16.gmra.mrb[0].mxu0 %v1586
        %v1756 = vpop.f32.mrb[0].mxu0
        %v1757 = vadd.f32 0.0, %v1756
        %v1758 = vpop.f32.mrb[0].mxu0
        %v1759 = vpop.f32.mrb[0].mxu0
        %v1760 = vadd.f32 0.0, %v1759
        %v1761 = vpop.f32.mrb[0].mxu0
        %1762 = vmatprep.mubr.bf16.mxu0 %v1589
        %1763 = vmatmul.mubr.bf16.gmra.mrb[0].mxu0 %v1588
        %v1764 = vpop.f32.mrb[0].mxu0
        %v1765 = vadd.f32 0.0, %v1764
        %v1766 = vpop.f32.mrb[0].mxu0
        %v1767 = vpop.f32.mrb[0].mxu0
        %v1768 = vadd.f32 0.0, %v1767
        %v1769 = vpop.f32.mrb[0].mxu0
        %1770 = vmatprep.mubr.bf16.mxu0 %v1591
        %1771 = vmatmul.mubr.bf16.gmra.mrb[0].mxu0 %v1590
        %v1772 = vpop.f32.mrb[0].mxu0
        %v1773 = vadd.f32 0.0, %v1772
        %v1774 = vpop.f32.mrb[0].mxu0
        %v1775 = vpop.f32.mrb[0].mxu0
        %v1776 = vadd.f32 0.0, %v1775
        %v1777 = vpop.f32.mrb[0].mxu0
        %1778 = vmatprep.mubr.bf16.mxu0 %v1593
        %1779 = vmatmul.mubr.bf16.gmra.mrb[0].mxu0 %v1592
        %v1780 = vpop.f32.mrb[0].mxu0
        %v1781 = vadd.f32 0.0, %v1780
        %v1782 = vpop.f32.mrb[0].mxu0
        %v1783 = vpop.f32.mrb[0].mxu0
        %v1784 = vadd.f32 0.0, %v1783
        %v1785 = vpop.f32.mrb[0].mxu0
        %1786 = vdwg.mxu0
        %v1787 = vmax.f32 %v1661, %v1693
        %v1788 = vmax.f32 %v1664, %v1696
        %v1789 = vmax.f32 %v1669, %v1701
        %v1790 = vmax.f32 %v1672, %v1704
        %v1791 = vmax.f32 %v1677, %v1709
        %v1792 = vmax.f32 %v1680, %v1712
        %v1793 = vmax.f32 %v1685, %v1717
        %v1794 = vmax.f32 %v1688, %v1720
        %v1795 = vmax.f32 %v1725, %v1757
        %v1796 = vmax.f32 %v1728, %v1760
        %v1797 = vmax.f32 %v1733, %v1765
        %v1798 = vmax.f32 %v1736, %v1768
        %v1799 = vmax.f32 %v1741, %v1773
        %v1800 = vmax.f32 %v1744, %v1776
        %v1801 = vmax.f32 %v1749, %v1781
        %v1802 = vmax.f32 %v1752, %v1784
        %v1803 = vmax.f32 %v1787, %v1795
        %v1804 = vmax.f32 %v1788, %v1796
        %v1805 = vmax.f32 %v1789, %v1797
        %v1806 = vmax.f32 %v1790, %v1798
        %v1807 = vmax.f32 %v1791, %v1799
        %v1808 = vmax.f32 %v1792, %v1800
        %v1809 = vmax.f32 %v1793, %v1801
        %v1810 = vmax.f32 %v1794, %v1802
        %s1811 = scalar_lea.vmem %s523, 128
        %v1812 = vld [vmem:[%s1811] sm:$0xf]
        %v1813 = vld [vmem:[%s1811 + $0x4] sm:$0xf]
        %v1814 = vld [vmem:[%s1811 + $0x8] sm:$0xf]
        %v1815 = vld [vmem:[%s1811 + $0xc] sm:$0xf]
        %v1816 = vld [vmem:[%s1811 + $0x10] sm:$0xf]
        %v1817 = vld [vmem:[%s1811 + $0x14] sm:$0xf]
        %v1818 = vld [vmem:[%s1811 + $0x18] sm:$0xf]
        %v1819 = vld [vmem:[%s1811 + $0x1c] sm:$0xf]
        %v1820 = vld [vmem:[%s1811 + $0x20] sm:$0xf]
        %v1821 = vld [vmem:[%s1811 + $0x24] sm:$0xf]
        %v1822 = vld [vmem:[%s1811 + $0x28] sm:$0xf]
        %v1823 = vld [vmem:[%s1811 + $0x2c] sm:$0xf]
        %v1824 = vld [vmem:[%s1811 + $0x30] sm:$0xf]
        %v1825 = vld [vmem:[%s1811 + $0x34] sm:$0xf]
        %v1826 = vld [vmem:[%s1811 + $0x38] sm:$0xf]
        %v1827 = vld [vmem:[%s1811 + $0x3c] sm:$0xf]
        %v1828 = vld [vmem:[%s1811 + $0x40] sm:$0xf]
        %v1829 = vld [vmem:[%s1811 + $0x44] sm:$0xf]
        %v1830 = vld [vmem:[%s1811 + $0x48] sm:$0xf]
        %v1831 = vld [vmem:[%s1811 + $0x4c] sm:$0xf]
        %v1832 = vld [vmem:[%s1811 + $0x50] sm:$0xf]
        %v1833 = vld [vmem:[%s1811 + $0x54] sm:$0xf]
        %v1834 = vld [vmem:[%s1811 + $0x58] sm:$0xf]
        %v1835 = vld [vmem:[%s1811 + $0x5c] sm:$0xf]
        %v1836 = vld [vmem:[%s1811 + $0x60] sm:$0xf]
        %v1837 = vld [vmem:[%s1811 + $0x64] sm:$0xf]
        %v1838 = vld [vmem:[%s1811 + $0x68] sm:$0xf]
        %v1839 = vld [vmem:[%s1811 + $0x6c] sm:$0xf]
        %v1840 = vld [vmem:[%s1811 + $0x70] sm:$0xf]
        %v1841 = vld [vmem:[%s1811 + $0x74] sm:$0xf]
        %v1842 = vld [vmem:[%s1811 + $0x78] sm:$0xf]
        %v1843 = vld [vmem:[%s1811 + $0x7c] sm:$0xf]
        %v1876 = vunpack.c.l.b16 %v1812
        %v1877 = vunpack.c.l.b16 %v1813
        %v1878 = vunpack.c.l.b16 %v1814
        %v1879 = vunpack.c.l.b16 %v1815
        %v1880 = vunpack.c.l.b16 %v1816
        %v1881 = vunpack.c.l.b16 %v1817
        %v1882 = vunpack.c.l.b16 %v1818
        %v1883 = vunpack.c.l.b16 %v1819
        %v1884 = vunpack.c.l.b16 %v1820
        %v1885 = vunpack.c.l.b16 %v1821
        %v1886 = vunpack.c.l.b16 %v1822
        %v1887 = vunpack.c.l.b16 %v1823
        %v1888 = vunpack.c.l.b16 %v1824
        %v1889 = vunpack.c.l.b16 %v1825
        %v1890 = vunpack.c.l.b16 %v1826
        %v1891 = vunpack.c.l.b16 %v1827
        %v1892 = vunpack.c.l.b16 %v1828
        %v1893 = vunpack.c.l.b16 %v1829
        %v1894 = vunpack.c.l.b16 %v1830
        %v1895 = vunpack.c.l.b16 %v1831
        %v1896 = vunpack.c.l.b16 %v1832
        %v1897 = vunpack.c.l.b16 %v1833
        %v1898 = vunpack.c.l.b16 %v1834
        %v1899 = vunpack.c.l.b16 %v1835
        %v1900 = vunpack.c.l.b16 %v1836
        %v1901 = vunpack.c.l.b16 %v1837
        %v1902 = vunpack.c.l.b16 %v1838
        %v1903 = vunpack.c.l.b16 %v1839
        %v1904 = vunpack.c.l.b16 %v1840
        %v1905 = vunpack.c.l.b16 %v1841
        %v1906 = vunpack.c.l.b16 %v1842
        %v1907 = vunpack.c.l.b16 %v1843
        %v1908 = vpack.c.b16 %v1877, %v1876
        %v1909 = vpack.c.b16 %v1879, %v1878
        %v1910 = vpack.c.b16 %v1881, %v1880
        %v1911 = vpack.c.b16 %v1883, %v1882
        %v1912 = vpack.c.b16 %v1885, %v1884
        %v1913 = vpack.c.b16 %v1887, %v1886
        %v1914 = vpack.c.b16 %v1889, %v1888
        %v1915 = vpack.c.b16 %v1891, %v1890
        %v1916 = vpack.c.b16 %v1893, %v1892
        %v1917 = vpack.c.b16 %v1895, %v1894
        %v1918 = vpack.c.b16 %v1897, %v1896
        %v1919 = vpack.c.b16 %v1899, %v1898
        %v1920 = vpack.c.b16 %v1901, %v1900
        %v1921 = vpack.c.b16 %v1903, %v1902
        %v1922 = vpack.c.b16 %v1905, %v1904
        %v1923 = vpack.c.b16 %v1907, %v1906
        %v1925 = vsel %vm544, %v1908, 0
        %v1928 = vsel %vm544, %v1909, 0
        %v1931 = vsel %vm544, %v1910, 0
        %v1934 = vsel %vm544, %v1911, 0
        %v1937 = vsel %vm544, %v1912, 0
        %v1940 = vsel %vm544, %v1913, 0
        %v1943 = vsel %vm544, %v1914, 0
        %v1946 = vsel %vm544, %v1915, 0
        %v1949 = vsel %vm544, %v1916, 0
        %v1952 = vsel %vm544, %v1917, 0
        %v1955 = vsel %vm544, %v1918, 0
        %v1958 = vsel %vm544, %v1919, 0
        %v1961 = vsel %vm544, %v1920, 0
        %v1964 = vsel %vm544, %v1921, 0
        %v1967 = vsel %vm544, %v1922, 0
        %v1970 = vsel %vm544, %v1923, 0
        %1972 = vmatprep.subr.bf16.mxu0 0
        %1973 = vmatpush1.bf16.msra.mxu0 %v1173
        %1974 = vmatprep.subr.bf16.mxu0 0
        %1975 = vmatpush1.bf16.msra.mxu0 %v1174
        %1976 = vmatprep.subr.bf16.mxu0 0
        %1977 = vmatpush1.bf16.msra.mxu0 0
        %1978 = vmatprep.subr.bf16.mxu0 0
        %1979 = vmatpush1.bf16.msra.mxu0 0
        %1980 = vmatprep.subr.bf16.mxu0 0
        %1981 = vmatpush1.bf16.msra.mxu0 0
        %1982 = vmatprep.subr.bf16.mxu0 0
        %1983 = vmatpush1.bf16.msra.mxu0 0
        %1984 = vmatprep.subr.bf16.mxu0 0
        %1985 = vmatpush1.bf16.msra.mxu0 0
        %1986 = vmatprep.subr.bf16.mxu0 0
        %1987 = vmatpush1.bf16.msra.mxu0 0
        %1988 = vmatprep.subr.bf16.mxu0 0
        %1989 = vmatpush1.bf16.msra.mxu0 0
        %1990 = vmatprep.subr.bf16.mxu0 0
        %1991 = vmatpush1.bf16.msra.mxu0 0
        %1992 = vmatprep.subr.bf16.mxu0 0
        %1993 = vmatpush1.bf16.msra.mxu0 0
        %1994 = vmatprep.subr.bf16.mxu0 0
        %1995 = vmatpush1.bf16.msra.mxu0 0
        %1996 = vmatprep.subr.bf16.mxu0 0
        %1997 = vmatpush1.bf16.msra.mxu0 0
        %1998 = vmatprep.subr.bf16.mxu0 0
        %1999 = vmatpush1.bf16.msra.mxu0 0
        %2000 = vmatprep.subr.bf16.mxu0 0
        %2001 = vmatpush1.bf16.msra.mxu0 0
        %2002 = vmatprep.subr.bf16.mxu0 0
        %2003 = vmatpush1.bf16.msra.mxu0 0
        %2004 = vmatprep.mubr.bf16.mxu0 0
        %2005 = vmatmul.mubr.bf16.gmra.mrb[0].mxu0 %v1925
        %v2006 = vpop.f32.mrb[0].mxu0
        %v2007 = vadd.f32 %v1083, %v2006
        %v2008 = vpop.f32.mrb[0].mxu0
        %v2009 = vpop.f32.mrb[0].mxu0
        %v2010 = vadd.f32 %v1083, %v2009
        %v2011 = vpop.f32.mrb[0].mxu0
        %2012 = vmatprep.mubr.bf16.mxu0 0
        %2013 = vmatmul.mubr.bf16.gmra.mrb[0].mxu0 %v1928
        %v2014 = vpop.f32.mrb[0].mxu0
        %v2015 = vadd.f32 %v1083, %v2014
        %v2016 = vpop.f32.mrb[0].mxu0
        %v2017 = vpop.f32.mrb[0].mxu0
        %v2018 = vadd.f32 %v1083, %v2017
        %v2019 = vpop.f32.mrb[0].mxu0
        %2020 = vmatprep.mubr.bf16.mxu0 0
        %2021 = vmatmul.mubr.bf16.gmra.mrb[0].mxu0 %v1931
        %v2022 = vpop.f32.mrb[0].mxu0
        %v2023 = vadd.f32 %v1083, %v2022
        %v2024 = vpop.f32.mrb[0].mxu0
        %v2025 = vpop.f32.mrb[0].mxu0
        %v2026 = vadd.f32 %v1083, %v2025
        %v2027 = vpop.f32.mrb[0].mxu0
        %2028 = vmatprep.mubr.bf16.mxu0 0
        %2029 = vmatmul.mubr.bf16.gmra.mrb[0].mxu0 %v1934
        %v2030 = vpop.f32.mrb[0].mxu0
        %v2031 = vadd.f32 %v1083, %v2030
        %v2032 = vpop.f32.mrb[0].mxu0
        %v2033 = vpop.f32.mrb[0].mxu0
        %v2034 = vadd.f32 %v1083, %v2033
        %v2035 = vpop.f32.mrb[0].mxu0
        %2036 = vmatprep.mubr.bf16.mxu0 0
        %2037 = vmatmul.mubr.bf16.gmra.mrb[0].mxu0 %v1937
        %v2038 = vpop.f32.mrb[0].mxu0
        %v2039 = vadd.f32 %v1083, %v2038
        %v2040 = vpop.f32.mrb[0].mxu0
        %v2041 = vpop.f32.mrb[0].mxu0
        %v2042 = vadd.f32 %v1083, %v2041
        %v2043 = vpop.f32.mrb[0].mxu0
        %2044 = vmatprep.mubr.bf16.mxu0 0
        %2045 = vmatmul.mubr.bf16.gmra.mrb[0].mxu0 %v1940
        %v2046 = vpop.f32.mrb[0].mxu0
        %v2047 = vadd.f32 %v1083, %v2046
        %v2048 = vpop.f32.mrb[0].mxu0
        %v2049 = vpop.f32.mrb[0].mxu0
        %v2050 = vadd.f32 %v1083, %v2049
        %v2051 = vpop.f32.mrb[0].mxu0
        %2052 = vmatprep.mubr.bf16.mxu0 0
        %2053 = vmatmul.mubr.bf16.gmra.mrb[0].mxu0 %v1943
        %v2054 = vpop.f32.mrb[0].mxu0
        %v2055 = vadd.f32 %v1083, %v2054
        %v2056 = vpop.f32.mrb[0].mxu0
        %v2057 = vpop.f32.mrb[0].mxu0
        %v2058 = vadd.f32 %v1083, %v2057
        %v2059 = vpop.f32.mrb[0].mxu0
        %2060 = vmatprep.mubr.bf16.mxu0 0
        %2061 = vmatmul.mubr.bf16.gmra.mrb[0].mxu0 %v1946
        %v2062 = vpop.f32.mrb[0].mxu0
        %v2063 = vadd.f32 %v1083, %v2062
        %v2064 = vpop.f32.mrb[0].mxu0
        %v2065 = vpop.f32.mrb[0].mxu0
        %v2066 = vadd.f32 %v1083, %v2065
        %v2067 = vpop.f32.mrb[0].mxu0
        %2068 = vmatprep.mubr.bf16.mxu0 0
        %2069 = vmatmul.mubr.bf16.gmra.mrb[0].mxu0 %v1949
        %v2070 = vpop.f32.mrb[0].mxu0
        %v2071 = vadd.f32 %v1083, %v2070
        %v2072 = vpop.f32.mrb[0].mxu0
        %v2073 = vpop.f32.mrb[0].mxu0
        %v2074 = vadd.f32 %v1083, %v2073
        %v2075 = vpop.f32.mrb[0].mxu0
        %2076 = vmatprep.mubr.bf16.mxu0 0
        %2077 = vmatmul.mubr.bf16.gmra.mrb[0].mxu0 %v1952
        %v2078 = vpop.f32.mrb[0].mxu0
        %v2079 = vadd.f32 %v1083, %v2078
        %v2080 = vpop.f32.mrb[0].mxu0
        %v2081 = vpop.f32.mrb[0].mxu0
        %v2082 = vadd.f32 %v1083, %v2081
        %v2083 = vpop.f32.mrb[0].mxu0
        %2084 = vmatprep.mubr.bf16.mxu0 0
        %2085 = vmatmul.mubr.bf16.gmra.mrb[0].mxu0 %v1955
        %v2086 = vpop.f32.mrb[0].mxu0
        %v2087 = vadd.f32 %v1083, %v2086
        %v2088 = vpop.f32.mrb[0].mxu0
        %v2089 = vpop.f32.mrb[0].mxu0
        %v2090 = vadd.f32 %v1083, %v2089
        %v2091 = vpop.f32.mrb[0].mxu0
        %2092 = vmatprep.mubr.bf16.mxu0 0
        %2093 = vmatmul.mubr.bf16.gmra.mrb[0].mxu0 %v1958
        %v2094 = vpop.f32.mrb[0].mxu0
        %v2095 = vadd.f32 %v1083, %v2094
        %v2096 = vpop.f32.mrb[0].mxu0
        %v2097 = vpop.f32.mrb[0].mxu0
        %v2098 = vadd.f32 %v1083, %v2097
        %v2099 = vpop.f32.mrb[0].mxu0
        %2100 = vmatprep.mubr.bf16.mxu0 0
        %2101 = vmatmul.mubr.bf16.gmra.mrb[0].mxu0 %v1961
        %v2102 = vpop.f32.mrb[0].mxu0
        %v2103 = vadd.f32 %v1083, %v2102
        %v2104 = vpop.f32.mrb[0].mxu0
        %v2105 = vpop.f32.mrb[0].mxu0
        %v2106 = vadd.f32 %v1083, %v2105
        %v2107 = vpop.f32.mrb[0].mxu0
        %2108 = vmatprep.mubr.bf16.mxu0 0
        %2109 = vmatmul.mubr.bf16.gmra.mrb[0].mxu0 %v1964
        %v2110 = vpop.f32.mrb[0].mxu0
        %v2111 = vadd.f32 %v1083, %v2110
        %v2112 = vpop.f32.mrb[0].mxu0
        %v2113 = vpop.f32.mrb[0].mxu0
        %v2114 = vadd.f32 %v1083, %v2113
        %v2115 = vpop.f32.mrb[0].mxu0
        %2116 = vmatprep.mubr.bf16.mxu0 0
        %2117 = vmatmul.mubr.bf16.gmra.mrb[0].mxu0 %v1967
        %v2118 = vpop.f32.mrb[0].mxu0
        %v2119 = vadd.f32 %v1083, %v2118
        %v2120 = vpop.f32.mrb[0].mxu0
        %v2121 = vpop.f32.mrb[0].mxu0
        %v2122 = vadd.f32 %v1083, %v2121
        %v2123 = vpop.f32.mrb[0].mxu0
        %2124 = vmatprep.mubr.bf16.mxu0 0
        %2125 = vmatmul.mubr.bf16.gmra.mrb[0].mxu0 %v1970
        %v2126 = vpop.f32.mrb[0].mxu0
        %v2127 = vadd.f32 %v1083, %v2126
        %v2128 = vpop.f32.mrb[0].mxu0
        %v2129 = vpop.f32.mrb[0].mxu0
        %v2130 = vadd.f32 %v1083, %v2129
        %v2131 = vpop.f32.mrb[0].mxu0
        %2132 = vdwg.mxu0
        %v2133 = vmax.f32 %v2007, 0.0
        %v2134 = vmax.f32 %v2010, 0.0
        %v2135 = vmax.f32 %v2015, 0.0
        %v2136 = vmax.f32 %v2018, 0.0
        %v2137 = vmax.f32 %v2023, 0.0
        %v2138 = vmax.f32 %v2026, 0.0
        %v2139 = vmax.f32 %v2031, 0.0
        %v2140 = vmax.f32 %v2034, 0.0
        %v2141 = vmax.f32 %v2039, 0.0
        %v2142 = vmax.f32 %v2042, 0.0
        %v2143 = vmax.f32 %v2047, 0.0
        %v2144 = vmax.f32 %v2050, 0.0
        %v2145 = vmax.f32 %v2055, 0.0
        %v2146 = vmax.f32 %v2058, 0.0
        %v2147 = vmax.f32 %v2063, 0.0
        %v2148 = vmax.f32 %v2066, 0.0
        %v2149 = vmax.f32 %v2071, 0.0
        %v2150 = vmax.f32 %v2074, 0.0
        %v2151 = vmax.f32 %v2079, 0.0
        %v2152 = vmax.f32 %v2082, 0.0
        %v2153 = vmax.f32 %v2087, 0.0
        %v2154 = vmax.f32 %v2090, 0.0
        %v2155 = vmax.f32 %v2095, 0.0
        %v2156 = vmax.f32 %v2098, 0.0
        %v2157 = vmax.f32 %v2103, 0.0
        %v2158 = vmax.f32 %v2106, 0.0
        %v2159 = vmax.f32 %v2111, 0.0
        %v2160 = vmax.f32 %v2114, 0.0
        %v2161 = vmax.f32 %v2119, 0.0
        %v2162 = vmax.f32 %v2122, 0.0
        %v2163 = vmax.f32 %v2127, 0.0
        %v2164 = vmax.f32 %v2130, 0.0
        %v2165 = vpack.c.bf16 %v2134, %v2133
        %v2166 = vpack.c.bf16 %v2136, %v2135
        %v2167 = vpack.c.bf16 %v2138, %v2137
        %v2168 = vpack.c.bf16 %v2140, %v2139
        %v2169 = vpack.c.bf16 %v2142, %v2141
        %v2170 = vpack.c.bf16 %v2144, %v2143
        %v2171 = vpack.c.bf16 %v2146, %v2145
        %v2172 = vpack.c.bf16 %v2148, %v2147
        %v2173 = vpack.c.bf16 %v2150, %v2149
        %v2174 = vpack.c.bf16 %v2152, %v2151
        %v2175 = vpack.c.bf16 %v2154, %v2153
        %v2176 = vpack.c.bf16 %v2156, %v2155
        %v2177 = vpack.c.bf16 %v2158, %v2157
        %v2178 = vpack.c.bf16 %v2160, %v2159
        %v2179 = vpack.c.bf16 %v2162, %v2161
        %v2180 = vpack.c.bf16 %v2164, %v2163
        %2181 = vmatprep.subr.bf16.mxu0 0
        %2182 = vmatpush1.bf16.msra.mxu0 %v2165
        %2183 = vmatprep.subr.bf16.mxu0 0
        %2184 = vmatpush1.bf16.msra.mxu0 %v2166
        %2185 = vmatprep.subr.bf16.mxu0 0
        %2186 = vmatpush1.bf16.msra.mxu0 %v2167
        %2187 = vmatprep.subr.bf16.mxu0 0
        %2188 = vmatpush1.bf16.msra.mxu0 %v2168
        %2189 = vmatprep.subr.bf16.mxu0 0
        %2190 = vmatpush1.bf16.msra.mxu0 %v2169
        %2191 = vmatprep.subr.bf16.mxu0 0
        %2192 = vmatpush1.bf16.msra.mxu0 %v2170
        %2193 = vmatprep.subr.bf16.mxu0 0
        %2194 = vmatpush1.bf16.msra.mxu0 %v2171
        %2195 = vmatprep.subr.bf16.mxu0 0
        %2196 = vmatpush1.bf16.msra.mxu0 %v2172
        %2197 = vmatprep.subr.bf16.mxu0 0
        %2198 = vmatpush1.bf16.msra.mxu0 %v2173
        %2199 = vmatprep.subr.bf16.mxu0 0
        %2200 = vmatpush1.bf16.msra.mxu0 %v2174
        %2201 = vmatprep.subr.bf16.mxu0 0
        %2202 = vmatpush1.bf16.msra.mxu0 %v2175
        %2203 = vmatprep.subr.bf16.mxu0 0
        %2204 = vmatpush1.bf16.msra.mxu0 %v2176
        %2205 = vmatprep.subr.bf16.mxu0 0
        %2206 = vmatpush1.bf16.msra.mxu0 %v2177
        %2207 = vmatprep.subr.bf16.mxu0 0
        %2208 = vmatpush1.bf16.msra.mxu0 %v2178
        %2209 = vmatprep.subr.bf16.mxu0 0
        %2210 = vmatpush1.bf16.msra.mxu0 %v2179
        %2211 = vmatprep.subr.bf16.mxu0 0
        %2212 = vmatpush1.bf16.msra.mxu0 %v2180
        %2213 = vmatprep.mubr.bf16.mxu0 %v1563
        %2214 = vmatmul.mubr.bf16.gmra.mrb[0].mxu0 %v1562
        %v2215 = vpop.f32.mrb[0].mxu0
        %v2216 = vadd.f32 0.0, %v2215
        %v2217 = vpop.f32.mrb[0].mxu0
        %v2218 = vpop.f32.mrb[0].mxu0
        %v2219 = vadd.f32 0.0, %v2218
        %v2220 = vpop.f32.mrb[0].mxu0
        %2221 = vmatprep.mubr.bf16.mxu0 %v1565
        %2222 = vmatmul.mubr.bf16.gmra.mrb[0].mxu0 %v1564
        %v2223 = vpop.f32.mrb[0].mxu0
        %v2224 = vadd.f32 0.0, %v2223
        %v2225 = vpop.f32.mrb[0].mxu0
        %v2226 = vpop.f32.mrb[0].mxu0
        %v2227 = vadd.f32 0.0, %v2226
        %v2228 = vpop.f32.mrb[0].mxu0
        %2229 = vmatprep.mubr.bf16.mxu0 %v1567
        %2230 = vmatmul.mubr.bf16.gmra.mrb[0].mxu0 %v1566
        %v2231 = vpop.f32.mrb[0].mxu0
        %v2232 = vadd.f32 0.0, %v2231
        %v2233 = vpop.f32.mrb[0].mxu0
        %v2234 = vpop.f32.mrb[0].mxu0
        %v2235 = vadd.f32 0.0, %v2234
        %v2236 = vpop.f32.mrb[0].mxu0
        %2237 = vmatprep.mubr.bf16.mxu0 %v1569
        %2238 = vmatmul.mubr.bf16.gmra.mrb[0].mxu0 %v1568
        %v2239 = vpop.f32.mrb[0].mxu0
        %v2240 = vadd.f32 0.0, %v2239
        %v2241 = vpop.f32.mrb[0].mxu0
        %v2242 = vpop.f32.mrb[0].mxu0
        %v2243 = vadd.f32 0.0, %v2242
        %v2244 = vpop.f32.mrb[0].mxu0
        %2245 = vmatprep.mubr.bf16.mxu0 %v1571
        %2246 = vmatmul.mubr.bf16.gmra.mrb[0].mxu0 %v1570
        %v2247 = vpop.f32.mrb[0].mxu0
        %v2248 = vadd.f32 0.0, %v2247
        %v2249 = vpop.f32.mrb[0].mxu0
        %v2250 = vpop.f32.mrb[0].mxu0
        %v2251 = vadd.f32 0.0, %v2250
        %v2252 = vpop.f32.mrb[0].mxu0
        %2253 = vmatprep.mubr.bf16.mxu0 %v1573
        %2254 = vmatmul.mubr.bf16.gmra.mrb[0].mxu0 %v1572
        %v2255 = vpop.f32.mrb[0].mxu0
        %v2256 = vadd.f32 0.0, %v2255
        %v2257 = vpop.f32.mrb[0].mxu0
        %v2258 = vpop.f32.mrb[0].mxu0
        %v2259 = vadd.f32 0.0, %v2258
        %v2260 = vpop.f32.mrb[0].mxu0
        %2261 = vmatprep.mubr.bf16.mxu0 %v1575
        %2262 = vmatmul.mubr.bf16.gmra.mrb[0].mxu0 %v1574
        %v2263 = vpop.f32.mrb[0].mxu0
        %v2264 = vadd.f32 0.0, %v2263
        %v2265 = vpop.f32.mrb[0].mxu0
        %v2266 = vpop.f32.mrb[0].mxu0
        %v2267 = vadd.f32 0.0, %v2266
        %v2268 = vpop.f32.mrb[0].mxu0
        %2269 = vmatprep.mubr.bf16.mxu0 %v1577
        %2270 = vmatmul.mubr.bf16.gmra.mrb[0].mxu0 %v1576
        %v2271 = vpop.f32.mrb[0].mxu0
        %v2272 = vadd.f32 0.0, %v2271
        %v2273 = vpop.f32.mrb[0].mxu0
        %v2274 = vpop.f32.mrb[0].mxu0
        %v2275 = vadd.f32 0.0, %v2274
        %v2276 = vpop.f32.mrb[0].mxu0
        %2277 = vmatprep.mubr.bf16.mxu0 %v1579
        %2278 = vmatmul.mubr.bf16.gmra.mrb[0].mxu0 %v1578
        %v2279 = vpop.f32.mrb[0].mxu0
        %v2280 = vadd.f32 0.0, %v2279
        %v2281 = vpop.f32.mrb[0].mxu0
        %v2282 = vpop.f32.mrb[0].mxu0
        %v2283 = vadd.f32 0.0, %v2282
        %v2284 = vpop.f32.mrb[0].mxu0
        %2285 = vmatprep.mubr.bf16.mxu0 %v1581
        %2286 = vmatmul.mubr.bf16.gmra.mrb[0].mxu0 %v1580
        %v2287 = vpop.f32.mrb[0].mxu0
        %v2288 = vadd.f32 0.0, %v2287
        %v2289 = vpop.f32.mrb[0].mxu0
        %v2290 = vpop.f32.mrb[0].mxu0
        %v2291 = vadd.f32 0.0, %v2290
        %v2292 = vpop.f32.mrb[0].mxu0
        %2293 = vmatprep.mubr.bf16.mxu0 %v1583
        %2294 = vmatmul.mubr.bf16.gmra.mrb[0].mxu0 %v1582
        %v2295 = vpop.f32.mrb[0].mxu0
        %v2296 = vadd.f32 0.0, %v2295
        %v2297 = vpop.f32.mrb[0].mxu0
        %v2298 = vpop.f32.mrb[0].mxu0
        %v2299 = vadd.f32 0.0, %v2298
        %v2300 = vpop.f32.mrb[0].mxu0
        %2301 = vmatprep.mubr.bf16.mxu0 %v1585
        %2302 = vmatmul.mubr.bf16.gmra.mrb[0].mxu0 %v1584
        %v2303 = vpop.f32.mrb[0].mxu0
        %v2304 = vadd.f32 0.0, %v2303
        %v2305 = vpop.f32.mrb[0].mxu0
        %v2306 = vpop.f32.mrb[0].mxu0
        %v2307 = vadd.f32 0.0, %v2306
        %v2308 = vpop.f32.mrb[0].mxu0
        %2309 = vmatprep.mubr.bf16.mxu0 %v1587
        %2310 = vmatmul.mubr.bf16.gmra.mrb[0].mxu0 %v1586
        %v2311 = vpop.f32.mrb[0].mxu0
        %v2312 = vadd.f32 0.0, %v2311
        %v2313 = vpop.f32.mrb[0].mxu0
        %v2314 = vpop.f32.mrb[0].mxu0
        %v2315 = vadd.f32 0.0, %v2314
        %v2316 = vpop.f32.mrb[0].mxu0
        %2317 = vmatprep.mubr.bf16.mxu0 %v1589
        %2318 = vmatmul.mubr.bf16.gmra.mrb[0].mxu0 %v1588
        %v2319 = vpop.f32.mrb[0].mxu0
        %v2320 = vadd.f32 0.0, %v2319
        %v2321 = vpop.f32.mrb[0].mxu0
        %v2322 = vpop.f32.mrb[0].mxu0
        %v2323 = vadd.f32 0.0, %v2322
        %v2324 = vpop.f32.mrb[0].mxu0
        %2325 = vmatprep.mubr.bf16.mxu0 %v1591
        %2326 = vmatmul.mubr.bf16.gmra.mrb[0].mxu0 %v1590
        %v2327 = vpop.f32.mrb[0].mxu0
        %v2328 = vadd.f32 0.0, %v2327
        %v2329 = vpop.f32.mrb[0].mxu0
        %v2330 = vpop.f32.mrb[0].mxu0
        %v2331 = vadd.f32 0.0, %v2330
        %v2332 = vpop.f32.mrb[0].mxu0
        %2333 = vmatprep.mubr.bf16.mxu0 %v1593
        %2334 = vmatmul.mubr.bf16.gmra.mrb[0].mxu0 %v1592
        %v2335 = vpop.f32.mrb[0].mxu0
        %v2336 = vadd.f32 0.0, %v2335
        %v2337 = vpop.f32.mrb[0].mxu0
        %v2338 = vpop.f32.mrb[0].mxu0
        %v2339 = vadd.f32 0.0, %v2338
        %v2340 = vpop.f32.mrb[0].mxu0
        %2341 = vdwg.mxu0
        %v2342 = vmax.f32 %v2216, %v2248
        %v2343 = vmax.f32 %v2219, %v2251
        %v2344 = vmax.f32 %v2224, %v2256
        %v2345 = vmax.f32 %v2227, %v2259
        %v2346 = vmax.f32 %v2232, %v2264
        %v2347 = vmax.f32 %v2235, %v2267
        %v2348 = vmax.f32 %v2240, %v2272
        %v2349 = vmax.f32 %v2243, %v2275
        %v2350 = vmax.f32 %v2280, %v2312
        %v2351 = vmax.f32 %v2283, %v2315
        %v2352 = vmax.f32 %v2288, %v2320
        %v2353 = vmax.f32 %v2291, %v2323
        %v2354 = vmax.f32 %v2296, %v2328
        %v2355 = vmax.f32 %v2299, %v2331
        %v2356 = vmax.f32 %v2304, %v2336
        %v2357 = vmax.f32 %v2307, %v2339
        %v2358 = vmax.f32 %v2342, %v2350
        %v2359 = vmax.f32 %v2343, %v2351
        %v2360 = vmax.f32 %v2344, %v2352
        %v2361 = vmax.f32 %v2345, %v2353
        %v2362 = vmax.f32 %v2346, %v2354
        %v2363 = vmax.f32 %v2347, %v2355
        %v2364 = vmax.f32 %v2348, %v2356
        %v2365 = vmax.f32 %v2349, %v2357
        %s2366 = scalar_lea.vmem %s523, 256
        %v2367 = vld [vmem:[%s2366] sm:$0xf]
        %v2368 = vld [vmem:[%s2366 + $0x4] sm:$0xf]
        %v2369 = vld [vmem:[%s2366 + $0x8] sm:$0xf]
        %v2370 = vld [vmem:[%s2366 + $0xc] sm:$0xf]
        %v2371 = vld [vmem:[%s2366 + $0x10] sm:$0xf]
        %v2372 = vld [vmem:[%s2366 + $0x14] sm:$0xf]
        %v2373 = vld [vmem:[%s2366 + $0x18] sm:$0xf]
        %v2374 = vld [vmem:[%s2366 + $0x1c] sm:$0xf]
        %v2375 = vld [vmem:[%s2366 + $0x20] sm:$0xf]
        %v2376 = vld [vmem:[%s2366 + $0x24] sm:$0xf]
        %v2377 = vld [vmem:[%s2366 + $0x28] sm:$0xf]
        %v2378 = vld [vmem:[%s2366 + $0x2c] sm:$0xf]
        %v2379 = vld [vmem:[%s2366 + $0x30] sm:$0xf]
        %v2380 = vld [vmem:[%s2366 + $0x34] sm:$0xf]
        %v2381 = vld [vmem:[%s2366 + $0x38] sm:$0xf]
        %v2382 = vld [vmem:[%s2366 + $0x3c] sm:$0xf]
        %v2383 = vld [vmem:[%s2366 + $0x40] sm:$0xf]
        %v2384 = vld [vmem:[%s2366 + $0x44] sm:$0xf]
        %v2385 = vld [vmem:[%s2366 + $0x48] sm:$0xf]
        %v2386 = vld [vmem:[%s2366 + $0x4c] sm:$0xf]
        %v2387 = vld [vmem:[%s2366 + $0x50] sm:$0xf]
        %v2388 = vld [vmem:[%s2366 + $0x54] sm:$0xf]
        %v2389 = vld [vmem:[%s2366 + $0x58] sm:$0xf]
        %v2390 = vld [vmem:[%s2366 + $0x5c] sm:$0xf]
        %v2391 = vld [vmem:[%s2366 + $0x60] sm:$0xf]
        %v2392 = vld [vmem:[%s2366 + $0x64] sm:$0xf]
        %v2393 = vld [vmem:[%s2366 + $0x68] sm:$0xf]
        %v2394 = vld [vmem:[%s2366 + $0x6c] sm:$0xf]
        %v2395 = vld [vmem:[%s2366 + $0x70] sm:$0xf]
        %v2396 = vld [vmem:[%s2366 + $0x74] sm:$0xf]
        %v2397 = vld [vmem:[%s2366 + $0x78] sm:$0xf]
        %v2398 = vld [vmem:[%s2366 + $0x7c] sm:$0xf]
        %v2431 = vunpack.c.l.b16 %v2367
        %v2432 = vunpack.c.l.b16 %v2368
        %v2433 = vunpack.c.l.b16 %v2369
        %v2434 = vunpack.c.l.b16 %v2370
        %v2435 = vunpack.c.l.b16 %v2371
        %v2436 = vunpack.c.l.b16 %v2372
        %v2437 = vunpack.c.l.b16 %v2373
        %v2438 = vunpack.c.l.b16 %v2374
        %v2439 = vunpack.c.l.b16 %v2375
        %v2440 = vunpack.c.l.b16 %v2376
        %v2441 = vunpack.c.l.b16 %v2377
        %v2442 = vunpack.c.l.b16 %v2378
        %v2443 = vunpack.c.l.b16 %v2379
        %v2444 = vunpack.c.l.b16 %v2380
        %v2445 = vunpack.c.l.b16 %v2381
        %v2446 = vunpack.c.l.b16 %v2382
        %v2447 = vunpack.c.l.b16 %v2383
        %v2448 = vunpack.c.l.b16 %v2384
        %v2449 = vunpack.c.l.b16 %v2385
        %v2450 = vunpack.c.l.b16 %v2386
        %v2451 = vunpack.c.l.b16 %v2387
        %v2452 = vunpack.c.l.b16 %v2388
        %v2453 = vunpack.c.l.b16 %v2389
        %v2454 = vunpack.c.l.b16 %v2390
        %v2455 = vunpack.c.l.b16 %v2391
        %v2456 = vunpack.c.l.b16 %v2392
        %v2457 = vunpack.c.l.b16 %v2393
        %v2458 = vunpack.c.l.b16 %v2394
        %v2459 = vunpack.c.l.b16 %v2395
        %v2460 = vunpack.c.l.b16 %v2396
        %v2461 = vunpack.c.l.b16 %v2397
        %v2462 = vunpack.c.l.b16 %v2398
        %v2463 = vpack.c.b16 %v2432, %v2431
        %v2464 = vpack.c.b16 %v2434, %v2433
        %v2465 = vpack.c.b16 %v2436, %v2435
        %v2466 = vpack.c.b16 %v2438, %v2437
        %v2467 = vpack.c.b16 %v2440, %v2439
        %v2468 = vpack.c.b16 %v2442, %v2441
        %v2469 = vpack.c.b16 %v2444, %v2443
        %v2470 = vpack.c.b16 %v2446, %v2445
        %v2471 = vpack.c.b16 %v2448, %v2447
        %v2472 = vpack.c.b16 %v2450, %v2449
        %v2473 = vpack.c.b16 %v2452, %v2451
        %v2474 = vpack.c.b16 %v2454, %v2453
        %v2475 = vpack.c.b16 %v2456, %v2455
        %v2476 = vpack.c.b16 %v2458, %v2457
        %v2477 = vpack.c.b16 %v2460, %v2459
        %v2478 = vpack.c.b16 %v2462, %v2461
        %v2480 = vsel %vm544, %v2463, 0
        %v2483 = vsel %vm544, %v2464, 0
        %v2486 = vsel %vm544, %v2465, 0
        %v2489 = vsel %vm544, %v2466, 0
        %v2492 = vsel %vm544, %v2467, 0
        %v2495 = vsel %vm544, %v2468, 0
        %v2498 = vsel %vm544, %v2469, 0
        %v2501 = vsel %vm544, %v2470, 0
        %v2504 = vsel %vm544, %v2471, 0
        %v2507 = vsel %vm544, %v2472, 0
        %v2510 = vsel %vm544, %v2473, 0
        %v2513 = vsel %vm544, %v2474, 0
        %v2516 = vsel %vm544, %v2475, 0
        %v2519 = vsel %vm544, %v2476, 0
        %v2522 = vsel %vm544, %v2477, 0
        %v2525 = vsel %vm544, %v2478, 0
        %2527 = vmatprep.subr.bf16.mxu0 0
        %2528 = vmatpush1.bf16.msra.mxu0 %v1173
        %2529 = vmatprep.subr.bf16.mxu0 0
        %2530 = vmatpush1.bf16.msra.mxu0 %v1174
        %2531 = vmatprep.subr.bf16.mxu0 0
        %2532 = vmatpush1.bf16.msra.mxu0 0
        %2533 = vmatprep.subr.bf16.mxu0 0
        %2534 = vmatpush1.bf16.msra.mxu0 0
        %2535 = vmatprep.subr.bf16.mxu0 0
        %2536 = vmatpush1.bf16.msra.mxu0 0
        %2537 = vmatprep.subr.bf16.mxu0 0
        %2538 = vmatpush1.bf16.msra.mxu0 0
        %2539 = vmatprep.subr.bf16.mxu0 0
        %2540 = vmatpush1.bf16.msra.mxu0 0
        %2541 = vmatprep.subr.bf16.mxu0 0
        %2542 = vmatpush1.bf16.msra.mxu0 0
        %2543 = vmatprep.subr.bf16.mxu0 0
        %2544 = vmatpush1.bf16.msra.mxu0 0
        %2545 = vmatprep.subr.bf16.mxu0 0
        %2546 = vmatpush1.bf16.msra.mxu0 0
        %2547 = vmatprep.subr.bf16.mxu0 0
        %2548 = vmatpush1.bf16.msra.mxu0 0
        %2549 = vmatprep.subr.bf16.mxu0 0
        %2550 = vmatpush1.bf16.msra.mxu0 0
        %2551 = vmatprep.subr.bf16.mxu0 0
        %2552 = vmatpush1.bf16.msra.mxu0 0
        %2553 = vmatprep.subr.bf16.mxu0 0
        %2554 = vmatpush1.bf16.msra.mxu0 0
        %2555 = vmatprep.subr.bf16.mxu0 0
        %2556 = vmatpush1.bf16.msra.mxu0 0
        %2557 = vmatprep.subr.bf16.mxu0 0
        %2558 = vmatpush1.bf16.msra.mxu0 0
        %2559 = vmatprep.mubr.bf16.mxu0 0
        %2560 = vmatmul.mubr.bf16.gmra.mrb[0].mxu0 %v2480
        %v2561 = vpop.f32.mrb[0].mxu0
        %v2562 = vadd.f32 %v1083, %v2561
        %v2563 = vpop.f32.mrb[0].mxu0
        %v2564 = vpop.f32.mrb[0].mxu0
        %v2565 = vadd.f32 %v1083, %v2564
        %v2566 = vpop.f32.mrb[0].mxu0
        %2567 = vmatprep.mubr.bf16.mxu0 0
        %2568 = vmatmul.mubr.bf16.gmra.mrb[0].mxu0 %v2483
        %v2569 = vpop.f32.mrb[0].mxu0
        %v2570 = vadd.f32 %v1083, %v2569
        %v2571 = vpop.f32.mrb[0].mxu0
        %v2572 = vpop.f32.mrb[0].mxu0
        %v2573 = vadd.f32 %v1083, %v2572
        %v2574 = vpop.f32.mrb[0].mxu0
        %2575 = vmatprep.mubr.bf16.mxu0 0
        %2576 = vmatmul.mubr.bf16.gmra.mrb[0].mxu0 %v2486
        %v2577 = vpop.f32.mrb[0].mxu0
        %v2578 = vadd.f32 %v1083, %v2577
        %v2579 = vpop.f32.mrb[0].mxu0
        %v2580 = vpop.f32.mrb[0].mxu0
        %v2581 = vadd.f32 %v1083, %v2580
        %v2582 = vpop.f32.mrb[0].mxu0
        %2583 = vmatprep.mubr.bf16.mxu0 0
        %2584 = vmatmul.mubr.bf16.gmra.mrb[0].mxu0 %v2489
        %v2585 = vpop.f32.mrb[0].mxu0
        %v2586 = vadd.f32 %v1083, %v2585
        %v2587 = vpop.f32.mrb[0].mxu0
        %v2588 = vpop.f32.mrb[0].mxu0
        %v2589 = vadd.f32 %v1083, %v2588
        %v2590 = vpop.f32.mrb[0].mxu0
        %2591 = vmatprep.mubr.bf16.mxu0 0
        %2592 = vmatmul.mubr.bf16.gmra.mrb[0].mxu0 %v2492
        %v2593 = vpop.f32.mrb[0].mxu0
        %v2594 = vadd.f32 %v1083, %v2593
        %v2595 = vpop.f32.mrb[0].mxu0
        %v2596 = vpop.f32.mrb[0].mxu0
        %v2597 = vadd.f32 %v1083, %v2596
        %v2598 = vpop.f32.mrb[0].mxu0
        %2599 = vmatprep.mubr.bf16.mxu0 0
        %2600 = vmatmul.mubr.bf16.gmra.mrb[0].mxu0 %v2495
        %v2601 = vpop.f32.mrb[0].mxu0
        %v2602 = vadd.f32 %v1083, %v2601
        %v2603 = vpop.f32.mrb[0].mxu0
        %v2604 = vpop.f32.mrb[0].mxu0
        %v2605 = vadd.f32 %v1083, %v2604
        %v2606 = vpop.f32.mrb[0].mxu0
        %2607 = vmatprep.mubr.bf16.mxu0 0
        %2608 = vmatmul.mubr.bf16.gmra.mrb[0].mxu0 %v2498
        %v2609 = vpop.f32.mrb[0].mxu0
        %v2610 = vadd.f32 %v1083, %v2609
        %v2611 = vpop.f32.mrb[0].mxu0
        %v2612 = vpop.f32.mrb[0].mxu0
        %v2613 = vadd.f32 %v1083, %v2612
        %v2614 = vpop.f32.mrb[0].mxu0
        %2615 = vmatprep.mubr.bf16.mxu0 0
        %2616 = vmatmul.mubr.bf16.gmra.mrb[0].mxu0 %v2501
        %v2617 = vpop.f32.mrb[0].mxu0
        %v2618 = vadd.f32 %v1083, %v2617
        %v2619 = vpop.f32.mrb[0].mxu0
        %v2620 = vpop.f32.mrb[0].mxu0
        %v2621 = vadd.f32 %v1083, %v2620
        %v2622 = vpop.f32.mrb[0].mxu0
        %2623 = vmatprep.mubr.bf16.mxu0 0
        %2624 = vmatmul.mubr.bf16.gmra.mrb[0].mxu0 %v2504
        %v2625 = vpop.f32.mrb[0].mxu0
        %v2626 = vadd.f32 %v1083, %v2625
        %v2627 = vpop.f32.mrb[0].mxu0
        %v2628 = vpop.f32.mrb[0].mxu0
        %v2629 = vadd.f32 %v1083, %v2628
        %v2630 = vpop.f32.mrb[0].mxu0
        %2631 = vmatprep.mubr.bf16.mxu0 0
        %2632 = vmatmul.mubr.bf16.gmra.mrb[0].mxu0 %v2507
        %v2633 = vpop.f32.mrb[0].mxu0
        %v2634 = vadd.f32 %v1083, %v2633
        %v2635 = vpop.f32.mrb[0].mxu0
        %v2636 = vpop.f32.mrb[0].mxu0
        %v2637 = vadd.f32 %v1083, %v2636
        %v2638 = vpop.f32.mrb[0].mxu0
        %2639 = vmatprep.mubr.bf16.mxu0 0
        %2640 = vmatmul.mubr.bf16.gmra.mrb[0].mxu0 %v2510
        %v2641 = vpop.f32.mrb[0].mxu0
        %v2642 = vadd.f32 %v1083, %v2641
        %v2643 = vpop.f32.mrb[0].mxu0
        %v2644 = vpop.f32.mrb[0].mxu0
        %v2645 = vadd.f32 %v1083, %v2644
        %v2646 = vpop.f32.mrb[0].mxu0
        %2647 = vmatprep.mubr.bf16.mxu0 0
        %2648 = vmatmul.mubr.bf16.gmra.mrb[0].mxu0 %v2513
        %v2649 = vpop.f32.mrb[0].mxu0
        %v2650 = vadd.f32 %v1083, %v2649
        %v2651 = vpop.f32.mrb[0].mxu0
        %v2652 = vpop.f32.mrb[0].mxu0
        %v2653 = vadd.f32 %v1083, %v2652
        %v2654 = vpop.f32.mrb[0].mxu0
        %2655 = vmatprep.mubr.bf16.mxu0 0
        %2656 = vmatmul.mubr.bf16.gmra.mrb[0].mxu0 %v2516
        %v2657 = vpop.f32.mrb[0].mxu0
        %v2658 = vadd.f32 %v1083, %v2657
        %v2659 = vpop.f32.mrb[0].mxu0
        %v2660 = vpop.f32.mrb[0].mxu0
        %v2661 = vadd.f32 %v1083, %v2660
        %v2662 = vpop.f32.mrb[0].mxu0
        %2663 = vmatprep.mubr.bf16.mxu0 0
        %2664 = vmatmul.mubr.bf16.gmra.mrb[0].mxu0 %v2519
        %v2665 = vpop.f32.mrb[0].mxu0
        %v2666 = vadd.f32 %v1083, %v2665
        %v2667 = vpop.f32.mrb[0].mxu0
        %v2668 = vpop.f32.mrb[0].mxu0
        %v2669 = vadd.f32 %v1083, %v2668
        %v2670 = vpop.f32.mrb[0].mxu0
        %2671 = vmatprep.mubr.bf16.mxu0 0
        %2672 = vmatmul.mubr.bf16.gmra.mrb[0].mxu0 %v2522
        %v2673 = vpop.f32.mrb[0].mxu0
        %v2674 = vadd.f32 %v1083, %v2673
        %v2675 = vpop.f32.mrb[0].mxu0
        %v2676 = vpop.f32.mrb[0].mxu0
        %v2677 = vadd.f32 %v1083, %v2676
        %v2678 = vpop.f32.mrb[0].mxu0
        %2679 = vmatprep.mubr.bf16.mxu0 0
        %2680 = vmatmul.mubr.bf16.gmra.mrb[0].mxu0 %v2525
        %v2681 = vpop.f32.mrb[0].mxu0
        %v2682 = vadd.f32 %v1083, %v2681
        %v2683 = vpop.f32.mrb[0].mxu0
        %v2684 = vpop.f32.mrb[0].mxu0
        %v2685 = vadd.f32 %v1083, %v2684
        %v2686 = vpop.f32.mrb[0].mxu0
        %2687 = vdwg.mxu0
        %v2688 = vmax.f32 %v2562, 0.0
        %v2689 = vmax.f32 %v2565, 0.0
        %v2690 = vmax.f32 %v2570, 0.0
        %v2691 = vmax.f32 %v2573, 0.0
        %v2692 = vmax.f32 %v2578, 0.0
        %v2693 = vmax.f32 %v2581, 0.0
        %v2694 = vmax.f32 %v2586, 0.0
        %v2695 = vmax.f32 %v2589, 0.0
        %v2696 = vmax.f32 %v2594, 0.0
        %v2697 = vmax.f32 %v2597, 0.0
        %v2698 = vmax.f32 %v2602, 0.0
        %v2699 = vmax.f32 %v2605, 0.0
        %v2700 = vmax.f32 %v2610, 0.0
        %v2701 = vmax.f32 %v2613, 0.0
        %v2702 = vmax.f32 %v2618, 0.0
        %v2703 = vmax.f32 %v2621, 0.0
        %v2704 = vmax.f32 %v2626, 0.0
        %v2705 = vmax.f32 %v2629, 0.0
        %v2706 = vmax.f32 %v2634, 0.0
        %v2707 = vmax.f32 %v2637, 0.0
        %v2708 = vmax.f32 %v2642, 0.0
        %v2709 = vmax.f32 %v2645, 0.0
        %v2710 = vmax.f32 %v2650, 0.0
        %v2711 = vmax.f32 %v2653, 0.0
        %v2712 = vmax.f32 %v2658, 0.0
        %v2713 = vmax.f32 %v2661, 0.0
        %v2714 = vmax.f32 %v2666, 0.0
        %v2715 = vmax.f32 %v2669, 0.0
        %v2716 = vmax.f32 %v2674, 0.0
        %v2717 = vmax.f32 %v2677, 0.0
        %v2718 = vmax.f32 %v2682, 0.0
        %v2719 = vmax.f32 %v2685, 0.0
        %v2720 = vpack.c.bf16 %v2689, %v2688
        %v2721 = vpack.c.bf16 %v2691, %v2690
        %v2722 = vpack.c.bf16 %v2693, %v2692
        %v2723 = vpack.c.bf16 %v2695, %v2694
        %v2724 = vpack.c.bf16 %v2697, %v2696
        %v2725 = vpack.c.bf16 %v2699, %v2698
        %v2726 = vpack.c.bf16 %v2701, %v2700
        %v2727 = vpack.c.bf16 %v2703, %v2702
        %v2728 = vpack.c.bf16 %v2705, %v2704
        %v2729 = vpack.c.bf16 %v2707, %v2706
        %v2730 = vpack.c.bf16 %v2709, %v2708
        %v2731 = vpack.c.bf16 %v2711, %v2710
        %v2732 = vpack.c.bf16 %v2713, %v2712
        %v2733 = vpack.c.bf16 %v2715, %v2714
        %v2734 = vpack.c.bf16 %v2717, %v2716
        %v2735 = vpack.c.bf16 %v2719, %v2718
        %2736 = vmatprep.subr.bf16.mxu0 0
        %2737 = vmatpush1.bf16.msra.mxu0 %v2720
        %2738 = vmatprep.subr.bf16.mxu0 0
        %2739 = vmatpush1.bf16.msra.mxu0 %v2721
        %2740 = vmatprep.subr.bf16.mxu0 0
        %2741 = vmatpush1.bf16.msra.mxu0 %v2722
        %2742 = vmatprep.subr.bf16.mxu0 0
        %2743 = vmatpush1.bf16.msra.mxu0 %v2723
        %2744 = vmatprep.subr.bf16.mxu0 0
        %2745 = vmatpush1.bf16.msra.mxu0 %v2724
        %2746 = vmatprep.subr.bf16.mxu0 0
        %2747 = vmatpush1.bf16.msra.mxu0 %v2725
        %2748 = vmatprep.subr.bf16.mxu0 0
        %2749 = vmatpush1.bf16.msra.mxu0 %v2726
        %2750 = vmatprep.subr.bf16.mxu0 0
        %2751 = vmatpush1.bf16.msra.mxu0 %v2727
        %2752 = vmatprep.subr.bf16.mxu0 0
        %2753 = vmatpush1.bf16.msra.mxu0 %v2728
        %2754 = vmatprep.subr.bf16.mxu0 0
        %2755 = vmatpush1.bf16.msra.mxu0 %v2729
        %2756 = vmatprep.subr.bf16.mxu0 0
        %2757 = vmatpush1.bf16.msra.mxu0 %v2730
        %2758 = vmatprep.subr.bf16.mxu0 0
        %2759 = vmatpush1.bf16.msra.mxu0 %v2731
        %2760 = vmatprep.subr.bf16.mxu0 0
        %2761 = vmatpush1.bf16.msra.mxu0 %v2732
        %2762 = vmatprep.subr.bf16.mxu0 0
        %2763 = vmatpush1.bf16.msra.mxu0 %v2733
        %2764 = vmatprep.subr.bf16.mxu0 0
        %2765 = vmatpush1.bf16.msra.mxu0 %v2734
        %2766 = vmatprep.subr.bf16.mxu0 0
        %2767 = vmatpush1.bf16.msra.mxu0 %v2735
        %2768 = vmatprep.mubr.bf16.mxu0 %v1563
        %2769 = vmatmul.mubr.bf16.gmra.mrb[0].mxu0 %v1562
        %v2770 = vpop.f32.mrb[0].mxu0
        %v2771 = vadd.f32 0.0, %v2770
        %v2772 = vpop.f32.mrb[0].mxu0
        %v2773 = vpop.f32.mrb[0].mxu0
        %v2774 = vadd.f32 0.0, %v2773
        %v2775 = vpop.f32.mrb[0].mxu0
        %2776 = vmatprep.mubr.bf16.mxu0 %v1565
        %2777 = vmatmul.mubr.bf16.gmra.mrb[0].mxu0 %v1564
        %v2778 = vpop.f32.mrb[0].mxu0
        %v2779 = vadd.f32 0.0, %v2778
        %v2780 = vpop.f32.mrb[0].mxu0
        %v2781 = vpop.f32.mrb[0].mxu0
        %v2782 = vadd.f32 0.0, %v2781
        %v2783 = vpop.f32.mrb[0].mxu0
        %2784 = vmatprep.mubr.bf16.mxu0 %v1567
        %2785 = vmatmul.mubr.bf16.gmra.mrb[0].mxu0 %v1566
        %v2786 = vpop.f32.mrb[0].mxu0
        %v2787 = vadd.f32 0.0, %v2786
        %v2788 = vpop.f32.mrb[0].mxu0
        %v2789 = vpop.f32.mrb[0].mxu0
        %v2790 = vadd.f32 0.0, %v2789
        %v2791 = vpop.f32.mrb[0].mxu0
        %2792 = vmatprep.mubr.bf16.mxu0 %v1569
        %2793 = vmatmul.mubr.bf16.gmra.mrb[0].mxu0 %v1568
        %v2794 = vpop.f32.mrb[0].mxu0
        %v2795 = vadd.f32 0.0, %v2794
        %v2796 = vpop.f32.mrb[0].mxu0
        %v2797 = vpop.f32.mrb[0].mxu0
        %v2798 = vadd.f32 0.0, %v2797
        %v2799 = vpop.f32.mrb[0].mxu0
        %2800 = vmatprep.mubr.bf16.mxu0 %v1571
        %2801 = vmatmul.mubr.bf16.gmra.mrb[0].mxu0 %v1570
        %v2802 = vpop.f32.mrb[0].mxu0
        %v2803 = vadd.f32 0.0, %v2802
        %v2804 = vpop.f32.mrb[0].mxu0
        %v2805 = vpop.f32.mrb[0].mxu0
        %v2806 = vadd.f32 0.0, %v2805
        %v2807 = vpop.f32.mrb[0].mxu0
        %2808 = vmatprep.mubr.bf16.mxu0 %v1573
        %2809 = vmatmul.mubr.bf16.gmra.mrb[0].mxu0 %v1572
        %v2810 = vpop.f32.mrb[0].mxu0
        %v2811 = vadd.f32 0.0, %v2810
        %v2812 = vpop.f32.mrb[0].mxu0
        %v2813 = vpop.f32.mrb[0].mxu0
        %v2814 = vadd.f32 0.0, %v2813
        %v2815 = vpop.f32.mrb[0].mxu0
        %2816 = vmatprep.mubr.bf16.mxu0 %v1575
        %2817 = vmatmul.mubr.bf16.gmra.mrb[0].mxu0 %v1574
        %v2818 = vpop.f32.mrb[0].mxu0
        %v2819 = vadd.f32 0.0, %v2818
        %v2820 = vpop.f32.mrb[0].mxu0
        %v2821 = vpop.f32.mrb[0].mxu0
        %v2822 = vadd.f32 0.0, %v2821
        %v2823 = vpop.f32.mrb[0].mxu0
        %2824 = vmatprep.mubr.bf16.mxu0 %v1577
        %2825 = vmatmul.mubr.bf16.gmra.mrb[0].mxu0 %v1576
        %v2826 = vpop.f32.mrb[0].mxu0
        %v2827 = vadd.f32 0.0, %v2826
        %v2828 = vpop.f32.mrb[0].mxu0
        %v2829 = vpop.f32.mrb[0].mxu0
        %v2830 = vadd.f32 0.0, %v2829
        %v2831 = vpop.f32.mrb[0].mxu0
        %2832 = vmatprep.mubr.bf16.mxu0 %v1579
        %2833 = vmatmul.mubr.bf16.gmra.mrb[0].mxu0 %v1578
        %v2834 = vpop.f32.mrb[0].mxu0
        %v2835 = vadd.f32 0.0, %v2834
        %v2836 = vpop.f32.mrb[0].mxu0
        %v2837 = vpop.f32.mrb[0].mxu0
        %v2838 = vadd.f32 0.0, %v2837
        %v2839 = vpop.f32.mrb[0].mxu0
        %2840 = vmatprep.mubr.bf16.mxu0 %v1581
        %2841 = vmatmul.mubr.bf16.gmra.mrb[0].mxu0 %v1580
        %v2842 = vpop.f32.mrb[0].mxu0
        %v2843 = vadd.f32 0.0, %v2842
        %v2844 = vpop.f32.mrb[0].mxu0
        %v2845 = vpop.f32.mrb[0].mxu0
        %v2846 = vadd.f32 0.0, %v2845
        %v2847 = vpop.f32.mrb[0].mxu0
        %2848 = vmatprep.mubr.bf16.mxu0 %v1583
        %2849 = vmatmul.mubr.bf16.gmra.mrb[0].mxu0 %v1582
        %v2850 = vpop.f32.mrb[0].mxu0
        %v2851 = vadd.f32 0.0, %v2850
        %v2852 = vpop.f32.mrb[0].mxu0
        %v2853 = vpop.f32.mrb[0].mxu0
        %v2854 = vadd.f32 0.0, %v2853
        %v2855 = vpop.f32.mrb[0].mxu0
        %2856 = vmatprep.mubr.bf16.mxu0 %v1585
        %2857 = vmatmul.mubr.bf16.gmra.mrb[0].mxu0 %v1584
        %v2858 = vpop.f32.mrb[0].mxu0
        %v2859 = vadd.f32 0.0, %v2858
        %v2860 = vpop.f32.mrb[0].mxu0
        %v2861 = vpop.f32.mrb[0].mxu0
        %v2862 = vadd.f32 0.0, %v2861
        %v2863 = vpop.f32.mrb[0].mxu0
        %2864 = vmatprep.mubr.bf16.mxu0 %v1587
        %2865 = vmatmul.mubr.bf16.gmra.mrb[0].mxu0 %v1586
        %v2866 = vpop.f32.mrb[0].mxu0
        %v2867 = vadd.f32 0.0, %v2866
        %v2868 = vpop.f32.mrb[0].mxu0
        %v2869 = vpop.f32.mrb[0].mxu0
        %v2870 = vadd.f32 0.0, %v2869
        %v2871 = vpop.f32.mrb[0].mxu0
        %2872 = vmatprep.mubr.bf16.mxu0 %v1589
        %2873 = vmatmul.mubr.bf16.gmra.mrb[0].mxu0 %v1588
        %v2874 = vpop.f32.mrb[0].mxu0
        %v2875 = vadd.f32 0.0, %v2874
        %v2876 = vpop.f32.mrb[0].mxu0
        %v2877 = vpop.f32.mrb[0].mxu0
        %v2878 = vadd.f32 0.0, %v2877
        %v2879 = vpop.f32.mrb[0].mxu0
        %2880 = vmatprep.mubr.bf16.mxu0 %v1591
        %2881 = vmatmul.mubr.bf16.gmra.mrb[0].mxu0 %v1590
        %v2882 = vpop.f32.mrb[0].mxu0
        %v2883 = vadd.f32 0.0, %v2882
        %v2884 = vpop.f32.mrb[0].mxu0
        %v2885 = vpop.f32.mrb[0].mxu0
        %v2886 = vadd.f32 0.0, %v2885
        %v2887 = vpop.f32.mrb[0].mxu0
        %2888 = vmatprep.mubr.bf16.mxu0 %v1593
        %2889 = vmatmul.mubr.bf16.gmra.mrb[0].mxu0 %v1592
        %v2890 = vpop.f32.mrb[0].mxu0
        %v2891 = vadd.f32 0.0, %v2890
        %v2892 = vpop.f32.mrb[0].mxu0
        %v2893 = vpop.f32.mrb[0].mxu0
        %v2894 = vadd.f32 0.0, %v2893
        %v2895 = vpop.f32.mrb[0].mxu0
        %2896 = vdwg.mxu0
        %v2897 = vmax.f32 %v2771, %v2803
        %v2898 = vmax.f32 %v2774, %v2806
        %v2899 = vmax.f32 %v2779, %v2811
        %v2900 = vmax.f32 %v2782, %v2814
        %v2901 = vmax.f32 %v2787, %v2819
        %v2902 = vmax.f32 %v2790, %v2822
        %v2903 = vmax.f32 %v2795, %v2827
        %v2904 = vmax.f32 %v2798, %v2830
        %v2905 = vmax.f32 %v2835, %v2867
        %v2906 = vmax.f32 %v2838, %v2870
        %v2907 = vmax.f32 %v2843, %v2875
        %v2908 = vmax.f32 %v2846, %v2878
        %v2909 = vmax.f32 %v2851, %v2883
        %v2910 = vmax.f32 %v2854, %v2886
        %v2911 = vmax.f32 %v2859, %v2891
        %v2912 = vmax.f32 %v2862, %v2894
        %v2913 = vmax.f32 %v2897, %v2905
        %v2914 = vmax.f32 %v2898, %v2906
        %v2915 = vmax.f32 %v2899, %v2907
        %v2916 = vmax.f32 %v2900, %v2908
        %v2917 = vmax.f32 %v2901, %v2909
        %v2918 = vmax.f32 %v2902, %v2910
        %v2919 = vmax.f32 %v2903, %v2911
        %v2920 = vmax.f32 %v2904, %v2912
        %s2921 = scalar_lea.vmem %s523, 384
        %v2922 = vld [vmem:[%s2921] sm:$0xf]
        %v2923 = vld [vmem:[%s2921 + $0x4] sm:$0xf]
        %v2924 = vld [vmem:[%s2921 + $0x8] sm:$0xf]
        %v2925 = vld [vmem:[%s2921 + $0xc] sm:$0xf]
        %v2926 = vld [vmem:[%s2921 + $0x10] sm:$0xf]
        %v2927 = vld [vmem:[%s2921 + $0x14] sm:$0xf]
        %v2928 = vld [vmem:[%s2921 + $0x18] sm:$0xf]
        %v2929 = vld [vmem:[%s2921 + $0x1c] sm:$0xf]
        %v2930 = vld [vmem:[%s2921 + $0x20] sm:$0xf]
        %v2931 = vld [vmem:[%s2921 + $0x24] sm:$0xf]
        %v2932 = vld [vmem:[%s2921 + $0x28] sm:$0xf]
        %v2933 = vld [vmem:[%s2921 + $0x2c] sm:$0xf]
        %v2934 = vld [vmem:[%s2921 + $0x30] sm:$0xf]
        %v2935 = vld [vmem:[%s2921 + $0x34] sm:$0xf]
        %v2936 = vld [vmem:[%s2921 + $0x38] sm:$0xf]
        %v2937 = vld [vmem:[%s2921 + $0x3c] sm:$0xf]
        %v2938 = vld [vmem:[%s2921 + $0x40] sm:$0xf]
        %v2939 = vld [vmem:[%s2921 + $0x44] sm:$0xf]
        %v2940 = vld [vmem:[%s2921 + $0x48] sm:$0xf]
        %v2941 = vld [vmem:[%s2921 + $0x4c] sm:$0xf]
        %v2942 = vld [vmem:[%s2921 + $0x50] sm:$0xf]
        %v2943 = vld [vmem:[%s2921 + $0x54] sm:$0xf]
        %v2944 = vld [vmem:[%s2921 + $0x58] sm:$0xf]
        %v2945 = vld [vmem:[%s2921 + $0x5c] sm:$0xf]
        %v2946 = vld [vmem:[%s2921 + $0x60] sm:$0xf]
        %v2947 = vld [vmem:[%s2921 + $0x64] sm:$0xf]
        %v2948 = vld [vmem:[%s2921 + $0x68] sm:$0xf]
        %v2949 = vld [vmem:[%s2921 + $0x6c] sm:$0xf]
        %v2950 = vld [vmem:[%s2921 + $0x70] sm:$0xf]
        %v2951 = vld [vmem:[%s2921 + $0x74] sm:$0xf]
        %v2952 = vld [vmem:[%s2921 + $0x78] sm:$0xf]
        %v2953 = vld [vmem:[%s2921 + $0x7c] sm:$0xf]
        %v2986 = vunpack.c.l.b16 %v2922
        %v2987 = vunpack.c.l.b16 %v2923
        %v2988 = vunpack.c.l.b16 %v2924
        %v2989 = vunpack.c.l.b16 %v2925
        %v2990 = vunpack.c.l.b16 %v2926
        %v2991 = vunpack.c.l.b16 %v2927
        %v2992 = vunpack.c.l.b16 %v2928
        %v2993 = vunpack.c.l.b16 %v2929
        %v2994 = vunpack.c.l.b16 %v2930
        %v2995 = vunpack.c.l.b16 %v2931
        %v2996 = vunpack.c.l.b16 %v2932
        %v2997 = vunpack.c.l.b16 %v2933
        %v2998 = vunpack.c.l.b16 %v2934
        %v2999 = vunpack.c.l.b16 %v2935
        %v3000 = vunpack.c.l.b16 %v2936
        %v3001 = vunpack.c.l.b16 %v2937
        %v3002 = vunpack.c.l.b16 %v2938
        %v3003 = vunpack.c.l.b16 %v2939
        %v3004 = vunpack.c.l.b16 %v2940
        %v3005 = vunpack.c.l.b16 %v2941
        %v3006 = vunpack.c.l.b16 %v2942
        %v3007 = vunpack.c.l.b16 %v2943
        %v3008 = vunpack.c.l.b16 %v2944
        %v3009 = vunpack.c.l.b16 %v2945
        %v3010 = vunpack.c.l.b16 %v2946
        %v3011 = vunpack.c.l.b16 %v2947
        %v3012 = vunpack.c.l.b16 %v2948
        %v3013 = vunpack.c.l.b16 %v2949
        %v3014 = vunpack.c.l.b16 %v2950
        %v3015 = vunpack.c.l.b16 %v2951
        %v3016 = vunpack.c.l.b16 %v2952
        %v3017 = vunpack.c.l.b16 %v2953
        %v3018 = vpack.c.b16 %v2987, %v2986
        %v3019 = vpack.c.b16 %v2989, %v2988
        %v3020 = vpack.c.b16 %v2991, %v2990
        %v3021 = vpack.c.b16 %v2993, %v2992
        %v3022 = vpack.c.b16 %v2995, %v2994
        %v3023 = vpack.c.b16 %v2997, %v2996
        %v3024 = vpack.c.b16 %v2999, %v2998
        %v3025 = vpack.c.b16 %v3001, %v3000
        %v3026 = vpack.c.b16 %v3003, %v3002
        %v3027 = vpack.c.b16 %v3005, %v3004
        %v3028 = vpack.c.b16 %v3007, %v3006
        %v3029 = vpack.c.b16 %v3009, %v3008
        %v3030 = vpack.c.b16 %v3011, %v3010
        %v3031 = vpack.c.b16 %v3013, %v3012
        %v3032 = vpack.c.b16 %v3015, %v3014
        %v3033 = vpack.c.b16 %v3017, %v3016
        %v3035 = vsel %vm544, %v3018, 0
        %v3038 = vsel %vm544, %v3019, 0
        %v3041 = vsel %vm544, %v3020, 0
        %v3044 = vsel %vm544, %v3021, 0
        %v3047 = vsel %vm544, %v3022, 0
        %v3050 = vsel %vm544, %v3023, 0
        %v3053 = vsel %vm544, %v3024, 0
        %v3056 = vsel %vm544, %v3025, 0
        %v3059 = vsel %vm544, %v3026, 0
        %v3062 = vsel %vm544, %v3027, 0
        %v3065 = vsel %vm544, %v3028, 0
        %v3068 = vsel %vm544, %v3029, 0
        %v3071 = vsel %vm544, %v3030, 0
        %v3074 = vsel %vm544, %v3031, 0
        %v3077 = vsel %vm544, %v3032, 0
        %v3080 = vsel %vm544, %v3033, 0
        %3082 = vmatprep.subr.bf16.mxu0 0
        %3083 = vmatpush1.bf16.msra.mxu0 %v1173
        %3084 = vmatprep.subr.bf16.mxu0 0
        %3085 = vmatpush1.bf16.msra.mxu0 %v1174
        %3086 = vmatprep.subr.bf16.mxu0 0
        %3087 = vmatpush1.bf16.msra.mxu0 0
        %3088 = vmatprep.subr.bf16.mxu0 0
        %3089 = vmatpush1.bf16.msra.mxu0 0
        %3090 = vmatprep.subr.bf16.mxu0 0
        %3091 = vmatpush1.bf16.msra.mxu0 0
        %3092 = vmatprep.subr.bf16.mxu0 0
        %3093 = vmatpush1.bf16.msra.mxu0 0
        %3094 = vmatprep.subr.bf16.mxu0 0
        %3095 = vmatpush1.bf16.msra.mxu0 0
        %3096 = vmatprep.subr.bf16.mxu0 0
        %3097 = vmatpush1.bf16.msra.mxu0 0
        %3098 = vmatprep.subr.bf16.mxu0 0
        %3099 = vmatpush1.bf16.msra.mxu0 0
        %3100 = vmatprep.subr.bf16.mxu0 0
        %3101 = vmatpush1.bf16.msra.mxu0 0
        %3102 = vmatprep.subr.bf16.mxu0 0
        %3103 = vmatpush1.bf16.msra.mxu0 0
        %3104 = vmatprep.subr.bf16.mxu0 0
        %3105 = vmatpush1.bf16.msra.mxu0 0
        %3106 = vmatprep.subr.bf16.mxu0 0
        %3107 = vmatpush1.bf16.msra.mxu0 0
        %3108 = vmatprep.subr.bf16.mxu0 0
        %3109 = vmatpush1.bf16.msra.mxu0 0
        %3110 = vmatprep.subr.bf16.mxu0 0
        %3111 = vmatpush1.bf16.msra.mxu0 0
        %3112 = vmatprep.subr.bf16.mxu0 0
        %3113 = vmatpush1.bf16.msra.mxu0 0
        %3114 = vmatprep.mubr.bf16.mxu0 0
        %3115 = vmatmul.mubr.bf16.gmra.mrb[0].mxu0 %v3035
        %v3116 = vpop.f32.mrb[0].mxu0
        %v3117 = vadd.f32 %v1083, %v3116
        %v3118 = vpop.f32.mrb[0].mxu0
        %v3119 = vpop.f32.mrb[0].mxu0
        %v3120 = vadd.f32 %v1083, %v3119
        %v3121 = vpop.f32.mrb[0].mxu0
        %3122 = vmatprep.mubr.bf16.mxu0 0
        %3123 = vmatmul.mubr.bf16.gmra.mrb[0].mxu0 %v3038
        %v3124 = vpop.f32.mrb[0].mxu0
        %v3125 = vadd.f32 %v1083, %v3124
        %v3126 = vpop.f32.mrb[0].mxu0
        %v3127 = vpop.f32.mrb[0].mxu0
        %v3128 = vadd.f32 %v1083, %v3127
        %v3129 = vpop.f32.mrb[0].mxu0
        %3130 = vmatprep.mubr.bf16.mxu0 0
        %3131 = vmatmul.mubr.bf16.gmra.mrb[0].mxu0 %v3041
        %v3132 = vpop.f32.mrb[0].mxu0
        %v3133 = vadd.f32 %v1083, %v3132
        %v3134 = vpop.f32.mrb[0].mxu0
        %v3135 = vpop.f32.mrb[0].mxu0
        %v3136 = vadd.f32 %v1083, %v3135
        %v3137 = vpop.f32.mrb[0].mxu0
        %3138 = vmatprep.mubr.bf16.mxu0 0
        %3139 = vmatmul.mubr.bf16.gmra.mrb[0].mxu0 %v3044
        %v3140 = vpop.f32.mrb[0].mxu0
        %v3141 = vadd.f32 %v1083, %v3140
        %v3142 = vpop.f32.mrb[0].mxu0
        %v3143 = vpop.f32.mrb[0].mxu0
        %v3144 = vadd.f32 %v1083, %v3143
        %v3145 = vpop.f32.mrb[0].mxu0
        %3146 = vmatprep.mubr.bf16.mxu0 0
        %3147 = vmatmul.mubr.bf16.gmra.mrb[0].mxu0 %v3047
        %v3148 = vpop.f32.mrb[0].mxu0
        %v3149 = vadd.f32 %v1083, %v3148
        %v3150 = vpop.f32.mrb[0].mxu0
        %v3151 = vpop.f32.mrb[0].mxu0
        %v3152 = vadd.f32 %v1083, %v3151
        %v3153 = vpop.f32.mrb[0].mxu0
        %3154 = vmatprep.mubr.bf16.mxu0 0
        %3155 = vmatmul.mubr.bf16.gmra.mrb[0].mxu0 %v3050
        %v3156 = vpop.f32.mrb[0].mxu0
        %v3157 = vadd.f32 %v1083, %v3156
        %v3158 = vpop.f32.mrb[0].mxu0
        %v3159 = vpop.f32.mrb[0].mxu0
        %v3160 = vadd.f32 %v1083, %v3159
        %v3161 = vpop.f32.mrb[0].mxu0
        %3162 = vmatprep.mubr.bf16.mxu0 0
        %3163 = vmatmul.mubr.bf16.gmra.mrb[0].mxu0 %v3053
        %v3164 = vpop.f32.mrb[0].mxu0
        %v3165 = vadd.f32 %v1083, %v3164
        %v3166 = vpop.f32.mrb[0].mxu0
        %v3167 = vpop.f32.mrb[0].mxu0
        %v3168 = vadd.f32 %v1083, %v3167
        %v3169 = vpop.f32.mrb[0].mxu0
        %3170 = vmatprep.mubr.bf16.mxu0 0
        %3171 = vmatmul.mubr.bf16.gmra.mrb[0].mxu0 %v3056
        %v3172 = vpop.f32.mrb[0].mxu0
        %v3173 = vadd.f32 %v1083, %v3172
        %v3174 = vpop.f32.mrb[0].mxu0
        %v3175 = vpop.f32.mrb[0].mxu0
        %v3176 = vadd.f32 %v1083, %v3175
        %v3177 = vpop.f32.mrb[0].mxu0
        %3178 = vmatprep.mubr.bf16.mxu0 0
        %3179 = vmatmul.mubr.bf16.gmra.mrb[0].mxu0 %v3059
        %v3180 = vpop.f32.mrb[0].mxu0
        %v3181 = vadd.f32 %v1083, %v3180
        %v3182 = vpop.f32.mrb[0].mxu0
        %v3183 = vpop.f32.mrb[0].mxu0
        %v3184 = vadd.f32 %v1083, %v3183
        %v3185 = vpop.f32.mrb[0].mxu0
        %3186 = vmatprep.mubr.bf16.mxu0 0
        %3187 = vmatmul.mubr.bf16.gmra.mrb[0].mxu0 %v3062
        %v3188 = vpop.f32.mrb[0].mxu0
        %v3189 = vadd.f32 %v1083, %v3188
        %v3190 = vpop.f32.mrb[0].mxu0
        %v3191 = vpop.f32.mrb[0].mxu0
        %v3192 = vadd.f32 %v1083, %v3191
        %v3193 = vpop.f32.mrb[0].mxu0
        %3194 = vmatprep.mubr.bf16.mxu0 0
        %3195 = vmatmul.mubr.bf16.gmra.mrb[0].mxu0 %v3065
        %v3196 = vpop.f32.mrb[0].mxu0
        %v3197 = vadd.f32 %v1083, %v3196
        %v3198 = vpop.f32.mrb[0].mxu0
        %v3199 = vpop.f32.mrb[0].mxu0
        %v3200 = vadd.f32 %v1083, %v3199
        %v3201 = vpop.f32.mrb[0].mxu0
        %3202 = vmatprep.mubr.bf16.mxu0 0
        %3203 = vmatmul.mubr.bf16.gmra.mrb[0].mxu0 %v3068
        %v3204 = vpop.f32.mrb[0].mxu0
        %v3205 = vadd.f32 %v1083, %v3204
        %v3206 = vpop.f32.mrb[0].mxu0
        %v3207 = vpop.f32.mrb[0].mxu0
        %v3208 = vadd.f32 %v1083, %v3207
        %v3209 = vpop.f32.mrb[0].mxu0
        %3210 = vmatprep.mubr.bf16.mxu0 0
        %3211 = vmatmul.mubr.bf16.gmra.mrb[0].mxu0 %v3071
        %v3212 = vpop.f32.mrb[0].mxu0
        %v3213 = vadd.f32 %v1083, %v3212
        %v3214 = vpop.f32.mrb[0].mxu0
        %v3215 = vpop.f32.mrb[0].mxu0
        %v3216 = vadd.f32 %v1083, %v3215
        %v3217 = vpop.f32.mrb[0].mxu0
        %3218 = vmatprep.mubr.bf16.mxu0 0
        %3219 = vmatmul.mubr.bf16.gmra.mrb[0].mxu0 %v3074
        %v3220 = vpop.f32.mrb[0].mxu0
        %v3221 = vadd.f32 %v1083, %v3220
        %v3222 = vpop.f32.mrb[0].mxu0
        %v3223 = vpop.f32.mrb[0].mxu0
        %v3224 = vadd.f32 %v1083, %v3223
        %v3225 = vpop.f32.mrb[0].mxu0
        %3226 = vmatprep.mubr.bf16.mxu0 0
        %3227 = vmatmul.mubr.bf16.gmra.mrb[0].mxu0 %v3077
        %v3228 = vpop.f32.mrb[0].mxu0
        %v3229 = vadd.f32 %v1083, %v3228
        %v3230 = vpop.f32.mrb[0].mxu0
        %v3231 = vpop.f32.mrb[0].mxu0
        %v3232 = vadd.f32 %v1083, %v3231
        %v3233 = vpop.f32.mrb[0].mxu0
        %3234 = vmatprep.mubr.bf16.mxu0 0
        %3235 = vmatmul.mubr.bf16.gmra.mrb[0].mxu0 %v3080
        %v3236 = vpop.f32.mrb[0].mxu0
        %v3237 = vadd.f32 %v1083, %v3236
        %v3238 = vpop.f32.mrb[0].mxu0
        %v3239 = vpop.f32.mrb[0].mxu0
        %v3240 = vadd.f32 %v1083, %v3239
        %v3241 = vpop.f32.mrb[0].mxu0
        %3242 = vdwg.mxu0
        %v3243 = vmax.f32 %v3117, 0.0
        %v3244 = vmax.f32 %v3120, 0.0
        %v3245 = vmax.f32 %v3125, 0.0
        %v3246 = vmax.f32 %v3128, 0.0
        %v3247 = vmax.f32 %v3133, 0.0
        %v3248 = vmax.f32 %v3136, 0.0
        %v3249 = vmax.f32 %v3141, 0.0
        %v3250 = vmax.f32 %v3144, 0.0
        %v3251 = vmax.f32 %v3149, 0.0
        %v3252 = vmax.f32 %v3152, 0.0
        %v3253 = vmax.f32 %v3157, 0.0
        %v3254 = vmax.f32 %v3160, 0.0
        %v3255 = vmax.f32 %v3165, 0.0
        %v3256 = vmax.f32 %v3168, 0.0
        %v3257 = vmax.f32 %v3173, 0.0
        %v3258 = vmax.f32 %v3176, 0.0
        %v3259 = vmax.f32 %v3181, 0.0
        %v3260 = vmax.f32 %v3184, 0.0
        %v3261 = vmax.f32 %v3189, 0.0
        %v3262 = vmax.f32 %v3192, 0.0
        %v3263 = vmax.f32 %v3197, 0.0
        %v3264 = vmax.f32 %v3200, 0.0
        %v3265 = vmax.f32 %v3205, 0.0
        %v3266 = vmax.f32 %v3208, 0.0
        %v3267 = vmax.f32 %v3213, 0.0
        %v3268 = vmax.f32 %v3216, 0.0
        %v3269 = vmax.f32 %v3221, 0.0
        %v3270 = vmax.f32 %v3224, 0.0
        %v3271 = vmax.f32 %v3229, 0.0
        %v3272 = vmax.f32 %v3232, 0.0
        %v3273 = vmax.f32 %v3237, 0.0
        %v3274 = vmax.f32 %v3240, 0.0
        %v3275 = vpack.c.bf16 %v3244, %v3243
        %v3276 = vpack.c.bf16 %v3246, %v3245
        %v3277 = vpack.c.bf16 %v3248, %v3247
        %v3278 = vpack.c.bf16 %v3250, %v3249
        %v3279 = vpack.c.bf16 %v3252, %v3251
        %v3280 = vpack.c.bf16 %v3254, %v3253
        %v3281 = vpack.c.bf16 %v3256, %v3255
        %v3282 = vpack.c.bf16 %v3258, %v3257
        %v3283 = vpack.c.bf16 %v3260, %v3259
        %v3284 = vpack.c.bf16 %v3262, %v3261
        %v3285 = vpack.c.bf16 %v3264, %v3263
        %v3286 = vpack.c.bf16 %v3266, %v3265
        %v3287 = vpack.c.bf16 %v3268, %v3267
        %v3288 = vpack.c.bf16 %v3270, %v3269
        %v3289 = vpack.c.bf16 %v3272, %v3271
        %v3290 = vpack.c.bf16 %v3274, %v3273
        %3291 = vmatprep.subr.bf16.mxu0 0
        %3292 = vmatpush1.bf16.msra.mxu0 %v3275
        %3293 = vmatprep.subr.bf16.mxu0 0
        %3294 = vmatpush1.bf16.msra.mxu0 %v3276
        %3295 = vmatprep.subr.bf16.mxu0 0
        %3296 = vmatpush1.bf16.msra.mxu0 %v3277
        %3297 = vmatprep.subr.bf16.mxu0 0
        %3298 = vmatpush1.bf16.msra.mxu0 %v3278
        %3299 = vmatprep.subr.bf16.mxu0 0
        %3300 = vmatpush1.bf16.msra.mxu0 %v3279
        %3301 = vmatprep.subr.bf16.mxu0 0
        %3302 = vmatpush1.bf16.msra.mxu0 %v3280
        %3303 = vmatprep.subr.bf16.mxu0 0
        %3304 = vmatpush1.bf16.msra.mxu0 %v3281
        %3305 = vmatprep.subr.bf16.mxu0 0
        %3306 = vmatpush1.bf16.msra.mxu0 %v3282
        %3307 = vmatprep.subr.bf16.mxu0 0
        %3308 = vmatpush1.bf16.msra.mxu0 %v3283
        %3309 = vmatprep.subr.bf16.mxu0 0
        %3310 = vmatpush1.bf16.msra.mxu0 %v3284
        %3311 = vmatprep.subr.bf16.mxu0 0
        %3312 = vmatpush1.bf16.msra.mxu0 %v3285
        %3313 = vmatprep.subr.bf16.mxu0 0
        %3314 = vmatpush1.bf16.msra.mxu0 %v3286
        %3315 = vmatprep.subr.bf16.mxu0 0
        %3316 = vmatpush1.bf16.msra.mxu0 %v3287
        %3317 = vmatprep.subr.bf16.mxu0 0
        %3318 = vmatpush1.bf16.msra.mxu0 %v3288
        %3319 = vmatprep.subr.bf16.mxu0 0
        %3320 = vmatpush1.bf16.msra.mxu0 %v3289
        %3321 = vmatprep.subr.bf16.mxu0 0
        %3322 = vmatpush1.bf16.msra.mxu0 %v3290
        %3323 = vmatprep.mubr.bf16.mxu0 %v1563
        %3324 = vmatmul.mubr.bf16.gmra.mrb[0].mxu0 %v1562
        %v3325 = vpop.f32.mrb[0].mxu0
        %v3326 = vadd.f32 0.0, %v3325
        %v3327 = vpop.f32.mrb[0].mxu0
        %v3328 = vpop.f32.mrb[0].mxu0
        %v3329 = vadd.f32 0.0, %v3328
        %v3330 = vpop.f32.mrb[0].mxu0
        %3331 = vmatprep.mubr.bf16.mxu0 %v1565
        %3332 = vmatmul.mubr.bf16.gmra.mrb[0].mxu0 %v1564
        %v3333 = vpop.f32.mrb[0].mxu0
        %v3334 = vadd.f32 0.0, %v3333
        %v3335 = vpop.f32.mrb[0].mxu0
        %v3336 = vpop.f32.mrb[0].mxu0
        %v3337 = vadd.f32 0.0, %v3336
        %v3338 = vpop.f32.mrb[0].mxu0
        %3339 = vmatprep.mubr.bf16.mxu0 %v1567
        %3340 = vmatmul.mubr.bf16.gmra.mrb[0].mxu0 %v1566
        %v3341 = vpop.f32.mrb[0].mxu0
        %v3342 = vadd.f32 0.0, %v3341
        %v3343 = vpop.f32.mrb[0].mxu0
        %v3344 = vpop.f32.mrb[0].mxu0
        %v3345 = vadd.f32 0.0, %v3344
        %v3346 = vpop.f32.mrb[0].mxu0
        %3347 = vmatprep.mubr.bf16.mxu0 %v1569
        %3348 = vmatmul.mubr.bf16.gmra.mrb[0].mxu0 %v1568
        %v3349 = vpop.f32.mrb[0].mxu0
        %v3350 = vadd.f32 0.0, %v3349
        %v3351 = vpop.f32.mrb[0].mxu0
        %v3352 = vpop.f32.mrb[0].mxu0
        %v3353 = vadd.f32 0.0, %v3352
        %v3354 = vpop.f32.mrb[0].mxu0
        %3355 = vmatprep.mubr.bf16.mxu0 %v1571
        %3356 = vmatmul.mubr.bf16.gmra.mrb[0].mxu0 %v1570
        %v3357 = vpop.f32.mrb[0].mxu0
        %v3358 = vadd.f32 0.0, %v3357
        %v3359 = vpop.f32.mrb[0].mxu0
        %v3360 = vpop.f32.mrb[0].mxu0
        %v3361 = vadd.f32 0.0, %v3360
        %v3362 = vpop.f32.mrb[0].mxu0
        %3363 = vmatprep.mubr.bf16.mxu0 %v1573
        %3364 = vmatmul.mubr.bf16.gmra.mrb[0].mxu0 %v1572
        %v3365 = vpop.f32.mrb[0].mxu0
        %v3366 = vadd.f32 0.0, %v3365
        %v3367 = vpop.f32.mrb[0].mxu0
        %v3368 = vpop.f32.mrb[0].mxu0
        %v3369 = vadd.f32 0.0, %v3368
        %v3370 = vpop.f32.mrb[0].mxu0
        %3371 = vmatprep.mubr.bf16.mxu0 %v1575
        %3372 = vmatmul.mubr.bf16.gmra.mrb[0].mxu0 %v1574
        %v3373 = vpop.f32.mrb[0].mxu0
        %v3374 = vadd.f32 0.0, %v3373
        %v3375 = vpop.f32.mrb[0].mxu0
        %v3376 = vpop.f32.mrb[0].mxu0
        %v3377 = vadd.f32 0.0, %v3376
        %v3378 = vpop.f32.mrb[0].mxu0
        %3379 = vmatprep.mubr.bf16.mxu0 %v1577
        %3380 = vmatmul.mubr.bf16.gmra.mrb[0].mxu0 %v1576
        %v3381 = vpop.f32.mrb[0].mxu0
        %v3382 = vadd.f32 0.0, %v3381
        %v3383 = vpop.f32.mrb[0].mxu0
        %v3384 = vpop.f32.mrb[0].mxu0
        %v3385 = vadd.f32 0.0, %v3384
        %v3386 = vpop.f32.mrb[0].mxu0
        %3387 = vmatprep.mubr.bf16.mxu0 %v1579
        %3388 = vmatmul.mubr.bf16.gmra.mrb[0].mxu0 %v1578
        %v3389 = vpop.f32.mrb[0].mxu0
        %v3390 = vadd.f32 0.0, %v3389
        %v3391 = vpop.f32.mrb[0].mxu0
        %v3392 = vpop.f32.mrb[0].mxu0
        %v3393 = vadd.f32 0.0, %v3392
        %v3394 = vpop.f32.mrb[0].mxu0
        %3395 = vmatprep.mubr.bf16.mxu0 %v1581
        %3396 = vmatmul.mubr.bf16.gmra.mrb[0].mxu0 %v1580
        %v3397 = vpop.f32.mrb[0].mxu0
        %v3398 = vadd.f32 0.0, %v3397
        %v3399 = vpop.f32.mrb[0].mxu0
        %v3400 = vpop.f32.mrb[0].mxu0
        %v3401 = vadd.f32 0.0, %v3400
        %v3402 = vpop.f32.mrb[0].mxu0
        %3403 = vmatprep.mubr.bf16.mxu0 %v1583
        %3404 = vmatmul.mubr.bf16.gmra.mrb[0].mxu0 %v1582
        %v3405 = vpop.f32.mrb[0].mxu0
        %v3406 = vadd.f32 0.0, %v3405
        %v3407 = vpop.f32.mrb[0].mxu0
        %v3408 = vpop.f32.mrb[0].mxu0
        %v3409 = vadd.f32 0.0, %v3408
        %v3410 = vpop.f32.mrb[0].mxu0
        %3411 = vmatprep.mubr.bf16.mxu0 %v1585
        %3412 = vmatmul.mubr.bf16.gmra.mrb[0].mxu0 %v1584
        %v3413 = vpop.f32.mrb[0].mxu0
        %v3414 = vadd.f32 0.0, %v3413
        %v3415 = vpop.f32.mrb[0].mxu0
        %v3416 = vpop.f32.mrb[0].mxu0
        %v3417 = vadd.f32 0.0, %v3416
        %v3418 = vpop.f32.mrb[0].mxu0
        %3419 = vmatprep.mubr.bf16.mxu0 %v1587
        %3420 = vmatmul.mubr.bf16.gmra.mrb[0].mxu0 %v1586
        %v3421 = vpop.f32.mrb[0].mxu0
        %v3422 = vadd.f32 0.0, %v3421
        %v3423 = vpop.f32.mrb[0].mxu0
        %v3424 = vpop.f32.mrb[0].mxu0
        %v3425 = vadd.f32 0.0, %v3424
        %v3426 = vpop.f32.mrb[0].mxu0
        %3427 = vmatprep.mubr.bf16.mxu0 %v1589
        %3428 = vmatmul.mubr.bf16.gmra.mrb[0].mxu0 %v1588
        %v3429 = vpop.f32.mrb[0].mxu0
        %v3430 = vadd.f32 0.0, %v3429
        %v3431 = vpop.f32.mrb[0].mxu0
        %v3432 = vpop.f32.mrb[0].mxu0
        %v3433 = vadd.f32 0.0, %v3432
        %v3434 = vpop.f32.mrb[0].mxu0
        %3435 = vmatprep.mubr.bf16.mxu0 %v1591
        %3436 = vmatmul.mubr.bf16.gmra.mrb[0].mxu0 %v1590
        %v3437 = vpop.f32.mrb[0].mxu0
        %v3438 = vadd.f32 0.0, %v3437
        %v3439 = vpop.f32.mrb[0].mxu0
        %v3440 = vpop.f32.mrb[0].mxu0
        %v3441 = vadd.f32 0.0, %v3440
        %v3442 = vpop.f32.mrb[0].mxu0
        %3443 = vmatprep.mubr.bf16.mxu0 %v1593
        %3444 = vmatmul.mubr.bf16.gmra.mrb[0].mxu0 %v1592
        %v3445 = vpop.f32.mrb[0].mxu0
        %v3446 = vadd.f32 0.0, %v3445
        %v3447 = vpop.f32.mrb[0].mxu0
        %v3448 = vpop.f32.mrb[0].mxu0
        %v3449 = vadd.f32 0.0, %v3448
        %v3450 = vpop.f32.mrb[0].mxu0
        %3451 = vdwg.mxu0
        %v3452 = vmax.f32 %v3326, %v3358
        %v3453 = vmax.f32 %v3329, %v3361
        %v3454 = vmax.f32 %v3334, %v3366
        %v3455 = vmax.f32 %v3337, %v3369
        %v3456 = vmax.f32 %v3342, %v3374
        %v3457 = vmax.f32 %v3345, %v3377
        %v3458 = vmax.f32 %v3350, %v3382
        %v3459 = vmax.f32 %v3353, %v3385
        %v3460 = vmax.f32 %v3390, %v3422
        %v3461 = vmax.f32 %v3393, %v3425
        %v3462 = vmax.f32 %v3398, %v3430
        %v3463 = vmax.f32 %v3401, %v3433
        %v3464 = vmax.f32 %v3406, %v3438
        %v3465 = vmax.f32 %v3409, %v3441
        %v3466 = vmax.f32 %v3414, %v3446
        %v3467 = vmax.f32 %v3417, %v3449
        %v3468 = vmax.f32 %v3452, %v3460
        %v3469 = vmax.f32 %v3453, %v3461
        %v3470 = vmax.f32 %v3454, %v3462
        %v3471 = vmax.f32 %v3455, %v3463
        %v3472 = vmax.f32 %v3456, %v3464
        %v3473 = vmax.f32 %v3457, %v3465
        %v3474 = vmax.f32 %v3458, %v3466
        %v3475 = vmax.f32 %v3459, %v3467
        %v3476 = vpack.c.bf16 %v1804, %v1803
        %v3477 = vpack.c.bf16 %v1806, %v1805
        %v3478 = vpack.c.bf16 %v1808, %v1807
        %v3479 = vpack.c.bf16 %v1810, %v1809
        %v3480 = vpack.c.bf16 %v2359, %v2358
        %v3481 = vpack.c.bf16 %v2361, %v2360
        %v3482 = vpack.c.bf16 %v2363, %v2362
        %v3483 = vpack.c.bf16 %v2365, %v2364
        %v3484 = vpack.c.bf16 %v2914, %v2913
        %v3485 = vpack.c.bf16 %v2916, %v2915
        %v3486 = vpack.c.bf16 %v2918, %v2917
        %v3487 = vpack.c.bf16 %v2920, %v2919
        %v3488 = vpack.c.bf16 %v3469, %v3468
        %v3489 = vpack.c.bf16 %v3471, %v3470
        %v3490 = vpack.c.bf16 %v3473, %v3472
        %v3491 = vpack.c.bf16 %v3475, %v3474
        %v3492 = vld [vmem:[%s4] sm:$0xf]
        %v3493 = vld [vmem:[%s4 + $0x4] sm:$0xf]
        %v3494 = vld [vmem:[%s4 + $0x8] sm:$0xf]
        %v3495 = vld [vmem:[%s4 + $0xc] sm:$0xf]
        %v3496 = vld [vmem:[%s4 + $0x10] sm:$0xf]
        %v3497 = vld [vmem:[%s4 + $0x14] sm:$0xf]
        %v3498 = vld [vmem:[%s4 + $0x18] sm:$0xf]
        %v3499 = vld [vmem:[%s4 + $0x1c] sm:$0xf]
        %v3500 = vld [vmem:[%s4 + $0x20] sm:$0xf]
        %v3501 = vld [vmem:[%s4 + $0x24] sm:$0xf]
        %v3502 = vld [vmem:[%s4 + $0x28] sm:$0xf]
        %v3503 = vld [vmem:[%s4 + $0x2c] sm:$0xf]
        %v3504 = vld [vmem:[%s5] sm:$0x1]
        %v3506 = vlaneseq
        %v3507 = vshrl.u32 %v3506, 7
        %v3508 = vsub.s32 0, %v3507
        %v3509 = vrot.slane %v3504, %v3508
        %v3523 = vunpack.c.l.b16 %v3492
        %v3524 = vunpack.c.l.b16 %v3493
        %v3525 = vunpack.c.l.b16 %v3494
        %v3526 = vunpack.c.l.b16 %v3495
        %v3527 = vunpack.c.l.b16 %v3496
        %v3528 = vunpack.c.l.b16 %v3497
        %v3529 = vunpack.c.l.b16 %v3498
        %v3530 = vunpack.c.l.b16 %v3499
        %v3531 = vunpack.c.l.b16 %v3500
        %v3532 = vunpack.c.l.b16 %v3501
        %v3533 = vunpack.c.l.b16 %v3502
        %v3534 = vunpack.c.l.b16 %v3503
        %v3535 = vpack.c.b16 %v3524, %v3523
        %v3536 = vpack.c.b16 %v3526, %v3525
        %v3537 = vpack.c.b16 %v3528, %v3527
        %v3538 = vpack.c.b16 %v3530, %v3529
        %v3539 = vpack.c.b16 %v3532, %v3531
        %v3540 = vpack.c.b16 %v3534, %v3533
        %vm3547 = vcmask 785408
        %v3549 = vsel %vm3547, %v3476, 0
        %v3552 = vsel %vm3547, %v3477, 0
        %v3555 = vsel %vm3547, %v3478, 0
        %v3558 = vsel %vm3547, %v3479, 0
        %v3561 = vsel %vm3547, %v3480, 0
        %v3564 = vsel %vm3547, %v3481, 0
        %v3567 = vsel %vm3547, %v3482, 0
        %v3570 = vsel %vm3547, %v3483, 0
        %v3573 = vsel %vm3547, %v3484, 0
        %v3576 = vsel %vm3547, %v3485, 0
        %v3579 = vsel %vm3547, %v3486, 0
        %v3582 = vsel %vm3547, %v3487, 0
        %v3585 = vsel %vm3547, %v3488, 0
        %v3588 = vsel %vm3547, %v3489, 0
        %v3591 = vsel %vm3547, %v3490, 0
        %v3594 = vsel %vm3547, %v3491, 0
        %3596 = vmatprep.subr.bf16.mxu0 0
        %3597 = vmatpush1.bf16.msra.mxu0 %v3535
        %3598 = vmatprep.subr.bf16.mxu0 0
        %3599 = vmatpush1.bf16.msra.mxu0 %v3536
        %3600 = vmatprep.subr.bf16.mxu0 0
        %3601 = vmatpush1.bf16.msra.mxu0 %v3537
        %3602 = vmatprep.subr.bf16.mxu0 0
        %3603 = vmatpush1.bf16.msra.mxu0 %v3538
        %3604 = vmatprep.subr.bf16.mxu0 0
        %3605 = vmatpush1.bf16.msra.mxu0 %v3539
        %3606 = vmatprep.subr.bf16.mxu0 0
        %3607 = vmatpush1.bf16.msra.mxu0 %v3540
        %3608 = vmatprep.subr.bf16.mxu0 0
        %3609 = vmatpush1.bf16.msra.mxu0 0
        %3610 = vmatprep.subr.bf16.mxu0 0
        %3611 = vmatpush1.bf16.msra.mxu0 0
        %3612 = vmatprep.subr.bf16.mxu0 0
        %3613 = vmatpush1.bf16.msra.mxu0 0
        %3614 = vmatprep.subr.bf16.mxu0 0
        %3615 = vmatpush1.bf16.msra.mxu0 0
        %3616 = vmatprep.subr.bf16.mxu0 0
        %3617 = vmatpush1.bf16.msra.mxu0 0
        %3618 = vmatprep.subr.bf16.mxu0 0
        %3619 = vmatpush1.bf16.msra.mxu0 0
        %3620 = vmatprep.subr.bf16.mxu0 0
        %3621 = vmatpush1.bf16.msra.mxu0 0
        %3622 = vmatprep.subr.bf16.mxu0 0
        %3623 = vmatpush1.bf16.msra.mxu0 0
        %3624 = vmatprep.subr.bf16.mxu0 0
        %3625 = vmatpush1.bf16.msra.mxu0 0
        %3626 = vmatprep.subr.bf16.mxu0 0
        %3627 = vmatpush1.bf16.msra.mxu0 0
        %3628 = vmatprep.mubr.bf16.mxu0 0
        %3629 = vmatmul.mubr.bf16.gmra.mrb[0].mxu0 %v3549
        %v3630 = vpop.f32.mrb[0].mxu0
        %v3631 = vadd.f32 %v3509, %v3630
        %v3632 = vpop.f32.mrb[0].mxu0
        %v3633 = vpop.f32.mrb[0].mxu0
        %v3634 = vadd.f32 %v3509, %v3633
        %v3635 = vpop.f32.mrb[0].mxu0
        %3636 = vmatprep.mubr.bf16.mxu0 0
        %3637 = vmatmul.mubr.bf16.gmra.mrb[0].mxu0 %v3552
        %v3638 = vpop.f32.mrb[0].mxu0
        %v3639 = vadd.f32 %v3509, %v3638
        %v3640 = vpop.f32.mrb[0].mxu0
        %v3641 = vpop.f32.mrb[0].mxu0
        %v3642 = vadd.f32 %v3509, %v3641
        %v3643 = vpop.f32.mrb[0].mxu0
        %3644 = vmatprep.mubr.bf16.mxu0 0
        %3645 = vmatmul.mubr.bf16.gmra.mrb[0].mxu0 %v3555
        %v3646 = vpop.f32.mrb[0].mxu0
        %v3647 = vadd.f32 %v3509, %v3646
        %v3648 = vpop.f32.mrb[0].mxu0
        %v3649 = vpop.f32.mrb[0].mxu0
        %v3650 = vadd.f32 %v3509, %v3649
        %v3651 = vpop.f32.mrb[0].mxu0
        %3652 = vmatprep.mubr.bf16.mxu0 0
        %3653 = vmatmul.mubr.bf16.gmra.mrb[0].mxu0 %v3558
        %v3654 = vpop.f32.mrb[0].mxu0
        %v3655 = vadd.f32 %v3509, %v3654
        %v3656 = vpop.f32.mrb[0].mxu0
        %v3657 = vpop.f32.mrb[0].mxu0
        %v3658 = vadd.f32 %v3509, %v3657
        %v3659 = vpop.f32.mrb[0].mxu0
        %3660 = vmatprep.mubr.bf16.mxu0 0
        %3661 = vmatmul.mubr.bf16.gmra.mrb[0].mxu0 %v3561
        %v3662 = vpop.f32.mrb[0].mxu0
        %v3663 = vadd.f32 %v3509, %v3662
        %v3664 = vpop.f32.mrb[0].mxu0
        %v3665 = vpop.f32.mrb[0].mxu0
        %v3666 = vadd.f32 %v3509, %v3665
        %v3667 = vpop.f32.mrb[0].mxu0
        %3668 = vmatprep.mubr.bf16.mxu0 0
        %3669 = vmatmul.mubr.bf16.gmra.mrb[0].mxu0 %v3564
        %v3670 = vpop.f32.mrb[0].mxu0
        %v3671 = vadd.f32 %v3509, %v3670
        %v3672 = vpop.f32.mrb[0].mxu0
        %v3673 = vpop.f32.mrb[0].mxu0
        %v3674 = vadd.f32 %v3509, %v3673
        %v3675 = vpop.f32.mrb[0].mxu0
        %3676 = vmatprep.mubr.bf16.mxu0 0
        %3677 = vmatmul.mubr.bf16.gmra.mrb[0].mxu0 %v3567
        %v3678 = vpop.f32.mrb[0].mxu0
        %v3679 = vadd.f32 %v3509, %v3678
        %v3680 = vpop.f32.mrb[0].mxu0
        %v3681 = vpop.f32.mrb[0].mxu0
        %v3682 = vadd.f32 %v3509, %v3681
        %v3683 = vpop.f32.mrb[0].mxu0
        %3684 = vmatprep.mubr.bf16.mxu0 0
        %3685 = vmatmul.mubr.bf16.gmra.mrb[0].mxu0 %v3570
        %v3686 = vpop.f32.mrb[0].mxu0
        %v3687 = vadd.f32 %v3509, %v3686
        %v3688 = vpop.f32.mrb[0].mxu0
        %v3689 = vpop.f32.mrb[0].mxu0
        %v3690 = vadd.f32 %v3509, %v3689
        %v3691 = vpop.f32.mrb[0].mxu0
        %3692 = vmatprep.mubr.bf16.mxu0 0
        %3693 = vmatmul.mubr.bf16.gmra.mrb[0].mxu0 %v3573
        %v3694 = vpop.f32.mrb[0].mxu0
        %v3695 = vadd.f32 %v3509, %v3694
        %v3696 = vpop.f32.mrb[0].mxu0
        %v3697 = vpop.f32.mrb[0].mxu0
        %v3698 = vadd.f32 %v3509, %v3697
        %v3699 = vpop.f32.mrb[0].mxu0
        %3700 = vmatprep.mubr.bf16.mxu0 0
        %3701 = vmatmul.mubr.bf16.gmra.mrb[0].mxu0 %v3576
        %v3702 = vpop.f32.mrb[0].mxu0
        %v3703 = vadd.f32 %v3509, %v3702
        %v3704 = vpop.f32.mrb[0].mxu0
        %v3705 = vpop.f32.mrb[0].mxu0
        %v3706 = vadd.f32 %v3509, %v3705
        %v3707 = vpop.f32.mrb[0].mxu0
        %3708 = vmatprep.mubr.bf16.mxu0 0
        %3709 = vmatmul.mubr.bf16.gmra.mrb[0].mxu0 %v3579
        %v3710 = vpop.f32.mrb[0].mxu0
        %v3711 = vadd.f32 %v3509, %v3710
        %v3712 = vpop.f32.mrb[0].mxu0
        %v3713 = vpop.f32.mrb[0].mxu0
        %v3714 = vadd.f32 %v3509, %v3713
        %v3715 = vpop.f32.mrb[0].mxu0
        %3716 = vmatprep.mubr.bf16.mxu0 0
        %3717 = vmatmul.mubr.bf16.gmra.mrb[0].mxu0 %v3582
        %v3718 = vpop.f32.mrb[0].mxu0
        %v3719 = vadd.f32 %v3509, %v3718
        %v3720 = vpop.f32.mrb[0].mxu0
        %v3721 = vpop.f32.mrb[0].mxu0
        %v3722 = vadd.f32 %v3509, %v3721
        %v3723 = vpop.f32.mrb[0].mxu0
        %3724 = vmatprep.mubr.bf16.mxu0 0
        %3725 = vmatmul.mubr.bf16.gmra.mrb[0].mxu0 %v3585
        %v3726 = vpop.f32.mrb[0].mxu0
        %v3727 = vadd.f32 %v3509, %v3726
        %v3728 = vpop.f32.mrb[0].mxu0
        %v3729 = vpop.f32.mrb[0].mxu0
        %v3730 = vadd.f32 %v3509, %v3729
        %v3731 = vpop.f32.mrb[0].mxu0
        %3732 = vmatprep.mubr.bf16.mxu0 0
        %3733 = vmatmul.mubr.bf16.gmra.mrb[0].mxu0 %v3588
        %v3734 = vpop.f32.mrb[0].mxu0
        %v3735 = vadd.f32 %v3509, %v3734
        %v3736 = vpop.f32.mrb[0].mxu0
        %v3737 = vpop.f32.mrb[0].mxu0
        %v3738 = vadd.f32 %v3509, %v3737
        %v3739 = vpop.f32.mrb[0].mxu0
        %3740 = vmatprep.mubr.bf16.mxu0 0
        %3741 = vmatmul.mubr.bf16.gmra.mrb[0].mxu0 %v3591
        %v3742 = vpop.f32.mrb[0].mxu0
        %v3743 = vadd.f32 %v3509, %v3742
        %v3744 = vpop.f32.mrb[0].mxu0
        %v3745 = vpop.f32.mrb[0].mxu0
        %v3746 = vadd.f32 %v3509, %v3745
        %v3747 = vpop.f32.mrb[0].mxu0
        %3748 = vmatprep.mubr.bf16.mxu0 0
        %3749 = vmatmul.mubr.bf16.gmra.mrb[0].mxu0 %v3594
        %v3750 = vpop.f32.mrb[0].mxu0
        %v3751 = vadd.f32 %v3509, %v3750
        %v3752 = vpop.f32.mrb[0].mxu0
        %v3753 = vpop.f32.mrb[0].mxu0
        %v3754 = vadd.f32 %v3509, %v3753
        %v3755 = vpop.f32.mrb[0].mxu0
        %3756 = vdwg.mxu0
        %v3757 = vmax.f32 %v3631, 0.0
        %v3758 = vmax.f32 %v3634, 0.0
        %v3759 = vmax.f32 %v3639, 0.0
        %v3760 = vmax.f32 %v3642, 0.0
        %v3761 = vmax.f32 %v3647, 0.0
        %v3762 = vmax.f32 %v3650, 0.0
        %v3763 = vmax.f32 %v3655, 0.0
        %v3764 = vmax.f32 %v3658, 0.0
        %v3765 = vmax.f32 %v3663, 0.0
        %v3766 = vmax.f32 %v3666, 0.0
        %v3767 = vmax.f32 %v3671, 0.0
        %v3768 = vmax.f32 %v3674, 0.0
        %v3769 = vmax.f32 %v3679, 0.0
        %v3770 = vmax.f32 %v3682, 0.0
        %v3771 = vmax.f32 %v3687, 0.0
        %v3772 = vmax.f32 %v3690, 0.0
        %v3773 = vmax.f32 %v3695, 0.0
        %v3774 = vmax.f32 %v3698, 0.0
        %v3775 = vmax.f32 %v3703, 0.0
        %v3776 = vmax.f32 %v3706, 0.0
        %v3777 = vmax.f32 %v3711, 0.0
        %v3778 = vmax.f32 %v3714, 0.0
        %v3779 = vmax.f32 %v3719, 0.0
        %v3780 = vmax.f32 %v3722, 0.0
        %v3781 = vmax.f32 %v3727, 0.0
        %v3782 = vmax.f32 %v3730, 0.0
        %v3783 = vmax.f32 %v3735, 0.0
        %v3784 = vmax.f32 %v3738, 0.0
        %v3785 = vmax.f32 %v3743, 0.0
        %v3786 = vmax.f32 %v3746, 0.0
        %v3787 = vmax.f32 %v3751, 0.0
        %v3788 = vmax.f32 %v3754, 0.0
        %3789 = vst.msk [vmem:[#allocation2 + $0x10] sm:$0xff] %vm527, %v3757
        %3790 = vst.msk [vmem:[#allocation2 + $0x18] sm:$0xff] %vm527, %v3758
        %3791 = vst.msk [vmem:[#allocation2 + $0x20] sm:$0xff] %vm527, %v3759
        %3792 = vst.msk [vmem:[#allocation2 + $0x28] sm:$0xff] %vm527, %v3760
        %3793 = vst.msk [vmem:[#allocation2 + $0x30] sm:$0xff] %vm527, %v3761
        %3794 = vst.msk [vmem:[#allocation2 + $0x38] sm:$0xff] %vm527, %v3762
        %3795 = vst.msk [vmem:[#allocation2 + $0x40] sm:$0xff] %vm527, %v3763
        %3796 = vst.msk [vmem:[#allocation2 + $0x48] sm:$0xff] %vm527, %v3764
        %3797 = vst.msk [vmem:[#allocation2 + $0x70] sm:$0xff] %vm527, %v3765
        %3798 = vst.msk [vmem:[#allocation2 + $0x78] sm:$0xff] %vm527, %v3766
        %3799 = vst.msk [vmem:[#allocation2 + $0x80] sm:$0xff] %vm527, %v3767
        %3800 = vst.msk [vmem:[#allocation2 + $0x88] sm:$0xff] %vm527, %v3768
        %3801 = vst.msk [vmem:[#allocation2 + $0x90] sm:$0xff] %vm527, %v3769
        %3802 = vst.msk [vmem:[#allocation2 + $0x98] sm:$0xff] %vm527, %v3770
        %3803 = vst.msk [vmem:[#allocation2 + $0xa0] sm:$0xff] %vm527, %v3771
        %3804 = vst.msk [vmem:[#allocation2 + $0xa8] sm:$0xff] %vm527, %v3772
        %3805 = vst.msk [vmem:[#allocation2 + $0xd0] sm:$0xff] %vm527, %v3773
        %3806 = vst.msk [vmem:[#allocation2 + $0xd8] sm:$0xff] %vm527, %v3774
        %3807 = vst.msk [vmem:[#allocation2 + $0xe0] sm:$0xff] %vm527, %v3775
        %3808 = vst.msk [vmem:[#allocation2 + $0xe8] sm:$0xff] %vm527, %v3776
        %3809 = vst.msk [vmem:[#allocation2 + $0xf0] sm:$0xff] %vm527, %v3777
        %3810 = vst.msk [vmem:[#allocation2 + $0xf8] sm:$0xff] %vm527, %v3778
        %3811 = vst.msk [vmem:[#allocation2 + $0x100] sm:$0xff] %vm527, %v3779
        %3812 = vst.msk [vmem:[#allocation2 + $0x108] sm:$0xff] %vm527, %v3780
        %3813 = vst.msk [vmem:[#allocation2 + $0x130] sm:$0xff] %vm527, %v3781
        %3814 = vst.msk [vmem:[#allocation2 + $0x138] sm:$0xff] %vm527, %v3782
        %3815 = vst.msk [vmem:[#allocation2 + $0x140] sm:$0xff] %vm527, %v3783
        %3816 = vst.msk [vmem:[#allocation2 + $0x148] sm:$0xff] %vm527, %v3784
        %3817 = vst.msk [vmem:[#allocation2 + $0x150] sm:$0xff] %vm527, %v3785
        %3818 = vst.msk [vmem:[#allocation2 + $0x158] sm:$0xff] %vm527, %v3786
        %3819 = vst.msk [vmem:[#allocation2 + $0x160] sm:$0xff] %vm527, %v3787
        %3820 = vst.msk [vmem:[#allocation2 + $0x168] sm:$0xff] %vm527, %v3788
        %v3821 = vld [vmem:[#allocation2 + $0x7] sm:$0xff]
        %v3822 = vld [vmem:[#allocation2 + $0xf] sm:$0xff]
        %v3823 = vld [vmem:[#allocation2 + $0x17] sm:$0xff]
        %v3824 = vld [vmem:[#allocation2 + $0x1f] sm:$0xff]
        %v3825 = vld [vmem:[#allocation2 + $0x27] sm:$0xff]
        %v3826 = vld [vmem:[#allocation2 + $0x2f] sm:$0xff]
        %v3827 = vld [vmem:[#allocation2 + $0x37] sm:$0xff]
        %v3828 = vld [vmem:[#allocation2 + $0x3f] sm:$0xff]
        %v3829 = vld [vmem:[#allocation2 + $0x67] sm:$0xff]
        %v3830 = vld [vmem:[#allocation2 + $0x6f] sm:$0xff]
        %v3831 = vld [vmem:[#allocation2 + $0x77] sm:$0xff]
        %v3832 = vld [vmem:[#allocation2 + $0x7f] sm:$0xff]
        %v3833 = vld [vmem:[#allocation2 + $0x87] sm:$0xff]
        %v3834 = vld [vmem:[#allocation2 + $0x8f] sm:$0xff]
        %v3835 = vld [vmem:[#allocation2 + $0x97] sm:$0xff]
        %v3836 = vld [vmem:[#allocation2 + $0x9f] sm:$0xff]
        %v3837 = vld [vmem:[#allocation2 + $0xc7] sm:$0xff]
        %v3838 = vld [vmem:[#allocation2 + $0xcf] sm:$0xff]
        %v3839 = vld [vmem:[#allocation2 + $0xd7] sm:$0xff]
        %v3840 = vld [vmem:[#allocation2 + $0xdf] sm:$0xff]
        %v3841 = vld [vmem:[#allocation2 + $0xe7] sm:$0xff]
        %v3842 = vld [vmem:[#allocation2 + $0xef] sm:$0xff]
        %v3843 = vld [vmem:[#allocation2 + $0xf7] sm:$0xff]
        %v3844 = vld [vmem:[#allocation2 + $0xff] sm:$0xff]
        %v3845 = vld [vmem:[#allocation2 + $0x127] sm:$0xff]
        %v3846 = vld [vmem:[#allocation2 + $0x12f] sm:$0xff]
        %v3847 = vld [vmem:[#allocation2 + $0x137] sm:$0xff]
        %v3848 = vld [vmem:[#allocation2 + $0x13f] sm:$0xff]
        %v3849 = vld [vmem:[#allocation2 + $0x147] sm:$0xff]
        %v3850 = vld [vmem:[#allocation2 + $0x14f] sm:$0xff]
        %v3851 = vld [vmem:[#allocation2 + $0x157] sm:$0xff]
        %v3852 = vld [vmem:[#allocation2 + $0x15f] sm:$0xff]
        %v3853 = vsel %vm978, 1, 0
        %v3854 = vsel %vm979, 1, 0
        %v3855 = vsel %vm980, 1, 0
        %v3856 = vsel %vm981, 1, 0
        %v3857 = vsel %vm982, 1, 0
        %v3858 = vsel %vm983, 1, 0
        %v3859 = vsel %vm984, 1, 0
        %v3860 = vsel %vm985, 1, 0
        %v3861 = vsel %vm986, 1, 0
        %v3862 = vsel %vm987, 1, 0
        %v3863 = vsel %vm988, 1, 0
        %v3864 = vsel %vm989, 1, 0
        %v3865 = vsel %vm990, 1, 0
        %v3866 = vsel %vm991, 1, 0
        %v3867 = vsel %vm992, 1, 0
        %v3868 = vsel %vm993, 1, 0
        %v3869 = vsel %vm994, 1, 0
        %v3870 = vsel %vm995, 1, 0
        %v3871 = vsel %vm996, 1, 0
        %v3872 = vsel %vm997, 1, 0
        %v3873 = vsel %vm998, 1, 0
        %v3874 = vsel %vm999, 1, 0
        %v3875 = vsel %vm1000, 1, 0
        %v3876 = vsel %vm1001, 1, 0
        %v3877 = vsel %vm1002, 1, 0
        %v3878 = vsel %vm1003, 1, 0
        %v3879 = vsel %vm1004, 1, 0
        %v3880 = vsel %vm1005, 1, 0
        %v3881 = vsel %vm1006, 1, 0
        %v3882 = vsel %vm1007, 1, 0
        %v3883 = vsel %vm1008, 1, 0
        %v3884 = vsel %vm1009, 1, 0
        %vm3885 = vcmp.eq.s32.totalorder %v3853, 1
        %vm3886 = vcmp.eq.s32.totalorder %v3854, 1
        %vm3887 = vcmp.eq.s32.totalorder %v3855, 1
        %vm3888 = vcmp.eq.s32.totalorder %v3856, 1
        %vm3889 = vcmp.eq.s32.totalorder %v3857, 1
        %vm3890 = vcmp.eq.s32.totalorder %v3858, 1
        %vm3891 = vcmp.eq.s32.totalorder %v3859, 1
        %vm3892 = vcmp.eq.s32.totalorder %v3860, 1
        %vm3893 = vcmp.eq.s32.totalorder %v3861, 1
        %vm3894 = vcmp.eq.s32.totalorder %v3862, 1
        %vm3895 = vcmp.eq.s32.totalorder %v3863, 1
        %vm3896 = vcmp.eq.s32.totalorder %v3864, 1
        %vm3897 = vcmp.eq.s32.totalorder %v3865, 1
        %vm3898 = vcmp.eq.s32.totalorder %v3866, 1
        %vm3899 = vcmp.eq.s32.totalorder %v3867, 1
        %vm3900 = vcmp.eq.s32.totalorder %v3868, 1
        %vm3901 = vcmp.eq.s32.totalorder %v3869, 1
        %vm3902 = vcmp.eq.s32.totalorder %v3870, 1
        %vm3903 = vcmp.eq.s32.totalorder %v3871, 1
        %vm3904 = vcmp.eq.s32.totalorder %v3872, 1
        %vm3905 = vcmp.eq.s32.totalorder %v3873, 1
        %vm3906 = vcmp.eq.s32.totalorder %v3874, 1
        %vm3907 = vcmp.eq.s32.totalorder %v3875, 1
        %vm3908 = vcmp.eq.s32.totalorder %v3876, 1
        %vm3909 = vcmp.eq.s32.totalorder %v3877, 1
        %vm3910 = vcmp.eq.s32.totalorder %v3878, 1
        %vm3911 = vcmp.eq.s32.totalorder %v3879, 1
        %vm3912 = vcmp.eq.s32.totalorder %v3880, 1
        %vm3913 = vcmp.eq.s32.totalorder %v3881, 1
        %vm3914 = vcmp.eq.s32.totalorder %v3882, 1
        %vm3915 = vcmp.eq.s32.totalorder %v3883, 1
        %vm3916 = vcmp.eq.s32.totalorder %v3884, 1
        %v3917 = vsel %vm3885, 0.0, %v3821
        %v3918 = vsel %vm3886, 0.0, %v3822
        %v3919 = vsel %vm3887, 0.0, %v3823
        %v3920 = vsel %vm3888, 0.0, %v3824
        %v3921 = vsel %vm3889, 0.0, %v3825
        %v3922 = vsel %vm3890, 0.0, %v3826
        %v3923 = vsel %vm3891, 0.0, %v3827
        %v3924 = vsel %vm3892, 0.0, %v3828
        %v3925 = vsel %vm3893, 0.0, %v3829
        %v3926 = vsel %vm3894, 0.0, %v3830
        %v3927 = vsel %vm3895, 0.0, %v3831
        %v3928 = vsel %vm3896, 0.0, %v3832
        %v3929 = vsel %vm3897, 0.0, %v3833
        %v3930 = vsel %vm3898, 0.0, %v3834
        %v3931 = vsel %vm3899, 0.0, %v3835
        %v3932 = vsel %vm3900, 0.0, %v3836
        %v3933 = vsel %vm3901, 0.0, %v3837
        %v3934 = vsel %vm3902, 0.0, %v3838
        %v3935 = vsel %vm3903, 0.0, %v3839
        %v3936 = vsel %vm3904, 0.0, %v3840
        %v3937 = vsel %vm3905, 0.0, %v3841
        %v3938 = vsel %vm3906, 0.0, %v3842
        %v3939 = vsel %vm3907, 0.0, %v3843
        %v3940 = vsel %vm3908, 0.0, %v3844
        %v3941 = vsel %vm3909, 0.0, %v3845
        %v3942 = vsel %vm3910, 0.0, %v3846
        %v3943 = vsel %vm3911, 0.0, %v3847
        %v3944 = vsel %vm3912, 0.0, %v3848
        %v3945 = vsel %vm3913, 0.0, %v3849
        %v3946 = vsel %vm3914, 0.0, %v3850
        %v3947 = vsel %vm3915, 0.0, %v3851
        %v3948 = vsel %vm3916, 0.0, %v3852
        %v3949 = vld [vmem:[#allocation2 + $0x8] sm:$0xff]
        %v3950 = vld [vmem:[#allocation2 + $0x10] sm:$0xff]
        %v3951 = vld [vmem:[#allocation2 + $0x18] sm:$0xff]
        %v3952 = vld [vmem:[#allocation2 + $0x20] sm:$0xff]
        %v3953 = vld [vmem:[#allocation2 + $0x28] sm:$0xff]
        %v3954 = vld [vmem:[#allocation2 + $0x30] sm:$0xff]
        %v3955 = vld [vmem:[#allocation2 + $0x38] sm:$0xff]
        %v3956 = vld [vmem:[#allocation2 + $0x40] sm:$0xff]
        %v3957 = vld [vmem:[#allocation2 + $0x68] sm:$0xff]
        %v3958 = vld [vmem:[#allocation2 + $0x70] sm:$0xff]
        %v3959 = vld [vmem:[#allocation2 + $0x78] sm:$0xff]
        %v3960 = vld [vmem:[#allocation2 + $0x80] sm:$0xff]
        %v3961 = vld [vmem:[#allocation2 + $0x88] sm:$0xff]
        %v3962 = vld [vmem:[#allocation2 + $0x90] sm:$0xff]
        %v3963 = vld [vmem:[#allocation2 + $0x98] sm:$0xff]
        %v3964 = vld [vmem:[#allocation2 + $0xa0] sm:$0xff]
        %v3965 = vld [vmem:[#allocation2 + $0xc8] sm:$0xff]
        %v3966 = vld [vmem:[#allocation2 + $0xd0] sm:$0xff]
        %v3967 = vld [vmem:[#allocation2 + $0xd8] sm:$0xff]
        %v3968 = vld [vmem:[#allocation2 + $0xe0] sm:$0xff]
        %v3969 = vld [vmem:[#allocation2 + $0xe8] sm:$0xff]
        %v3970 = vld [vmem:[#allocation2 + $0xf0] sm:$0xff]
        %v3971 = vld [vmem:[#allocation2 + $0xf8] sm:$0xff]
        %v3972 = vld [vmem:[#allocation2 + $0x100] sm:$0xff]
        %v3973 = vld [vmem:[#allocation2 + $0x128] sm:$0xff]
        %v3974 = vld [vmem:[#allocation2 + $0x130] sm:$0xff]
        %v3975 = vld [vmem:[#allocation2 + $0x138] sm:$0xff]
        %v3976 = vld [vmem:[#allocation2 + $0x140] sm:$0xff]
        %v3977 = vld [vmem:[#allocation2 + $0x148] sm:$0xff]
        %v3978 = vld [vmem:[#allocation2 + $0x150] sm:$0xff]
        %v3979 = vld [vmem:[#allocation2 + $0x158] sm:$0xff]
        %v3980 = vld [vmem:[#allocation2 + $0x160] sm:$0xff]
        %v3981 = vld [vmem:[#allocation2 + $0x9] sm:$0xff]
        %v3982 = vld [vmem:[#allocation2 + $0x11] sm:$0xff]
        %v3983 = vld [vmem:[#allocation2 + $0x19] sm:$0xff]
        %v3984 = vld [vmem:[#allocation2 + $0x21] sm:$0xff]
        %v3985 = vld [vmem:[#allocation2 + $0x29] sm:$0xff]
        %v3986 = vld [vmem:[#allocation2 + $0x31] sm:$0xff]
        %v3987 = vld [vmem:[#allocation2 + $0x39] sm:$0xff]
        %v3988 = vld [vmem:[#allocation2 + $0x41] sm:$0xff]
        %v3989 = vld [vmem:[#allocation2 + $0x69] sm:$0xff]
        %v3990 = vld [vmem:[#allocation2 + $0x71] sm:$0xff]
        %v3991 = vld [vmem:[#allocation2 + $0x79] sm:$0xff]
        %v3992 = vld [vmem:[#allocation2 + $0x81] sm:$0xff]
        %v3993 = vld [vmem:[#allocation2 + $0x89] sm:$0xff]
        %v3994 = vld [vmem:[#allocation2 + $0x91] sm:$0xff]
        %v3995 = vld [vmem:[#allocation2 + $0x99] sm:$0xff]
        %v3996 = vld [vmem:[#allocation2 + $0xa1] sm:$0xff]
        %v3997 = vld [vmem:[#allocation2 + $0xc9] sm:$0xff]
        %v3998 = vld [vmem:[#allocation2 + $0xd1] sm:$0xff]
        %v3999 = vld [vmem:[#allocation2 + $0xd9] sm:$0xff]
        %v4000 = vld [vmem:[#allocation2 + $0xe1] sm:$0xff]
        %v4001 = vld [vmem:[#allocation2 + $0xe9] sm:$0xff]
        %v4002 = vld [vmem:[#allocation2 + $0xf1] sm:$0xff]
        %v4003 = vld [vmem:[#allocation2 + $0xf9] sm:$0xff]
        %v4004 = vld [vmem:[#allocation2 + $0x101] sm:$0xff]
        %v4005 = vld [vmem:[#allocation2 + $0x129] sm:$0xff]
        %v4006 = vld [vmem:[#allocation2 + $0x131] sm:$0xff]
        %v4007 = vld [vmem:[#allocation2 + $0x139] sm:$0xff]
        %v4008 = vld [vmem:[#allocation2 + $0x141] sm:$0xff]
        %v4009 = vld [vmem:[#allocation2 + $0x149] sm:$0xff]
        %v4010 = vld [vmem:[#allocation2 + $0x151] sm:$0xff]
        %v4011 = vld [vmem:[#allocation2 + $0x159] sm:$0xff]
        %v4012 = vld [vmem:[#allocation2 + $0x161] sm:$0xff]
        %v4013 = vsel %vm1010, 1, 0
        %v4014 = vsel %vm1011, 1, 0
        %v4015 = vsel %vm1012, 1, 0
        %v4016 = vsel %vm1013, 1, 0
        %v4017 = vsel %vm1014, 1, 0
        %v4018 = vsel %vm1015, 1, 0
        %v4019 = vsel %vm1016, 1, 0
        %v4020 = vsel %vm1017, 1, 0
        %v4021 = vsel %vm1018, 1, 0
        %v4022 = vsel %vm1019, 1, 0
        %v4023 = vsel %vm1020, 1, 0
        %v4024 = vsel %vm1021, 1, 0
        %v4025 = vsel %vm1022, 1, 0
        %v4026 = vsel %vm1023, 1, 0
        %v4027 = vsel %vm1024, 1, 0
        %v4028 = vsel %vm1025, 1, 0
        %v4029 = vsel %vm1026, 1, 0
        %v4030 = vsel %vm1027, 1, 0
        %v4031 = vsel %vm1028, 1, 0
        %v4032 = vsel %vm1029, 1, 0
        %v4033 = vsel %vm1030, 1, 0
        %v4034 = vsel %vm1031, 1, 0
        %v4035 = vsel %vm1032, 1, 0
        %v4036 = vsel %vm1033, 1, 0
        %v4037 = vsel %vm1034, 1, 0
        %v4038 = vsel %vm1035, 1, 0
        %v4039 = vsel %vm1036, 1, 0
        %v4040 = vsel %vm1037, 1, 0
        %v4041 = vsel %vm1038, 1, 0
        %v4042 = vsel %vm1039, 1, 0
        %v4043 = vsel %vm1040, 1, 0
        %v4044 = vsel %vm1041, 1, 0
        %vm4045 = vcmp.eq.s32.totalorder %v4013, 1
        %vm4046 = vcmp.eq.s32.totalorder %v4014, 1
        %vm4047 = vcmp.eq.s32.totalorder %v4015, 1
        %vm4048 = vcmp.eq.s32.totalorder %v4016, 1
        %vm4049 = vcmp.eq.s32.totalorder %v4017, 1
        %vm4050 = vcmp.eq.s32.totalorder %v4018, 1
        %vm4051 = vcmp.eq.s32.totalorder %v4019, 1
        %vm4052 = vcmp.eq.s32.totalorder %v4020, 1
        %vm4053 = vcmp.eq.s32.totalorder %v4021, 1
        %vm4054 = vcmp.eq.s32.totalorder %v4022, 1
        %vm4055 = vcmp.eq.s32.totalorder %v4023, 1
        %vm4056 = vcmp.eq.s32.totalorder %v4024, 1
        %vm4057 = vcmp.eq.s32.totalorder %v4025, 1
        %vm4058 = vcmp.eq.s32.totalorder %v4026, 1
        %vm4059 = vcmp.eq.s32.totalorder %v4027, 1
        %vm4060 = vcmp.eq.s32.totalorder %v4028, 1
        %vm4061 = vcmp.eq.s32.totalorder %v4029, 1
        %vm4062 = vcmp.eq.s32.totalorder %v4030, 1
        %vm4063 = vcmp.eq.s32.totalorder %v4031, 1
        %vm4064 = vcmp.eq.s32.totalorder %v4032, 1
        %vm4065 = vcmp.eq.s32.totalorder %v4033, 1
        %vm4066 = vcmp.eq.s32.totalorder %v4034, 1
        %vm4067 = vcmp.eq.s32.totalorder %v4035, 1
        %vm4068 = vcmp.eq.s32.totalorder %v4036, 1
        %vm4069 = vcmp.eq.s32.totalorder %v4037, 1
        %vm4070 = vcmp.eq.s32.totalorder %v4038, 1
        %vm4071 = vcmp.eq.s32.totalorder %v4039, 1
        %vm4072 = vcmp.eq.s32.totalorder %v4040, 1
        %vm4073 = vcmp.eq.s32.totalorder %v4041, 1
        %vm4074 = vcmp.eq.s32.totalorder %v4042, 1
        %vm4075 = vcmp.eq.s32.totalorder %v4043, 1
        %vm4076 = vcmp.eq.s32.totalorder %v4044, 1
        %v4077 = vsel %vm4045, 0.0, %v3981
        %v4078 = vsel %vm4046, 0.0, %v3982
        %v4079 = vsel %vm4047, 0.0, %v3983
        %v4080 = vsel %vm4048, 0.0, %v3984
        %v4081 = vsel %vm4049, 0.0, %v3985
        %v4082 = vsel %vm4050, 0.0, %v3986
        %v4083 = vsel %vm4051, 0.0, %v3987
        %v4084 = vsel %vm4052, 0.0, %v3988
        %v4085 = vsel %vm4053, 0.0, %v3989
        %v4086 = vsel %vm4054, 0.0, %v3990
        %v4087 = vsel %vm4055, 0.0, %v3991
        %v4088 = vsel %vm4056, 0.0, %v3992
        %v4089 = vsel %vm4057, 0.0, %v3993
        %v4090 = vsel %vm4058, 0.0, %v3994
        %v4091 = vsel %vm4059, 0.0, %v3995
        %v4092 = vsel %vm4060, 0.0, %v3996
        %v4093 = vsel %vm4061, 0.0, %v3997
        %v4094 = vsel %vm4062, 0.0, %v3998
        %v4095 = vsel %vm4063, 0.0, %v3999
        %v4096 = vsel %vm4064, 0.0, %v4000
        %v4097 = vsel %vm4065, 0.0, %v4001
        %v4098 = vsel %vm4066, 0.0, %v4002
        %v4099 = vsel %vm4067, 0.0, %v4003
        %v4100 = vsel %vm4068, 0.0, %v4004
        %v4101 = vsel %vm4069, 0.0, %v4005
        %v4102 = vsel %vm4070, 0.0, %v4006
        %v4103 = vsel %vm4071, 0.0, %v4007
        %v4104 = vsel %vm4072, 0.0, %v4008
        %v4105 = vsel %vm4073, 0.0, %v4009
        %v4106 = vsel %vm4074, 0.0, %v4010
        %v4107 = vsel %vm4075, 0.0, %v4011
        %v4108 = vsel %vm4076, 0.0, %v4012
        %v4109 = vld [vmem:[#allocation2 + $0x47] sm:$0xff]
        %v4110 = vld [vmem:[#allocation2 + $0xa7] sm:$0xff]
        %v4111 = vld [vmem:[#allocation2 + $0x107] sm:$0xff]
        %v4112 = vld [vmem:[#allocation2 + $0x167] sm:$0xff]
        %v4113 = vsel %vm3885, 0.0, %v3822
        %v4114 = vsel %vm3886, 0.0, %v3823
        %v4115 = vsel %vm3887, 0.0, %v3824
        %v4116 = vsel %vm3888, 0.0, %v3825
        %v4117 = vsel %vm3889, 0.0, %v3826
        %v4118 = vsel %vm3890, 0.0, %v3827
        %v4119 = vsel %vm3891, 0.0, %v3828
        %v4120 = vsel %vm3892, 0.0, %v4109
        %v4121 = vsel %vm3893, 0.0, %v3830
        %v4122 = vsel %vm3894, 0.0, %v3831
        %v4123 = vsel %vm3895, 0.0, %v3832
        %v4124 = vsel %vm3896, 0.0, %v3833
        %v4125 = vsel %vm3897, 0.0, %v3834
        %v4126 = vsel %vm3898, 0.0, %v3835
        %v4127 = vsel %vm3899, 0.0, %v3836
        %v4128 = vsel %vm3900, 0.0, %v4110
        %v4129 = vsel %vm3901, 0.0, %v3838
        %v4130 = vsel %vm3902, 0.0, %v3839
        %v4131 = vsel %vm3903, 0.0, %v3840
        %v4132 = vsel %vm3904, 0.0, %v3841
        %v4133 = vsel %vm3905, 0.0, %v3842
        %v4134 = vsel %vm3906, 0.0, %v3843
        %v4135 = vsel %vm3907, 0.0, %v3844
        %v4136 = vsel %vm3908, 0.0, %v4111
        %v4137 = vsel %vm3909, 0.0, %v3846
        %v4138 = vsel %vm3910, 0.0, %v3847
        %v4139 = vsel %vm3911, 0.0, %v3848
        %v4140 = vsel %vm3912, 0.0, %v3849
        %v4141 = vsel %vm3913, 0.0, %v3850
        %v4142 = vsel %vm3914, 0.0, %v3851
        %v4143 = vsel %vm3915, 0.0, %v3852
        %v4144 = vsel %vm3916, 0.0, %v4112
        %v4145 = vld [vmem:[#allocation2 + $0x48] sm:$0xff]
        %v4146 = vld [vmem:[#allocation2 + $0xa8] sm:$0xff]
        %v4147 = vld [vmem:[#allocation2 + $0x108] sm:$0xff]
        %v4148 = vld [vmem:[#allocation2 + $0x168] sm:$0xff]
        %v4149 = vld [vmem:[#allocation2 + $0x49] sm:$0xff]
        %v4150 = vld [vmem:[#allocation2 + $0xa9] sm:$0xff]
        %v4151 = vld [vmem:[#allocation2 + $0x109] sm:$0xff]
        %v4152 = vld [vmem:[#allocation2 + $0x169] sm:$0xff]
        %v4153 = vsel %vm4045, 0.0, %v3982
        %v4154 = vsel %vm4046, 0.0, %v3983
        %v4155 = vsel %vm4047, 0.0, %v3984
        %v4156 = vsel %vm4048, 0.0, %v3985
        %v4157 = vsel %vm4049, 0.0, %v3986
        %v4158 = vsel %vm4050, 0.0, %v3987
        %v4159 = vsel %vm4051, 0.0, %v3988
        %v4160 = vsel %vm4052, 0.0, %v4149
        %v4161 = vsel %vm4053, 0.0, %v3990
        %v4162 = vsel %vm4054, 0.0, %v3991
        %v4163 = vsel %vm4055, 0.0, %v3992
        %v4164 = vsel %vm4056, 0.0, %v3993
        %v4165 = vsel %vm4057, 0.0, %v3994
        %v4166 = vsel %vm4058, 0.0, %v3995
        %v4167 = vsel %vm4059, 0.0, %v3996
        %v4168 = vsel %vm4060, 0.0, %v4150
        %v4169 = vsel %vm4061, 0.0, %v3998
        %v4170 = vsel %vm4062, 0.0, %v3999
        %v4171 = vsel %vm4063, 0.0, %v4000
        %v4172 = vsel %vm4064, 0.0, %v4001
        %v4173 = vsel %vm4065, 0.0, %v4002
        %v4174 = vsel %vm4066, 0.0, %v4003
        %v4175 = vsel %vm4067, 0.0, %v4004
        %v4176 = vsel %vm4068, 0.0, %v4151
        %v4177 = vsel %vm4069, 0.0, %v4006
        %v4178 = vsel %vm4070, 0.0, %v4007
        %v4179 = vsel %vm4071, 0.0, %v4008
        %v4180 = vsel %vm4072, 0.0, %v4009
        %v4181 = vsel %vm4073, 0.0, %v4010
        %v4182 = vsel %vm4074, 0.0, %v4011
        %v4183 = vsel %vm4075, 0.0, %v4012
        %v4184 = vsel %vm4076, 0.0, %v4152
        %v4185 = vld [vmem:[#allocation2 + $0x4f] sm:$0xff]
        %v4186 = vld [vmem:[#allocation2 + $0xaf] sm:$0xff]
        %v4187 = vld [vmem:[#allocation2 + $0x10f] sm:$0xff]
        %v4188 = vld [vmem:[#allocation2 + $0x16f] sm:$0xff]
        %v4189 = vsel %vm3885, 0.0, %v3823
        %v4190 = vsel %vm3886, 0.0, %v3824
        %v4191 = vsel %vm3887, 0.0, %v3825
        %v4192 = vsel %vm3888, 0.0, %v3826
        %v4193 = vsel %vm3889, 0.0, %v3827
        %v4194 = vsel %vm3890, 0.0, %v3828
        %v4195 = vsel %vm3891, 0.0, %v4109
        %v4196 = vsel %vm3892, 0.0, %v4185
        %v4197 = vsel %vm3893, 0.0, %v3831
        %v4198 = vsel %vm3894, 0.0, %v3832
        %v4199 = vsel %vm3895, 0.0, %v3833
        %v4200 = vsel %vm3896, 0.0, %v3834
        %v4201 = vsel %vm3897, 0.0, %v3835
        %v4202 = vsel %vm3898, 0.0, %v3836
        %v4203 = vsel %vm3899, 0.0, %v4110
        %v4204 = vsel %vm3900, 0.0, %v4186
        %v4205 = vsel %vm3901, 0.0, %v3839
        %v4206 = vsel %vm3902, 0.0, %v3840
        %v4207 = vsel %vm3903, 0.0, %v3841
        %v4208 = vsel %vm3904, 0.0, %v3842
        %v4209 = vsel %vm3905, 0.0, %v3843
        %v4210 = vsel %vm3906, 0.0, %v3844
        %v4211 = vsel %vm3907, 0.0, %v4111
        %v4212 = vsel %vm3908, 0.0, %v4187
        %v4213 = vsel %vm3909, 0.0, %v3847
        %v4214 = vsel %vm3910, 0.0, %v3848
        %v4215 = vsel %vm3911, 0.0, %v3849
        %v4216 = vsel %vm3912, 0.0, %v3850
        %v4217 = vsel %vm3913, 0.0, %v3851
        %v4218 = vsel %vm3914, 0.0, %v3852
        %v4219 = vsel %vm3915, 0.0, %v4112
        %v4220 = vsel %vm3916, 0.0, %v4188
        %v4221 = vld [vmem:[#allocation2 + $0x50] sm:$0xff]
        %v4222 = vld [vmem:[#allocation2 + $0xb0] sm:$0xff]
        %v4223 = vld [vmem:[#allocation2 + $0x110] sm:$0xff]
        %v4224 = vld [vmem:[#allocation2 + $0x170] sm:$0xff]
        %v4225 = vld [vmem:[#allocation2 + $0x51] sm:$0xff]
        %v4226 = vld [vmem:[#allocation2 + $0xb1] sm:$0xff]
        %v4227 = vld [vmem:[#allocation2 + $0x111] sm:$0xff]
        %v4228 = vld [vmem:[#allocation2 + $0x171] sm:$0xff]
        %v4229 = vsel %vm4045, 0.0, %v3983
        %v4230 = vsel %vm4046, 0.0, %v3984
        %v4231 = vsel %vm4047, 0.0, %v3985
        %v4232 = vsel %vm4048, 0.0, %v3986
        %v4233 = vsel %vm4049, 0.0, %v3987
        %v4234 = vsel %vm4050, 0.0, %v3988
        %v4235 = vsel %vm4051, 0.0, %v4149
        %v4236 = vsel %vm4052, 0.0, %v4225
        %v4237 = vsel %vm4053, 0.0, %v3991
        %v4238 = vsel %vm4054, 0.0, %v3992
        %v4239 = vsel %vm4055, 0.0, %v3993
        %v4240 = vsel %vm4056, 0.0, %v3994
        %v4241 = vsel %vm4057, 0.0, %v3995
        %v4242 = vsel %vm4058, 0.0, %v3996
        %v4243 = vsel %vm4059, 0.0, %v4150
        %v4244 = vsel %vm4060, 0.0, %v4226
        %v4245 = vsel %vm4061, 0.0, %v3999
        %v4246 = vsel %vm4062, 0.0, %v4000
        %v4247 = vsel %vm4063, 0.0, %v4001
        %v4248 = vsel %vm4064, 0.0, %v4002
        %v4249 = vsel %vm4065, 0.0, %v4003
        %v4250 = vsel %vm4066, 0.0, %v4004
        %v4251 = vsel %vm4067, 0.0, %v4151
        %v4252 = vsel %vm4068, 0.0, %v4227
        %v4253 = vsel %vm4069, 0.0, %v4007
        %v4254 = vsel %vm4070, 0.0, %v4008
        %v4255 = vsel %vm4071, 0.0, %v4009
        %v4256 = vsel %vm4072, 0.0, %v4010
        %v4257 = vsel %vm4073, 0.0, %v4011
        %v4258 = vsel %vm4074, 0.0, %v4012
        %v4259 = vsel %vm4075, 0.0, %v4152
        %v4260 = vsel %vm4076, 0.0, %v4228
        %4293 = vrot.lane.b32.xlu0 %v3949, 16
        %v4294 = vpop.permute.xlu0 %4293
        %4295 = vrot.lane.b32.xlu0 %v3950, 16
        %v4296 = vpop.permute.xlu0 %4295
        %4297 = vrot.lane.b32.xlu0 %v3951, 16
        %v4298 = vpop.permute.xlu0 %4297
        %4299 = vrot.lane.b32.xlu0 %v3952, 16
        %v4300 = vpop.permute.xlu0 %4299
        %4301 = vrot.lane.b32.xlu0 %v3953, 16
        %v4302 = vpop.permute.xlu0 %4301
        %4303 = vrot.lane.b32.xlu0 %v3954, 16
        %v4304 = vpop.permute.xlu0 %4303
        %4305 = vrot.lane.b32.xlu0 %v3955, 16
        %v4306 = vpop.permute.xlu0 %4305
        %4307 = vrot.lane.b32.xlu0 %v3956, 16
        %v4308 = vpop.permute.xlu0 %4307
        %4309 = vrot.lane.b32.xlu0 %v3957, 16
        %v4310 = vpop.permute.xlu0 %4309
        %4311 = vrot.lane.b32.xlu0 %v3958, 16
        %v4312 = vpop.permute.xlu0 %4311
        %4313 = vrot.lane.b32.xlu0 %v3959, 16
        %v4314 = vpop.permute.xlu0 %4313
        %4315 = vrot.lane.b32.xlu0 %v3960, 16
        %v4316 = vpop.permute.xlu0 %4315
        %4317 = vrot.lane.b32.xlu0 %v3961, 16
        %v4318 = vpop.permute.xlu0 %4317
        %4319 = vrot.lane.b32.xlu0 %v3962, 16
        %v4320 = vpop.permute.xlu0 %4319
        %4321 = vrot.lane.b32.xlu0 %v3963, 16
        %v4322 = vpop.permute.xlu0 %4321
        %4323 = vrot.lane.b32.xlu0 %v3964, 16
        %v4324 = vpop.permute.xlu0 %4323
        %4325 = vrot.lane.b32.xlu0 %v3965, 16
        %v4326 = vpop.permute.xlu0 %4325
        %4327 = vrot.lane.b32.xlu0 %v3966, 16
        %v4328 = vpop.permute.xlu0 %4327
        %4329 = vrot.lane.b32.xlu0 %v3967, 16
        %v4330 = vpop.permute.xlu0 %4329
        %4331 = vrot.lane.b32.xlu0 %v3968, 16
        %v4332 = vpop.permute.xlu0 %4331
        %4333 = vrot.lane.b32.xlu0 %v3969, 16
        %v4334 = vpop.permute.xlu0 %4333
        %4335 = vrot.lane.b32.xlu0 %v3970, 16
        %v4336 = vpop.permute.xlu0 %4335
        %4337 = vrot.lane.b32.xlu0 %v3971, 16
        %v4338 = vpop.permute.xlu0 %4337
        %4339 = vrot.lane.b32.xlu0 %v3972, 16
        %v4340 = vpop.permute.xlu0 %4339
        %4341 = vrot.lane.b32.xlu0 %v3973, 16
        %v4342 = vpop.permute.xlu0 %4341
        %4343 = vrot.lane.b32.xlu0 %v3974, 16
        %v4344 = vpop.permute.xlu0 %4343
        %4345 = vrot.lane.b32.xlu0 %v3975, 16
        %v4346 = vpop.permute.xlu0 %4345
        %4347 = vrot.lane.b32.xlu0 %v3976, 16
        %v4348 = vpop.permute.xlu0 %4347
        %4349 = vrot.lane.b32.xlu0 %v3977, 16
        %v4350 = vpop.permute.xlu0 %4349
        %4351 = vrot.lane.b32.xlu0 %v3978, 16
        %v4352 = vpop.permute.xlu0 %4351
        %4353 = vrot.lane.b32.xlu0 %v3979, 16
        %v4354 = vpop.permute.xlu0 %4353
        %4355 = vrot.lane.b32.xlu0 %v3980, 16
        %v4356 = vpop.permute.xlu0 %4355
        %4421 = vrot.lane.b32.xlu0 %v4077, 32
        %v4422 = vpop.permute.xlu0 %4421
        %4423 = vrot.lane.b32.xlu0 %v4078, 32
        %v4424 = vpop.permute.xlu0 %4423
        %4425 = vrot.lane.b32.xlu0 %v4079, 32
        %v4426 = vpop.permute.xlu0 %4425
        %4427 = vrot.lane.b32.xlu0 %v4080, 32
        %v4428 = vpop.permute.xlu0 %4427
        %4429 = vrot.lane.b32.xlu0 %v4081, 32
        %v4430 = vpop.permute.xlu0 %4429
        %4431 = vrot.lane.b32.xlu0 %v4082, 32
        %v4432 = vpop.permute.xlu0 %4431
        %4433 = vrot.lane.b32.xlu0 %v4083, 32
        %v4434 = vpop.permute.xlu0 %4433
        %4435 = vrot.lane.b32.xlu0 %v4084, 32
        %v4436 = vpop.permute.xlu0 %4435
        %4437 = vrot.lane.b32.xlu0 %v4085, 32
        %v4438 = vpop.permute.xlu0 %4437
        %4439 = vrot.lane.b32.xlu0 %v4086, 32
        %v4440 = vpop.permute.xlu0 %4439
        %4441 = vrot.lane.b32.xlu0 %v4087, 32
        %v4442 = vpop.permute.xlu0 %4441
        %4443 = vrot.lane.b32.xlu0 %v4088, 32
        %v4444 = vpop.permute.xlu0 %4443
        %4445 = vrot.lane.b32.xlu0 %v4089, 32
        %v4446 = vpop.permute.xlu0 %4445
        %4447 = vrot.lane.b32.xlu0 %v4090, 32
        %v4448 = vpop.permute.xlu0 %4447
        %4449 = vrot.lane.b32.xlu0 %v4091, 32
        %v4450 = vpop.permute.xlu0 %4449
        %4451 = vrot.lane.b32.xlu0 %v4092, 32
        %v4452 = vpop.permute.xlu0 %4451
        %4453 = vrot.lane.b32.xlu0 %v4093, 32
        %v4454 = vpop.permute.xlu0 %4453
        %4455 = vrot.lane.b32.xlu0 %v4094, 32
        %v4456 = vpop.permute.xlu0 %4455
        %4457 = vrot.lane.b32.xlu0 %v4095, 32
        %v4458 = vpop.permute.xlu0 %4457
        %4459 = vrot.lane.b32.xlu0 %v4096, 32
        %v4460 = vpop.permute.xlu0 %4459
        %4461 = vrot.lane.b32.xlu0 %v4097, 32
        %v4462 = vpop.permute.xlu0 %4461
        %4463 = vrot.lane.b32.xlu0 %v4098, 32
        %v4464 = vpop.permute.xlu0 %4463
        %4465 = vrot.lane.b32.xlu0 %v4099, 32
        %v4466 = vpop.permute.xlu0 %4465
        %4467 = vrot.lane.b32.xlu0 %v4100, 32
        %v4468 = vpop.permute.xlu0 %4467
        %4469 = vrot.lane.b32.xlu0 %v4101, 32
        %v4470 = vpop.permute.xlu0 %4469
        %4471 = vrot.lane.b32.xlu0 %v4102, 32
        %v4472 = vpop.permute.xlu0 %4471
        %4473 = vrot.lane.b32.xlu0 %v4103, 32
        %v4474 = vpop.permute.xlu0 %4473
        %4475 = vrot.lane.b32.xlu0 %v4104, 32
        %v4476 = vpop.permute.xlu0 %4475
        %4477 = vrot.lane.b32.xlu0 %v4105, 32
        %v4478 = vpop.permute.xlu0 %4477
        %4479 = vrot.lane.b32.xlu0 %v4106, 32
        %v4480 = vpop.permute.xlu0 %4479
        %4481 = vrot.lane.b32.xlu0 %v4107, 32
        %v4482 = vpop.permute.xlu0 %4481
        %4483 = vrot.lane.b32.xlu0 %v4108, 32
        %v4484 = vpop.permute.xlu0 %4483
        %4549 = vrot.lane.b32.xlu0 %v4113, 48
        %v4550 = vpop.permute.xlu0 %4549
        %4551 = vrot.lane.b32.xlu0 %v4114, 48
        %v4552 = vpop.permute.xlu0 %4551
        %4553 = vrot.lane.b32.xlu0 %v4115, 48
        %v4554 = vpop.permute.xlu0 %4553
        %4555 = vrot.lane.b32.xlu0 %v4116, 48
        %v4556 = vpop.permute.xlu0 %4555
        %4557 = vrot.lane.b32.xlu0 %v4117, 48
        %v4558 = vpop.permute.xlu0 %4557
        %4559 = vrot.lane.b32.xlu0 %v4118, 48
        %v4560 = vpop.permute.xlu0 %4559
        %4561 = vrot.lane.b32.xlu0 %v4119, 48
        %v4562 = vpop.permute.xlu0 %4561
        %4563 = vrot.lane.b32.xlu0 %v4120, 48
        %v4564 = vpop.permute.xlu0 %4563
        %4565 = vrot.lane.b32.xlu0 %v4121, 48
        %v4566 = vpop.permute.xlu0 %4565
        %4567 = vrot.lane.b32.xlu0 %v4122, 48
        %v4568 = vpop.permute.xlu0 %4567
        %4569 = vrot.lane.b32.xlu0 %v4123, 48
        %v4570 = vpop.permute.xlu0 %4569
        %4571 = vrot.lane.b32.xlu0 %v4124, 48
        %v4572 = vpop.permute.xlu0 %4571
        %4573 = vrot.lane.b32.xlu0 %v4125, 48
        %v4574 = vpop.permute.xlu0 %4573
        %4575 = vrot.lane.b32.xlu0 %v4126, 48
        %v4576 = vpop.permute.xlu0 %4575
        %4577 = vrot.lane.b32.xlu0 %v4127, 48
        %v4578 = vpop.permute.xlu0 %4577
        %4579 = vrot.lane.b32.xlu0 %v4128, 48
        %v4580 = vpop.permute.xlu0 %4579
        %4581 = vrot.lane.b32.xlu0 %v4129, 48
        %v4582 = vpop.permute.xlu0 %4581
        %4583 = vrot.lane.b32.xlu0 %v4130, 48
        %v4584 = vpop.permute.xlu0 %4583
        %4585 = vrot.lane.b32.xlu0 %v4131, 48
        %v4586 = vpop.permute.xlu0 %4585
        %4587 = vrot.lane.b32.xlu0 %v4132, 48
        %v4588 = vpop.permute.xlu0 %4587
        %4589 = vrot.lane.b32.xlu0 %v4133, 48
        %v4590 = vpop.permute.xlu0 %4589
        %4591 = vrot.lane.b32.xlu0 %v4134, 48
        %v4592 = vpop.permute.xlu0 %4591
        %4593 = vrot.lane.b32.xlu0 %v4135, 48
        %v4594 = vpop.permute.xlu0 %4593
        %4595 = vrot.lane.b32.xlu0 %v4136, 48
        %v4596 = vpop.permute.xlu0 %4595
        %4597 = vrot.lane.b32.xlu0 %v4137, 48
        %v4598 = vpop.permute.xlu0 %4597
        %4599 = vrot.lane.b32.xlu0 %v4138, 48
        %v4600 = vpop.permute.xlu0 %4599
        %4601 = vrot.lane.b32.xlu0 %v4139, 48
        %v4602 = vpop.permute.xlu0 %4601
        %4603 = vrot.lane.b32.xlu0 %v4140, 48
        %v4604 = vpop.permute.xlu0 %4603
        %4605 = vrot.lane.b32.xlu0 %v4141, 48
        %v4606 = vpop.permute.xlu0 %4605
        %4607 = vrot.lane.b32.xlu0 %v4142, 48
        %v4608 = vpop.permute.xlu0 %4607
        %4609 = vrot.lane.b32.xlu0 %v4143, 48
        %v4610 = vpop.permute.xlu0 %4609
        %4611 = vrot.lane.b32.xlu0 %v4144, 48
        %v4612 = vpop.permute.xlu0 %4611
        %4649 = vrot.lane.b32.xlu0 %v3950, 64
        %v4650 = vpop.permute.xlu0 %4649
        %4651 = vrot.lane.b32.xlu0 %v3951, 64
        %v4652 = vpop.permute.xlu0 %4651
        %4653 = vrot.lane.b32.xlu0 %v3952, 64
        %v4654 = vpop.permute.xlu0 %4653
        %4655 = vrot.lane.b32.xlu0 %v3953, 64
        %v4656 = vpop.permute.xlu0 %4655
        %4657 = vrot.lane.b32.xlu0 %v3954, 64
        %v4658 = vpop.permute.xlu0 %4657
        %4659 = vrot.lane.b32.xlu0 %v3955, 64
        %v4660 = vpop.permute.xlu0 %4659
        %4661 = vrot.lane.b32.xlu0 %v3956, 64
        %v4662 = vpop.permute.xlu0 %4661
        %4663 = vrot.lane.b32.xlu0 %v4145, 64
        %v4664 = vpop.permute.xlu0 %4663
        %4665 = vrot.lane.b32.xlu0 %v3958, 64
        %v4666 = vpop.permute.xlu0 %4665
        %4667 = vrot.lane.b32.xlu0 %v3959, 64
        %v4668 = vpop.permute.xlu0 %4667
        %4669 = vrot.lane.b32.xlu0 %v3960, 64
        %v4670 = vpop.permute.xlu0 %4669
        %4671 = vrot.lane.b32.xlu0 %v3961, 64
        %v4672 = vpop.permute.xlu0 %4671
        %4673 = vrot.lane.b32.xlu0 %v3962, 64
        %v4674 = vpop.permute.xlu0 %4673
        %4675 = vrot.lane.b32.xlu0 %v3963, 64
        %v4676 = vpop.permute.xlu0 %4675
        %4677 = vrot.lane.b32.xlu0 %v3964, 64
        %v4678 = vpop.permute.xlu0 %4677
        %4679 = vrot.lane.b32.xlu0 %v4146, 64
        %v4680 = vpop.permute.xlu0 %4679
        %4681 = vrot.lane.b32.xlu0 %v3966, 64
        %v4682 = vpop.permute.xlu0 %4681
        %4683 = vrot.lane.b32.xlu0 %v3967, 64
        %v4684 = vpop.permute.xlu0 %4683
        %4685 = vrot.lane.b32.xlu0 %v3968, 64
        %v4686 = vpop.permute.xlu0 %4685
        %4687 = vrot.lane.b32.xlu0 %v3969, 64
        %v4688 = vpop.permute.xlu0 %4687
        %4689 = vrot.lane.b32.xlu0 %v3970, 64
        %v4690 = vpop.permute.xlu0 %4689
        %4691 = vrot.lane.b32.xlu0 %v3971, 64
        %v4692 = vpop.permute.xlu0 %4691
        %4693 = vrot.lane.b32.xlu0 %v3972, 64
        %v4694 = vpop.permute.xlu0 %4693
        %4695 = vrot.lane.b32.xlu0 %v4147, 64
        %v4696 = vpop.permute.xlu0 %4695
        %4697 = vrot.lane.b32.xlu0 %v3974, 64
        %v4698 = vpop.permute.xlu0 %4697
        %4699 = vrot.lane.b32.xlu0 %v3975, 64
        %v4700 = vpop.permute.xlu0 %4699
        %4701 = vrot.lane.b32.xlu0 %v3976, 64
        %v4702 = vpop.permute.xlu0 %4701
        %4703 = vrot.lane.b32.xlu0 %v3977, 64
        %v4704 = vpop.permute.xlu0 %4703
        %4705 = vrot.lane.b32.xlu0 %v3978, 64
        %v4706 = vpop.permute.xlu0 %4705
        %4707 = vrot.lane.b32.xlu0 %v3979, 64
        %v4708 = vpop.permute.xlu0 %4707
        %4709 = vrot.lane.b32.xlu0 %v3980, 64
        %v4710 = vpop.permute.xlu0 %4709
        %4711 = vrot.lane.b32.xlu0 %v4148, 64
        %v4712 = vpop.permute.xlu0 %4711
        %4777 = vrot.lane.b32.xlu0 %v4153, 80
        %v4778 = vpop.permute.xlu0 %4777
        %4779 = vrot.lane.b32.xlu0 %v4154, 80
        %v4780 = vpop.permute.xlu0 %4779
        %4781 = vrot.lane.b32.xlu0 %v4155, 80
        %v4782 = vpop.permute.xlu0 %4781
        %4783 = vrot.lane.b32.xlu0 %v4156, 80
        %v4784 = vpop.permute.xlu0 %4783
        %4785 = vrot.lane.b32.xlu0 %v4157, 80
        %v4786 = vpop.permute.xlu0 %4785
        %4787 = vrot.lane.b32.xlu0 %v4158, 80
        %v4788 = vpop.permute.xlu0 %4787
        %4789 = vrot.lane.b32.xlu0 %v4159, 80
        %v4790 = vpop.permute.xlu0 %4789
        %4791 = vrot.lane.b32.xlu0 %v4160, 80
        %v4792 = vpop.permute.xlu0 %4791
        %4793 = vrot.lane.b32.xlu0 %v4161, 80
        %v4794 = vpop.permute.xlu0 %4793
        %4795 = vrot.lane.b32.xlu0 %v4162, 80
        %v4796 = vpop.permute.xlu0 %4795
        %4797 = vrot.lane.b32.xlu0 %v4163, 80
        %v4798 = vpop.permute.xlu0 %4797
        %4799 = vrot.lane.b32.xlu0 %v4164, 80
        %v4800 = vpop.permute.xlu0 %4799
        %4801 = vrot.lane.b32.xlu0 %v4165, 80
        %v4802 = vpop.permute.xlu0 %4801
        %4803 = vrot.lane.b32.xlu0 %v4166, 80
        %v4804 = vpop.permute.xlu0 %4803
        %4805 = vrot.lane.b32.xlu0 %v4167, 80
        %v4806 = vpop.permute.xlu0 %4805
        %4807 = vrot.lane.b32.xlu0 %v4168, 80
        %v4808 = vpop.permute.xlu0 %4807
        %4809 = vrot.lane.b32.xlu0 %v4169, 80
        %v4810 = vpop.permute.xlu0 %4809
        %4811 = vrot.lane.b32.xlu0 %v4170, 80
        %v4812 = vpop.permute.xlu0 %4811
        %4813 = vrot.lane.b32.xlu0 %v4171, 80
        %v4814 = vpop.permute.xlu0 %4813
        %4815 = vrot.lane.b32.xlu0 %v4172, 80
        %v4816 = vpop.permute.xlu0 %4815
        %4817 = vrot.lane.b32.xlu0 %v4173, 80
        %v4818 = vpop.permute.xlu0 %4817
        %4819 = vrot.lane.b32.xlu0 %v4174, 80
        %v4820 = vpop.permute.xlu0 %4819
        %4821 = vrot.lane.b32.xlu0 %v4175, 80
        %v4822 = vpop.permute.xlu0 %4821
        %4823 = vrot.lane.b32.xlu0 %v4176, 80
        %v4824 = vpop.permute.xlu0 %4823
        %4825 = vrot.lane.b32.xlu0 %v4177, 80
        %v4826 = vpop.permute.xlu0 %4825
        %4827 = vrot.lane.b32.xlu0 %v4178, 80
        %v4828 = vpop.permute.xlu0 %4827
        %4829 = vrot.lane.b32.xlu0 %v4179, 80
        %v4830 = vpop.permute.xlu0 %4829
        %4831 = vrot.lane.b32.xlu0 %v4180, 80
        %v4832 = vpop.permute.xlu0 %4831
        %4833 = vrot.lane.b32.xlu0 %v4181, 80
        %v4834 = vpop.permute.xlu0 %4833
        %4835 = vrot.lane.b32.xlu0 %v4182, 80
        %v4836 = vpop.permute.xlu0 %4835
        %4837 = vrot.lane.b32.xlu0 %v4183, 80
        %v4838 = vpop.permute.xlu0 %4837
        %4839 = vrot.lane.b32.xlu0 %v4184, 80
        %v4840 = vpop.permute.xlu0 %4839
        %4905 = vrot.lane.b32.xlu0 %v4189, 96
        %v4906 = vpop.permute.xlu0 %4905
        %4907 = vrot.lane.b32.xlu0 %v4190, 96
        %v4908 = vpop.permute.xlu0 %4907
        %4909 = vrot.lane.b32.xlu0 %v4191, 96
        %v4910 = vpop.permute.xlu0 %4909
        %4911 = vrot.lane.b32.xlu0 %v4192, 96
        %v4912 = vpop.permute.xlu0 %4911
        %4913 = vrot.lane.b32.xlu0 %v4193, 96
        %v4914 = vpop.permute.xlu0 %4913
        %4915 = vrot.lane.b32.xlu0 %v4194, 96
        %v4916 = vpop.permute.xlu0 %4915
        %4917 = vrot.lane.b32.xlu0 %v4195, 96
        %v4918 = vpop.permute.xlu0 %4917
        %4919 = vrot.lane.b32.xlu0 %v4196, 96
        %v4920 = vpop.permute.xlu0 %4919
        %4921 = vrot.lane.b32.xlu0 %v4197, 96
        %v4922 = vpop.permute.xlu0 %4921
        %4923 = vrot.lane.b32.xlu0 %v4198, 96
        %v4924 = vpop.permute.xlu0 %4923
        %4925 = vrot.lane.b32.xlu0 %v4199, 96
        %v4926 = vpop.permute.xlu0 %4925
        %4927 = vrot.lane.b32.xlu0 %v4200, 96
        %v4928 = vpop.permute.xlu0 %4927
        %4929 = vrot.lane.b32.xlu0 %v4201, 96
        %v4930 = vpop.permute.xlu0 %4929
        %4931 = vrot.lane.b32.xlu0 %v4202, 96
        %v4932 = vpop.permute.xlu0 %4931
        %4933 = vrot.lane.b32.xlu0 %v4203, 96
        %v4934 = vpop.permute.xlu0 %4933
        %4935 = vrot.lane.b32.xlu0 %v4204, 96
        %v4936 = vpop.permute.xlu0 %4935
        %4937 = vrot.lane.b32.xlu0 %v4205, 96
        %v4938 = vpop.permute.xlu0 %4937
        %4939 = vrot.lane.b32.xlu0 %v4206, 96
        %v4940 = vpop.permute.xlu0 %4939
        %4941 = vrot.lane.b32.xlu0 %v4207, 96
        %v4942 = vpop.permute.xlu0 %4941
        %4943 = vrot.lane.b32.xlu0 %v4208, 96
        %v4944 = vpop.permute.xlu0 %4943
        %4945 = vrot.lane.b32.xlu0 %v4209, 96
        %v4946 = vpop.permute.xlu0 %4945
        %4947 = vrot.lane.b32.xlu0 %v4210, 96
        %v4948 = vpop.permute.xlu0 %4947
        %4949 = vrot.lane.b32.xlu0 %v4211, 96
        %v4950 = vpop.permute.xlu0 %4949
        %4951 = vrot.lane.b32.xlu0 %v4212, 96
        %v4952 = vpop.permute.xlu0 %4951
        %4953 = vrot.lane.b32.xlu0 %v4213, 96
        %v4954 = vpop.permute.xlu0 %4953
        %4955 = vrot.lane.b32.xlu0 %v4214, 96
        %v4956 = vpop.permute.xlu0 %4955
        %4957 = vrot.lane.b32.xlu0 %v4215, 96
        %v4958 = vpop.permute.xlu0 %4957
        %4959 = vrot.lane.b32.xlu0 %v4216, 96
        %v4960 = vpop.permute.xlu0 %4959
        %4961 = vrot.lane.b32.xlu0 %v4217, 96
        %v4962 = vpop.permute.xlu0 %4961
        %4963 = vrot.lane.b32.xlu0 %v4218, 96
        %v4964 = vpop.permute.xlu0 %4963
        %4965 = vrot.lane.b32.xlu0 %v4219, 96
        %v4966 = vpop.permute.xlu0 %4965
        %4967 = vrot.lane.b32.xlu0 %v4220, 96
        %v4968 = vpop.permute.xlu0 %4967
        %5005 = vrot.lane.b32.xlu0 %v3951, 112
        %v5006 = vpop.permute.xlu0 %5005
        %5007 = vrot.lane.b32.xlu0 %v3952, 112
        %v5008 = vpop.permute.xlu0 %5007
        %5009 = vrot.lane.b32.xlu0 %v3953, 112
        %v5010 = vpop.permute.xlu0 %5009
        %5011 = vrot.lane.b32.xlu0 %v3954, 112
        %v5012 = vpop.permute.xlu0 %5011
        %5013 = vrot.lane.b32.xlu0 %v3955, 112
        %v5014 = vpop.permute.xlu0 %5013
        %5015 = vrot.lane.b32.xlu0 %v3956, 112
        %v5016 = vpop.permute.xlu0 %5015
        %5017 = vrot.lane.b32.xlu0 %v4145, 112
        %v5018 = vpop.permute.xlu0 %5017
        %5019 = vrot.lane.b32.xlu0 %v4221, 112
        %v5020 = vpop.permute.xlu0 %5019
        %5021 = vrot.lane.b32.xlu0 %v3959, 112
        %v5022 = vpop.permute.xlu0 %5021
        %5023 = vrot.lane.b32.xlu0 %v3960, 112
        %v5024 = vpop.permute.xlu0 %5023
        %5025 = vrot.lane.b32.xlu0 %v3961, 112
        %v5026 = vpop.permute.xlu0 %5025
        %5027 = vrot.lane.b32.xlu0 %v3962, 112
        %v5028 = vpop.permute.xlu0 %5027
        %5029 = vrot.lane.b32.xlu0 %v3963, 112
        %v5030 = vpop.permute.xlu0 %5029
        %5031 = vrot.lane.b32.xlu0 %v3964, 112
        %v5032 = vpop.permute.xlu0 %5031
        %5033 = vrot.lane.b32.xlu0 %v4146, 112
        %v5034 = vpop.permute.xlu0 %5033
        %5035 = vrot.lane.b32.xlu0 %v4222, 112
        %v5036 = vpop.permute.xlu0 %5035
        %5037 = vrot.lane.b32.xlu0 %v3967, 112
        %v5038 = vpop.permute.xlu0 %5037
        %5039 = vrot.lane.b32.xlu0 %v3968, 112
        %v5040 = vpop.permute.xlu0 %5039
        %5041 = vrot.lane.b32.xlu0 %v3969, 112
        %v5042 = vpop.permute.xlu0 %5041
        %5043 = vrot.lane.b32.xlu0 %v3970, 112
        %v5044 = vpop.permute.xlu0 %5043
        %5045 = vrot.lane.b32.xlu0 %v3971, 112
        %v5046 = vpop.permute.xlu0 %5045
        %5047 = vrot.lane.b32.xlu0 %v3972, 112
        %v5048 = vpop.permute.xlu0 %5047
        %5049 = vrot.lane.b32.xlu0 %v4147, 112
        %v5050 = vpop.permute.xlu0 %5049
        %5051 = vrot.lane.b32.xlu0 %v4223, 112
        %v5052 = vpop.permute.xlu0 %5051
        %5053 = vrot.lane.b32.xlu0 %v3975, 112
        %v5054 = vpop.permute.xlu0 %5053
        %5055 = vrot.lane.b32.xlu0 %v3976, 112
        %v5056 = vpop.permute.xlu0 %5055
        %5057 = vrot.lane.b32.xlu0 %v3977, 112
        %v5058 = vpop.permute.xlu0 %5057
        %5059 = vrot.lane.b32.xlu0 %v3978, 112
        %v5060 = vpop.permute.xlu0 %5059
        %5061 = vrot.lane.b32.xlu0 %v3979, 112
        %v5062 = vpop.permute.xlu0 %5061
        %5063 = vrot.lane.b32.xlu0 %v3980, 112
        %v5064 = vpop.permute.xlu0 %5063
        %5065 = vrot.lane.b32.xlu0 %v4148, 112
        %v5066 = vpop.permute.xlu0 %5065
        %5067 = vrot.lane.b32.xlu0 %v4224, 112
        %v5068 = vpop.permute.xlu0 %5067
        %v5101 = vsel %vm527, %v3917, %v4294
        %v5102 = vsel %vm527, %v3918, %v4296
        %v5103 = vsel %vm527, %v3919, %v4298
        %v5104 = vsel %vm527, %v3920, %v4300
        %v5105 = vsel %vm527, %v3921, %v4302
        %v5106 = vsel %vm527, %v3922, %v4304
        %v5107 = vsel %vm527, %v3923, %v4306
        %v5108 = vsel %vm527, %v3924, %v4308
        %v5109 = vsel %vm527, %v3925, %v4310
        %v5110 = vsel %vm527, %v3926, %v4312
        %v5111 = vsel %vm527, %v3927, %v4314
        %v5112 = vsel %vm527, %v3928, %v4316
        %v5113 = vsel %vm527, %v3929, %v4318
        %v5114 = vsel %vm527, %v3930, %v4320
        %v5115 = vsel %vm527, %v3931, %v4322
        %v5116 = vsel %vm527, %v3932, %v4324
        %v5117 = vsel %vm527, %v3933, %v4326
        %v5118 = vsel %vm527, %v3934, %v4328
        %v5119 = vsel %vm527, %v3935, %v4330
        %v5120 = vsel %vm527, %v3936, %v4332
        %v5121 = vsel %vm527, %v3937, %v4334
        %v5122 = vsel %vm527, %v3938, %v4336
        %v5123 = vsel %vm527, %v3939, %v4338
        %v5124 = vsel %vm527, %v3940, %v4340
        %v5125 = vsel %vm527, %v3941, %v4342
        %v5126 = vsel %vm527, %v3942, %v4344
        %v5127 = vsel %vm527, %v3943, %v4346
        %v5128 = vsel %vm527, %v3944, %v4348
        %v5129 = vsel %vm527, %v3945, %v4350
        %v5130 = vsel %vm527, %v3946, %v4352
        %v5131 = vsel %vm527, %v3947, %v4354
        %v5132 = vsel %vm527, %v3948, %v4356
        %v5133 = vsel %vm544, %v5101, %v4422
        %v5134 = vsel %vm544, %v5102, %v4424
        %v5135 = vsel %vm544, %v5103, %v4426
        %v5136 = vsel %vm544, %v5104, %v4428
        %v5137 = vsel %vm544, %v5105, %v4430
        %v5138 = vsel %vm544, %v5106, %v4432
        %v5139 = vsel %vm544, %v5107, %v4434
        %v5140 = vsel %vm544, %v5108, %v4436
        %v5141 = vsel %vm544, %v5109, %v4438
        %v5142 = vsel %vm544, %v5110, %v4440
        %v5143 = vsel %vm544, %v5111, %v4442
        %v5144 = vsel %vm544, %v5112, %v4444
        %v5145 = vsel %vm544, %v5113, %v4446
        %v5146 = vsel %vm544, %v5114, %v4448
        %v5147 = vsel %vm544, %v5115, %v4450
        %v5148 = vsel %vm544, %v5116, %v4452
        %v5149 = vsel %vm544, %v5117, %v4454
        %v5150 = vsel %vm544, %v5118, %v4456
        %v5151 = vsel %vm544, %v5119, %v4458
        %v5152 = vsel %vm544, %v5120, %v4460
        %v5153 = vsel %vm544, %v5121, %v4462
        %v5154 = vsel %vm544, %v5122, %v4464
        %v5155 = vsel %vm544, %v5123, %v4466
        %v5156 = vsel %vm544, %v5124, %v4468
        %v5157 = vsel %vm544, %v5125, %v4470
        %v5158 = vsel %vm544, %v5126, %v4472
        %v5159 = vsel %vm544, %v5127, %v4474
        %v5160 = vsel %vm544, %v5128, %v4476
        %v5161 = vsel %vm544, %v5129, %v4478
        %v5162 = vsel %vm544, %v5130, %v4480
        %v5163 = vsel %vm544, %v5131, %v4482
        %v5164 = vsel %vm544, %v5132, %v4484
        %vm5165 = vcmask 392192
        %v5166 = vsel %vm5165, %v5133, %v4550
        %v5167 = vsel %vm5165, %v5134, %v4552
        %v5168 = vsel %vm5165, %v5135, %v4554
        %v5169 = vsel %vm5165, %v5136, %v4556
        %v5170 = vsel %vm5165, %v5137, %v4558
        %v5171 = vsel %vm5165, %v5138, %v4560
        %v5172 = vsel %vm5165, %v5139, %v4562
        %v5173 = vsel %vm5165, %v5140, %v4564
        %v5174 = vsel %vm5165, %v5141, %v4566
        %v5175 = vsel %vm5165, %v5142, %v4568
        %v5176 = vsel %vm5165, %v5143, %v4570
        %v5177 = vsel %vm5165, %v5144, %v4572
        %v5178 = vsel %vm5165, %v5145, %v4574
        %v5179 = vsel %vm5165, %v5146, %v4576
        %v5180 = vsel %vm5165, %v5147, %v4578
        %v5181 = vsel %vm5165, %v5148, %v4580
        %v5182 = vsel %vm5165, %v5149, %v4582
        %v5183 = vsel %vm5165, %v5150, %v4584
        %v5184 = vsel %vm5165, %v5151, %v4586
        %v5185 = vsel %vm5165, %v5152, %v4588
        %v5186 = vsel %vm5165, %v5153, %v4590
        %v5187 = vsel %vm5165, %v5154, %v4592
        %v5188 = vsel %vm5165, %v5155, %v4594
        %v5189 = vsel %vm5165, %v5156, %v4596
        %v5190 = vsel %vm5165, %v5157, %v4598
        %v5191 = vsel %vm5165, %v5158, %v4600
        %v5192 = vsel %vm5165, %v5159, %v4602
        %v5193 = vsel %vm5165, %v5160, %v4604
        %v5194 = vsel %vm5165, %v5161, %v4606
        %v5195 = vsel %vm5165, %v5162, %v4608
        %v5196 = vsel %vm5165, %v5163, %v4610
        %v5197 = vsel %vm5165, %v5164, %v4612
        %vm5198 = vcmask 523264
        %v5199 = vsel %vm5198, %v5166, %v4650
        %v5200 = vsel %vm5198, %v5167, %v4652
        %v5201 = vsel %vm5198, %v5168, %v4654
        %v5202 = vsel %vm5198, %v5169, %v4656
        %v5203 = vsel %vm5198, %v5170, %v4658
        %v5204 = vsel %vm5198, %v5171, %v4660
        %v5205 = vsel %vm5198, %v5172, %v4662
        %v5206 = vsel %vm5198, %v5173, %v4664
        %v5207 = vsel %vm5198, %v5174, %v4666
        %v5208 = vsel %vm5198, %v5175, %v4668
        %v5209 = vsel %vm5198, %v5176, %v4670
        %v5210 = vsel %vm5198, %v5177, %v4672
        %v5211 = vsel %vm5198, %v5178, %v4674
        %v5212 = vsel %vm5198, %v5179, %v4676
        %v5213 = vsel %vm5198, %v5180, %v4678
        %v5214 = vsel %vm5198, %v5181, %v4680
        %v5215 = vsel %vm5198, %v5182, %v4682
        %v5216 = vsel %vm5198, %v5183, %v4684
        %v5217 = vsel %vm5198, %v5184, %v4686
        %v5218 = vsel %vm5198, %v5185, %v4688
        %v5219 = vsel %vm5198, %v5186, %v4690
        %v5220 = vsel %vm5198, %v5187, %v4692
        %v5221 = vsel %vm5198, %v5188, %v4694
        %v5222 = vsel %vm5198, %v5189, %v4696
        %v5223 = vsel %vm5198, %v5190, %v4698
        %v5224 = vsel %vm5198, %v5191, %v4700
        %v5225 = vsel %vm5198, %v5192, %v4702
        %v5226 = vsel %vm5198, %v5193, %v4704
        %v5227 = vsel %vm5198, %v5194, %v4706
        %v5228 = vsel %vm5198, %v5195, %v4708
        %v5229 = vsel %vm5198, %v5196, %v4710
        %v5230 = vsel %vm5198, %v5197, %v4712
        %vm5231 = vcmask 654336
        %v5232 = vsel %vm5231, %v5199, %v4778
        %v5233 = vsel %vm5231, %v5200, %v4780
        %v5234 = vsel %vm5231, %v5201, %v4782
        %v5235 = vsel %vm5231, %v5202, %v4784
        %v5236 = vsel %vm5231, %v5203, %v4786
        %v5237 = vsel %vm5231, %v5204, %v4788
        %v5238 = vsel %vm5231, %v5205, %v4790
        %v5239 = vsel %vm5231, %v5206, %v4792
        %v5240 = vsel %vm5231, %v5207, %v4794
        %v5241 = vsel %vm5231, %v5208, %v4796
        %v5242 = vsel %vm5231, %v5209, %v4798
        %v5243 = vsel %vm5231, %v5210, %v4800
        %v5244 = vsel %vm5231, %v5211, %v4802
        %v5245 = vsel %vm5231, %v5212, %v4804
        %v5246 = vsel %vm5231, %v5213, %v4806
        %v5247 = vsel %vm5231, %v5214, %v4808
        %v5248 = vsel %vm5231, %v5215, %v4810
        %v5249 = vsel %vm5231, %v5216, %v4812
        %v5250 = vsel %vm5231, %v5217, %v4814
        %v5251 = vsel %vm5231, %v5218, %v4816
        %v5252 = vsel %vm5231, %v5219, %v4818
        %v5253 = vsel %vm5231, %v5220, %v4820
        %v5254 = vsel %vm5231, %v5221, %v4822
        %v5255 = vsel %vm5231, %v5222, %v4824
        %v5256 = vsel %vm5231, %v5223, %v4826
        %v5257 = vsel %vm5231, %v5224, %v4828
        %v5258 = vsel %vm5231, %v5225, %v4830
        %v5259 = vsel %vm5231, %v5226, %v4832
        %v5260 = vsel %vm5231, %v5227, %v4834
        %v5261 = vsel %vm5231, %v5228, %v4836
        %v5262 = vsel %vm5231, %v5229, %v4838
        %v5263 = vsel %vm5231, %v5230, %v4840
        %v5264 = vsel %vm3547, %v5232, %v4906
        %v5265 = vsel %vm3547, %v5233, %v4908
        %v5266 = vsel %vm3547, %v5234, %v4910
        %v5267 = vsel %vm3547, %v5235, %v4912
        %v5268 = vsel %vm3547, %v5236, %v4914
        %v5269 = vsel %vm3547, %v5237, %v4916
        %v5270 = vsel %vm3547, %v5238, %v4918
        %v5271 = vsel %vm3547, %v5239, %v4920
        %v5272 = vsel %vm3547, %v5240, %v4922
        %v5273 = vsel %vm3547, %v5241, %v4924
        %v5274 = vsel %vm3547, %v5242, %v4926
        %v5275 = vsel %vm3547, %v5243, %v4928
        %v5276 = vsel %vm3547, %v5244, %v4930
        %v5277 = vsel %vm3547, %v5245, %v4932
        %v5278 = vsel %vm3547, %v5246, %v4934
        %v5279 = vsel %vm3547, %v5247, %v4936
        %v5280 = vsel %vm3547, %v5248, %v4938
        %v5281 = vsel %vm3547, %v5249, %v4940
        %v5282 = vsel %vm3547, %v5250, %v4942
        %v5283 = vsel %vm3547, %v5251, %v4944
        %v5284 = vsel %vm3547, %v5252, %v4946
        %v5285 = vsel %vm3547, %v5253, %v4948
        %v5286 = vsel %vm3547, %v5254, %v4950
        %v5287 = vsel %vm3547, %v5255, %v4952
        %v5288 = vsel %vm3547, %v5256, %v4954
        %v5289 = vsel %vm3547, %v5257, %v4956
        %v5290 = vsel %vm3547, %v5258, %v4958
        %v5291 = vsel %vm3547, %v5259, %v4960
        %v5292 = vsel %vm3547, %v5260, %v4962
        %v5293 = vsel %vm3547, %v5261, %v4964
        %v5294 = vsel %vm3547, %v5262, %v4966
        %v5295 = vsel %vm3547, %v5263, %v4968
        %vm5296 = vcmask 916480
        %v5297 = vsel %vm5296, %v5264, %v5006
        %v5298 = vsel %vm5296, %v5265, %v5008
        %v5299 = vsel %vm5296, %v5266, %v5010
        %v5300 = vsel %vm5296, %v5267, %v5012
        %v5301 = vsel %vm5296, %v5268, %v5014
        %v5302 = vsel %vm5296, %v5269, %v5016
        %v5303 = vsel %vm5296, %v5270, %v5018
        %v5304 = vsel %vm5296, %v5271, %v5020
        %v5305 = vsel %vm5296, %v5272, %v5022
        %v5306 = vsel %vm5296, %v5273, %v5024
        %v5307 = vsel %vm5296, %v5274, %v5026
        %v5308 = vsel %vm5296, %v5275, %v5028
        %v5309 = vsel %vm5296, %v5276, %v5030
        %v5310 = vsel %vm5296, %v5277, %v5032
        %v5311 = vsel %vm5296, %v5278, %v5034
        %v5312 = vsel %vm5296, %v5279, %v5036
        %v5313 = vsel %vm5296, %v5280, %v5038
        %v5314 = vsel %vm5296, %v5281, %v5040
        %v5315 = vsel %vm5296, %v5282, %v5042
        %v5316 = vsel %vm5296, %v5283, %v5044
        %v5317 = vsel %vm5296, %v5284, %v5046
        %v5318 = vsel %vm5296, %v5285, %v5048
        %v5319 = vsel %vm5296, %v5286, %v5050
        %v5320 = vsel %vm5296, %v5287, %v5052
        %v5321 = vsel %vm5296, %v5288, %v5054
        %v5322 = vsel %vm5296, %v5289, %v5056
        %v5323 = vsel %vm5296, %v5290, %v5058
        %v5324 = vsel %vm5296, %v5291, %v5060
        %v5325 = vsel %vm5296, %v5292, %v5062
        %v5326 = vsel %vm5296, %v5293, %v5064
        %v5327 = vsel %vm5296, %v5294, %v5066
        %v5328 = vsel %vm5296, %v5295, %v5068
        %v5329 = vpack.c.bf16 %v5298, %v5297
        %v5330 = vpack.c.bf16 %v4230, %v4229
        %v5331 = vpack.c.bf16 %v5300, %v5299
        %v5332 = vpack.c.bf16 %v4232, %v4231
        %v5333 = vpack.c.bf16 %v5302, %v5301
        %v5334 = vpack.c.bf16 %v4234, %v4233
        %v5335 = vpack.c.bf16 %v5304, %v5303
        %v5336 = vpack.c.bf16 %v4236, %v4235
        %v5337 = vpack.c.bf16 %v5306, %v5305
        %v5338 = vpack.c.bf16 %v4238, %v4237
        %v5339 = vpack.c.bf16 %v5308, %v5307
        %v5340 = vpack.c.bf16 %v4240, %v4239
        %v5341 = vpack.c.bf16 %v5310, %v5309
        %v5342 = vpack.c.bf16 %v4242, %v4241
        %v5343 = vpack.c.bf16 %v5312, %v5311
        %v5344 = vpack.c.bf16 %v4244, %v4243
        %v5345 = vpack.c.bf16 %v5314, %v5313
        %v5346 = vpack.c.bf16 %v4246, %v4245
        %v5347 = vpack.c.bf16 %v5316, %v5315
        %v5348 = vpack.c.bf16 %v4248, %v4247
        %v5349 = vpack.c.bf16 %v5318, %v5317
        %v5350 = vpack.c.bf16 %v4250, %v4249
        %v5351 = vpack.c.bf16 %v5320, %v5319
        %v5352 = vpack.c.bf16 %v4252, %v4251
        %v5353 = vpack.c.bf16 %v5322, %v5321
        %v5354 = vpack.c.bf16 %v4254, %v4253
        %v5355 = vpack.c.bf16 %v5324, %v5323
        %v5356 = vpack.c.bf16 %v4256, %v4255
        %v5357 = vpack.c.bf16 %v5326, %v5325
        %v5358 = vpack.c.bf16 %v4258, %v4257
        %v5359 = vpack.c.bf16 %v5328, %v5327
        %v5360 = vpack.c.bf16 %v4260, %v4259
        %v5361 = vld [vmem:[%s6] sm:$0xf]
        %v5362 = vld [vmem:[%s6 + $0x4] sm:$0xf]
        %v5363 = vld [vmem:[%s6 + $0x8] sm:$0xf]
        %v5364 = vld [vmem:[%s6 + $0xc] sm:$0xf]
        %v5365 = vld [vmem:[%s6 + $0x10] sm:$0xf]
        %v5366 = vld [vmem:[%s6 + $0x14] sm:$0xf]
        %v5367 = vld [vmem:[%s6 + $0x18] sm:$0xf]
        %v5368 = vld [vmem:[%s6 + $0x1c] sm:$0xf]
        %v5369 = vld [vmem:[%s6 + $0x20] sm:$0xf]
        %v5370 = vld [vmem:[%s6 + $0x24] sm:$0xf]
        %v5371 = vld [vmem:[%s6 + $0x28] sm:$0xf]
        %v5372 = vld [vmem:[%s6 + $0x2c] sm:$0xf]
        %v5373 = vld [vmem:[%s6 + $0x30] sm:$0xf]
        %v5374 = vld [vmem:[%s6 + $0x34] sm:$0xf]
        %v5375 = vld [vmem:[%s6 + $0x38] sm:$0xf]
        %v5376 = vld [vmem:[%s6 + $0x3c] sm:$0xf]
        %v5377 = vld [vmem:[%s6 + $0x40] sm:$0xf]
        %v5378 = vld [vmem:[%s6 + $0x44] sm:$0xf]
        %v5379 = vld [vmem:[%s7] sm:$0x1]
        %v5381 = vlaneseq
        %v5382 = vshrl.u32 %v5381, 7
        %v5383 = vsub.s32 0, %v5382
        %v5384 = vrot.slane %v5379, %v5383
        %v5404 = vunpack.c.l.b16 %v5361
        %v5405 = vunpack.c.l.b16 %v5362
        %v5406 = vunpack.c.l.b16 %v5363
        %v5407 = vunpack.c.l.b16 %v5364
        %v5408 = vunpack.c.l.b16 %v5365
        %v5409 = vunpack.c.l.b16 %v5366
        %v5410 = vunpack.c.l.b16 %v5367
        %v5411 = vunpack.c.l.b16 %v5368
        %v5412 = vunpack.c.l.b16 %v5369
        %v5413 = vunpack.c.l.b16 %v5370
        %v5414 = vunpack.c.l.b16 %v5371
        %v5415 = vunpack.c.l.b16 %v5372
        %v5416 = vunpack.c.l.b16 %v5373
        %v5417 = vunpack.c.l.b16 %v5374
        %v5418 = vunpack.c.l.b16 %v5375
        %v5419 = vunpack.c.l.b16 %v5376
        %v5420 = vunpack.c.l.b16 %v5377
        %v5421 = vunpack.c.l.b16 %v5378
        %v5422 = vpack.c.b16 %v5405, %v5404
        %v5423 = vpack.c.b16 %v5407, %v5406
        %v5424 = vpack.c.b16 %v5409, %v5408
        %v5425 = vpack.c.b16 %v5411, %v5410
        %v5426 = vpack.c.b16 %v5413, %v5412
        %v5427 = vpack.c.b16 %v5415, %v5414
        %v5428 = vpack.c.b16 %v5417, %v5416
        %v5429 = vpack.c.b16 %v5419, %v5418
        %v5430 = vpack.c.b16 %v5421, %v5420
        %v5441 = vsel %vm527, %v5330, 0
        %v5444 = vsel %vm527, %v5332, 0
        %v5447 = vsel %vm527, %v5334, 0
        %v5450 = vsel %vm527, %v5336, 0
        %v5453 = vsel %vm527, %v5338, 0
        %v5456 = vsel %vm527, %v5340, 0
        %v5459 = vsel %vm527, %v5342, 0
        %v5462 = vsel %vm527, %v5344, 0
        %v5465 = vsel %vm527, %v5346, 0
        %v5468 = vsel %vm527, %v5348, 0
        %v5471 = vsel %vm527, %v5350, 0
        %v5474 = vsel %vm527, %v5352, 0
        %v5477 = vsel %vm527, %v5354, 0
        %v5480 = vsel %vm527, %v5356, 0
        %v5483 = vsel %vm527, %v5358, 0
        %v5486 = vsel %vm527, %v5360, 0
        %5488 = vmatprep.subr.bf16.mxu0 0
        %5489 = vmatpush1.bf16.msra.mxu0 %v5422
        %5490 = vmatprep.subr.bf16.mxu0 0
        %5491 = vmatpush1.bf16.msra.mxu0 %v5423
        %5492 = vmatprep.subr.bf16.mxu0 0
        %5493 = vmatpush1.bf16.msra.mxu0 %v5424
        %5494 = vmatprep.subr.bf16.mxu0 0
        %5495 = vmatpush1.bf16.msra.mxu0 %v5425
        %5496 = vmatprep.subr.bf16.mxu0 0
        %5497 = vmatpush1.bf16.msra.mxu0 %v5426
        %5498 = vmatprep.subr.bf16.mxu0 0
        %5499 = vmatpush1.bf16.msra.mxu0 %v5427
        %5500 = vmatprep.subr.bf16.mxu0 0
        %5501 = vmatpush1.bf16.msra.mxu0 %v5428
        %5502 = vmatprep.subr.bf16.mxu0 0
        %5503 = vmatpush1.bf16.msra.mxu0 %v5429
        %5504 = vmatprep.subr.bf16.mxu0 0
        %5505 = vmatpush1.bf16.msra.mxu0 %v5430
        %5506 = vmatprep.subr.bf16.mxu0 0
        %5507 = vmatpush1.bf16.msra.mxu0 0
        %5508 = vmatprep.subr.bf16.mxu0 0
        %5509 = vmatpush1.bf16.msra.mxu0 0
        %5510 = vmatprep.subr.bf16.mxu0 0
        %5511 = vmatpush1.bf16.msra.mxu0 0
        %5512 = vmatprep.subr.bf16.mxu0 0
        %5513 = vmatpush1.bf16.msra.mxu0 0
        %5514 = vmatprep.subr.bf16.mxu0 0
        %5515 = vmatpush1.bf16.msra.mxu0 0
        %5516 = vmatprep.subr.bf16.mxu0 0
        %5517 = vmatpush1.bf16.msra.mxu0 0
        %5518 = vmatprep.subr.bf16.mxu0 0
        %5519 = vmatpush1.bf16.msra.mxu0 0
        %5520 = vmatprep.mubr.bf16.mxu0 %v5441
        %5521 = vmatmul.mubr.bf16.gmra.mrb[0].mxu0 %v5329
        %v5522 = vpop.f32.mrb[0].mxu0
        %v5523 = vadd.f32 %v5384, %v5522
        %v5524 = vpop.f32.mrb[0].mxu0
        %v5525 = vpop.f32.mrb[0].mxu0
        %v5526 = vadd.f32 %v5384, %v5525
        %v5527 = vpop.f32.mrb[0].mxu0
        %5528 = vmatprep.mubr.bf16.mxu0 %v5444
        %5529 = vmatmul.mubr.bf16.gmra.mrb[0].mxu0 %v5331
        %v5530 = vpop.f32.mrb[0].mxu0
        %v5531 = vadd.f32 %v5384, %v5530
        %v5532 = vpop.f32.mrb[0].mxu0
        %v5533 = vpop.f32.mrb[0].mxu0
        %v5534 = vadd.f32 %v5384, %v5533
        %v5535 = vpop.f32.mrb[0].mxu0
        %5536 = vmatprep.mubr.bf16.mxu0 %v5447
        %5537 = vmatmul.mubr.bf16.gmra.mrb[0].mxu0 %v5333
        %v5538 = vpop.f32.mrb[0].mxu0
        %v5539 = vadd.f32 %v5384, %v5538
        %v5540 = vpop.f32.mrb[0].mxu0
        %v5541 = vpop.f32.mrb[0].mxu0
        %v5542 = vadd.f32 %v5384, %v5541
        %v5543 = vpop.f32.mrb[0].mxu0
        %5544 = vmatprep.mubr.bf16.mxu0 %v5450
        %5545 = vmatmul.mubr.bf16.gmra.mrb[0].mxu0 %v5335
        %v5546 = vpop.f32.mrb[0].mxu0
        %v5547 = vadd.f32 %v5384, %v5546
        %v5548 = vpop.f32.mrb[0].mxu0
        %v5549 = vpop.f32.mrb[0].mxu0
        %v5550 = vadd.f32 %v5384, %v5549
        %v5551 = vpop.f32.mrb[0].mxu0
        %5552 = vmatprep.mubr.bf16.mxu0 %v5453
        %5553 = vmatmul.mubr.bf16.gmra.mrb[0].mxu0 %v5337
        %v5554 = vpop.f32.mrb[0].mxu0
        %v5555 = vadd.f32 %v5384, %v5554
        %v5556 = vpop.f32.mrb[0].mxu0
        %v5557 = vpop.f32.mrb[0].mxu0
        %v5558 = vadd.f32 %v5384, %v5557
        %v5559 = vpop.f32.mrb[0].mxu0
        %5560 = vmatprep.mubr.bf16.mxu0 %v5456
        %5561 = vmatmul.mubr.bf16.gmra.mrb[0].mxu0 %v5339
        %v5562 = vpop.f32.mrb[0].mxu0
        %v5563 = vadd.f32 %v5384, %v5562
        %v5564 = vpop.f32.mrb[0].mxu0
        %v5565 = vpop.f32.mrb[0].mxu0
        %v5566 = vadd.f32 %v5384, %v5565
        %v5567 = vpop.f32.mrb[0].mxu0
        %5568 = vmatprep.mubr.bf16.mxu0 %v5459
        %5569 = vmatmul.mubr.bf16.gmra.mrb[0].mxu0 %v5341
        %v5570 = vpop.f32.mrb[0].mxu0
        %v5571 = vadd.f32 %v5384, %v5570
        %v5572 = vpop.f32.mrb[0].mxu0
        %v5573 = vpop.f32.mrb[0].mxu0
        %v5574 = vadd.f32 %v5384, %v5573
        %v5575 = vpop.f32.mrb[0].mxu0
        %5576 = vmatprep.mubr.bf16.mxu0 %v5462
        %5577 = vmatmul.mubr.bf16.gmra.mrb[0].mxu0 %v5343
        %v5578 = vpop.f32.mrb[0].mxu0
        %v5579 = vadd.f32 %v5384, %v5578
        %v5580 = vpop.f32.mrb[0].mxu0
        %v5581 = vpop.f32.mrb[0].mxu0
        %v5582 = vadd.f32 %v5384, %v5581
        %v5583 = vpop.f32.mrb[0].mxu0
        %5584 = vmatprep.mubr.bf16.mxu0 %v5465
        %5585 = vmatmul.mubr.bf16.gmra.mrb[0].mxu0 %v5345
        %v5586 = vpop.f32.mrb[0].mxu0
        %v5587 = vadd.f32 %v5384, %v5586
        %v5588 = vpop.f32.mrb[0].mxu0
        %v5589 = vpop.f32.mrb[0].mxu0
        %v5590 = vadd.f32 %v5384, %v5589
        %v5591 = vpop.f32.mrb[0].mxu0
        %5592 = vmatprep.mubr.bf16.mxu0 %v5468
        %5593 = vmatmul.mubr.bf16.gmra.mrb[0].mxu0 %v5347
        %v5594 = vpop.f32.mrb[0].mxu0
        %v5595 = vadd.f32 %v5384, %v5594
        %v5596 = vpop.f32.mrb[0].mxu0
        %v5597 = vpop.f32.mrb[0].mxu0
        %v5598 = vadd.f32 %v5384, %v5597
        %v5599 = vpop.f32.mrb[0].mxu0
        %5600 = vmatprep.mubr.bf16.mxu0 %v5471
        %5601 = vmatmul.mubr.bf16.gmra.mrb[0].mxu0 %v5349
        %v5602 = vpop.f32.mrb[0].mxu0
        %v5603 = vadd.f32 %v5384, %v5602
        %v5604 = vpop.f32.mrb[0].mxu0
        %v5605 = vpop.f32.mrb[0].mxu0
        %v5606 = vadd.f32 %v5384, %v5605
        %v5607 = vpop.f32.mrb[0].mxu0
        %5608 = vmatprep.mubr.bf16.mxu0 %v5474
        %5609 = vmatmul.mubr.bf16.gmra.mrb[0].mxu0 %v5351
        %v5610 = vpop.f32.mrb[0].mxu0
        %v5611 = vadd.f32 %v5384, %v5610
        %v5612 = vpop.f32.mrb[0].mxu0
        %v5613 = vpop.f32.mrb[0].mxu0
        %v5614 = vadd.f32 %v5384, %v5613
        %v5615 = vpop.f32.mrb[0].mxu0
        %5616 = vmatprep.mubr.bf16.mxu0 %v5477
        %5617 = vmatmul.mubr.bf16.gmra.mrb[0].mxu0 %v5353
        %v5618 = vpop.f32.mrb[0].mxu0
        %v5619 = vadd.f32 %v5384, %v5618
        %v5620 = vpop.f32.mrb[0].mxu0
        %v5621 = vpop.f32.mrb[0].mxu0
        %v5622 = vadd.f32 %v5384, %v5621
        %v5623 = vpop.f32.mrb[0].mxu0
        %5624 = vmatprep.mubr.bf16.mxu0 %v5480
        %5625 = vmatmul.mubr.bf16.gmra.mrb[0].mxu0 %v5355
        %v5626 = vpop.f32.mrb[0].mxu0
        %v5627 = vadd.f32 %v5384, %v5626
        %v5628 = vpop.f32.mrb[0].mxu0
        %v5629 = vpop.f32.mrb[0].mxu0
        %v5630 = vadd.f32 %v5384, %v5629
        %v5631 = vpop.f32.mrb[0].mxu0
        %5632 = vmatprep.mubr.bf16.mxu0 %v5483
        %5633 = vmatmul.mubr.bf16.gmra.mrb[0].mxu0 %v5357
        %v5634 = vpop.f32.mrb[0].mxu0
        %v5635 = vadd.f32 %v5384, %v5634
        %v5636 = vpop.f32.mrb[0].mxu0
        %v5637 = vpop.f32.mrb[0].mxu0
        %v5638 = vadd.f32 %v5384, %v5637
        %v5639 = vpop.f32.mrb[0].mxu0
        %5640 = vmatprep.mubr.bf16.mxu0 %v5486
        %5641 = vmatmul.mubr.bf16.gmra.mrb[0].mxu0 %v5359
        %v5642 = vpop.f32.mrb[0].mxu0
        %v5643 = vadd.f32 %v5384, %v5642
        %v5644 = vpop.f32.mrb[0].mxu0
        %v5645 = vpop.f32.mrb[0].mxu0
        %v5646 = vadd.f32 %v5384, %v5645
        %v5647 = vpop.f32.mrb[0].mxu0
        %5648 = vdwg.mxu0
        %v5649 = vmax.f32 %v5523, 0.0
        %v5650 = vmax.f32 %v5526, 0.0
        %v5651 = vmax.f32 %v5531, 0.0
        %v5652 = vmax.f32 %v5534, 0.0
        %v5653 = vmax.f32 %v5539, 0.0
        %v5654 = vmax.f32 %v5542, 0.0
        %v5655 = vmax.f32 %v5547, 0.0
        %v5656 = vmax.f32 %v5550, 0.0
        %v5657 = vmax.f32 %v5555, 0.0
        %v5658 = vmax.f32 %v5558, 0.0
        %v5659 = vmax.f32 %v5563, 0.0
        %v5660 = vmax.f32 %v5566, 0.0
        %v5661 = vmax.f32 %v5571, 0.0
        %v5662 = vmax.f32 %v5574, 0.0
        %v5663 = vmax.f32 %v5579, 0.0
        %v5664 = vmax.f32 %v5582, 0.0
        %v5665 = vmax.f32 %v5587, 0.0
        %v5666 = vmax.f32 %v5590, 0.0
        %v5667 = vmax.f32 %v5595, 0.0
        %v5668 = vmax.f32 %v5598, 0.0
        %v5669 = vmax.f32 %v5603, 0.0
        %v5670 = vmax.f32 %v5606, 0.0
        %v5671 = vmax.f32 %v5611, 0.0
        %v5672 = vmax.f32 %v5614, 0.0
        %v5673 = vmax.f32 %v5619, 0.0
        %v5674 = vmax.f32 %v5622, 0.0
        %v5675 = vmax.f32 %v5627, 0.0
        %v5676 = vmax.f32 %v5630, 0.0
        %v5677 = vmax.f32 %v5635, 0.0
        %v5678 = vmax.f32 %v5638, 0.0
        %v5679 = vmax.f32 %v5643, 0.0
        %v5680 = vmax.f32 %v5646, 0.0
        %v5681 = vpack.c.bf16 %v5650, %v5649
        %v5682 = vpack.c.bf16 %v5652, %v5651
        %v5683 = vpack.c.bf16 %v5654, %v5653
        %v5684 = vpack.c.bf16 %v5656, %v5655
        %v5685 = vpack.c.bf16 %v5658, %v5657
        %v5686 = vpack.c.bf16 %v5660, %v5659
        %v5687 = vpack.c.bf16 %v5662, %v5661
        %v5688 = vpack.c.bf16 %v5664, %v5663
        %v5689 = vpack.c.bf16 %v5666, %v5665
        %v5690 = vpack.c.bf16 %v5668, %v5667
        %v5691 = vpack.c.bf16 %v5670, %v5669
        %v5692 = vpack.c.bf16 %v5672, %v5671
        %v5693 = vpack.c.bf16 %v5674, %v5673
        %v5694 = vpack.c.bf16 %v5676, %v5675
        %v5695 = vpack.c.bf16 %v5678, %v5677
        %v5696 = vpack.c.bf16 %v5680, %v5679
        %v5697 = vld [vmem:[%s8] sm:$0xf]
        %v5698 = vld [vmem:[%s8 + $0x4] sm:$0xf]
        %v5699 = vld [vmem:[%s8 + $0x8] sm:$0xf]
        %v5700 = vld [vmem:[%s8 + $0xc] sm:$0xf]
        %v5701 = vld [vmem:[%s8 + $0x10] sm:$0xf]
        %v5702 = vld [vmem:[%s8 + $0x14] sm:$0xf]
        %v5703 = vld [vmem:[%s8 + $0x18] sm:$0xf]
        %v5704 = vld [vmem:[%s8 + $0x1c] sm:$0xf]
        %v5705 = vld [vmem:[%s8 + $0x20] sm:$0xf]
        %v5706 = vld [vmem:[%s8 + $0x24] sm:$0xf]
        %v5707 = vld [vmem:[%s8 + $0x28] sm:$0xf]
        %v5708 = vld [vmem:[%s8 + $0x2c] sm:$0xf]
        %v5709 = vld [vmem:[%s8 + $0x30] sm:$0xf]
        %v5710 = vld [vmem:[%s8 + $0x34] sm:$0xf]
        %v5711 = vld [vmem:[%s8 + $0x38] sm:$0xf]
        %v5712 = vld [vmem:[%s8 + $0x3c] sm:$0xf]
        %v5713 = vld [vmem:[%s9] sm:$0x1]
        %v5715 = vlaneseq
        %v5716 = vshrl.u32 %v5715, 7
        %v5717 = vsub.s32 0, %v5716
        %v5718 = vrot.slane %v5713, %v5717
        %v5736 = vunpack.c.l.b16 %v5697
        %v5737 = vunpack.c.l.b16 %v5698
        %v5738 = vunpack.c.l.b16 %v5699
        %v5739 = vunpack.c.l.b16 %v5700
        %v5740 = vunpack.c.l.b16 %v5701
        %v5741 = vunpack.c.l.b16 %v5702
        %v5742 = vunpack.c.l.b16 %v5703
        %v5743 = vunpack.c.l.b16 %v5704
        %v5744 = vunpack.c.l.b16 %v5705
        %v5745 = vunpack.c.l.b16 %v5706
        %v5746 = vunpack.c.l.b16 %v5707
        %v5747 = vunpack.c.l.b16 %v5708
        %v5748 = vunpack.c.l.b16 %v5709
        %v5749 = vunpack.c.l.b16 %v5710
        %v5750 = vunpack.c.l.b16 %v5711
        %v5751 = vunpack.c.l.b16 %v5712
        %v5752 = vpack.c.b16 %v5737, %v5736
        %v5753 = vpack.c.b16 %v5739, %v5738
        %v5754 = vpack.c.b16 %v5741, %v5740
        %v5755 = vpack.c.b16 %v5743, %v5742
        %v5756 = vpack.c.b16 %v5745, %v5744
        %v5757 = vpack.c.b16 %v5747, %v5746
        %v5758 = vpack.c.b16 %v5749, %v5748
        %v5759 = vpack.c.b16 %v5751, %v5750
        %5768 = vmatprep.subr.bf16.mxu0 0
        %5769 = vmatpush1.bf16.msra.mxu0 %v5752
        %5770 = vmatprep.subr.bf16.mxu0 0
        %5771 = vmatpush1.bf16.msra.mxu0 %v5753
        %5772 = vmatprep.subr.bf16.mxu0 0
        %5773 = vmatpush1.bf16.msra.mxu0 %v5754
        %5774 = vmatprep.subr.bf16.mxu0 0
        %5775 = vmatpush1.bf16.msra.mxu0 %v5755
        %5776 = vmatprep.subr.bf16.mxu0 0
        %5777 = vmatpush1.bf16.msra.mxu0 %v5756
        %5778 = vmatprep.subr.bf16.mxu0 0
        %5779 = vmatpush1.bf16.msra.mxu0 %v5757
        %5780 = vmatprep.subr.bf16.mxu0 0
        %5781 = vmatpush1.bf16.msra.mxu0 %v5758
        %5782 = vmatprep.subr.bf16.mxu0 0
        %5783 = vmatpush1.bf16.msra.mxu0 %v5759
        %5784 = vmatprep.subr.bf16.mxu0 0
        %5785 = vmatpush1.bf16.msra.mxu0 0
        %5786 = vmatprep.subr.bf16.mxu0 0
        %5787 = vmatpush1.bf16.msra.mxu0 0
        %5788 = vmatprep.subr.bf16.mxu0 0
        %5789 = vmatpush1.bf16.msra.mxu0 0
        %5790 = vmatprep.subr.bf16.mxu0 0
        %5791 = vmatpush1.bf16.msra.mxu0 0
        %5792 = vmatprep.subr.bf16.mxu0 0
        %5793 = vmatpush1.bf16.msra.mxu0 0
        %5794 = vmatprep.subr.bf16.mxu0 0
        %5795 = vmatpush1.bf16.msra.mxu0 0
        %5796 = vmatprep.subr.bf16.mxu0 0
        %5797 = vmatpush1.bf16.msra.mxu0 0
        %5798 = vmatprep.subr.bf16.mxu0 0
        %5799 = vmatpush1.bf16.msra.mxu0 0
        %5800 = vmatprep.mubr.bf16.mxu0 0
        %5801 = vmatmul.mubr.bf16.gmra.mrb[0].mxu0 %v5681
        %v5802 = vpop.f32.mrb[0].mxu0
        %v5803 = vadd.f32 %v5718, %v5802
        %v5804 = vpop.f32.mrb[0].mxu0
        %v5805 = vpop.f32.mrb[0].mxu0
        %v5806 = vadd.f32 %v5718, %v5805
        %v5807 = vpop.f32.mrb[0].mxu0
        %5808 = vmatprep.mubr.bf16.mxu0 0
        %5809 = vmatmul.mubr.bf16.gmra.mrb[0].mxu0 %v5682
        %v5810 = vpop.f32.mrb[0].mxu0
        %v5811 = vadd.f32 %v5718, %v5810
        %v5812 = vpop.f32.mrb[0].mxu0
        %v5813 = vpop.f32.mrb[0].mxu0
        %v5814 = vadd.f32 %v5718, %v5813
        %v5815 = vpop.f32.mrb[0].mxu0
        %5816 = vmatprep.mubr.bf16.mxu0 0
        %5817 = vmatmul.mubr.bf16.gmra.mrb[0].mxu0 %v5683
        %v5818 = vpop.f32.mrb[0].mxu0
        %v5819 = vadd.f32 %v5718, %v5818
        %v5820 = vpop.f32.mrb[0].mxu0
        %v5821 = vpop.f32.mrb[0].mxu0
        %v5822 = vadd.f32 %v5718, %v5821
        %v5823 = vpop.f32.mrb[0].mxu0
        %5824 = vmatprep.mubr.bf16.mxu0 0
        %5825 = vmatmul.mubr.bf16.gmra.mrb[0].mxu0 %v5684
        %v5826 = vpop.f32.mrb[0].mxu0
        %v5827 = vadd.f32 %v5718, %v5826
        %v5828 = vpop.f32.mrb[0].mxu0
        %v5829 = vpop.f32.mrb[0].mxu0
        %v5830 = vadd.f32 %v5718, %v5829
        %v5831 = vpop.f32.mrb[0].mxu0
        %5832 = vmatprep.mubr.bf16.mxu0 0
        %5833 = vmatmul.mubr.bf16.gmra.mrb[0].mxu0 %v5685
        %v5834 = vpop.f32.mrb[0].mxu0
        %v5835 = vadd.f32 %v5718, %v5834
        %v5836 = vpop.f32.mrb[0].mxu0
        %v5837 = vpop.f32.mrb[0].mxu0
        %v5838 = vadd.f32 %v5718, %v5837
        %v5839 = vpop.f32.mrb[0].mxu0
        %5840 = vmatprep.mubr.bf16.mxu0 0
        %5841 = vmatmul.mubr.bf16.gmra.mrb[0].mxu0 %v5686
        %v5842 = vpop.f32.mrb[0].mxu0
        %v5843 = vadd.f32 %v5718, %v5842
        %v5844 = vpop.f32.mrb[0].mxu0
        %v5845 = vpop.f32.mrb[0].mxu0
        %v5846 = vadd.f32 %v5718, %v5845
        %v5847 = vpop.f32.mrb[0].mxu0
        %5848 = vmatprep.mubr.bf16.mxu0 0
        %5849 = vmatmul.mubr.bf16.gmra.mrb[0].mxu0 %v5687
        %v5850 = vpop.f32.mrb[0].mxu0
        %v5851 = vadd.f32 %v5718, %v5850
        %v5852 = vpop.f32.mrb[0].mxu0
        %v5853 = vpop.f32.mrb[0].mxu0
        %v5854 = vadd.f32 %v5718, %v5853
        %v5855 = vpop.f32.mrb[0].mxu0
        %5856 = vmatprep.mubr.bf16.mxu0 0
        %5857 = vmatmul.mubr.bf16.gmra.mrb[0].mxu0 %v5688
        %v5858 = vpop.f32.mrb[0].mxu0
        %v5859 = vadd.f32 %v5718, %v5858
        %v5860 = vpop.f32.mrb[0].mxu0
        %v5861 = vpop.f32.mrb[0].mxu0
        %v5862 = vadd.f32 %v5718, %v5861
        %v5863 = vpop.f32.mrb[0].mxu0
        %5864 = vmatprep.mubr.bf16.mxu0 0
        %5865 = vmatmul.mubr.bf16.gmra.mrb[0].mxu0 %v5689
        %v5866 = vpop.f32.mrb[0].mxu0
        %v5867 = vadd.f32 %v5718, %v5866
        %v5868 = vpop.f32.mrb[0].mxu0
        %v5869 = vpop.f32.mrb[0].mxu0
        %v5870 = vadd.f32 %v5718, %v5869
        %v5871 = vpop.f32.mrb[0].mxu0
        %5872 = vmatprep.mubr.bf16.mxu0 0
        %5873 = vmatmul.mubr.bf16.gmra.mrb[0].mxu0 %v5690
        %v5874 = vpop.f32.mrb[0].mxu0
        %v5875 = vadd.f32 %v5718, %v5874
        %v5876 = vpop.f32.mrb[0].mxu0
        %v5877 = vpop.f32.mrb[0].mxu0
        %v5878 = vadd.f32 %v5718, %v5877
        %v5879 = vpop.f32.mrb[0].mxu0
        %5880 = vmatprep.mubr.bf16.mxu0 0
        %5881 = vmatmul.mubr.bf16.gmra.mrb[0].mxu0 %v5691
        %v5882 = vpop.f32.mrb[0].mxu0
        %v5883 = vadd.f32 %v5718, %v5882
        %v5884 = vpop.f32.mrb[0].mxu0
        %v5885 = vpop.f32.mrb[0].mxu0
        %v5886 = vadd.f32 %v5718, %v5885
        %v5887 = vpop.f32.mrb[0].mxu0
        %5888 = vmatprep.mubr.bf16.mxu0 0
        %5889 = vmatmul.mubr.bf16.gmra.mrb[0].mxu0 %v5692
        %v5890 = vpop.f32.mrb[0].mxu0
        %v5891 = vadd.f32 %v5718, %v5890
        %v5892 = vpop.f32.mrb[0].mxu0
        %v5893 = vpop.f32.mrb[0].mxu0
        %v5894 = vadd.f32 %v5718, %v5893
        %v5895 = vpop.f32.mrb[0].mxu0
        %5896 = vmatprep.mubr.bf16.mxu0 0
        %5897 = vmatmul.mubr.bf16.gmra.mrb[0].mxu0 %v5693
        %v5898 = vpop.f32.mrb[0].mxu0
        %v5899 = vadd.f32 %v5718, %v5898
        %v5900 = vpop.f32.mrb[0].mxu0
        %v5901 = vpop.f32.mrb[0].mxu0
        %v5902 = vadd.f32 %v5718, %v5901
        %v5903 = vpop.f32.mrb[0].mxu0
        %5904 = vmatprep.mubr.bf16.mxu0 0
        %5905 = vmatmul.mubr.bf16.gmra.mrb[0].mxu0 %v5694
        %v5906 = vpop.f32.mrb[0].mxu0
        %v5907 = vadd.f32 %v5718, %v5906
        %v5908 = vpop.f32.mrb[0].mxu0
        %v5909 = vpop.f32.mrb[0].mxu0
        %v5910 = vadd.f32 %v5718, %v5909
        %v5911 = vpop.f32.mrb[0].mxu0
        %5912 = vmatprep.mubr.bf16.mxu0 0
        %5913 = vmatmul.mubr.bf16.gmra.mrb[0].mxu0 %v5695
        %v5914 = vpop.f32.mrb[0].mxu0
        %v5915 = vadd.f32 %v5718, %v5914
        %v5916 = vpop.f32.mrb[0].mxu0
        %v5917 = vpop.f32.mrb[0].mxu0
        %v5918 = vadd.f32 %v5718, %v5917
        %v5919 = vpop.f32.mrb[0].mxu0
        %5920 = vmatprep.mubr.bf16.mxu0 0
        %5921 = vmatmul.mubr.bf16.gmra.mrb[0].mxu0 %v5696
        %v5922 = vpop.f32.mrb[0].mxu0
        %v5923 = vadd.f32 %v5718, %v5922
        %v5924 = vpop.f32.mrb[0].mxu0
        %v5925 = vpop.f32.mrb[0].mxu0
        %v5926 = vadd.f32 %v5718, %v5925
        %v5927 = vpop.f32.mrb[0].mxu0
        %5928 = vdwg.mxu0
        %v5929 = vmax.f32 %v5803, 0.0
        %v5930 = vmax.f32 %v5806, 0.0
        %v5931 = vmax.f32 %v5811, 0.0
        %v5932 = vmax.f32 %v5814, 0.0
        %v5933 = vmax.f32 %v5819, 0.0
        %v5934 = vmax.f32 %v5822, 0.0
        %v5935 = vmax.f32 %v5827, 0.0
        %v5936 = vmax.f32 %v5830, 0.0
        %v5937 = vmax.f32 %v5835, 0.0
        %v5938 = vmax.f32 %v5838, 0.0
        %v5939 = vmax.f32 %v5843, 0.0
        %v5940 = vmax.f32 %v5846, 0.0
        %v5941 = vmax.f32 %v5851, 0.0
        %v5942 = vmax.f32 %v5854, 0.0
        %v5943 = vmax.f32 %v5859, 0.0
        %v5944 = vmax.f32 %v5862, 0.0
        %v5945 = vmax.f32 %v5867, 0.0
        %v5946 = vmax.f32 %v5870, 0.0
        %v5947 = vmax.f32 %v5875, 0.0
        %v5948 = vmax.f32 %v5878, 0.0
        %v5949 = vmax.f32 %v5883, 0.0
        %v5950 = vmax.f32 %v5886, 0.0
        %v5951 = vmax.f32 %v5891, 0.0
        %v5952 = vmax.f32 %v5894, 0.0
        %v5953 = vmax.f32 %v5899, 0.0
        %v5954 = vmax.f32 %v5902, 0.0
        %v5955 = vmax.f32 %v5907, 0.0
        %v5956 = vmax.f32 %v5910, 0.0
        %v5957 = vmax.f32 %v5915, 0.0
        %v5958 = vmax.f32 %v5918, 0.0
        %v5959 = vmax.f32 %v5923, 0.0
        %v5960 = vmax.f32 %v5926, 0.0
        %5961 = vst.msk [vmem:[#allocation2 + $0x10] sm:$0xff] %vm527, %v5929
        %5962 = vst.msk [vmem:[#allocation2 + $0x18] sm:$0xff] %vm527, %v5930
        %5963 = vst.msk [vmem:[#allocation2 + $0x20] sm:$0xff] %vm527, %v5931
        %5964 = vst.msk [vmem:[#allocation2 + $0x28] sm:$0xff] %vm527, %v5932
        %5965 = vst.msk [vmem:[#allocation2 + $0x30] sm:$0xff] %vm527, %v5933
        %5966 = vst.msk [vmem:[#allocation2 + $0x38] sm:$0xff] %vm527, %v5934
        %5967 = vst.msk [vmem:[#allocation2 + $0x40] sm:$0xff] %vm527, %v5935
        %5968 = vst.msk [vmem:[#allocation2 + $0x48] sm:$0xff] %vm527, %v5936
        %5969 = vst.msk [vmem:[#allocation2 + $0x70] sm:$0xff] %vm527, %v5937
        %5970 = vst.msk [vmem:[#allocation2 + $0x78] sm:$0xff] %vm527, %v5938
        %5971 = vst.msk [vmem:[#allocation2 + $0x80] sm:$0xff] %vm527, %v5939
        %5972 = vst.msk [vmem:[#allocation2 + $0x88] sm:$0xff] %vm527, %v5940
        %5973 = vst.msk [vmem:[#allocation2 + $0x90] sm:$0xff] %vm527, %v5941
        %5974 = vst.msk [vmem:[#allocation2 + $0x98] sm:$0xff] %vm527, %v5942
        %5975 = vst.msk [vmem:[#allocation2 + $0xa0] sm:$0xff] %vm527, %v5943
        %5976 = vst.msk [vmem:[#allocation2 + $0xa8] sm:$0xff] %vm527, %v5944
        %5977 = vst.msk [vmem:[#allocation2 + $0xd0] sm:$0xff] %vm527, %v5945
        %5978 = vst.msk [vmem:[#allocation2 + $0xd8] sm:$0xff] %vm527, %v5946
        %5979 = vst.msk [vmem:[#allocation2 + $0xe0] sm:$0xff] %vm527, %v5947
        %5980 = vst.msk [vmem:[#allocation2 + $0xe8] sm:$0xff] %vm527, %v5948
        %5981 = vst.msk [vmem:[#allocation2 + $0xf0] sm:$0xff] %vm527, %v5949
        %5982 = vst.msk [vmem:[#allocation2 + $0xf8] sm:$0xff] %vm527, %v5950
        %5983 = vst.msk [vmem:[#allocation2 + $0x100] sm:$0xff] %vm527, %v5951
        %5984 = vst.msk [vmem:[#allocation2 + $0x108] sm:$0xff] %vm527, %v5952
        %5985 = vst.msk [vmem:[#allocation2 + $0x130] sm:$0xff] %vm527, %v5953
        %5986 = vst.msk [vmem:[#allocation2 + $0x138] sm:$0xff] %vm527, %v5954
        %5987 = vst.msk [vmem:[#allocation2 + $0x140] sm:$0xff] %vm527, %v5955
        %5988 = vst.msk [vmem:[#allocation2 + $0x148] sm:$0xff] %vm527, %v5956
        %5989 = vst.msk [vmem:[#allocation2 + $0x150] sm:$0xff] %vm527, %v5957
        %5990 = vst.msk [vmem:[#allocation2 + $0x158] sm:$0xff] %vm527, %v5958
        %5991 = vst.msk [vmem:[#allocation2 + $0x160] sm:$0xff] %vm527, %v5959
        %5992 = vst.msk [vmem:[#allocation2 + $0x168] sm:$0xff] %vm527, %v5960
        %v5993 = vld [vmem:[#allocation2 + $0x7] sm:$0xff]
        %v5994 = vld [vmem:[#allocation2 + $0xf] sm:$0xff]
        %v5995 = vld [vmem:[#allocation2 + $0x17] sm:$0xff]
        %v5996 = vld [vmem:[#allocation2 + $0x1f] sm:$0xff]
        %v5997 = vld [vmem:[#allocation2 + $0x27] sm:$0xff]
        %v5998 = vld [vmem:[#allocation2 + $0x2f] sm:$0xff]
        %v5999 = vld [vmem:[#allocation2 + $0x37] sm:$0xff]
        %v6000 = vld [vmem:[#allocation2 + $0x3f] sm:$0xff]
        %v6001 = vld [vmem:[#allocation2 + $0x67] sm:$0xff]
        %v6002 = vld [vmem:[#allocation2 + $0x6f] sm:$0xff]
        %v6003 = vld [vmem:[#allocation2 + $0x77] sm:$0xff]
        %v6004 = vld [vmem:[#allocation2 + $0x7f] sm:$0xff]
        %v6005 = vld [vmem:[#allocation2 + $0x87] sm:$0xff]
        %v6006 = vld [vmem:[#allocation2 + $0x8f] sm:$0xff]
        %v6007 = vld [vmem:[#allocation2 + $0x97] sm:$0xff]
        %v6008 = vld [vmem:[#allocation2 + $0x9f] sm:$0xff]
        %v6009 = vld [vmem:[#allocation2 + $0xc7] sm:$0xff]
        %v6010 = vld [vmem:[#allocation2 + $0xcf] sm:$0xff]
        %v6011 = vld [vmem:[#allocation2 + $0xd7] sm:$0xff]
        %v6012 = vld [vmem:[#allocation2 + $0xdf] sm:$0xff]
        %v6013 = vld [vmem:[#allocation2 + $0xe7] sm:$0xff]
        %v6014 = vld [vmem:[#allocation2 + $0xef] sm:$0xff]
        %v6015 = vld [vmem:[#allocation2 + $0xf7] sm:$0xff]
        %v6016 = vld [vmem:[#allocation2 + $0xff] sm:$0xff]
        %v6017 = vld [vmem:[#allocation2 + $0x127] sm:$0xff]
        %v6018 = vld [vmem:[#allocation2 + $0x12f] sm:$0xff]
        %v6019 = vld [vmem:[#allocation2 + $0x137] sm:$0xff]
        %v6020 = vld [vmem:[#allocation2 + $0x13f] sm:$0xff]
        %v6021 = vld [vmem:[#allocation2 + $0x147] sm:$0xff]
        %v6022 = vld [vmem:[#allocation2 + $0x14f] sm:$0xff]
        %v6023 = vld [vmem:[#allocation2 + $0x157] sm:$0xff]
        %v6024 = vld [vmem:[#allocation2 + $0x15f] sm:$0xff]
        %v6025 = vsel %vm3885, 0.0, %v5993
        %v6026 = vsel %vm3886, 0.0, %v5994
        %v6027 = vsel %vm3887, 0.0, %v5995
        %v6028 = vsel %vm3888, 0.0, %v5996
        %v6029 = vsel %vm3889, 0.0, %v5997
        %v6030 = vsel %vm3890, 0.0, %v5998
        %v6031 = vsel %vm3891, 0.0, %v5999
        %v6032 = vsel %vm3892, 0.0, %v6000
        %v6033 = vsel %vm3893, 0.0, %v6001
        %v6034 = vsel %vm3894, 0.0, %v6002
        %v6035 = vsel %vm3895, 0.0, %v6003
        %v6036 = vsel %vm3896, 0.0, %v6004
        %v6037 = vsel %vm3897, 0.0, %v6005
        %v6038 = vsel %vm3898, 0.0, %v6006
        %v6039 = vsel %vm3899, 0.0, %v6007
        %v6040 = vsel %vm3900, 0.0, %v6008
        %v6041 = vsel %vm3901, 0.0, %v6009
        %v6042 = vsel %vm3902, 0.0, %v6010
        %v6043 = vsel %vm3903, 0.0, %v6011
        %v6044 = vsel %vm3904, 0.0, %v6012
        %v6045 = vsel %vm3905, 0.0, %v6013
        %v6046 = vsel %vm3906, 0.0, %v6014
        %v6047 = vsel %vm3907, 0.0, %v6015
        %v6048 = vsel %vm3908, 0.0, %v6016
        %v6049 = vsel %vm3909, 0.0, %v6017
        %v6050 = vsel %vm3910, 0.0, %v6018
        %v6051 = vsel %vm3911, 0.0, %v6019
        %v6052 = vsel %vm3912, 0.0, %v6020
        %v6053 = vsel %vm3913, 0.0, %v6021
        %v6054 = vsel %vm3914, 0.0, %v6022
        %v6055 = vsel %vm3915, 0.0, %v6023
        %v6056 = vsel %vm3916, 0.0, %v6024
        %v6057 = vld [vmem:[#allocation2 + $0x8] sm:$0xff]
        %v6058 = vld [vmem:[#allocation2 + $0x10] sm:$0xff]
        %v6059 = vld [vmem:[#allocation2 + $0x18] sm:$0xff]
        %v6060 = vld [vmem:[#allocation2 + $0x20] sm:$0xff]
        %v6061 = vld [vmem:[#allocation2 + $0x28] sm:$0xff]
        %v6062 = vld [vmem:[#allocation2 + $0x30] sm:$0xff]
        %v6063 = vld [vmem:[#allocation2 + $0x38] sm:$0xff]
        %v6064 = vld [vmem:[#allocation2 + $0x40] sm:$0xff]
        %v6065 = vld [vmem:[#allocation2 + $0x68] sm:$0xff]
        %v6066 = vld [vmem:[#allocation2 + $0x70] sm:$0xff]
        %v6067 = vld [vmem:[#allocation2 + $0x78] sm:$0xff]
        %v6068 = vld [vmem:[#allocation2 + $0x80] sm:$0xff]
        %v6069 = vld [vmem:[#allocation2 + $0x88] sm:$0xff]
        %v6070 = vld [vmem:[#allocation2 + $0x90] sm:$0xff]
        %v6071 = vld [vmem:[#allocation2 + $0x98] sm:$0xff]
        %v6072 = vld [vmem:[#allocation2 + $0xa0] sm:$0xff]
        %v6073 = vld [vmem:[#allocation2 + $0xc8] sm:$0xff]
        %v6074 = vld [vmem:[#allocation2 + $0xd0] sm:$0xff]
        %v6075 = vld [vmem:[#allocation2 + $0xd8] sm:$0xff]
        %v6076 = vld [vmem:[#allocation2 + $0xe0] sm:$0xff]
        %v6077 = vld [vmem:[#allocation2 + $0xe8] sm:$0xff]
        %v6078 = vld [vmem:[#allocation2 + $0xf0] sm:$0xff]
        %v6079 = vld [vmem:[#allocation2 + $0xf8] sm:$0xff]
        %v6080 = vld [vmem:[#allocation2 + $0x100] sm:$0xff]
        %v6081 = vld [vmem:[#allocation2 + $0x128] sm:$0xff]
        %v6082 = vld [vmem:[#allocation2 + $0x130] sm:$0xff]
        %v6083 = vld [vmem:[#allocation2 + $0x138] sm:$0xff]
        %v6084 = vld [vmem:[#allocation2 + $0x140] sm:$0xff]
        %v6085 = vld [vmem:[#allocation2 + $0x148] sm:$0xff]
        %v6086 = vld [vmem:[#allocation2 + $0x150] sm:$0xff]
        %v6087 = vld [vmem:[#allocation2 + $0x158] sm:$0xff]
        %v6088 = vld [vmem:[#allocation2 + $0x160] sm:$0xff]
        %v6089 = vld [vmem:[#allocation2 + $0x9] sm:$0xff]
        %v6090 = vld [vmem:[#allocation2 + $0x11] sm:$0xff]
        %v6091 = vld [vmem:[#allocation2 + $0x19] sm:$0xff]
        %v6092 = vld [vmem:[#allocation2 + $0x21] sm:$0xff]
        %v6093 = vld [vmem:[#allocation2 + $0x29] sm:$0xff]
        %v6094 = vld [vmem:[#allocation2 + $0x31] sm:$0xff]
        %v6095 = vld [vmem:[#allocation2 + $0x39] sm:$0xff]
        %v6096 = vld [vmem:[#allocation2 + $0x41] sm:$0xff]
        %v6097 = vld [vmem:[#allocation2 + $0x69] sm:$0xff]
        %v6098 = vld [vmem:[#allocation2 + $0x71] sm:$0xff]
        %v6099 = vld [vmem:[#allocation2 + $0x79] sm:$0xff]
        %v6100 = vld [vmem:[#allocation2 + $0x81] sm:$0xff]
        %v6101 = vld [vmem:[#allocation2 + $0x89] sm:$0xff]
        %v6102 = vld [vmem:[#allocation2 + $0x91] sm:$0xff]
        %v6103 = vld [vmem:[#allocation2 + $0x99] sm:$0xff]
        %v6104 = vld [vmem:[#allocation2 + $0xa1] sm:$0xff]
        %v6105 = vld [vmem:[#allocation2 + $0xc9] sm:$0xff]
        %v6106 = vld [vmem:[#allocation2 + $0xd1] sm:$0xff]
        %v6107 = vld [vmem:[#allocation2 + $0xd9] sm:$0xff]
        %v6108 = vld [vmem:[#allocation2 + $0xe1] sm:$0xff]
        %v6109 = vld [vmem:[#allocation2 + $0xe9] sm:$0xff]
        %v6110 = vld [vmem:[#allocation2 + $0xf1] sm:$0xff]
        %v6111 = vld [vmem:[#allocation2 + $0xf9] sm:$0xff]
        %v6112 = vld [vmem:[#allocation2 + $0x101] sm:$0xff]
        %v6113 = vld [vmem:[#allocation2 + $0x129] sm:$0xff]
        %v6114 = vld [vmem:[#allocation2 + $0x131] sm:$0xff]
        %v6115 = vld [vmem:[#allocation2 + $0x139] sm:$0xff]
        %v6116 = vld [vmem:[#allocation2 + $0x141] sm:$0xff]
        %v6117 = vld [vmem:[#allocation2 + $0x149] sm:$0xff]
        %v6118 = vld [vmem:[#allocation2 + $0x151] sm:$0xff]
        %v6119 = vld [vmem:[#allocation2 + $0x159] sm:$0xff]
        %v6120 = vld [vmem:[#allocation2 + $0x161] sm:$0xff]
        %v6121 = vsel %vm4045, 0.0, %v6089
        %v6122 = vsel %vm4046, 0.0, %v6090
        %v6123 = vsel %vm4047, 0.0, %v6091
        %v6124 = vsel %vm4048, 0.0, %v6092
        %v6125 = vsel %vm4049, 0.0, %v6093
        %v6126 = vsel %vm4050, 0.0, %v6094
        %v6127 = vsel %vm4051, 0.0, %v6095
        %v6128 = vsel %vm4052, 0.0, %v6096
        %v6129 = vsel %vm4053, 0.0, %v6097
        %v6130 = vsel %vm4054, 0.0, %v6098
        %v6131 = vsel %vm4055, 0.0, %v6099
        %v6132 = vsel %vm4056, 0.0, %v6100
        %v6133 = vsel %vm4057, 0.0, %v6101
        %v6134 = vsel %vm4058, 0.0, %v6102
        %v6135 = vsel %vm4059, 0.0, %v6103
        %v6136 = vsel %vm4060, 0.0, %v6104
        %v6137 = vsel %vm4061, 0.0, %v6105
        %v6138 = vsel %vm4062, 0.0, %v6106
        %v6139 = vsel %vm4063, 0.0, %v6107
        %v6140 = vsel %vm4064, 0.0, %v6108
        %v6141 = vsel %vm4065, 0.0, %v6109
        %v6142 = vsel %vm4066, 0.0, %v6110
        %v6143 = vsel %vm4067, 0.0, %v6111
        %v6144 = vsel %vm4068, 0.0, %v6112
        %v6145 = vsel %vm4069, 0.0, %v6113
        %v6146 = vsel %vm4070, 0.0, %v6114
        %v6147 = vsel %vm4071, 0.0, %v6115
        %v6148 = vsel %vm4072, 0.0, %v6116
        %v6149 = vsel %vm4073, 0.0, %v6117
        %v6150 = vsel %vm4074, 0.0, %v6118
        %v6151 = vsel %vm4075, 0.0, %v6119
        %v6152 = vsel %vm4076, 0.0, %v6120
        %v6153 = vld [vmem:[#allocation2 + $0x47] sm:$0xff]
        %v6154 = vld [vmem:[#allocation2 + $0xa7] sm:$0xff]
        %v6155 = vld [vmem:[#allocation2 + $0x107] sm:$0xff]
        %v6156 = vld [vmem:[#allocation2 + $0x167] sm:$0xff]
        %v6157 = vsel %vm3885, 0.0, %v5994
        %v6158 = vsel %vm3886, 0.0, %v5995
        %v6159 = vsel %vm3887, 0.0, %v5996
        %v6160 = vsel %vm3888, 0.0, %v5997
        %v6161 = vsel %vm3889, 0.0, %v5998
        %v6162 = vsel %vm3890, 0.0, %v5999
        %v6163 = vsel %vm3891, 0.0, %v6000
        %v6164 = vsel %vm3892, 0.0, %v6153
        %v6165 = vsel %vm3893, 0.0, %v6002
        %v6166 = vsel %vm3894, 0.0, %v6003
        %v6167 = vsel %vm3895, 0.0, %v6004
        %v6168 = vsel %vm3896, 0.0, %v6005
        %v6169 = vsel %vm3897, 0.0, %v6006
        %v6170 = vsel %vm3898, 0.0, %v6007
        %v6171 = vsel %vm3899, 0.0, %v6008
        %v6172 = vsel %vm3900, 0.0, %v6154
        %v6173 = vsel %vm3901, 0.0, %v6010
        %v6174 = vsel %vm3902, 0.0, %v6011
        %v6175 = vsel %vm3903, 0.0, %v6012
        %v6176 = vsel %vm3904, 0.0, %v6013
        %v6177 = vsel %vm3905, 0.0, %v6014
        %v6178 = vsel %vm3906, 0.0, %v6015
        %v6179 = vsel %vm3907, 0.0, %v6016
        %v6180 = vsel %vm3908, 0.0, %v6155
        %v6181 = vsel %vm3909, 0.0, %v6018
        %v6182 = vsel %vm3910, 0.0, %v6019
        %v6183 = vsel %vm3911, 0.0, %v6020
        %v6184 = vsel %vm3912, 0.0, %v6021
        %v6185 = vsel %vm3913, 0.0, %v6022
        %v6186 = vsel %vm3914, 0.0, %v6023
        %v6187 = vsel %vm3915, 0.0, %v6024
        %v6188 = vsel %vm3916, 0.0, %v6156
        %v6189 = vld [vmem:[#allocation2 + $0x48] sm:$0xff]
        %v6190 = vld [vmem:[#allocation2 + $0xa8] sm:$0xff]
        %v6191 = vld [vmem:[#allocation2 + $0x108] sm:$0xff]
        %v6192 = vld [vmem:[#allocation2 + $0x168] sm:$0xff]
        %v6193 = vld [vmem:[#allocation2 + $0x49] sm:$0xff]
        %v6194 = vld [vmem:[#allocation2 + $0xa9] sm:$0xff]
        %v6195 = vld [vmem:[#allocation2 + $0x109] sm:$0xff]
        %v6196 = vld [vmem:[#allocation2 + $0x169] sm:$0xff]
        %v6197 = vsel %vm4045, 0.0, %v6090
        %v6198 = vsel %vm4046, 0.0, %v6091
        %v6199 = vsel %vm4047, 0.0, %v6092
        %v6200 = vsel %vm4048, 0.0, %v6093
        %v6201 = vsel %vm4049, 0.0, %v6094
        %v6202 = vsel %vm4050, 0.0, %v6095
        %v6203 = vsel %vm4051, 0.0, %v6096
        %v6204 = vsel %vm4052, 0.0, %v6193
        %v6205 = vsel %vm4053, 0.0, %v6098
        %v6206 = vsel %vm4054, 0.0, %v6099
        %v6207 = vsel %vm4055, 0.0, %v6100
        %v6208 = vsel %vm4056, 0.0, %v6101
        %v6209 = vsel %vm4057, 0.0, %v6102
        %v6210 = vsel %vm4058, 0.0, %v6103
        %v6211 = vsel %vm4059, 0.0, %v6104
        %v6212 = vsel %vm4060, 0.0, %v6194
        %v6213 = vsel %vm4061, 0.0, %v6106
        %v6214 = vsel %vm4062, 0.0, %v6107
        %v6215 = vsel %vm4063, 0.0, %v6108
        %v6216 = vsel %vm4064, 0.0, %v6109
        %v6217 = vsel %vm4065, 0.0, %v6110
        %v6218 = vsel %vm4066, 0.0, %v6111
        %v6219 = vsel %vm4067, 0.0, %v6112
        %v6220 = vsel %vm4068, 0.0, %v6195
        %v6221 = vsel %vm4069, 0.0, %v6114
        %v6222 = vsel %vm4070, 0.0, %v6115
        %v6223 = vsel %vm4071, 0.0, %v6116
        %v6224 = vsel %vm4072, 0.0, %v6117
        %v6225 = vsel %vm4073, 0.0, %v6118
        %v6226 = vsel %vm4074, 0.0, %v6119
        %v6227 = vsel %vm4075, 0.0, %v6120
        %v6228 = vsel %vm4076, 0.0, %v6196
        %v6229 = vld [vmem:[#allocation2 + $0x4f] sm:$0xff]
        %v6230 = vld [vmem:[#allocation2 + $0xaf] sm:$0xff]
        %v6231 = vld [vmem:[#allocation2 + $0x10f] sm:$0xff]
        %v6232 = vld [vmem:[#allocation2 + $0x16f] sm:$0xff]
        %v6233 = vsel %vm3885, 0.0, %v5995
        %v6234 = vsel %vm3886, 0.0, %v5996
        %v6235 = vsel %vm3887, 0.0, %v5997
        %v6236 = vsel %vm3888, 0.0, %v5998
        %v6237 = vsel %vm3889, 0.0, %v5999
        %v6238 = vsel %vm3890, 0.0, %v6000
        %v6239 = vsel %vm3891, 0.0, %v6153
        %v6240 = vsel %vm3892, 0.0, %v6229
        %v6241 = vsel %vm3893, 0.0, %v6003
        %v6242 = vsel %vm3894, 0.0, %v6004
        %v6243 = vsel %vm3895, 0.0, %v6005
        %v6244 = vsel %vm3896, 0.0, %v6006
        %v6245 = vsel %vm3897, 0.0, %v6007
        %v6246 = vsel %vm3898, 0.0, %v6008
        %v6247 = vsel %vm3899, 0.0, %v6154
        %v6248 = vsel %vm3900, 0.0, %v6230
        %v6249 = vsel %vm3901, 0.0, %v6011
        %v6250 = vsel %vm3902, 0.0, %v6012
        %v6251 = vsel %vm3903, 0.0, %v6013
        %v6252 = vsel %vm3904, 0.0, %v6014
        %v6253 = vsel %vm3905, 0.0, %v6015
        %v6254 = vsel %vm3906, 0.0, %v6016
        %v6255 = vsel %vm3907, 0.0, %v6155
        %v6256 = vsel %vm3908, 0.0, %v6231
        %v6257 = vsel %vm3909, 0.0, %v6019
        %v6258 = vsel %vm3910, 0.0, %v6020
        %v6259 = vsel %vm3911, 0.0, %v6021
        %v6260 = vsel %vm3912, 0.0, %v6022
        %v6261 = vsel %vm3913, 0.0, %v6023
        %v6262 = vsel %vm3914, 0.0, %v6024
        %v6263 = vsel %vm3915, 0.0, %v6156
        %v6264 = vsel %vm3916, 0.0, %v6232
        %v6265 = vld [vmem:[#allocation2 + $0x50] sm:$0xff]
        %v6266 = vld [vmem:[#allocation2 + $0xb0] sm:$0xff]
        %v6267 = vld [vmem:[#allocation2 + $0x110] sm:$0xff]
        %v6268 = vld [vmem:[#allocation2 + $0x170] sm:$0xff]
        %v6269 = vld [vmem:[#allocation2 + $0x51] sm:$0xff]
        %v6270 = vld [vmem:[#allocation2 + $0xb1] sm:$0xff]
        %v6271 = vld [vmem:[#allocation2 + $0x111] sm:$0xff]
        %v6272 = vld [vmem:[#allocation2 + $0x171] sm:$0xff]
        %v6273 = vsel %vm4045, 0.0, %v6091
        %v6274 = vsel %vm4046, 0.0, %v6092
        %v6275 = vsel %vm4047, 0.0, %v6093
        %v6276 = vsel %vm4048, 0.0, %v6094
        %v6277 = vsel %vm4049, 0.0, %v6095
        %v6278 = vsel %vm4050, 0.0, %v6096
        %v6279 = vsel %vm4051, 0.0, %v6193
        %v6280 = vsel %vm4052, 0.0, %v6269
        %v6281 = vsel %vm4053, 0.0, %v6099
        %v6282 = vsel %vm4054, 0.0, %v6100
        %v6283 = vsel %vm4055, 0.0, %v6101
        %v6284 = vsel %vm4056, 0.0, %v6102
        %v6285 = vsel %vm4057, 0.0, %v6103
        %v6286 = vsel %vm4058, 0.0, %v6104
        %v6287 = vsel %vm4059, 0.0, %v6194
        %v6288 = vsel %vm4060, 0.0, %v6270
        %v6289 = vsel %vm4061, 0.0, %v6107
        %v6290 = vsel %vm4062, 0.0, %v6108
        %v6291 = vsel %vm4063, 0.0, %v6109
        %v6292 = vsel %vm4064, 0.0, %v6110
        %v6293 = vsel %vm4065, 0.0, %v6111
        %v6294 = vsel %vm4066, 0.0, %v6112
        %v6295 = vsel %vm4067, 0.0, %v6195
        %v6296 = vsel %vm4068, 0.0, %v6271
        %v6297 = vsel %vm4069, 0.0, %v6115
        %v6298 = vsel %vm4070, 0.0, %v6116
        %v6299 = vsel %vm4071, 0.0, %v6117
        %v6300 = vsel %vm4072, 0.0, %v6118
        %v6301 = vsel %vm4073, 0.0, %v6119
        %v6302 = vsel %vm4074, 0.0, %v6120
        %v6303 = vsel %vm4075, 0.0, %v6196
        %v6304 = vsel %vm4076, 0.0, %v6272
        %6337 = vrot.lane.b32.xlu0 %v6057, 16
        %v6338 = vpop.permute.xlu0 %6337
        %6339 = vrot.lane.b32.xlu0 %v6058, 16
        %v6340 = vpop.permute.xlu0 %6339
        %6341 = vrot.lane.b32.xlu0 %v6059, 16
        %v6342 = vpop.permute.xlu0 %6341
        %6343 = vrot.lane.b32.xlu0 %v6060, 16
        %v6344 = vpop.permute.xlu0 %6343
        %6345 = vrot.lane.b32.xlu0 %v6061, 16
        %v6346 = vpop.permute.xlu0 %6345
        %6347 = vrot.lane.b32.xlu0 %v6062, 16
        %v6348 = vpop.permute.xlu0 %6347
        %6349 = vrot.lane.b32.xlu0 %v6063, 16
        %v6350 = vpop.permute.xlu0 %6349
        %6351 = vrot.lane.b32.xlu0 %v6064, 16
        %v6352 = vpop.permute.xlu0 %6351
        %6353 = vrot.lane.b32.xlu0 %v6065, 16
        %v6354 = vpop.permute.xlu0 %6353
        %6355 = vrot.lane.b32.xlu0 %v6066, 16
        %v6356 = vpop.permute.xlu0 %6355
        %6357 = vrot.lane.b32.xlu0 %v6067, 16
        %v6358 = vpop.permute.xlu0 %6357
        %6359 = vrot.lane.b32.xlu0 %v6068, 16
        %v6360 = vpop.permute.xlu0 %6359
        %6361 = vrot.lane.b32.xlu0 %v6069, 16
        %v6362 = vpop.permute.xlu0 %6361
        %6363 = vrot.lane.b32.xlu0 %v6070, 16
        %v6364 = vpop.permute.xlu0 %6363
        %6365 = vrot.lane.b32.xlu0 %v6071, 16
        %v6366 = vpop.permute.xlu0 %6365
        %6367 = vrot.lane.b32.xlu0 %v6072, 16
        %v6368 = vpop.permute.xlu0 %6367
        %6369 = vrot.lane.b32.xlu0 %v6073, 16
        %v6370 = vpop.permute.xlu0 %6369
        %6371 = vrot.lane.b32.xlu0 %v6074, 16
        %v6372 = vpop.permute.xlu0 %6371
        %6373 = vrot.lane.b32.xlu0 %v6075, 16
        %v6374 = vpop.permute.xlu0 %6373
        %6375 = vrot.lane.b32.xlu0 %v6076, 16
        %v6376 = vpop.permute.xlu0 %6375
        %6377 = vrot.lane.b32.xlu0 %v6077, 16
        %v6378 = vpop.permute.xlu0 %6377
        %6379 = vrot.lane.b32.xlu0 %v6078, 16
        %v6380 = vpop.permute.xlu0 %6379
        %6381 = vrot.lane.b32.xlu0 %v6079, 16
        %v6382 = vpop.permute.xlu0 %6381
        %6383 = vrot.lane.b32.xlu0 %v6080, 16
        %v6384 = vpop.permute.xlu0 %6383
        %6385 = vrot.lane.b32.xlu0 %v6081, 16
        %v6386 = vpop.permute.xlu0 %6385
        %6387 = vrot.lane.b32.xlu0 %v6082, 16
        %v6388 = vpop.permute.xlu0 %6387
        %6389 = vrot.lane.b32.xlu0 %v6083, 16
        %v6390 = vpop.permute.xlu0 %6389
        %6391 = vrot.lane.b32.xlu0 %v6084, 16
        %v6392 = vpop.permute.xlu0 %6391
        %6393 = vrot.lane.b32.xlu0 %v6085, 16
        %v6394 = vpop.permute.xlu0 %6393
        %6395 = vrot.lane.b32.xlu0 %v6086, 16
        %v6396 = vpop.permute.xlu0 %6395
        %6397 = vrot.lane.b32.xlu0 %v6087, 16
        %v6398 = vpop.permute.xlu0 %6397
        %6399 = vrot.lane.b32.xlu0 %v6088, 16
        %v6400 = vpop.permute.xlu0 %6399
        %6465 = vrot.lane.b32.xlu0 %v6121, 32
        %v6466 = vpop.permute.xlu0 %6465
        %6467 = vrot.lane.b32.xlu0 %v6122, 32
        %v6468 = vpop.permute.xlu0 %6467
        %6469 = vrot.lane.b32.xlu0 %v6123, 32
        %v6470 = vpop.permute.xlu0 %6469
        %6471 = vrot.lane.b32.xlu0 %v6124, 32
        %v6472 = vpop.permute.xlu0 %6471
        %6473 = vrot.lane.b32.xlu0 %v6125, 32
        %v6474 = vpop.permute.xlu0 %6473
        %6475 = vrot.lane.b32.xlu0 %v6126, 32
        %v6476 = vpop.permute.xlu0 %6475
        %6477 = vrot.lane.b32.xlu0 %v6127, 32
        %v6478 = vpop.permute.xlu0 %6477
        %6479 = vrot.lane.b32.xlu0 %v6128, 32
        %v6480 = vpop.permute.xlu0 %6479
        %6481 = vrot.lane.b32.xlu0 %v6129, 32
        %v6482 = vpop.permute.xlu0 %6481
        %6483 = vrot.lane.b32.xlu0 %v6130, 32
        %v6484 = vpop.permute.xlu0 %6483
        %6485 = vrot.lane.b32.xlu0 %v6131, 32
        %v6486 = vpop.permute.xlu0 %6485
        %6487 = vrot.lane.b32.xlu0 %v6132, 32
        %v6488 = vpop.permute.xlu0 %6487
        %6489 = vrot.lane.b32.xlu0 %v6133, 32
        %v6490 = vpop.permute.xlu0 %6489
        %6491 = vrot.lane.b32.xlu0 %v6134, 32
        %v6492 = vpop.permute.xlu0 %6491
        %6493 = vrot.lane.b32.xlu0 %v6135, 32
        %v6494 = vpop.permute.xlu0 %6493
        %6495 = vrot.lane.b32.xlu0 %v6136, 32
        %v6496 = vpop.permute.xlu0 %6495
        %6497 = vrot.lane.b32.xlu0 %v6137, 32
        %v6498 = vpop.permute.xlu0 %6497
        %6499 = vrot.lane.b32.xlu0 %v6138, 32
        %v6500 = vpop.permute.xlu0 %6499
        %6501 = vrot.lane.b32.xlu0 %v6139, 32
        %v6502 = vpop.permute.xlu0 %6501
        %6503 = vrot.lane.b32.xlu0 %v6140, 32
        %v6504 = vpop.permute.xlu0 %6503
        %6505 = vrot.lane.b32.xlu0 %v6141, 32
        %v6506 = vpop.permute.xlu0 %6505
        %6507 = vrot.lane.b32.xlu0 %v6142, 32
        %v6508 = vpop.permute.xlu0 %6507
        %6509 = vrot.lane.b32.xlu0 %v6143, 32
        %v6510 = vpop.permute.xlu0 %6509
        %6511 = vrot.lane.b32.xlu0 %v6144, 32
        %v6512 = vpop.permute.xlu0 %6511
        %6513 = vrot.lane.b32.xlu0 %v6145, 32
        %v6514 = vpop.permute.xlu0 %6513
        %6515 = vrot.lane.b32.xlu0 %v6146, 32
        %v6516 = vpop.permute.xlu0 %6515
        %6517 = vrot.lane.b32.xlu0 %v6147, 32
        %v6518 = vpop.permute.xlu0 %6517
        %6519 = vrot.lane.b32.xlu0 %v6148, 32
        %v6520 = vpop.permute.xlu0 %6519
        %6521 = vrot.lane.b32.xlu0 %v6149, 32
        %v6522 = vpop.permute.xlu0 %6521
        %6523 = vrot.lane.b32.xlu0 %v6150, 32
        %v6524 = vpop.permute.xlu0 %6523
        %6525 = vrot.lane.b32.xlu0 %v6151, 32
        %v6526 = vpop.permute.xlu0 %6525
        %6527 = vrot.lane.b32.xlu0 %v6152, 32
        %v6528 = vpop.permute.xlu0 %6527
        %6593 = vrot.lane.b32.xlu0 %v6157, 48
        %v6594 = vpop.permute.xlu0 %6593
        %6595 = vrot.lane.b32.xlu0 %v6158, 48
        %v6596 = vpop.permute.xlu0 %6595
        %6597 = vrot.lane.b32.xlu0 %v6159, 48
        %v6598 = vpop.permute.xlu0 %6597
        %6599 = vrot.lane.b32.xlu0 %v6160, 48
        %v6600 = vpop.permute.xlu0 %6599
        %6601 = vrot.lane.b32.xlu0 %v6161, 48
        %v6602 = vpop.permute.xlu0 %6601
        %6603 = vrot.lane.b32.xlu0 %v6162, 48
        %v6604 = vpop.permute.xlu0 %6603
        %6605 = vrot.lane.b32.xlu0 %v6163, 48
        %v6606 = vpop.permute.xlu0 %6605
        %6607 = vrot.lane.b32.xlu0 %v6164, 48
        %v6608 = vpop.permute.xlu0 %6607
        %6609 = vrot.lane.b32.xlu0 %v6165, 48
        %v6610 = vpop.permute.xlu0 %6609
        %6611 = vrot.lane.b32.xlu0 %v6166, 48
        %v6612 = vpop.permute.xlu0 %6611
        %6613 = vrot.lane.b32.xlu0 %v6167, 48
        %v6614 = vpop.permute.xlu0 %6613
        %6615 = vrot.lane.b32.xlu0 %v6168, 48
        %v6616 = vpop.permute.xlu0 %6615
        %6617 = vrot.lane.b32.xlu0 %v6169, 48
        %v6618 = vpop.permute.xlu0 %6617
        %6619 = vrot.lane.b32.xlu0 %v6170, 48
        %v6620 = vpop.permute.xlu0 %6619
        %6621 = vrot.lane.b32.xlu0 %v6171, 48
        %v6622 = vpop.permute.xlu0 %6621
        %6623 = vrot.lane.b32.xlu0 %v6172, 48
        %v6624 = vpop.permute.xlu0 %6623
        %6625 = vrot.lane.b32.xlu0 %v6173, 48
        %v6626 = vpop.permute.xlu0 %6625
        %6627 = vrot.lane.b32.xlu0 %v6174, 48
        %v6628 = vpop.permute.xlu0 %6627
        %6629 = vrot.lane.b32.xlu0 %v6175, 48
        %v6630 = vpop.permute.xlu0 %6629
        %6631 = vrot.lane.b32.xlu0 %v6176, 48
        %v6632 = vpop.permute.xlu0 %6631
        %6633 = vrot.lane.b32.xlu0 %v6177, 48
        %v6634 = vpop.permute.xlu0 %6633
        %6635 = vrot.lane.b32.xlu0 %v6178, 48
        %v6636 = vpop.permute.xlu0 %6635
        %6637 = vrot.lane.b32.xlu0 %v6179, 48
        %v6638 = vpop.permute.xlu0 %6637
        %6639 = vrot.lane.b32.xlu0 %v6180, 48
        %v6640 = vpop.permute.xlu0 %6639
        %6641 = vrot.lane.b32.xlu0 %v6181, 48
        %v6642 = vpop.permute.xlu0 %6641
        %6643 = vrot.lane.b32.xlu0 %v6182, 48
        %v6644 = vpop.permute.xlu0 %6643
        %6645 = vrot.lane.b32.xlu0 %v6183, 48
        %v6646 = vpop.permute.xlu0 %6645
        %6647 = vrot.lane.b32.xlu0 %v6184, 48
        %v6648 = vpop.permute.xlu0 %6647
        %6649 = vrot.lane.b32.xlu0 %v6185, 48
        %v6650 = vpop.permute.xlu0 %6649
        %6651 = vrot.lane.b32.xlu0 %v6186, 48
        %v6652 = vpop.permute.xlu0 %6651
        %6653 = vrot.lane.b32.xlu0 %v6187, 48
        %v6654 = vpop.permute.xlu0 %6653
        %6655 = vrot.lane.b32.xlu0 %v6188, 48
        %v6656 = vpop.permute.xlu0 %6655
        %6693 = vrot.lane.b32.xlu0 %v6058, 64
        %v6694 = vpop.permute.xlu0 %6693
        %6695 = vrot.lane.b32.xlu0 %v6059, 64
        %v6696 = vpop.permute.xlu0 %6695
        %6697 = vrot.lane.b32.xlu0 %v6060, 64
        %v6698 = vpop.permute.xlu0 %6697
        %6699 = vrot.lane.b32.xlu0 %v6061, 64
        %v6700 = vpop.permute.xlu0 %6699
        %6701 = vrot.lane.b32.xlu0 %v6062, 64
        %v6702 = vpop.permute.xlu0 %6701
        %6703 = vrot.lane.b32.xlu0 %v6063, 64
        %v6704 = vpop.permute.xlu0 %6703
        %6705 = vrot.lane.b32.xlu0 %v6064, 64
        %v6706 = vpop.permute.xlu0 %6705
        %6707 = vrot.lane.b32.xlu0 %v6189, 64
        %v6708 = vpop.permute.xlu0 %6707
        %6709 = vrot.lane.b32.xlu0 %v6066, 64
        %v6710 = vpop.permute.xlu0 %6709
        %6711 = vrot.lane.b32.xlu0 %v6067, 64
        %v6712 = vpop.permute.xlu0 %6711
        %6713 = vrot.lane.b32.xlu0 %v6068, 64
        %v6714 = vpop.permute.xlu0 %6713
        %6715 = vrot.lane.b32.xlu0 %v6069, 64
        %v6716 = vpop.permute.xlu0 %6715
        %6717 = vrot.lane.b32.xlu0 %v6070, 64
        %v6718 = vpop.permute.xlu0 %6717
        %6719 = vrot.lane.b32.xlu0 %v6071, 64
        %v6720 = vpop.permute.xlu0 %6719
        %6721 = vrot.lane.b32.xlu0 %v6072, 64
        %v6722 = vpop.permute.xlu0 %6721
        %6723 = vrot.lane.b32.xlu0 %v6190, 64
        %v6724 = vpop.permute.xlu0 %6723
        %6725 = vrot.lane.b32.xlu0 %v6074, 64
        %v6726 = vpop.permute.xlu0 %6725
        %6727 = vrot.lane.b32.xlu0 %v6075, 64
        %v6728 = vpop.permute.xlu0 %6727
        %6729 = vrot.lane.b32.xlu0 %v6076, 64
        %v6730 = vpop.permute.xlu0 %6729
        %6731 = vrot.lane.b32.xlu0 %v6077, 64
        %v6732 = vpop.permute.xlu0 %6731
        %6733 = vrot.lane.b32.xlu0 %v6078, 64
        %v6734 = vpop.permute.xlu0 %6733
        %6735 = vrot.lane.b32.xlu0 %v6079, 64
        %v6736 = vpop.permute.xlu0 %6735
        %6737 = vrot.lane.b32.xlu0 %v6080, 64
        %v6738 = vpop.permute.xlu0 %6737
        %6739 = vrot.lane.b32.xlu0 %v6191, 64
        %v6740 = vpop.permute.xlu0 %6739
        %6741 = vrot.lane.b32.xlu0 %v6082, 64
        %v6742 = vpop.permute.xlu0 %6741
        %6743 = vrot.lane.b32.xlu0 %v6083, 64
        %v6744 = vpop.permute.xlu0 %6743
        %6745 = vrot.lane.b32.xlu0 %v6084, 64
        %v6746 = vpop.permute.xlu0 %6745
        %6747 = vrot.lane.b32.xlu0 %v6085, 64
        %v6748 = vpop.permute.xlu0 %6747
        %6749 = vrot.lane.b32.xlu0 %v6086, 64
        %v6750 = vpop.permute.xlu0 %6749
        %6751 = vrot.lane.b32.xlu0 %v6087, 64
        %v6752 = vpop.permute.xlu0 %6751
        %6753 = vrot.lane.b32.xlu0 %v6088, 64
        %v6754 = vpop.permute.xlu0 %6753
        %6755 = vrot.lane.b32.xlu0 %v6192, 64
        %v6756 = vpop.permute.xlu0 %6755
        %6821 = vrot.lane.b32.xlu0 %v6197, 80
        %v6822 = vpop.permute.xlu0 %6821
        %6823 = vrot.lane.b32.xlu0 %v6198, 80
        %v6824 = vpop.permute.xlu0 %6823
        %6825 = vrot.lane.b32.xlu0 %v6199, 80
        %v6826 = vpop.permute.xlu0 %6825
        %6827 = vrot.lane.b32.xlu0 %v6200, 80
        %v6828 = vpop.permute.xlu0 %6827
        %6829 = vrot.lane.b32.xlu0 %v6201, 80
        %v6830 = vpop.permute.xlu0 %6829
        %6831 = vrot.lane.b32.xlu0 %v6202, 80
        %v6832 = vpop.permute.xlu0 %6831
        %6833 = vrot.lane.b32.xlu0 %v6203, 80
        %v6834 = vpop.permute.xlu0 %6833
        %6835 = vrot.lane.b32.xlu0 %v6204, 80
        %v6836 = vpop.permute.xlu0 %6835
        %6837 = vrot.lane.b32.xlu0 %v6205, 80
        %v6838 = vpop.permute.xlu0 %6837
        %6839 = vrot.lane.b32.xlu0 %v6206, 80
        %v6840 = vpop.permute.xlu0 %6839
        %6841 = vrot.lane.b32.xlu0 %v6207, 80
        %v6842 = vpop.permute.xlu0 %6841
        %6843 = vrot.lane.b32.xlu0 %v6208, 80
        %v6844 = vpop.permute.xlu0 %6843
        %6845 = vrot.lane.b32.xlu0 %v6209, 80
        %v6846 = vpop.permute.xlu0 %6845
        %6847 = vrot.lane.b32.xlu0 %v6210, 80
        %v6848 = vpop.permute.xlu0 %6847
        %6849 = vrot.lane.b32.xlu0 %v6211, 80
        %v6850 = vpop.permute.xlu0 %6849
        %6851 = vrot.lane.b32.xlu0 %v6212, 80
        %v6852 = vpop.permute.xlu0 %6851
        %6853 = vrot.lane.b32.xlu0 %v6213, 80
        %v6854 = vpop.permute.xlu0 %6853
        %6855 = vrot.lane.b32.xlu0 %v6214, 80
        %v6856 = vpop.permute.xlu0 %6855
        %6857 = vrot.lane.b32.xlu0 %v6215, 80
        %v6858 = vpop.permute.xlu0 %6857
        %6859 = vrot.lane.b32.xlu0 %v6216, 80
        %v6860 = vpop.permute.xlu0 %6859
        %6861 = vrot.lane.b32.xlu0 %v6217, 80
        %v6862 = vpop.permute.xlu0 %6861
        %6863 = vrot.lane.b32.xlu0 %v6218, 80
        %v6864 = vpop.permute.xlu0 %6863
        %6865 = vrot.lane.b32.xlu0 %v6219, 80
        %v6866 = vpop.permute.xlu0 %6865
        %6867 = vrot.lane.b32.xlu0 %v6220, 80
        %v6868 = vpop.permute.xlu0 %6867
        %6869 = vrot.lane.b32.xlu0 %v6221, 80
        %v6870 = vpop.permute.xlu0 %6869
        %6871 = vrot.lane.b32.xlu0 %v6222, 80
        %v6872 = vpop.permute.xlu0 %6871
        %6873 = vrot.lane.b32.xlu0 %v6223, 80
        %v6874 = vpop.permute.xlu0 %6873
        %6875 = vrot.lane.b32.xlu0 %v6224, 80
        %v6876 = vpop.permute.xlu0 %6875
        %6877 = vrot.lane.b32.xlu0 %v6225, 80
        %v6878 = vpop.permute.xlu0 %6877
        %6879 = vrot.lane.b32.xlu0 %v6226, 80
        %v6880 = vpop.permute.xlu0 %6879
        %6881 = vrot.lane.b32.xlu0 %v6227, 80
        %v6882 = vpop.permute.xlu0 %6881
        %6883 = vrot.lane.b32.xlu0 %v6228, 80
        %v6884 = vpop.permute.xlu0 %6883
        %6949 = vrot.lane.b32.xlu0 %v6233, 96
        %v6950 = vpop.permute.xlu0 %6949
        %6951 = vrot.lane.b32.xlu0 %v6234, 96
        %v6952 = vpop.permute.xlu0 %6951
        %6953 = vrot.lane.b32.xlu0 %v6235, 96
        %v6954 = vpop.permute.xlu0 %6953
        %6955 = vrot.lane.b32.xlu0 %v6236, 96
        %v6956 = vpop.permute.xlu0 %6955
        %6957 = vrot.lane.b32.xlu0 %v6237, 96
        %v6958 = vpop.permute.xlu0 %6957
        %6959 = vrot.lane.b32.xlu0 %v6238, 96
        %v6960 = vpop.permute.xlu0 %6959
        %6961 = vrot.lane.b32.xlu0 %v6239, 96
        %v6962 = vpop.permute.xlu0 %6961
        %6963 = vrot.lane.b32.xlu0 %v6240, 96
        %v6964 = vpop.permute.xlu0 %6963
        %6965 = vrot.lane.b32.xlu0 %v6241, 96
        %v6966 = vpop.permute.xlu0 %6965
        %6967 = vrot.lane.b32.xlu0 %v6242, 96
        %v6968 = vpop.permute.xlu0 %6967
        %6969 = vrot.lane.b32.xlu0 %v6243, 96
        %v6970 = vpop.permute.xlu0 %6969
        %6971 = vrot.lane.b32.xlu0 %v6244, 96
        %v6972 = vpop.permute.xlu0 %6971
        %6973 = vrot.lane.b32.xlu0 %v6245, 96
        %v6974 = vpop.permute.xlu0 %6973
        %6975 = vrot.lane.b32.xlu0 %v6246, 96
        %v6976 = vpop.permute.xlu0 %6975
        %6977 = vrot.lane.b32.xlu0 %v6247, 96
        %v6978 = vpop.permute.xlu0 %6977
        %6979 = vrot.lane.b32.xlu0 %v6248, 96
        %v6980 = vpop.permute.xlu0 %6979
        %6981 = vrot.lane.b32.xlu0 %v6249, 96
        %v6982 = vpop.permute.xlu0 %6981
        %6983 = vrot.lane.b32.xlu0 %v6250, 96
        %v6984 = vpop.permute.xlu0 %6983
        %6985 = vrot.lane.b32.xlu0 %v6251, 96
        %v6986 = vpop.permute.xlu0 %6985
        %6987 = vrot.lane.b32.xlu0 %v6252, 96
        %v6988 = vpop.permute.xlu0 %6987
        %6989 = vrot.lane.b32.xlu0 %v6253, 96
        %v6990 = vpop.permute.xlu0 %6989
        %6991 = vrot.lane.b32.xlu0 %v6254, 96
        %v6992 = vpop.permute.xlu0 %6991
        %6993 = vrot.lane.b32.xlu0 %v6255, 96
        %v6994 = vpop.permute.xlu0 %6993
        %6995 = vrot.lane.b32.xlu0 %v6256, 96
        %v6996 = vpop.permute.xlu0 %6995
        %6997 = vrot.lane.b32.xlu0 %v6257, 96
        %v6998 = vpop.permute.xlu0 %6997
        %6999 = vrot.lane.b32.xlu0 %v6258, 96
        %v7000 = vpop.permute.xlu0 %6999
        %7001 = vrot.lane.b32.xlu0 %v6259, 96
        %v7002 = vpop.permute.xlu0 %7001
        %7003 = vrot.lane.b32.xlu0 %v6260, 96
        %v7004 = vpop.permute.xlu0 %7003
        %7005 = vrot.lane.b32.xlu0 %v6261, 96
        %v7006 = vpop.permute.xlu0 %7005
        %7007 = vrot.lane.b32.xlu0 %v6262, 96
        %v7008 = vpop.permute.xlu0 %7007
        %7009 = vrot.lane.b32.xlu0 %v6263, 96
        %v7010 = vpop.permute.xlu0 %7009
        %7011 = vrot.lane.b32.xlu0 %v6264, 96
        %v7012 = vpop.permute.xlu0 %7011
        %7049 = vrot.lane.b32.xlu0 %v6059, 112
        %v7050 = vpop.permute.xlu0 %7049
        %7051 = vrot.lane.b32.xlu0 %v6060, 112
        %v7052 = vpop.permute.xlu0 %7051
        %7053 = vrot.lane.b32.xlu0 %v6061, 112
        %v7054 = vpop.permute.xlu0 %7053
        %7055 = vrot.lane.b32.xlu0 %v6062, 112
        %v7056 = vpop.permute.xlu0 %7055
        %7057 = vrot.lane.b32.xlu0 %v6063, 112
        %v7058 = vpop.permute.xlu0 %7057
        %7059 = vrot.lane.b32.xlu0 %v6064, 112
        %v7060 = vpop.permute.xlu0 %7059
        %7061 = vrot.lane.b32.xlu0 %v6189, 112
        %v7062 = vpop.permute.xlu0 %7061
        %7063 = vrot.lane.b32.xlu0 %v6265, 112
        %v7064 = vpop.permute.xlu0 %7063
        %7065 = vrot.lane.b32.xlu0 %v6067, 112
        %v7066 = vpop.permute.xlu0 %7065
        %7067 = vrot.lane.b32.xlu0 %v6068, 112
        %v7068 = vpop.permute.xlu0 %7067
        %7069 = vrot.lane.b32.xlu0 %v6069, 112
        %v7070 = vpop.permute.xlu0 %7069
        %7071 = vrot.lane.b32.xlu0 %v6070, 112
        %v7072 = vpop.permute.xlu0 %7071
        %7073 = vrot.lane.b32.xlu0 %v6071, 112
        %v7074 = vpop.permute.xlu0 %7073
        %7075 = vrot.lane.b32.xlu0 %v6072, 112
        %v7076 = vpop.permute.xlu0 %7075
        %7077 = vrot.lane.b32.xlu0 %v6190, 112
        %v7078 = vpop.permute.xlu0 %7077
        %7079 = vrot.lane.b32.xlu0 %v6266, 112
        %v7080 = vpop.permute.xlu0 %7079
        %7081 = vrot.lane.b32.xlu0 %v6075, 112
        %v7082 = vpop.permute.xlu0 %7081
        %7083 = vrot.lane.b32.xlu0 %v6076, 112
        %v7084 = vpop.permute.xlu0 %7083
        %7085 = vrot.lane.b32.xlu0 %v6077, 112
        %v7086 = vpop.permute.xlu0 %7085
        %7087 = vrot.lane.b32.xlu0 %v6078, 112
        %v7088 = vpop.permute.xlu0 %7087
        %7089 = vrot.lane.b32.xlu0 %v6079, 112
        %v7090 = vpop.permute.xlu0 %7089
        %7091 = vrot.lane.b32.xlu0 %v6080, 112
        %v7092 = vpop.permute.xlu0 %7091
        %7093 = vrot.lane.b32.xlu0 %v6191, 112
        %v7094 = vpop.permute.xlu0 %7093
        %7095 = vrot.lane.b32.xlu0 %v6267, 112
        %v7096 = vpop.permute.xlu0 %7095
        %7097 = vrot.lane.b32.xlu0 %v6083, 112
        %v7098 = vpop.permute.xlu0 %7097
        %7099 = vrot.lane.b32.xlu0 %v6084, 112
        %v7100 = vpop.permute.xlu0 %7099
        %7101 = vrot.lane.b32.xlu0 %v6085, 112
        %v7102 = vpop.permute.xlu0 %7101
        %7103 = vrot.lane.b32.xlu0 %v6086, 112
        %v7104 = vpop.permute.xlu0 %7103
        %7105 = vrot.lane.b32.xlu0 %v6087, 112
        %v7106 = vpop.permute.xlu0 %7105
        %7107 = vrot.lane.b32.xlu0 %v6088, 112
        %v7108 = vpop.permute.xlu0 %7107
        %7109 = vrot.lane.b32.xlu0 %v6192, 112
        %v7110 = vpop.permute.xlu0 %7109
        %7111 = vrot.lane.b32.xlu0 %v6268, 112
        %v7112 = vpop.permute.xlu0 %7111
        %v7145 = vsel %vm527, %v6025, %v6338
        %v7146 = vsel %vm527, %v6026, %v6340
        %v7147 = vsel %vm527, %v6027, %v6342
        %v7148 = vsel %vm527, %v6028, %v6344
        %v7149 = vsel %vm527, %v6029, %v6346
        %v7150 = vsel %vm527, %v6030, %v6348
        %v7151 = vsel %vm527, %v6031, %v6350
        %v7152 = vsel %vm527, %v6032, %v6352
        %v7153 = vsel %vm527, %v6033, %v6354
        %v7154 = vsel %vm527, %v6034, %v6356
        %v7155 = vsel %vm527, %v6035, %v6358
        %v7156 = vsel %vm527, %v6036, %v6360
        %v7157 = vsel %vm527, %v6037, %v6362
        %v7158 = vsel %vm527, %v6038, %v6364
        %v7159 = vsel %vm527, %v6039, %v6366
        %v7160 = vsel %vm527, %v6040, %v6368
        %v7161 = vsel %vm527, %v6041, %v6370
        %v7162 = vsel %vm527, %v6042, %v6372
        %v7163 = vsel %vm527, %v6043, %v6374
        %v7164 = vsel %vm527, %v6044, %v6376
        %v7165 = vsel %vm527, %v6045, %v6378
        %v7166 = vsel %vm527, %v6046, %v6380
        %v7167 = vsel %vm527, %v6047, %v6382
        %v7168 = vsel %vm527, %v6048, %v6384
        %v7169 = vsel %vm527, %v6049, %v6386
        %v7170 = vsel %vm527, %v6050, %v6388
        %v7171 = vsel %vm527, %v6051, %v6390
        %v7172 = vsel %vm527, %v6052, %v6392
        %v7173 = vsel %vm527, %v6053, %v6394
        %v7174 = vsel %vm527, %v6054, %v6396
        %v7175 = vsel %vm527, %v6055, %v6398
        %v7176 = vsel %vm527, %v6056, %v6400
        %v7177 = vsel %vm544, %v7145, %v6466
        %v7178 = vsel %vm544, %v7146, %v6468
        %v7179 = vsel %vm544, %v7147, %v6470
        %v7180 = vsel %vm544, %v7148, %v6472
        %v7181 = vsel %vm544, %v7149, %v6474
        %v7182 = vsel %vm544, %v7150, %v6476
        %v7183 = vsel %vm544, %v7151, %v6478
        %v7184 = vsel %vm544, %v7152, %v6480
        %v7185 = vsel %vm544, %v7153, %v6482
        %v7186 = vsel %vm544, %v7154, %v6484
        %v7187 = vsel %vm544, %v7155, %v6486
        %v7188 = vsel %vm544, %v7156, %v6488
        %v7189 = vsel %vm544, %v7157, %v6490
        %v7190 = vsel %vm544, %v7158, %v6492
        %v7191 = vsel %vm544, %v7159, %v6494
        %v7192 = vsel %vm544, %v7160, %v6496
        %v7193 = vsel %vm544, %v7161, %v6498
        %v7194 = vsel %vm544, %v7162, %v6500
        %v7195 = vsel %vm544, %v7163, %v6502
        %v7196 = vsel %vm544, %v7164, %v6504
        %v7197 = vsel %vm544, %v7165, %v6506
        %v7198 = vsel %vm544, %v7166, %v6508
        %v7199 = vsel %vm544, %v7167, %v6510
        %v7200 = vsel %vm544, %v7168, %v6512
        %v7201 = vsel %vm544, %v7169, %v6514
        %v7202 = vsel %vm544, %v7170, %v6516
        %v7203 = vsel %vm544, %v7171, %v6518
        %v7204 = vsel %vm544, %v7172, %v6520
        %v7205 = vsel %vm544, %v7173, %v6522
        %v7206 = vsel %vm544, %v7174, %v6524
        %v7207 = vsel %vm544, %v7175, %v6526
        %v7208 = vsel %vm544, %v7176, %v6528
        %v7209 = vsel %vm5165, %v7177, %v6594
        %v7210 = vsel %vm5165, %v7178, %v6596
        %v7211 = vsel %vm5165, %v7179, %v6598
        %v7212 = vsel %vm5165, %v7180, %v6600
        %v7213 = vsel %vm5165, %v7181, %v6602
        %v7214 = vsel %vm5165, %v7182, %v6604
        %v7215 = vsel %vm5165, %v7183, %v6606
        %v7216 = vsel %vm5165, %v7184, %v6608
        %v7217 = vsel %vm5165, %v7185, %v6610
        %v7218 = vsel %vm5165, %v7186, %v6612
        %v7219 = vsel %vm5165, %v7187, %v6614
        %v7220 = vsel %vm5165, %v7188, %v6616
        %v7221 = vsel %vm5165, %v7189, %v6618
        %v7222 = vsel %vm5165, %v7190, %v6620
        %v7223 = vsel %vm5165, %v7191, %v6622
        %v7224 = vsel %vm5165, %v7192, %v6624
        %v7225 = vsel %vm5165, %v7193, %v6626
        %v7226 = vsel %vm5165, %v7194, %v6628
        %v7227 = vsel %vm5165, %v7195, %v6630
        %v7228 = vsel %vm5165, %v7196, %v6632
        %v7229 = vsel %vm5165, %v7197, %v6634
        %v7230 = vsel %vm5165, %v7198, %v6636
        %v7231 = vsel %vm5165, %v7199, %v6638
        %v7232 = vsel %vm5165, %v7200, %v6640
        %v7233 = vsel %vm5165, %v7201, %v6642
        %v7234 = vsel %vm5165, %v7202, %v6644
        %v7235 = vsel %vm5165, %v7203, %v6646
        %v7236 = vsel %vm5165, %v7204, %v6648
        %v7237 = vsel %vm5165, %v7205, %v6650
        %v7238 = vsel %vm5165, %v7206, %v6652
        %v7239 = vsel %vm5165, %v7207, %v6654
        %v7240 = vsel %vm5165, %v7208, %v6656
        %v7241 = vsel %vm5198, %v7209, %v6694
        %v7242 = vsel %vm5198, %v7210, %v6696
        %v7243 = vsel %vm5198, %v7211, %v6698
        %v7244 = vsel %vm5198, %v7212, %v6700
        %v7245 = vsel %vm5198, %v7213, %v6702
        %v7246 = vsel %vm5198, %v7214, %v6704
        %v7247 = vsel %vm5198, %v7215, %v6706
        %v7248 = vsel %vm5198, %v7216, %v6708
        %v7249 = vsel %vm5198, %v7217, %v6710
        %v7250 = vsel %vm5198, %v7218, %v6712
        %v7251 = vsel %vm5198, %v7219, %v6714
        %v7252 = vsel %vm5198, %v7220, %v6716
        %v7253 = vsel %vm5198, %v7221, %v6718
        %v7254 = vsel %vm5198, %v7222, %v6720
        %v7255 = vsel %vm5198, %v7223, %v6722
        %v7256 = vsel %vm5198, %v7224, %v6724
        %v7257 = vsel %vm5198, %v7225, %v6726
        %v7258 = vsel %vm5198, %v7226, %v6728
        %v7259 = vsel %vm5198, %v7227, %v6730
        %v7260 = vsel %vm5198, %v7228, %v6732
        %v7261 = vsel %vm5198, %v7229, %v6734
        %v7262 = vsel %vm5198, %v7230, %v6736
        %v7263 = vsel %vm5198, %v7231, %v6738
        %v7264 = vsel %vm5198, %v7232, %v6740
        %v7265 = vsel %vm5198, %v7233, %v6742
        %v7266 = vsel %vm5198, %v7234, %v6744
        %v7267 = vsel %vm5198, %v7235, %v6746
        %v7268 = vsel %vm5198, %v7236, %v6748
        %v7269 = vsel %vm5198, %v7237, %v6750
        %v7270 = vsel %vm5198, %v7238, %v6752
        %v7271 = vsel %vm5198, %v7239, %v6754
        %v7272 = vsel %vm5198, %v7240, %v6756
        %v7273 = vsel %vm5231, %v7241, %v6822
        %v7274 = vsel %vm5231, %v7242, %v6824
        %v7275 = vsel %vm5231, %v7243, %v6826
        %v7276 = vsel %vm5231, %v7244, %v6828
        %v7277 = vsel %vm5231, %v7245, %v6830
        %v7278 = vsel %vm5231, %v7246, %v6832
        %v7279 = vsel %vm5231, %v7247, %v6834
        %v7280 = vsel %vm5231, %v7248, %v6836
        %v7281 = vsel %vm5231, %v7249, %v6838
        %v7282 = vsel %vm5231, %v7250, %v6840
        %v7283 = vsel %vm5231, %v7251, %v6842
        %v7284 = vsel %vm5231, %v7252, %v6844
        %v7285 = vsel %vm5231, %v7253, %v6846
        %v7286 = vsel %vm5231, %v7254, %v6848
        %v7287 = vsel %vm5231, %v7255, %v6850
        %v7288 = vsel %vm5231, %v7256, %v6852
        %v7289 = vsel %vm5231, %v7257, %v6854
        %v7290 = vsel %vm5231, %v7258, %v6856
        %v7291 = vsel %vm5231, %v7259, %v6858
        %v7292 = vsel %vm5231, %v7260, %v6860
        %v7293 = vsel %vm5231, %v7261, %v6862
        %v7294 = vsel %vm5231, %v7262, %v6864
        %v7295 = vsel %vm5231, %v7263, %v6866
        %v7296 = vsel %vm5231, %v7264, %v6868
        %v7297 = vsel %vm5231, %v7265, %v6870
        %v7298 = vsel %vm5231, %v7266, %v6872
        %v7299 = vsel %vm5231, %v7267, %v6874
        %v7300 = vsel %vm5231, %v7268, %v6876
        %v7301 = vsel %vm5231, %v7269, %v6878
        %v7302 = vsel %vm5231, %v7270, %v6880
        %v7303 = vsel %vm5231, %v7271, %v6882
        %v7304 = vsel %vm5231, %v7272, %v6884
        %v7305 = vsel %vm3547, %v7273, %v6950
        %v7306 = vsel %vm3547, %v7274, %v6952
        %v7307 = vsel %vm3547, %v7275, %v6954
        %v7308 = vsel %vm3547, %v7276, %v6956
        %v7309 = vsel %vm3547, %v7277, %v6958
        %v7310 = vsel %vm3547, %v7278, %v6960
        %v7311 = vsel %vm3547, %v7279, %v6962
        %v7312 = vsel %vm3547, %v7280, %v6964
        %v7313 = vsel %vm3547, %v7281, %v6966
        %v7314 = vsel %vm3547, %v7282, %v6968
        %v7315 = vsel %vm3547, %v7283, %v6970
        %v7316 = vsel %vm3547, %v7284, %v6972
        %v7317 = vsel %vm3547, %v7285, %v6974
        %v7318 = vsel %vm3547, %v7286, %v6976
        %v7319 = vsel %vm3547, %v7287, %v6978
        %v7320 = vsel %vm3547, %v7288, %v6980
        %v7321 = vsel %vm3547, %v7289, %v6982
        %v7322 = vsel %vm3547, %v7290, %v6984
        %v7323 = vsel %vm3547, %v7291, %v6986
        %v7324 = vsel %vm3547, %v7292, %v6988
        %v7325 = vsel %vm3547, %v7293, %v6990
        %v7326 = vsel %vm3547, %v7294, %v6992
        %v7327 = vsel %vm3547, %v7295, %v6994
        %v7328 = vsel %vm3547, %v7296, %v6996
        %v7329 = vsel %vm3547, %v7297, %v6998
        %v7330 = vsel %vm3547, %v7298, %v7000
        %v7331 = vsel %vm3547, %v7299, %v7002
        %v7332 = vsel %vm3547, %v7300, %v7004
        %v7333 = vsel %vm3547, %v7301, %v7006
        %v7334 = vsel %vm3547, %v7302, %v7008
        %v7335 = vsel %vm3547, %v7303, %v7010
        %v7336 = vsel %vm3547, %v7304, %v7012
        %v7337 = vsel %vm5296, %v7305, %v7050
        %v7338 = vsel %vm5296, %v7306, %v7052
        %v7339 = vsel %vm5296, %v7307, %v7054
        %v7340 = vsel %vm5296, %v7308, %v7056
        %v7341 = vsel %vm5296, %v7309, %v7058
        %v7342 = vsel %vm5296, %v7310, %v7060
        %v7343 = vsel %vm5296, %v7311, %v7062
        %v7344 = vsel %vm5296, %v7312, %v7064
        %v7345 = vsel %vm5296, %v7313, %v7066
        %v7346 = vsel %vm5296, %v7314, %v7068
        %v7347 = vsel %vm5296, %v7315, %v7070
        %v7348 = vsel %vm5296, %v7316, %v7072
        %v7349 = vsel %vm5296, %v7317, %v7074
        %v7350 = vsel %vm5296, %v7318, %v7076
        %v7351 = vsel %vm5296, %v7319, %v7078
        %v7352 = vsel %vm5296, %v7320, %v7080
        %v7353 = vsel %vm5296, %v7321, %v7082
        %v7354 = vsel %vm5296, %v7322, %v7084
        %v7355 = vsel %vm5296, %v7323, %v7086
        %v7356 = vsel %vm5296, %v7324, %v7088
        %v7357 = vsel %vm5296, %v7325, %v7090
        %v7358 = vsel %vm5296, %v7326, %v7092
        %v7359 = vsel %vm5296, %v7327, %v7094
        %v7360 = vsel %vm5296, %v7328, %v7096
        %v7361 = vsel %vm5296, %v7329, %v7098
        %v7362 = vsel %vm5296, %v7330, %v7100
        %v7363 = vsel %vm5296, %v7331, %v7102
        %v7364 = vsel %vm5296, %v7332, %v7104
        %v7365 = vsel %vm5296, %v7333, %v7106
        %v7366 = vsel %vm5296, %v7334, %v7108
        %v7367 = vsel %vm5296, %v7335, %v7110
        %v7368 = vsel %vm5296, %v7336, %v7112
        %v7369 = vpack.c.bf16 %v7338, %v7337
        %v7370 = vpack.c.bf16 %v6274, %v6273
        %v7371 = vpack.c.bf16 %v7340, %v7339
        %v7372 = vpack.c.bf16 %v6276, %v6275
        %v7373 = vpack.c.bf16 %v7342, %v7341
        %v7374 = vpack.c.bf16 %v6278, %v6277
        %v7375 = vpack.c.bf16 %v7344, %v7343
        %v7376 = vpack.c.bf16 %v6280, %v6279
        %v7377 = vpack.c.bf16 %v7346, %v7345
        %v7378 = vpack.c.bf16 %v6282, %v6281
        %v7379 = vpack.c.bf16 %v7348, %v7347
        %v7380 = vpack.c.bf16 %v6284, %v6283
        %v7381 = vpack.c.bf16 %v7350, %v7349
        %v7382 = vpack.c.bf16 %v6286, %v6285
        %v7383 = vpack.c.bf16 %v7352, %v7351
        %v7384 = vpack.c.bf16 %v6288, %v6287
        %v7385 = vpack.c.bf16 %v7354, %v7353
        %v7386 = vpack.c.bf16 %v6290, %v6289
        %v7387 = vpack.c.bf16 %v7356, %v7355
        %v7388 = vpack.c.bf16 %v6292, %v6291
        %v7389 = vpack.c.bf16 %v7358, %v7357
        %v7390 = vpack.c.bf16 %v6294, %v6293
        %v7391 = vpack.c.bf16 %v7360, %v7359
        %v7392 = vpack.c.bf16 %v6296, %v6295
        %v7393 = vpack.c.bf16 %v7362, %v7361
        %v7394 = vpack.c.bf16 %v6298, %v6297
        %v7395 = vpack.c.bf16 %v7364, %v7363
        %v7396 = vpack.c.bf16 %v6300, %v6299
        %v7397 = vpack.c.bf16 %v7366, %v7365
        %v7398 = vpack.c.bf16 %v6302, %v6301
        %v7399 = vpack.c.bf16 %v7368, %v7367
        %v7400 = vpack.c.bf16 %v6304, %v6303
        %v7401 = vld [vmem:[%s10] sm:$0xf]
        %v7402 = vld [vmem:[%s10 + $0x4] sm:$0xf]
        %v7403 = vld [vmem:[%s10 + $0x8] sm:$0xf]
        %v7404 = vld [vmem:[%s10 + $0xc] sm:$0xf]
        %v7405 = vld [vmem:[%s10 + $0x10] sm:$0xf]
        %v7406 = vld [vmem:[%s10 + $0x14] sm:$0xf]
        %v7407 = vld [vmem:[%s10 + $0x18] sm:$0xf]
        %v7408 = vld [vmem:[%s10 + $0x1c] sm:$0xf]
        %v7409 = vld [vmem:[%s10 + $0x20] sm:$0xf]
        %v7410 = vld [vmem:[%s10 + $0x24] sm:$0xf]
        %v7411 = vld [vmem:[%s10 + $0x28] sm:$0xf]
        %v7412 = vld [vmem:[%s10 + $0x2c] sm:$0xf]
        %v7413 = vld [vmem:[%s10 + $0x30] sm:$0xf]
        %v7414 = vld [vmem:[%s10 + $0x34] sm:$0xf]
        %v7415 = vld [vmem:[%s10 + $0x38] sm:$0xf]
        %v7416 = vld [vmem:[%s10 + $0x3c] sm:$0xf]
        %v7417 = vld [vmem:[%s10 + $0x40] sm:$0xf]
        %v7418 = vld [vmem:[%s10 + $0x44] sm:$0xf]
        %v7419 = vld [vmem:[%s11] sm:$0x1]
        %v7421 = vlaneseq
        %v7422 = vshrl.u32 %v7421, 7
        %v7423 = vsub.s32 0, %v7422
        %v7424 = vrot.slane %v7419, %v7423
        %v7444 = vunpack.c.l.b16 %v7401
        %v7445 = vunpack.c.l.b16 %v7402
        %v7446 = vunpack.c.l.b16 %v7403
        %v7447 = vunpack.c.l.b16 %v7404
        %v7448 = vunpack.c.l.b16 %v7405
        %v7449 = vunpack.c.l.b16 %v7406
        %v7450 = vunpack.c.l.b16 %v7407
        %v7451 = vunpack.c.l.b16 %v7408
        %v7452 = vunpack.c.l.b16 %v7409
        %v7453 = vunpack.c.l.b16 %v7410
        %v7454 = vunpack.c.l.b16 %v7411
        %v7455 = vunpack.c.l.b16 %v7412
        %v7456 = vunpack.c.l.b16 %v7413
        %v7457 = vunpack.c.l.b16 %v7414
        %v7458 = vunpack.c.l.b16 %v7415
        %v7459 = vunpack.c.l.b16 %v7416
        %v7460 = vunpack.c.l.b16 %v7417
        %v7461 = vunpack.c.l.b16 %v7418
        %v7462 = vpack.c.b16 %v7445, %v7444
        %v7463 = vpack.c.b16 %v7447, %v7446
        %v7464 = vpack.c.b16 %v7449, %v7448
        %v7465 = vpack.c.b16 %v7451, %v7450
        %v7466 = vpack.c.b16 %v7453, %v7452
        %v7467 = vpack.c.b16 %v7455, %v7454
        %v7468 = vpack.c.b16 %v7457, %v7456
        %v7469 = vpack.c.b16 %v7459, %v7458
        %v7470 = vpack.c.b16 %v7461, %v7460
        %v7481 = vsel %vm527, %v7370, 0
        %v7484 = vsel %vm527, %v7372, 0
        %v7487 = vsel %vm527, %v7374, 0
        %v7490 = vsel %vm527, %v7376, 0
        %v7493 = vsel %vm527, %v7378, 0
        %v7496 = vsel %vm527, %v7380, 0
        %v7499 = vsel %vm527, %v7382, 0
        %v7502 = vsel %vm527, %v7384, 0
        %v7505 = vsel %vm527, %v7386, 0
        %v7508 = vsel %vm527, %v7388, 0
        %v7511 = vsel %vm527, %v7390, 0
        %v7514 = vsel %vm527, %v7392, 0
        %v7517 = vsel %vm527, %v7394, 0
        %v7520 = vsel %vm527, %v7396, 0
        %v7523 = vsel %vm527, %v7398, 0
        %v7526 = vsel %vm527, %v7400, 0
        %7528 = vmatprep.subr.bf16.mxu0 0
        %7529 = vmatpush1.bf16.msra.mxu0 %v7462
        %7530 = vmatprep.subr.bf16.mxu0 0
        %7531 = vmatpush1.bf16.msra.mxu0 %v7463
        %7532 = vmatprep.subr.bf16.mxu0 0
        %7533 = vmatpush1.bf16.msra.mxu0 %v7464
        %7534 = vmatprep.subr.bf16.mxu0 0
        %7535 = vmatpush1.bf16.msra.mxu0 %v7465
        %7536 = vmatprep.subr.bf16.mxu0 0
        %7537 = vmatpush1.bf16.msra.mxu0 %v7466
        %7538 = vmatprep.subr.bf16.mxu0 0
        %7539 = vmatpush1.bf16.msra.mxu0 %v7467
        %7540 = vmatprep.subr.bf16.mxu0 0
        %7541 = vmatpush1.bf16.msra.mxu0 %v7468
        %7542 = vmatprep.subr.bf16.mxu0 0
        %7543 = vmatpush1.bf16.msra.mxu0 %v7469
        %7544 = vmatprep.subr.bf16.mxu0 0
        %7545 = vmatpush1.bf16.msra.mxu0 %v7470
        %7546 = vmatprep.subr.bf16.mxu0 0
        %7547 = vmatpush1.bf16.msra.mxu0 0
        %7548 = vmatprep.subr.bf16.mxu0 0
        %7549 = vmatpush1.bf16.msra.mxu0 0
        %7550 = vmatprep.subr.bf16.mxu0 0
        %7551 = vmatpush1.bf16.msra.mxu0 0
        %7552 = vmatprep.subr.bf16.mxu0 0
        %7553 = vmatpush1.bf16.msra.mxu0 0
        %7554 = vmatprep.subr.bf16.mxu0 0
        %7555 = vmatpush1.bf16.msra.mxu0 0
        %7556 = vmatprep.subr.bf16.mxu0 0
        %7557 = vmatpush1.bf16.msra.mxu0 0
        %7558 = vmatprep.subr.bf16.mxu0 0
        %7559 = vmatpush1.bf16.msra.mxu0 0
        %7560 = vmatprep.mubr.bf16.mxu0 %v7481
        %7561 = vmatmul.mubr.bf16.gmra.mrb[0].mxu0 %v7369
        %v7562 = vpop.f32.mrb[0].mxu0
        %v7563 = vadd.f32 %v7424, %v7562
        %v7564 = vpop.f32.mrb[0].mxu0
        %v7565 = vpop.f32.mrb[0].mxu0
        %v7566 = vadd.f32 %v7424, %v7565
        %v7567 = vpop.f32.mrb[0].mxu0
        %7568 = vmatprep.mubr.bf16.mxu0 %v7484
        %7569 = vmatmul.mubr.bf16.gmra.mrb[0].mxu0 %v7371
        %v7570 = vpop.f32.mrb[0].mxu0
        %v7571 = vadd.f32 %v7424, %v7570
        %v7572 = vpop.f32.mrb[0].mxu0
        %v7573 = vpop.f32.mrb[0].mxu0
        %v7574 = vadd.f32 %v7424, %v7573
        %v7575 = vpop.f32.mrb[0].mxu0
        %7576 = vmatprep.mubr.bf16.mxu0 %v7487
        %7577 = vmatmul.mubr.bf16.gmra.mrb[0].mxu0 %v7373
        %v7578 = vpop.f32.mrb[0].mxu0
        %v7579 = vadd.f32 %v7424, %v7578
        %v7580 = vpop.f32.mrb[0].mxu0
        %v7581 = vpop.f32.mrb[0].mxu0
        %v7582 = vadd.f32 %v7424, %v7581
        %v7583 = vpop.f32.mrb[0].mxu0
        %7584 = vmatprep.mubr.bf16.mxu0 %v7490
        %7585 = vmatmul.mubr.bf16.gmra.mrb[0].mxu0 %v7375
        %v7586 = vpop.f32.mrb[0].mxu0
        %v7587 = vadd.f32 %v7424, %v7586
        %v7588 = vpop.f32.mrb[0].mxu0
        %v7589 = vpop.f32.mrb[0].mxu0
        %v7590 = vadd.f32 %v7424, %v7589
        %v7591 = vpop.f32.mrb[0].mxu0
        %7592 = vmatprep.mubr.bf16.mxu0 %v7493
        %7593 = vmatmul.mubr.bf16.gmra.mrb[0].mxu0 %v7377
        %v7594 = vpop.f32.mrb[0].mxu0
        %v7595 = vadd.f32 %v7424, %v7594
        %v7596 = vpop.f32.mrb[0].mxu0
        %v7597 = vpop.f32.mrb[0].mxu0
        %v7598 = vadd.f32 %v7424, %v7597
        %v7599 = vpop.f32.mrb[0].mxu0
        %7600 = vmatprep.mubr.bf16.mxu0 %v7496
        %7601 = vmatmul.mubr.bf16.gmra.mrb[0].mxu0 %v7379
        %v7602 = vpop.f32.mrb[0].mxu0
        %v7603 = vadd.f32 %v7424, %v7602
        %v7604 = vpop.f32.mrb[0].mxu0
        %v7605 = vpop.f32.mrb[0].mxu0
        %v7606 = vadd.f32 %v7424, %v7605
        %v7607 = vpop.f32.mrb[0].mxu0
        %7608 = vmatprep.mubr.bf16.mxu0 %v7499
        %7609 = vmatmul.mubr.bf16.gmra.mrb[0].mxu0 %v7381
        %v7610 = vpop.f32.mrb[0].mxu0
        %v7611 = vadd.f32 %v7424, %v7610
        %v7612 = vpop.f32.mrb[0].mxu0
        %v7613 = vpop.f32.mrb[0].mxu0
        %v7614 = vadd.f32 %v7424, %v7613
        %v7615 = vpop.f32.mrb[0].mxu0
        %7616 = vmatprep.mubr.bf16.mxu0 %v7502
        %7617 = vmatmul.mubr.bf16.gmra.mrb[0].mxu0 %v7383
        %v7618 = vpop.f32.mrb[0].mxu0
        %v7619 = vadd.f32 %v7424, %v7618
        %v7620 = vpop.f32.mrb[0].mxu0
        %v7621 = vpop.f32.mrb[0].mxu0
        %v7622 = vadd.f32 %v7424, %v7621
        %v7623 = vpop.f32.mrb[0].mxu0
        %7624 = vmatprep.mubr.bf16.mxu0 %v7505
        %7625 = vmatmul.mubr.bf16.gmra.mrb[0].mxu0 %v7385
        %v7626 = vpop.f32.mrb[0].mxu0
        %v7627 = vadd.f32 %v7424, %v7626
        %v7628 = vpop.f32.mrb[0].mxu0
        %v7629 = vpop.f32.mrb[0].mxu0
        %v7630 = vadd.f32 %v7424, %v7629
        %v7631 = vpop.f32.mrb[0].mxu0
        %7632 = vmatprep.mubr.bf16.mxu0 %v7508
        %7633 = vmatmul.mubr.bf16.gmra.mrb[0].mxu0 %v7387
        %v7634 = vpop.f32.mrb[0].mxu0
        %v7635 = vadd.f32 %v7424, %v7634
        %v7636 = vpop.f32.mrb[0].mxu0
        %v7637 = vpop.f32.mrb[0].mxu0
        %v7638 = vadd.f32 %v7424, %v7637
        %v7639 = vpop.f32.mrb[0].mxu0
        %7640 = vmatprep.mubr.bf16.mxu0 %v7511
        %7641 = vmatmul.mubr.bf16.gmra.mrb[0].mxu0 %v7389
        %v7642 = vpop.f32.mrb[0].mxu0
        %v7643 = vadd.f32 %v7424, %v7642
        %v7644 = vpop.f32.mrb[0].mxu0
        %v7645 = vpop.f32.mrb[0].mxu0
        %v7646 = vadd.f32 %v7424, %v7645
        %v7647 = vpop.f32.mrb[0].mxu0
        %7648 = vmatprep.mubr.bf16.mxu0 %v7514
        %7649 = vmatmul.mubr.bf16.gmra.mrb[0].mxu0 %v7391
        %v7650 = vpop.f32.mrb[0].mxu0
        %v7651 = vadd.f32 %v7424, %v7650
        %v7652 = vpop.f32.mrb[0].mxu0
        %v7653 = vpop.f32.mrb[0].mxu0
        %v7654 = vadd.f32 %v7424, %v7653
        %v7655 = vpop.f32.mrb[0].mxu0
        %7656 = vmatprep.mubr.bf16.mxu0 %v7517
        %7657 = vmatmul.mubr.bf16.gmra.mrb[0].mxu0 %v7393
        %v7658 = vpop.f32.mrb[0].mxu0
        %v7659 = vadd.f32 %v7424, %v7658
        %v7660 = vpop.f32.mrb[0].mxu0
        %v7661 = vpop.f32.mrb[0].mxu0
        %v7662 = vadd.f32 %v7424, %v7661
        %v7663 = vpop.f32.mrb[0].mxu0
        %7664 = vmatprep.mubr.bf16.mxu0 %v7520
        %7665 = vmatmul.mubr.bf16.gmra.mrb[0].mxu0 %v7395
        %v7666 = vpop.f32.mrb[0].mxu0
        %v7667 = vadd.f32 %v7424, %v7666
        %v7668 = vpop.f32.mrb[0].mxu0
        %v7669 = vpop.f32.mrb[0].mxu0
        %v7670 = vadd.f32 %v7424, %v7669
        %v7671 = vpop.f32.mrb[0].mxu0
        %7672 = vmatprep.mubr.bf16.mxu0 %v7523
        %7673 = vmatmul.mubr.bf16.gmra.mrb[0].mxu0 %v7397
        %v7674 = vpop.f32.mrb[0].mxu0
        %v7675 = vadd.f32 %v7424, %v7674
        %v7676 = vpop.f32.mrb[0].mxu0
        %v7677 = vpop.f32.mrb[0].mxu0
        %v7678 = vadd.f32 %v7424, %v7677
        %v7679 = vpop.f32.mrb[0].mxu0
        %7680 = vmatprep.mubr.bf16.mxu0 %v7526
        %7681 = vmatmul.mubr.bf16.gmra.mrb[0].mxu0 %v7399
        %v7682 = vpop.f32.mrb[0].mxu0
        %v7683 = vadd.f32 %v7424, %v7682
        %v7684 = vpop.f32.mrb[0].mxu0
        %v7685 = vpop.f32.mrb[0].mxu0
        %v7686 = vadd.f32 %v7424, %v7685
        %v7687 = vpop.f32.mrb[0].mxu0
        %7688 = vdwg.mxu0
        %v7689 = vmax.f32 %v7563, 0.0
        %v7690 = vmax.f32 %v7566, 0.0
        %v7691 = vmax.f32 %v7571, 0.0
        %v7692 = vmax.f32 %v7574, 0.0
        %v7693 = vmax.f32 %v7579, 0.0
        %v7694 = vmax.f32 %v7582, 0.0
        %v7695 = vmax.f32 %v7587, 0.0
        %v7696 = vmax.f32 %v7590, 0.0
        %v7697 = vmax.f32 %v7595, 0.0
        %v7698 = vmax.f32 %v7598, 0.0
        %v7699 = vmax.f32 %v7603, 0.0
        %v7700 = vmax.f32 %v7606, 0.0
        %v7701 = vmax.f32 %v7611, 0.0
        %v7702 = vmax.f32 %v7614, 0.0
        %v7703 = vmax.f32 %v7619, 0.0
        %v7704 = vmax.f32 %v7622, 0.0
        %v7705 = vmax.f32 %v7627, 0.0
        %v7706 = vmax.f32 %v7630, 0.0
        %v7707 = vmax.f32 %v7635, 0.0
        %v7708 = vmax.f32 %v7638, 0.0
        %v7709 = vmax.f32 %v7643, 0.0
        %v7710 = vmax.f32 %v7646, 0.0
        %v7711 = vmax.f32 %v7651, 0.0
        %v7712 = vmax.f32 %v7654, 0.0
        %v7713 = vmax.f32 %v7659, 0.0
        %v7714 = vmax.f32 %v7662, 0.0
        %v7715 = vmax.f32 %v7667, 0.0
        %v7716 = vmax.f32 %v7670, 0.0
        %v7717 = vmax.f32 %v7675, 0.0
        %v7718 = vmax.f32 %v7678, 0.0
        %v7719 = vmax.f32 %v7683, 0.0
        %v7720 = vmax.f32 %v7686, 0.0
        %v7721 = vpack.c.bf16 %v7690, %v7689
        %v7722 = vpack.c.bf16 %v7692, %v7691
        %v7723 = vpack.c.bf16 %v7694, %v7693
        %v7724 = vpack.c.bf16 %v7696, %v7695
        %v7725 = vpack.c.bf16 %v7698, %v7697
        %v7726 = vpack.c.bf16 %v7700, %v7699
        %v7727 = vpack.c.bf16 %v7702, %v7701
        %v7728 = vpack.c.bf16 %v7704, %v7703
        %v7729 = vpack.c.bf16 %v7706, %v7705
        %v7730 = vpack.c.bf16 %v7708, %v7707
        %v7731 = vpack.c.bf16 %v7710, %v7709
        %v7732 = vpack.c.bf16 %v7712, %v7711
        %v7733 = vpack.c.bf16 %v7714, %v7713
        %v7734 = vpack.c.bf16 %v7716, %v7715
        %v7735 = vpack.c.bf16 %v7718, %v7717
        %v7736 = vpack.c.bf16 %v7720, %v7719
        %v7737 = vld [vmem:[%s12] sm:$0xf]
        %v7738 = vld [vmem:[%s12 + $0x4] sm:$0xf]
        %v7739 = vld [vmem:[%s12 + $0x8] sm:$0xf]
        %v7740 = vld [vmem:[%s12 + $0xc] sm:$0xf]
        %v7741 = vld [vmem:[%s12 + $0x10] sm:$0xf]
        %v7742 = vld [vmem:[%s12 + $0x14] sm:$0xf]
        %v7743 = vld [vmem:[%s12 + $0x18] sm:$0xf]
        %v7744 = vld [vmem:[%s12 + $0x1c] sm:$0xf]
        %v7745 = vld [vmem:[%s12 + $0x20] sm:$0xf]
        %v7746 = vld [vmem:[%s12 + $0x24] sm:$0xf]
        %v7747 = vld [vmem:[%s12 + $0x28] sm:$0xf]
        %v7748 = vld [vmem:[%s12 + $0x2c] sm:$0xf]
        %v7749 = vld [vmem:[%s12 + $0x30] sm:$0xf]
        %v7750 = vld [vmem:[%s12 + $0x34] sm:$0xf]
        %v7751 = vld [vmem:[%s12 + $0x38] sm:$0xf]
        %v7752 = vld [vmem:[%s12 + $0x3c] sm:$0xf]
        %v7753 = vld [vmem:[%s13] sm:$0x1]
        %v7755 = vlaneseq
        %v7756 = vshrl.u32 %v7755, 7
        %v7757 = vsub.s32 0, %v7756
        %v7758 = vrot.slane %v7753, %v7757
        %v7776 = vunpack.c.l.b16 %v7737
        %v7777 = vunpack.c.l.b16 %v7738
        %v7778 = vunpack.c.l.b16 %v7739
        %v7779 = vunpack.c.l.b16 %v7740
        %v7780 = vunpack.c.l.b16 %v7741
        %v7781 = vunpack.c.l.b16 %v7742
        %v7782 = vunpack.c.l.b16 %v7743
        %v7783 = vunpack.c.l.b16 %v7744
        %v7784 = vunpack.c.l.b16 %v7745
        %v7785 = vunpack.c.l.b16 %v7746
        %v7786 = vunpack.c.l.b16 %v7747
        %v7787 = vunpack.c.l.b16 %v7748
        %v7788 = vunpack.c.l.b16 %v7749
        %v7789 = vunpack.c.l.b16 %v7750
        %v7790 = vunpack.c.l.b16 %v7751
        %v7791 = vunpack.c.l.b16 %v7752
        %v7792 = vpack.c.b16 %v7777, %v7776
        %v7793 = vpack.c.b16 %v7779, %v7778
        %v7794 = vpack.c.b16 %v7781, %v7780
        %v7795 = vpack.c.b16 %v7783, %v7782
        %v7796 = vpack.c.b16 %v7785, %v7784
        %v7797 = vpack.c.b16 %v7787, %v7786
        %v7798 = vpack.c.b16 %v7789, %v7788
        %v7799 = vpack.c.b16 %v7791, %v7790
        %7808 = vmatprep.subr.bf16.mxu0 0
        %7809 = vmatpush1.bf16.msra.mxu0 %v7792
        %7810 = vmatprep.subr.bf16.mxu0 0
        %7811 = vmatpush1.bf16.msra.mxu0 %v7793
        %7812 = vmatprep.subr.bf16.mxu0 0
        %7813 = vmatpush1.bf16.msra.mxu0 %v7794
        %7814 = vmatprep.subr.bf16.mxu0 0
        %7815 = vmatpush1.bf16.msra.mxu0 %v7795
        %7816 = vmatprep.subr.bf16.mxu0 0
        %7817 = vmatpush1.bf16.msra.mxu0 %v7796
        %7818 = vmatprep.subr.bf16.mxu0 0
        %7819 = vmatpush1.bf16.msra.mxu0 %v7797
        %7820 = vmatprep.subr.bf16.mxu0 0
        %7821 = vmatpush1.bf16.msra.mxu0 %v7798
        %7822 = vmatprep.subr.bf16.mxu0 0
        %7823 = vmatpush1.bf16.msra.mxu0 %v7799
        %7824 = vmatprep.subr.bf16.mxu0 0
        %7825 = vmatpush1.bf16.msra.mxu0 0
        %7826 = vmatprep.subr.bf16.mxu0 0
        %7827 = vmatpush1.bf16.msra.mxu0 0
        %7828 = vmatprep.subr.bf16.mxu0 0
        %7829 = vmatpush1.bf16.msra.mxu0 0
        %7830 = vmatprep.subr.bf16.mxu0 0
        %7831 = vmatpush1.bf16.msra.mxu0 0
        %7832 = vmatprep.subr.bf16.mxu0 0
        %7833 = vmatpush1.bf16.msra.mxu0 0
        %7834 = vmatprep.subr.bf16.mxu0 0
        %7835 = vmatpush1.bf16.msra.mxu0 0
        %7836 = vmatprep.subr.bf16.mxu0 0
        %7837 = vmatpush1.bf16.msra.mxu0 0
        %7838 = vmatprep.subr.bf16.mxu0 0
        %7839 = vmatpush1.bf16.msra.mxu0 0
        %7840 = vmatprep.mubr.bf16.mxu0 0
        %7841 = vmatmul.mubr.bf16.gmra.mrb[0].mxu0 %v7721
        %v7842 = vpop.f32.mrb[0].mxu0
        %v7843 = vadd.f32 %v7758, %v7842
        %v7844 = vpop.f32.mrb[0].mxu0
        %v7845 = vpop.f32.mrb[0].mxu0
        %v7846 = vadd.f32 %v7758, %v7845
        %v7847 = vpop.f32.mrb[0].mxu0
        %7848 = vmatprep.mubr.bf16.mxu0 0
        %7849 = vmatmul.mubr.bf16.gmra.mrb[0].mxu0 %v7722
        %v7850 = vpop.f32.mrb[0].mxu0
        %v7851 = vadd.f32 %v7758, %v7850
        %v7852 = vpop.f32.mrb[0].mxu0
        %v7853 = vpop.f32.mrb[0].mxu0
        %v7854 = vadd.f32 %v7758, %v7853
        %v7855 = vpop.f32.mrb[0].mxu0
        %7856 = vmatprep.mubr.bf16.mxu0 0
        %7857 = vmatmul.mubr.bf16.gmra.mrb[0].mxu0 %v7723
        %v7858 = vpop.f32.mrb[0].mxu0
        %v7859 = vadd.f32 %v7758, %v7858
        %v7860 = vpop.f32.mrb[0].mxu0
        %v7861 = vpop.f32.mrb[0].mxu0
        %v7862 = vadd.f32 %v7758, %v7861
        %v7863 = vpop.f32.mrb[0].mxu0
        %7864 = vmatprep.mubr.bf16.mxu0 0
        %7865 = vmatmul.mubr.bf16.gmra.mrb[0].mxu0 %v7724
        %v7866 = vpop.f32.mrb[0].mxu0
        %v7867 = vadd.f32 %v7758, %v7866
        %v7868 = vpop.f32.mrb[0].mxu0
        %v7869 = vpop.f32.mrb[0].mxu0
        %v7870 = vadd.f32 %v7758, %v7869
        %v7871 = vpop.f32.mrb[0].mxu0
        %7872 = vmatprep.mubr.bf16.mxu0 0
        %7873 = vmatmul.mubr.bf16.gmra.mrb[0].mxu0 %v7725
        %v7874 = vpop.f32.mrb[0].mxu0
        %v7875 = vadd.f32 %v7758, %v7874
        %v7876 = vpop.f32.mrb[0].mxu0
        %v7877 = vpop.f32.mrb[0].mxu0
        %v7878 = vadd.f32 %v7758, %v7877
        %v7879 = vpop.f32.mrb[0].mxu0
        %7880 = vmatprep.mubr.bf16.mxu0 0
        %7881 = vmatmul.mubr.bf16.gmra.mrb[0].mxu0 %v7726
        %v7882 = vpop.f32.mrb[0].mxu0
        %v7883 = vadd.f32 %v7758, %v7882
        %v7884 = vpop.f32.mrb[0].mxu0
        %v7885 = vpop.f32.mrb[0].mxu0
        %v7886 = vadd.f32 %v7758, %v7885
        %v7887 = vpop.f32.mrb[0].mxu0
        %7888 = vmatprep.mubr.bf16.mxu0 0
        %7889 = vmatmul.mubr.bf16.gmra.mrb[0].mxu0 %v7727
        %v7890 = vpop.f32.mrb[0].mxu0
        %v7891 = vadd.f32 %v7758, %v7890
        %v7892 = vpop.f32.mrb[0].mxu0
        %v7893 = vpop.f32.mrb[0].mxu0
        %v7894 = vadd.f32 %v7758, %v7893
        %v7895 = vpop.f32.mrb[0].mxu0
        %7896 = vmatprep.mubr.bf16.mxu0 0
        %7897 = vmatmul.mubr.bf16.gmra.mrb[0].mxu0 %v7728
        %v7898 = vpop.f32.mrb[0].mxu0
        %v7899 = vadd.f32 %v7758, %v7898
        %v7900 = vpop.f32.mrb[0].mxu0
        %v7901 = vpop.f32.mrb[0].mxu0
        %v7902 = vadd.f32 %v7758, %v7901
        %v7903 = vpop.f32.mrb[0].mxu0
        %7904 = vmatprep.mubr.bf16.mxu0 0
        %7905 = vmatmul.mubr.bf16.gmra.mrb[0].mxu0 %v7729
        %v7906 = vpop.f32.mrb[0].mxu0
        %v7907 = vadd.f32 %v7758, %v7906
        %v7908 = vpop.f32.mrb[0].mxu0
        %v7909 = vpop.f32.mrb[0].mxu0
        %v7910 = vadd.f32 %v7758, %v7909
        %v7911 = vpop.f32.mrb[0].mxu0
        %7912 = vmatprep.mubr.bf16.mxu0 0
        %7913 = vmatmul.mubr.bf16.gmra.mrb[0].mxu0 %v7730
        %v7914 = vpop.f32.mrb[0].mxu0
        %v7915 = vadd.f32 %v7758, %v7914
        %v7916 = vpop.f32.mrb[0].mxu0
        %v7917 = vpop.f32.mrb[0].mxu0
        %v7918 = vadd.f32 %v7758, %v7917
        %v7919 = vpop.f32.mrb[0].mxu0
        %7920 = vmatprep.mubr.bf16.mxu0 0
        %7921 = vmatmul.mubr.bf16.gmra.mrb[0].mxu0 %v7731
        %v7922 = vpop.f32.mrb[0].mxu0
        %v7923 = vadd.f32 %v7758, %v7922
        %v7924 = vpop.f32.mrb[0].mxu0
        %v7925 = vpop.f32.mrb[0].mxu0
        %v7926 = vadd.f32 %v7758, %v7925
        %v7927 = vpop.f32.mrb[0].mxu0
        %7928 = vmatprep.mubr.bf16.mxu0 0
        %7929 = vmatmul.mubr.bf16.gmra.mrb[0].mxu0 %v7732
        %v7930 = vpop.f32.mrb[0].mxu0
        %v7931 = vadd.f32 %v7758, %v7930
        %v7932 = vpop.f32.mrb[0].mxu0
        %v7933 = vpop.f32.mrb[0].mxu0
        %v7934 = vadd.f32 %v7758, %v7933
        %v7935 = vpop.f32.mrb[0].mxu0
        %7936 = vmatprep.mubr.bf16.mxu0 0
        %7937 = vmatmul.mubr.bf16.gmra.mrb[0].mxu0 %v7733
        %v7938 = vpop.f32.mrb[0].mxu0
        %v7939 = vadd.f32 %v7758, %v7938
        %v7940 = vpop.f32.mrb[0].mxu0
        %v7941 = vpop.f32.mrb[0].mxu0
        %v7942 = vadd.f32 %v7758, %v7941
        %v7943 = vpop.f32.mrb[0].mxu0
        %7944 = vmatprep.mubr.bf16.mxu0 0
        %7945 = vmatmul.mubr.bf16.gmra.mrb[0].mxu0 %v7734
        %v7946 = vpop.f32.mrb[0].mxu0
        %v7947 = vadd.f32 %v7758, %v7946
        %v7948 = vpop.f32.mrb[0].mxu0
        %v7949 = vpop.f32.mrb[0].mxu0
        %v7950 = vadd.f32 %v7758, %v7949
        %v7951 = vpop.f32.mrb[0].mxu0
        %7952 = vmatprep.mubr.bf16.mxu0 0
        %7953 = vmatmul.mubr.bf16.gmra.mrb[0].mxu0 %v7735
        %v7954 = vpop.f32.mrb[0].mxu0
        %v7955 = vadd.f32 %v7758, %v7954
        %v7956 = vpop.f32.mrb[0].mxu0
        %v7957 = vpop.f32.mrb[0].mxu0
        %v7958 = vadd.f32 %v7758, %v7957
        %v7959 = vpop.f32.mrb[0].mxu0
        %7960 = vmatprep.mubr.bf16.mxu0 0
        %7961 = vmatmul.mubr.bf16.gmra.mrb[0].mxu0 %v7736
        %v7962 = vpop.f32.mrb[0].mxu0
        %v7963 = vadd.f32 %v7758, %v7962
        %v7964 = vpop.f32.mrb[0].mxu0
        %v7965 = vpop.f32.mrb[0].mxu0
        %v7966 = vadd.f32 %v7758, %v7965
        %v7967 = vpop.f32.mrb[0].mxu0
        %7968 = vdwg.mxu0
        %v7969 = vmax.f32 %v7843, 0.0
        %v7970 = vmax.f32 %v7846, 0.0
        %v7971 = vmax.f32 %v7851, 0.0
        %v7972 = vmax.f32 %v7854, 0.0
        %v7973 = vmax.f32 %v7859, 0.0
        %v7974 = vmax.f32 %v7862, 0.0
        %v7975 = vmax.f32 %v7867, 0.0
        %v7976 = vmax.f32 %v7870, 0.0
        %v7977 = vmax.f32 %v7875, 0.0
        %v7978 = vmax.f32 %v7878, 0.0
        %v7979 = vmax.f32 %v7883, 0.0
        %v7980 = vmax.f32 %v7886, 0.0
        %v7981 = vmax.f32 %v7891, 0.0
        %v7982 = vmax.f32 %v7894, 0.0
        %v7983 = vmax.f32 %v7899, 0.0
        %v7984 = vmax.f32 %v7902, 0.0
        %v7985 = vmax.f32 %v7907, 0.0
        %v7986 = vmax.f32 %v7910, 0.0
        %v7987 = vmax.f32 %v7915, 0.0
        %v7988 = vmax.f32 %v7918, 0.0
        %v7989 = vmax.f32 %v7923, 0.0
        %v7990 = vmax.f32 %v7926, 0.0
        %v7991 = vmax.f32 %v7931, 0.0
        %v7992 = vmax.f32 %v7934, 0.0
        %v7993 = vmax.f32 %v7939, 0.0
        %v7994 = vmax.f32 %v7942, 0.0
        %v7995 = vmax.f32 %v7947, 0.0
        %v7996 = vmax.f32 %v7950, 0.0
        %v7997 = vmax.f32 %v7955, 0.0
        %v7998 = vmax.f32 %v7958, 0.0
        %v7999 = vmax.f32 %v7963, 0.0
        %v8000 = vmax.f32 %v7966, 0.0
        %8001 = vst.msk [vmem:[#allocation3 + $0x10] sm:$0xff] %vm544, %v7969
        %8002 = vst.msk [vmem:[#allocation3 + $0x18] sm:$0xff] %vm544, %v7970
        %8003 = vst.msk [vmem:[#allocation3 + $0x20] sm:$0xff] %vm544, %v7971
        %8004 = vst.msk [vmem:[#allocation3 + $0x28] sm:$0xff] %vm544, %v7972
        %8005 = vst.msk [vmem:[#allocation3 + $0x30] sm:$0xff] %vm544, %v7973
        %8006 = vst.msk [vmem:[#allocation3 + $0x38] sm:$0xff] %vm544, %v7974
        %8007 = vst.msk [vmem:[#allocation3 + $0x40] sm:$0xff] %vm544, %v7975
        %8008 = vst.msk [vmem:[#allocation3 + $0x48] sm:$0xff] %vm544, %v7976
        %8009 = vst.msk [vmem:[#allocation3 + $0x70] sm:$0xff] %vm544, %v7977
        %8010 = vst.msk [vmem:[#allocation3 + $0x78] sm:$0xff] %vm544, %v7978
        %8011 = vst.msk [vmem:[#allocation3 + $0x80] sm:$0xff] %vm544, %v7979
        %8012 = vst.msk [vmem:[#allocation3 + $0x88] sm:$0xff] %vm544, %v7980
        %8013 = vst.msk [vmem:[#allocation3 + $0x90] sm:$0xff] %vm544, %v7981
        %8014 = vst.msk [vmem:[#allocation3 + $0x98] sm:$0xff] %vm544, %v7982
        %8015 = vst.msk [vmem:[#allocation3 + $0xa0] sm:$0xff] %vm544, %v7983
        %8016 = vst.msk [vmem:[#allocation3 + $0xa8] sm:$0xff] %vm544, %v7984
        %8017 = vst.msk [vmem:[#allocation3 + $0xd0] sm:$0xff] %vm544, %v7985
        %8018 = vst.msk [vmem:[#allocation3 + $0xd8] sm:$0xff] %vm544, %v7986
        %8019 = vst.msk [vmem:[#allocation3 + $0xe0] sm:$0xff] %vm544, %v7987
        %8020 = vst.msk [vmem:[#allocation3 + $0xe8] sm:$0xff] %vm544, %v7988
        %8021 = vst.msk [vmem:[#allocation3 + $0xf0] sm:$0xff] %vm544, %v7989
        %8022 = vst.msk [vmem:[#allocation3 + $0xf8] sm:$0xff] %vm544, %v7990
        %8023 = vst.msk [vmem:[#allocation3 + $0x100] sm:$0xff] %vm544, %v7991
        %8024 = vst.msk [vmem:[#allocation3 + $0x108] sm:$0xff] %vm544, %v7992
        %8025 = vst.msk [vmem:[#allocation3 + $0x130] sm:$0xff] %vm544, %v7993
        %8026 = vst.msk [vmem:[#allocation3 + $0x138] sm:$0xff] %vm544, %v7994
        %8027 = vst.msk [vmem:[#allocation3 + $0x140] sm:$0xff] %vm544, %v7995
        %8028 = vst.msk [vmem:[#allocation3 + $0x148] sm:$0xff] %vm544, %v7996
        %8029 = vst.msk [vmem:[#allocation3 + $0x150] sm:$0xff] %vm544, %v7997
        %8030 = vst.msk [vmem:[#allocation3 + $0x158] sm:$0xff] %vm544, %v7998
        %8031 = vst.msk [vmem:[#allocation3 + $0x160] sm:$0xff] %vm544, %v7999
        %8032 = vst.msk [vmem:[#allocation3 + $0x168] sm:$0xff] %vm544, %v8000
        %v8033 = vld [vmem:[#allocation3 + $0x7] sm:$0xff]
        %v8034 = vld [vmem:[#allocation3 + $0xf] sm:$0xff]
        %v8035 = vld [vmem:[#allocation3 + $0x17] sm:$0xff]
        %v8036 = vld [vmem:[#allocation3 + $0x1f] sm:$0xff]
        %v8037 = vld [vmem:[#allocation3 + $0x27] sm:$0xff]
        %v8038 = vld [vmem:[#allocation3 + $0x2f] sm:$0xff]
        %v8039 = vld [vmem:[#allocation3 + $0x37] sm:$0xff]
        %v8040 = vld [vmem:[#allocation3 + $0x3f] sm:$0xff]
        %v8041 = vld [vmem:[#allocation3 + $0x67] sm:$0xff]
        %v8042 = vld [vmem:[#allocation3 + $0x6f] sm:$0xff]
        %v8043 = vld [vmem:[#allocation3 + $0x77] sm:$0xff]
        %v8044 = vld [vmem:[#allocation3 + $0x7f] sm:$0xff]
        %v8045 = vld [vmem:[#allocation3 + $0x87] sm:$0xff]
        %v8046 = vld [vmem:[#allocation3 + $0x8f] sm:$0xff]
        %v8047 = vld [vmem:[#allocation3 + $0x97] sm:$0xff]
        %v8048 = vld [vmem:[#allocation3 + $0x9f] sm:$0xff]
        %v8049 = vld [vmem:[#allocation3 + $0xc7] sm:$0xff]
        %v8050 = vld [vmem:[#allocation3 + $0xcf] sm:$0xff]
        %v8051 = vld [vmem:[#allocation3 + $0xd7] sm:$0xff]
        %v8052 = vld [vmem:[#allocation3 + $0xdf] sm:$0xff]
        %v8053 = vld [vmem:[#allocation3 + $0xe7] sm:$0xff]
        %v8054 = vld [vmem:[#allocation3 + $0xef] sm:$0xff]
        %v8055 = vld [vmem:[#allocation3 + $0xf7] sm:$0xff]
        %v8056 = vld [vmem:[#allocation3 + $0xff] sm:$0xff]
        %v8057 = vld [vmem:[#allocation3 + $0x127] sm:$0xff]
        %v8058 = vld [vmem:[#allocation3 + $0x12f] sm:$0xff]
        %v8059 = vld [vmem:[#allocation3 + $0x137] sm:$0xff]
        %v8060 = vld [vmem:[#allocation3 + $0x13f] sm:$0xff]
        %v8061 = vld [vmem:[#allocation3 + $0x147] sm:$0xff]
        %v8062 = vld [vmem:[#allocation3 + $0x14f] sm:$0xff]
        %v8063 = vld [vmem:[#allocation3 + $0x157] sm:$0xff]
        %v8064 = vld [vmem:[#allocation3 + $0x15f] sm:$0xff]
        %v8065 = vsel %vm3885, 0.0, %v8033
        %v8066 = vsel %vm3886, 0.0, %v8034
        %v8067 = vsel %vm3887, 0.0, %v8035
        %v8068 = vsel %vm3888, 0.0, %v8036
        %v8069 = vsel %vm3889, 0.0, %v8037
        %v8070 = vsel %vm3890, 0.0, %v8038
        %v8071 = vsel %vm3891, 0.0, %v8039
        %v8072 = vsel %vm3892, 0.0, %v8040
        %v8073 = vsel %vm3893, 0.0, %v8041
        %v8074 = vsel %vm3894, 0.0, %v8042
        %v8075 = vsel %vm3895, 0.0, %v8043
        %v8076 = vsel %vm3896, 0.0, %v8044
        %v8077 = vsel %vm3897, 0.0, %v8045
        %v8078 = vsel %vm3898, 0.0, %v8046
        %v8079 = vsel %vm3899, 0.0, %v8047
        %v8080 = vsel %vm3900, 0.0, %v8048
        %v8081 = vsel %vm3901, 0.0, %v8049
        %v8082 = vsel %vm3902, 0.0, %v8050
        %v8083 = vsel %vm3903, 0.0, %v8051
        %v8084 = vsel %vm3904, 0.0, %v8052
        %v8085 = vsel %vm3905, 0.0, %v8053
        %v8086 = vsel %vm3906, 0.0, %v8054
        %v8087 = vsel %vm3907, 0.0, %v8055
        %v8088 = vsel %vm3908, 0.0, %v8056
        %v8089 = vsel %vm3909, 0.0, %v8057
        %v8090 = vsel %vm3910, 0.0, %v8058
        %v8091 = vsel %vm3911, 0.0, %v8059
        %v8092 = vsel %vm3912, 0.0, %v8060
        %v8093 = vsel %vm3913, 0.0, %v8061
        %v8094 = vsel %vm3914, 0.0, %v8062
        %v8095 = vsel %vm3915, 0.0, %v8063
        %v8096 = vsel %vm3916, 0.0, %v8064
        %v8097 = vld [vmem:[#allocation3 + $0x8] sm:$0xff]
        %v8098 = vld [vmem:[#allocation3 + $0x10] sm:$0xff]
        %v8099 = vld [vmem:[#allocation3 + $0x18] sm:$0xff]
        %v8100 = vld [vmem:[#allocation3 + $0x20] sm:$0xff]
        %v8101 = vld [vmem:[#allocation3 + $0x28] sm:$0xff]
        %v8102 = vld [vmem:[#allocation3 + $0x30] sm:$0xff]
        %v8103 = vld [vmem:[#allocation3 + $0x38] sm:$0xff]
        %v8104 = vld [vmem:[#allocation3 + $0x40] sm:$0xff]
        %v8105 = vld [vmem:[#allocation3 + $0x68] sm:$0xff]
        %v8106 = vld [vmem:[#allocation3 + $0x70] sm:$0xff]
        %v8107 = vld [vmem:[#allocation3 + $0x78] sm:$0xff]
        %v8108 = vld [vmem:[#allocation3 + $0x80] sm:$0xff]
        %v8109 = vld [vmem:[#allocation3 + $0x88] sm:$0xff]
        %v8110 = vld [vmem:[#allocation3 + $0x90] sm:$0xff]
        %v8111 = vld [vmem:[#allocation3 + $0x98] sm:$0xff]
        %v8112 = vld [vmem:[#allocation3 + $0xa0] sm:$0xff]
        %v8113 = vld [vmem:[#allocation3 + $0xc8] sm:$0xff]
        %v8114 = vld [vmem:[#allocation3 + $0xd0] sm:$0xff]
        %v8115 = vld [vmem:[#allocation3 + $0xd8] sm:$0xff]
        %v8116 = vld [vmem:[#allocation3 + $0xe0] sm:$0xff]
        %v8117 = vld [vmem:[#allocation3 + $0xe8] sm:$0xff]
        %v8118 = vld [vmem:[#allocation3 + $0xf0] sm:$0xff]
        %v8119 = vld [vmem:[#allocation3 + $0xf8] sm:$0xff]
        %v8120 = vld [vmem:[#allocation3 + $0x100] sm:$0xff]
        %v8121 = vld [vmem:[#allocation3 + $0x128] sm:$0xff]
        %v8122 = vld [vmem:[#allocation3 + $0x130] sm:$0xff]
        %v8123 = vld [vmem:[#allocation3 + $0x138] sm:$0xff]
        %v8124 = vld [vmem:[#allocation3 + $0x140] sm:$0xff]
        %v8125 = vld [vmem:[#allocation3 + $0x148] sm:$0xff]
        %v8126 = vld [vmem:[#allocation3 + $0x150] sm:$0xff]
        %v8127 = vld [vmem:[#allocation3 + $0x158] sm:$0xff]
        %v8128 = vld [vmem:[#allocation3 + $0x160] sm:$0xff]
        %v8129 = vld [vmem:[#allocation3 + $0x9] sm:$0xff]
        %v8130 = vld [vmem:[#allocation3 + $0x11] sm:$0xff]
        %v8131 = vld [vmem:[#allocation3 + $0x19] sm:$0xff]
        %v8132 = vld [vmem:[#allocation3 + $0x21] sm:$0xff]
        %v8133 = vld [vmem:[#allocation3 + $0x29] sm:$0xff]
        %v8134 = vld [vmem:[#allocation3 + $0x31] sm:$0xff]
        %v8135 = vld [vmem:[#allocation3 + $0x39] sm:$0xff]
        %v8136 = vld [vmem:[#allocation3 + $0x41] sm:$0xff]
        %v8137 = vld [vmem:[#allocation3 + $0x69] sm:$0xff]
        %v8138 = vld [vmem:[#allocation3 + $0x71] sm:$0xff]
        %v8139 = vld [vmem:[#allocation3 + $0x79] sm:$0xff]
        %v8140 = vld [vmem:[#allocation3 + $0x81] sm:$0xff]
        %v8141 = vld [vmem:[#allocation3 + $0x89] sm:$0xff]
        %v8142 = vld [vmem:[#allocation3 + $0x91] sm:$0xff]
        %v8143 = vld [vmem:[#allocation3 + $0x99] sm:$0xff]
        %v8144 = vld [vmem:[#allocation3 + $0xa1] sm:$0xff]
        %v8145 = vld [vmem:[#allocation3 + $0xc9] sm:$0xff]
        %v8146 = vld [vmem:[#allocation3 + $0xd1] sm:$0xff]
        %v8147 = vld [vmem:[#allocation3 + $0xd9] sm:$0xff]
        %v8148 = vld [vmem:[#allocation3 + $0xe1] sm:$0xff]
        %v8149 = vld [vmem:[#allocation3 + $0xe9] sm:$0xff]
        %v8150 = vld [vmem:[#allocation3 + $0xf1] sm:$0xff]
        %v8151 = vld [vmem:[#allocation3 + $0xf9] sm:$0xff]
        %v8152 = vld [vmem:[#allocation3 + $0x101] sm:$0xff]
        %v8153 = vld [vmem:[#allocation3 + $0x129] sm:$0xff]
        %v8154 = vld [vmem:[#allocation3 + $0x131] sm:$0xff]
        %v8155 = vld [vmem:[#allocation3 + $0x139] sm:$0xff]
        %v8156 = vld [vmem:[#allocation3 + $0x141] sm:$0xff]
        %v8157 = vld [vmem:[#allocation3 + $0x149] sm:$0xff]
        %v8158 = vld [vmem:[#allocation3 + $0x151] sm:$0xff]
        %v8159 = vld [vmem:[#allocation3 + $0x159] sm:$0xff]
        %v8160 = vld [vmem:[#allocation3 + $0x161] sm:$0xff]
        %v8161 = vsel %vm4045, 0.0, %v8129
        %v8162 = vsel %vm4046, 0.0, %v8130
        %v8163 = vsel %vm4047, 0.0, %v8131
        %v8164 = vsel %vm4048, 0.0, %v8132
        %v8165 = vsel %vm4049, 0.0, %v8133
        %v8166 = vsel %vm4050, 0.0, %v8134
        %v8167 = vsel %vm4051, 0.0, %v8135
        %v8168 = vsel %vm4052, 0.0, %v8136
        %v8169 = vsel %vm4053, 0.0, %v8137
        %v8170 = vsel %vm4054, 0.0, %v8138
        %v8171 = vsel %vm4055, 0.0, %v8139
        %v8172 = vsel %vm4056, 0.0, %v8140
        %v8173 = vsel %vm4057, 0.0, %v8141
        %v8174 = vsel %vm4058, 0.0, %v8142
        %v8175 = vsel %vm4059, 0.0, %v8143
        %v8176 = vsel %vm4060, 0.0, %v8144
        %v8177 = vsel %vm4061, 0.0, %v8145
        %v8178 = vsel %vm4062, 0.0, %v8146
        %v8179 = vsel %vm4063, 0.0, %v8147
        %v8180 = vsel %vm4064, 0.0, %v8148
        %v8181 = vsel %vm4065, 0.0, %v8149
        %v8182 = vsel %vm4066, 0.0, %v8150
        %v8183 = vsel %vm4067, 0.0, %v8151
        %v8184 = vsel %vm4068, 0.0, %v8152
        %v8185 = vsel %vm4069, 0.0, %v8153
        %v8186 = vsel %vm4070, 0.0, %v8154
        %v8187 = vsel %vm4071, 0.0, %v8155
        %v8188 = vsel %vm4072, 0.0, %v8156
        %v8189 = vsel %vm4073, 0.0, %v8157
        %v8190 = vsel %vm4074, 0.0, %v8158
        %v8191 = vsel %vm4075, 0.0, %v8159
        %v8192 = vsel %vm4076, 0.0, %v8160
        %v8193 = vld [vmem:[#allocation3 + $0x47] sm:$0xff]
        %v8194 = vld [vmem:[#allocation3 + $0xa7] sm:$0xff]
        %v8195 = vld [vmem:[#allocation3 + $0x107] sm:$0xff]
        %v8196 = vld [vmem:[#allocation3 + $0x167] sm:$0xff]
        %v8197 = vsel %vm3885, 0.0, %v8034
        %v8198 = vsel %vm3886, 0.0, %v8035
        %v8199 = vsel %vm3887, 0.0, %v8036
        %v8200 = vsel %vm3888, 0.0, %v8037
        %v8201 = vsel %vm3889, 0.0, %v8038
        %v8202 = vsel %vm3890, 0.0, %v8039
        %v8203 = vsel %vm3891, 0.0, %v8040
        %v8204 = vsel %vm3892, 0.0, %v8193
        %v8205 = vsel %vm3893, 0.0, %v8042
        %v8206 = vsel %vm3894, 0.0, %v8043
        %v8207 = vsel %vm3895, 0.0, %v8044
        %v8208 = vsel %vm3896, 0.0, %v8045
        %v8209 = vsel %vm3897, 0.0, %v8046
        %v8210 = vsel %vm3898, 0.0, %v8047
        %v8211 = vsel %vm3899, 0.0, %v8048
        %v8212 = vsel %vm3900, 0.0, %v8194
        %v8213 = vsel %vm3901, 0.0, %v8050
        %v8214 = vsel %vm3902, 0.0, %v8051
        %v8215 = vsel %vm3903, 0.0, %v8052
        %v8216 = vsel %vm3904, 0.0, %v8053
        %v8217 = vsel %vm3905, 0.0, %v8054
        %v8218 = vsel %vm3906, 0.0, %v8055
        %v8219 = vsel %vm3907, 0.0, %v8056
        %v8220 = vsel %vm3908, 0.0, %v8195
        %v8221 = vsel %vm3909, 0.0, %v8058
        %v8222 = vsel %vm3910, 0.0, %v8059
        %v8223 = vsel %vm3911, 0.0, %v8060
        %v8224 = vsel %vm3912, 0.0, %v8061
        %v8225 = vsel %vm3913, 0.0, %v8062
        %v8226 = vsel %vm3914, 0.0, %v8063
        %v8227 = vsel %vm3915, 0.0, %v8064
        %v8228 = vsel %vm3916, 0.0, %v8196
        %v8229 = vld [vmem:[#allocation3 + $0x48] sm:$0xff]
        %v8230 = vld [vmem:[#allocation3 + $0xa8] sm:$0xff]
        %v8231 = vld [vmem:[#allocation3 + $0x108] sm:$0xff]
        %v8232 = vld [vmem:[#allocation3 + $0x168] sm:$0xff]
        %v8233 = vld [vmem:[#allocation3 + $0x49] sm:$0xff]
        %v8234 = vld [vmem:[#allocation3 + $0xa9] sm:$0xff]
        %v8235 = vld [vmem:[#allocation3 + $0x109] sm:$0xff]
        %v8236 = vld [vmem:[#allocation3 + $0x169] sm:$0xff]
        %v8237 = vsel %vm4045, 0.0, %v8130
        %v8238 = vsel %vm4046, 0.0, %v8131
        %v8239 = vsel %vm4047, 0.0, %v8132
        %v8240 = vsel %vm4048, 0.0, %v8133
        %v8241 = vsel %vm4049, 0.0, %v8134
        %v8242 = vsel %vm4050, 0.0, %v8135
        %v8243 = vsel %vm4051, 0.0, %v8136
        %v8244 = vsel %vm4052, 0.0, %v8233
        %v8245 = vsel %vm4053, 0.0, %v8138
        %v8246 = vsel %vm4054, 0.0, %v8139
        %v8247 = vsel %vm4055, 0.0, %v8140
        %v8248 = vsel %vm4056, 0.0, %v8141
        %v8249 = vsel %vm4057, 0.0, %v8142
        %v8250 = vsel %vm4058, 0.0, %v8143
        %v8251 = vsel %vm4059, 0.0, %v8144
        %v8252 = vsel %vm4060, 0.0, %v8234
        %v8253 = vsel %vm4061, 0.0, %v8146
        %v8254 = vsel %vm4062, 0.0, %v8147
        %v8255 = vsel %vm4063, 0.0, %v8148
        %v8256 = vsel %vm4064, 0.0, %v8149
        %v8257 = vsel %vm4065, 0.0, %v8150
        %v8258 = vsel %vm4066, 0.0, %v8151
        %v8259 = vsel %vm4067, 0.0, %v8152
        %v8260 = vsel %vm4068, 0.0, %v8235
        %v8261 = vsel %vm4069, 0.0, %v8154
        %v8262 = vsel %vm4070, 0.0, %v8155
        %v8263 = vsel %vm4071, 0.0, %v8156
        %v8264 = vsel %vm4072, 0.0, %v8157
        %v8265 = vsel %vm4073, 0.0, %v8158
        %v8266 = vsel %vm4074, 0.0, %v8159
        %v8267 = vsel %vm4075, 0.0, %v8160
        %v8268 = vsel %vm4076, 0.0, %v8236
        %v8269 = vld [vmem:[#allocation3 + $0x4f] sm:$0xff]
        %v8270 = vld [vmem:[#allocation3 + $0xaf] sm:$0xff]
        %v8271 = vld [vmem:[#allocation3 + $0x10f] sm:$0xff]
        %v8272 = vld [vmem:[#allocation3 + $0x16f] sm:$0xff]
        %v8273 = vsel %vm3885, 0.0, %v8035
        %v8274 = vsel %vm3886, 0.0, %v8036
        %v8275 = vsel %vm3887, 0.0, %v8037
        %v8276 = vsel %vm3888, 0.0, %v8038
        %v8277 = vsel %vm3889, 0.0, %v8039
        %v8278 = vsel %vm3890, 0.0, %v8040
        %v8279 = vsel %vm3891, 0.0, %v8193
        %v8280 = vsel %vm3892, 0.0, %v8269
        %v8281 = vsel %vm3893, 0.0, %v8043
        %v8282 = vsel %vm3894, 0.0, %v8044
        %v8283 = vsel %vm3895, 0.0, %v8045
        %v8284 = vsel %vm3896, 0.0, %v8046
        %v8285 = vsel %vm3897, 0.0, %v8047
        %v8286 = vsel %vm3898, 0.0, %v8048
        %v8287 = vsel %vm3899, 0.0, %v8194
        %v8288 = vsel %vm3900, 0.0, %v8270
        %v8289 = vsel %vm3901, 0.0, %v8051
        %v8290 = vsel %vm3902, 0.0, %v8052
        %v8291 = vsel %vm3903, 0.0, %v8053
        %v8292 = vsel %vm3904, 0.0, %v8054
        %v8293 = vsel %vm3905, 0.0, %v8055
        %v8294 = vsel %vm3906, 0.0, %v8056
        %v8295 = vsel %vm3907, 0.0, %v8195
        %v8296 = vsel %vm3908, 0.0, %v8271
        %v8297 = vsel %vm3909, 0.0, %v8059
        %v8298 = vsel %vm3910, 0.0, %v8060
        %v8299 = vsel %vm3911, 0.0, %v8061
        %v8300 = vsel %vm3912, 0.0, %v8062
        %v8301 = vsel %vm3913, 0.0, %v8063
        %v8302 = vsel %vm3914, 0.0, %v8064
        %v8303 = vsel %vm3915, 0.0, %v8196
        %v8304 = vsel %vm3916, 0.0, %v8272
        %v8305 = vld [vmem:[#allocation3 + $0x50] sm:$0xff]
        %v8306 = vld [vmem:[#allocation3 + $0xb0] sm:$0xff]
        %v8307 = vld [vmem:[#allocation3 + $0x110] sm:$0xff]
        %v8308 = vld [vmem:[#allocation3 + $0x170] sm:$0xff]
        %v8309 = vld [vmem:[#allocation3 + $0x51] sm:$0xff]
        %v8310 = vld [vmem:[#allocation3 + $0xb1] sm:$0xff]
        %v8311 = vld [vmem:[#allocation3 + $0x111] sm:$0xff]
        %v8312 = vld [vmem:[#allocation3 + $0x171] sm:$0xff]
        %v8313 = vsel %vm4045, 0.0, %v8131
        %v8314 = vsel %vm4046, 0.0, %v8132
        %v8315 = vsel %vm4047, 0.0, %v8133
        %v8316 = vsel %vm4048, 0.0, %v8134
        %v8317 = vsel %vm4049, 0.0, %v8135
        %v8318 = vsel %vm4050, 0.0, %v8136
        %v8319 = vsel %vm4051, 0.0, %v8233
        %v8320 = vsel %vm4052, 0.0, %v8309
        %v8321 = vsel %vm4053, 0.0, %v8139
        %v8322 = vsel %vm4054, 0.0, %v8140
        %v8323 = vsel %vm4055, 0.0, %v8141
        %v8324 = vsel %vm4056, 0.0, %v8142
        %v8325 = vsel %vm4057, 0.0, %v8143
        %v8326 = vsel %vm4058, 0.0, %v8144
        %v8327 = vsel %vm4059, 0.0, %v8234
        %v8328 = vsel %vm4060, 0.0, %v8310
        %v8329 = vsel %vm4061, 0.0, %v8147
        %v8330 = vsel %vm4062, 0.0, %v8148
        %v8331 = vsel %vm4063, 0.0, %v8149
        %v8332 = vsel %vm4064, 0.0, %v8150
        %v8333 = vsel %vm4065, 0.0, %v8151
        %v8334 = vsel %vm4066, 0.0, %v8152
        %v8335 = vsel %vm4067, 0.0, %v8235
        %v8336 = vsel %vm4068, 0.0, %v8311
        %v8337 = vsel %vm4069, 0.0, %v8155
        %v8338 = vsel %vm4070, 0.0, %v8156
        %v8339 = vsel %vm4071, 0.0, %v8157
        %v8340 = vsel %vm4072, 0.0, %v8158
        %v8341 = vsel %vm4073, 0.0, %v8159
        %v8342 = vsel %vm4074, 0.0, %v8160
        %v8343 = vsel %vm4075, 0.0, %v8236
        %v8344 = vsel %vm4076, 0.0, %v8312
        %8377 = vrot.lane.b32.xlu0 %v8097, 32
        %v8378 = vpop.permute.xlu0 %8377
        %8379 = vrot.lane.b32.xlu0 %v8098, 32
        %v8380 = vpop.permute.xlu0 %8379
        %8381 = vrot.lane.b32.xlu0 %v8099, 32
        %v8382 = vpop.permute.xlu0 %8381
        %8383 = vrot.lane.b32.xlu0 %v8100, 32
        %v8384 = vpop.permute.xlu0 %8383
        %8385 = vrot.lane.b32.xlu0 %v8101, 32
        %v8386 = vpop.permute.xlu0 %8385
        %8387 = vrot.lane.b32.xlu0 %v8102, 32
        %v8388 = vpop.permute.xlu0 %8387
        %8389 = vrot.lane.b32.xlu0 %v8103, 32
        %v8390 = vpop.permute.xlu0 %8389
        %8391 = vrot.lane.b32.xlu0 %v8104, 32
        %v8392 = vpop.permute.xlu0 %8391
        %8393 = vrot.lane.b32.xlu0 %v8105, 32
        %v8394 = vpop.permute.xlu0 %8393
        %8395 = vrot.lane.b32.xlu0 %v8106, 32
        %v8396 = vpop.permute.xlu0 %8395
        %8397 = vrot.lane.b32.xlu0 %v8107, 32
        %v8398 = vpop.permute.xlu0 %8397
        %8399 = vrot.lane.b32.xlu0 %v8108, 32
        %v8400 = vpop.permute.xlu0 %8399
        %8401 = vrot.lane.b32.xlu0 %v8109, 32
        %v8402 = vpop.permute.xlu0 %8401
        %8403 = vrot.lane.b32.xlu0 %v8110, 32
        %v8404 = vpop.permute.xlu0 %8403
        %8405 = vrot.lane.b32.xlu0 %v8111, 32
        %v8406 = vpop.permute.xlu0 %8405
        %8407 = vrot.lane.b32.xlu0 %v8112, 32
        %v8408 = vpop.permute.xlu0 %8407
        %8409 = vrot.lane.b32.xlu0 %v8113, 32
        %v8410 = vpop.permute.xlu0 %8409
        %8411 = vrot.lane.b32.xlu0 %v8114, 32
        %v8412 = vpop.permute.xlu0 %8411
        %8413 = vrot.lane.b32.xlu0 %v8115, 32
        %v8414 = vpop.permute.xlu0 %8413
        %8415 = vrot.lane.b32.xlu0 %v8116, 32
        %v8416 = vpop.permute.xlu0 %8415
        %8417 = vrot.lane.b32.xlu0 %v8117, 32
        %v8418 = vpop.permute.xlu0 %8417
        %8419 = vrot.lane.b32.xlu0 %v8118, 32
        %v8420 = vpop.permute.xlu0 %8419
        %8421 = vrot.lane.b32.xlu0 %v8119, 32
        %v8422 = vpop.permute.xlu0 %8421
        %8423 = vrot.lane.b32.xlu0 %v8120, 32
        %v8424 = vpop.permute.xlu0 %8423
        %8425 = vrot.lane.b32.xlu0 %v8121, 32
        %v8426 = vpop.permute.xlu0 %8425
        %8427 = vrot.lane.b32.xlu0 %v8122, 32
        %v8428 = vpop.permute.xlu0 %8427
        %8429 = vrot.lane.b32.xlu0 %v8123, 32
        %v8430 = vpop.permute.xlu0 %8429
        %8431 = vrot.lane.b32.xlu0 %v8124, 32
        %v8432 = vpop.permute.xlu0 %8431
        %8433 = vrot.lane.b32.xlu0 %v8125, 32
        %v8434 = vpop.permute.xlu0 %8433
        %8435 = vrot.lane.b32.xlu0 %v8126, 32
        %v8436 = vpop.permute.xlu0 %8435
        %8437 = vrot.lane.b32.xlu0 %v8127, 32
        %v8438 = vpop.permute.xlu0 %8437
        %8439 = vrot.lane.b32.xlu0 %v8128, 32
        %v8440 = vpop.permute.xlu0 %8439
        %8505 = vrot.lane.b32.xlu0 %v8161, 64
        %v8506 = vpop.permute.xlu0 %8505
        %8507 = vrot.lane.b32.xlu0 %v8162, 64
        %v8508 = vpop.permute.xlu0 %8507
        %8509 = vrot.lane.b32.xlu0 %v8163, 64
        %v8510 = vpop.permute.xlu0 %8509
        %8511 = vrot.lane.b32.xlu0 %v8164, 64
        %v8512 = vpop.permute.xlu0 %8511
        %8513 = vrot.lane.b32.xlu0 %v8165, 64
        %v8514 = vpop.permute.xlu0 %8513
        %8515 = vrot.lane.b32.xlu0 %v8166, 64
        %v8516 = vpop.permute.xlu0 %8515
        %8517 = vrot.lane.b32.xlu0 %v8167, 64
        %v8518 = vpop.permute.xlu0 %8517
        %8519 = vrot.lane.b32.xlu0 %v8168, 64
        %v8520 = vpop.permute.xlu0 %8519
        %8521 = vrot.lane.b32.xlu0 %v8169, 64
        %v8522 = vpop.permute.xlu0 %8521
        %8523 = vrot.lane.b32.xlu0 %v8170, 64
        %v8524 = vpop.permute.xlu0 %8523
        %8525 = vrot.lane.b32.xlu0 %v8171, 64
        %v8526 = vpop.permute.xlu0 %8525
        %8527 = vrot.lane.b32.xlu0 %v8172, 64
        %v8528 = vpop.permute.xlu0 %8527
        %8529 = vrot.lane.b32.xlu0 %v8173, 64
        %v8530 = vpop.permute.xlu0 %8529
        %8531 = vrot.lane.b32.xlu0 %v8174, 64
        %v8532 = vpop.permute.xlu0 %8531
        %8533 = vrot.lane.b32.xlu0 %v8175, 64
        %v8534 = vpop.permute.xlu0 %8533
        %8535 = vrot.lane.b32.xlu0 %v8176, 64
        %v8536 = vpop.permute.xlu0 %8535
        %8537 = vrot.lane.b32.xlu0 %v8177, 64
        %v8538 = vpop.permute.xlu0 %8537
        %8539 = vrot.lane.b32.xlu0 %v8178, 64
        %v8540 = vpop.permute.xlu0 %8539
        %8541 = vrot.lane.b32.xlu0 %v8179, 64
        %v8542 = vpop.permute.xlu0 %8541
        %8543 = vrot.lane.b32.xlu0 %v8180, 64
        %v8544 = vpop.permute.xlu0 %8543
        %8545 = vrot.lane.b32.xlu0 %v8181, 64
        %v8546 = vpop.permute.xlu0 %8545
        %8547 = vrot.lane.b32.xlu0 %v8182, 64
        %v8548 = vpop.permute.xlu0 %8547
        %8549 = vrot.lane.b32.xlu0 %v8183, 64
        %v8550 = vpop.permute.xlu0 %8549
        %8551 = vrot.lane.b32.xlu0 %v8184, 64
        %v8552 = vpop.permute.xlu0 %8551
        %8553 = vrot.lane.b32.xlu0 %v8185, 64
        %v8554 = vpop.permute.xlu0 %8553
        %8555 = vrot.lane.b32.xlu0 %v8186, 64
        %v8556 = vpop.permute.xlu0 %8555
        %8557 = vrot.lane.b32.xlu0 %v8187, 64
        %v8558 = vpop.permute.xlu0 %8557
        %8559 = vrot.lane.b32.xlu0 %v8188, 64
        %v8560 = vpop.permute.xlu0 %8559
        %8561 = vrot.lane.b32.xlu0 %v8189, 64
        %v8562 = vpop.permute.xlu0 %8561
        %8563 = vrot.lane.b32.xlu0 %v8190, 64
        %v8564 = vpop.permute.xlu0 %8563
        %8565 = vrot.lane.b32.xlu0 %v8191, 64
        %v8566 = vpop.permute.xlu0 %8565
        %8567 = vrot.lane.b32.xlu0 %v8192, 64
        %v8568 = vpop.permute.xlu0 %8567
        %8633 = vrot.lane.b32.xlu0 %v8197, 96
        %v8634 = vpop.permute.xlu0 %8633
        %8635 = vrot.lane.b32.xlu0 %v8198, 96
        %v8636 = vpop.permute.xlu0 %8635
        %8637 = vrot.lane.b32.xlu0 %v8199, 96
        %v8638 = vpop.permute.xlu0 %8637
        %8639 = vrot.lane.b32.xlu0 %v8200, 96
        %v8640 = vpop.permute.xlu0 %8639
        %8641 = vrot.lane.b32.xlu0 %v8201, 96
        %v8642 = vpop.permute.xlu0 %8641
        %8643 = vrot.lane.b32.xlu0 %v8202, 96
        %v8644 = vpop.permute.xlu0 %8643
        %8645 = vrot.lane.b32.xlu0 %v8203, 96
        %v8646 = vpop.permute.xlu0 %8645
        %8647 = vrot.lane.b32.xlu0 %v8204, 96
        %v8648 = vpop.permute.xlu0 %8647
        %8649 = vrot.lane.b32.xlu0 %v8205, 96
        %v8650 = vpop.permute.xlu0 %8649
        %8651 = vrot.lane.b32.xlu0 %v8206, 96
        %v8652 = vpop.permute.xlu0 %8651
        %8653 = vrot.lane.b32.xlu0 %v8207, 96
        %v8654 = vpop.permute.xlu0 %8653
        %8655 = vrot.lane.b32.xlu0 %v8208, 96
        %v8656 = vpop.permute.xlu0 %8655
        %8657 = vrot.lane.b32.xlu0 %v8209, 96
        %v8658 = vpop.permute.xlu0 %8657
        %8659 = vrot.lane.b32.xlu0 %v8210, 96
        %v8660 = vpop.permute.xlu0 %8659
        %8661 = vrot.lane.b32.xlu0 %v8211, 96
        %v8662 = vpop.permute.xlu0 %8661
        %8663 = vrot.lane.b32.xlu0 %v8212, 96
        %v8664 = vpop.permute.xlu0 %8663
        %8665 = vrot.lane.b32.xlu0 %v8213, 96
        %v8666 = vpop.permute.xlu0 %8665
        %8667 = vrot.lane.b32.xlu0 %v8214, 96
        %v8668 = vpop.permute.xlu0 %8667
        %8669 = vrot.lane.b32.xlu0 %v8215, 96
        %v8670 = vpop.permute.xlu0 %8669
        %8671 = vrot.lane.b32.xlu0 %v8216, 96
        %v8672 = vpop.permute.xlu0 %8671
        %8673 = vrot.lane.b32.xlu0 %v8217, 96
        %v8674 = vpop.permute.xlu0 %8673
        %8675 = vrot.lane.b32.xlu0 %v8218, 96
        %v8676 = vpop.permute.xlu0 %8675
        %8677 = vrot.lane.b32.xlu0 %v8219, 96
        %v8678 = vpop.permute.xlu0 %8677
        %8679 = vrot.lane.b32.xlu0 %v8220, 96
        %v8680 = vpop.permute.xlu0 %8679
        %8681 = vrot.lane.b32.xlu0 %v8221, 96
        %v8682 = vpop.permute.xlu0 %8681
        %8683 = vrot.lane.b32.xlu0 %v8222, 96
        %v8684 = vpop.permute.xlu0 %8683
        %8685 = vrot.lane.b32.xlu0 %v8223, 96
        %v8686 = vpop.permute.xlu0 %8685
        %8687 = vrot.lane.b32.xlu0 %v8224, 96
        %v8688 = vpop.permute.xlu0 %8687
        %8689 = vrot.lane.b32.xlu0 %v8225, 96
        %v8690 = vpop.permute.xlu0 %8689
        %8691 = vrot.lane.b32.xlu0 %v8226, 96
        %v8692 = vpop.permute.xlu0 %8691
        %8693 = vrot.lane.b32.xlu0 %v8227, 96
        %v8694 = vpop.permute.xlu0 %8693
        %8695 = vrot.lane.b32.xlu0 %v8228, 96
        %v8696 = vpop.permute.xlu0 %8695
        %8761 = vrot.lane.b32.xlu0 %v8237, 32
        %v8762 = vpop.permute.xlu0 %8761
        %8763 = vrot.lane.b32.xlu0 %v8238, 32
        %v8764 = vpop.permute.xlu0 %8763
        %8765 = vrot.lane.b32.xlu0 %v8239, 32
        %v8766 = vpop.permute.xlu0 %8765
        %8767 = vrot.lane.b32.xlu0 %v8240, 32
        %v8768 = vpop.permute.xlu0 %8767
        %8769 = vrot.lane.b32.xlu0 %v8241, 32
        %v8770 = vpop.permute.xlu0 %8769
        %8771 = vrot.lane.b32.xlu0 %v8242, 32
        %v8772 = vpop.permute.xlu0 %8771
        %8773 = vrot.lane.b32.xlu0 %v8243, 32
        %v8774 = vpop.permute.xlu0 %8773
        %8775 = vrot.lane.b32.xlu0 %v8244, 32
        %v8776 = vpop.permute.xlu0 %8775
        %8777 = vrot.lane.b32.xlu0 %v8245, 32
        %v8778 = vpop.permute.xlu0 %8777
        %8779 = vrot.lane.b32.xlu0 %v8246, 32
        %v8780 = vpop.permute.xlu0 %8779
        %8781 = vrot.lane.b32.xlu0 %v8247, 32
        %v8782 = vpop.permute.xlu0 %8781
        %8783 = vrot.lane.b32.xlu0 %v8248, 32
        %v8784 = vpop.permute.xlu0 %8783
        %8785 = vrot.lane.b32.xlu0 %v8249, 32
        %v8786 = vpop.permute.xlu0 %8785
        %8787 = vrot.lane.b32.xlu0 %v8250, 32
        %v8788 = vpop.permute.xlu0 %8787
        %8789 = vrot.lane.b32.xlu0 %v8251, 32
        %v8790 = vpop.permute.xlu0 %8789
        %8791 = vrot.lane.b32.xlu0 %v8252, 32
        %v8792 = vpop.permute.xlu0 %8791
        %8793 = vrot.lane.b32.xlu0 %v8253, 32
        %v8794 = vpop.permute.xlu0 %8793
        %8795 = vrot.lane.b32.xlu0 %v8254, 32
        %v8796 = vpop.permute.xlu0 %8795
        %8797 = vrot.lane.b32.xlu0 %v8255, 32
        %v8798 = vpop.permute.xlu0 %8797
        %8799 = vrot.lane.b32.xlu0 %v8256, 32
        %v8800 = vpop.permute.xlu0 %8799
        %8801 = vrot.lane.b32.xlu0 %v8257, 32
        %v8802 = vpop.permute.xlu0 %8801
        %8803 = vrot.lane.b32.xlu0 %v8258, 32
        %v8804 = vpop.permute.xlu0 %8803
        %8805 = vrot.lane.b32.xlu0 %v8259, 32
        %v8806 = vpop.permute.xlu0 %8805
        %8807 = vrot.lane.b32.xlu0 %v8260, 32
        %v8808 = vpop.permute.xlu0 %8807
        %8809 = vrot.lane.b32.xlu0 %v8261, 32
        %v8810 = vpop.permute.xlu0 %8809
        %8811 = vrot.lane.b32.xlu0 %v8262, 32
        %v8812 = vpop.permute.xlu0 %8811
        %8813 = vrot.lane.b32.xlu0 %v8263, 32
        %v8814 = vpop.permute.xlu0 %8813
        %8815 = vrot.lane.b32.xlu0 %v8264, 32
        %v8816 = vpop.permute.xlu0 %8815
        %8817 = vrot.lane.b32.xlu0 %v8265, 32
        %v8818 = vpop.permute.xlu0 %8817
        %8819 = vrot.lane.b32.xlu0 %v8266, 32
        %v8820 = vpop.permute.xlu0 %8819
        %8821 = vrot.lane.b32.xlu0 %v8267, 32
        %v8822 = vpop.permute.xlu0 %8821
        %8823 = vrot.lane.b32.xlu0 %v8268, 32
        %v8824 = vpop.permute.xlu0 %8823
        %8889 = vrot.lane.b32.xlu0 %v8273, 64
        %v8890 = vpop.permute.xlu0 %8889
        %8891 = vrot.lane.b32.xlu0 %v8274, 64
        %v8892 = vpop.permute.xlu0 %8891
        %8893 = vrot.lane.b32.xlu0 %v8275, 64
        %v8894 = vpop.permute.xlu0 %8893
        %8895 = vrot.lane.b32.xlu0 %v8276, 64
        %v8896 = vpop.permute.xlu0 %8895
        %8897 = vrot.lane.b32.xlu0 %v8277, 64
        %v8898 = vpop.permute.xlu0 %8897
        %8899 = vrot.lane.b32.xlu0 %v8278, 64
        %v8900 = vpop.permute.xlu0 %8899
        %8901 = vrot.lane.b32.xlu0 %v8279, 64
        %v8902 = vpop.permute.xlu0 %8901
        %8903 = vrot.lane.b32.xlu0 %v8280, 64
        %v8904 = vpop.permute.xlu0 %8903
        %8905 = vrot.lane.b32.xlu0 %v8281, 64
        %v8906 = vpop.permute.xlu0 %8905
        %8907 = vrot.lane.b32.xlu0 %v8282, 64
        %v8908 = vpop.permute.xlu0 %8907
        %8909 = vrot.lane.b32.xlu0 %v8283, 64
        %v8910 = vpop.permute.xlu0 %8909
        %8911 = vrot.lane.b32.xlu0 %v8284, 64
        %v8912 = vpop.permute.xlu0 %8911
        %8913 = vrot.lane.b32.xlu0 %v8285, 64
        %v8914 = vpop.permute.xlu0 %8913
        %8915 = vrot.lane.b32.xlu0 %v8286, 64
        %v8916 = vpop.permute.xlu0 %8915
        %8917 = vrot.lane.b32.xlu0 %v8287, 64
        %v8918 = vpop.permute.xlu0 %8917
        %8919 = vrot.lane.b32.xlu0 %v8288, 64
        %v8920 = vpop.permute.xlu0 %8919
        %8921 = vrot.lane.b32.xlu0 %v8289, 64
        %v8922 = vpop.permute.xlu0 %8921
        %8923 = vrot.lane.b32.xlu0 %v8290, 64
        %v8924 = vpop.permute.xlu0 %8923
        %8925 = vrot.lane.b32.xlu0 %v8291, 64
        %v8926 = vpop.permute.xlu0 %8925
        %8927 = vrot.lane.b32.xlu0 %v8292, 64
        %v8928 = vpop.permute.xlu0 %8927
        %8929 = vrot.lane.b32.xlu0 %v8293, 64
        %v8930 = vpop.permute.xlu0 %8929
        %8931 = vrot.lane.b32.xlu0 %v8294, 64
        %v8932 = vpop.permute.xlu0 %8931
        %8933 = vrot.lane.b32.xlu0 %v8295, 64
        %v8934 = vpop.permute.xlu0 %8933
        %8935 = vrot.lane.b32.xlu0 %v8296, 64
        %v8936 = vpop.permute.xlu0 %8935
        %8937 = vrot.lane.b32.xlu0 %v8297, 64
        %v8938 = vpop.permute.xlu0 %8937
        %8939 = vrot.lane.b32.xlu0 %v8298, 64
        %v8940 = vpop.permute.xlu0 %8939
        %8941 = vrot.lane.b32.xlu0 %v8299, 64
        %v8942 = vpop.permute.xlu0 %8941
        %8943 = vrot.lane.b32.xlu0 %v8300, 64
        %v8944 = vpop.permute.xlu0 %8943
        %8945 = vrot.lane.b32.xlu0 %v8301, 64
        %v8946 = vpop.permute.xlu0 %8945
        %8947 = vrot.lane.b32.xlu0 %v8302, 64
        %v8948 = vpop.permute.xlu0 %8947
        %8949 = vrot.lane.b32.xlu0 %v8303, 64
        %v8950 = vpop.permute.xlu0 %8949
        %8951 = vrot.lane.b32.xlu0 %v8304, 64
        %v8952 = vpop.permute.xlu0 %8951
        %8993 = vrot.lane.b32.xlu0 %v8099, 96
        %v8994 = vpop.permute.xlu0 %8993
        %8995 = vrot.lane.b32.xlu0 %v8100, 96
        %v8996 = vpop.permute.xlu0 %8995
        %8997 = vrot.lane.b32.xlu0 %v8101, 96
        %v8998 = vpop.permute.xlu0 %8997
        %8999 = vrot.lane.b32.xlu0 %v8102, 96
        %v9000 = vpop.permute.xlu0 %8999
        %9001 = vrot.lane.b32.xlu0 %v8103, 96
        %v9002 = vpop.permute.xlu0 %9001
        %9003 = vrot.lane.b32.xlu0 %v8104, 96
        %v9004 = vpop.permute.xlu0 %9003
        %9005 = vrot.lane.b32.xlu0 %v8229, 96
        %v9006 = vpop.permute.xlu0 %9005
        %9007 = vrot.lane.b32.xlu0 %v8305, 96
        %v9008 = vpop.permute.xlu0 %9007
        %9009 = vrot.lane.b32.xlu0 %v8107, 96
        %v9010 = vpop.permute.xlu0 %9009
        %9011 = vrot.lane.b32.xlu0 %v8108, 96
        %v9012 = vpop.permute.xlu0 %9011
        %9013 = vrot.lane.b32.xlu0 %v8109, 96
        %v9014 = vpop.permute.xlu0 %9013
        %9015 = vrot.lane.b32.xlu0 %v8110, 96
        %v9016 = vpop.permute.xlu0 %9015
        %9017 = vrot.lane.b32.xlu0 %v8111, 96
        %v9018 = vpop.permute.xlu0 %9017
        %9019 = vrot.lane.b32.xlu0 %v8112, 96
        %v9020 = vpop.permute.xlu0 %9019
        %9021 = vrot.lane.b32.xlu0 %v8230, 96
        %v9022 = vpop.permute.xlu0 %9021
        %9023 = vrot.lane.b32.xlu0 %v8306, 96
        %v9024 = vpop.permute.xlu0 %9023
        %9025 = vrot.lane.b32.xlu0 %v8115, 96
        %v9026 = vpop.permute.xlu0 %9025
        %9027 = vrot.lane.b32.xlu0 %v8116, 96
        %v9028 = vpop.permute.xlu0 %9027
        %9029 = vrot.lane.b32.xlu0 %v8117, 96
        %v9030 = vpop.permute.xlu0 %9029
        %9031 = vrot.lane.b32.xlu0 %v8118, 96
        %v9032 = vpop.permute.xlu0 %9031
        %9033 = vrot.lane.b32.xlu0 %v8119, 96
        %v9034 = vpop.permute.xlu0 %9033
        %9035 = vrot.lane.b32.xlu0 %v8120, 96
        %v9036 = vpop.permute.xlu0 %9035
        %9037 = vrot.lane.b32.xlu0 %v8231, 96
        %v9038 = vpop.permute.xlu0 %9037
        %9039 = vrot.lane.b32.xlu0 %v8307, 96
        %v9040 = vpop.permute.xlu0 %9039
        %9041 = vrot.lane.b32.xlu0 %v8123, 96
        %v9042 = vpop.permute.xlu0 %9041
        %9043 = vrot.lane.b32.xlu0 %v8124, 96
        %v9044 = vpop.permute.xlu0 %9043
        %9045 = vrot.lane.b32.xlu0 %v8125, 96
        %v9046 = vpop.permute.xlu0 %9045
        %9047 = vrot.lane.b32.xlu0 %v8126, 96
        %v9048 = vpop.permute.xlu0 %9047
        %9049 = vrot.lane.b32.xlu0 %v8127, 96
        %v9050 = vpop.permute.xlu0 %9049
        %9051 = vrot.lane.b32.xlu0 %v8128, 96
        %v9052 = vpop.permute.xlu0 %9051
        %9053 = vrot.lane.b32.xlu0 %v8232, 96
        %v9054 = vpop.permute.xlu0 %9053
        %9055 = vrot.lane.b32.xlu0 %v8308, 96
        %v9056 = vpop.permute.xlu0 %9055
        %v9089 = vsel %vm544, %v8065, %v8378
        %v9090 = vsel %vm544, %v8066, %v8380
        %v9091 = vsel %vm544, %v8067, %v8382
        %v9092 = vsel %vm544, %v8068, %v8384
        %v9093 = vsel %vm544, %v8069, %v8386
        %v9094 = vsel %vm544, %v8070, %v8388
        %v9095 = vsel %vm544, %v8071, %v8390
        %v9096 = vsel %vm544, %v8072, %v8392
        %v9097 = vsel %vm544, %v8073, %v8394
        %v9098 = vsel %vm544, %v8074, %v8396
        %v9099 = vsel %vm544, %v8075, %v8398
        %v9100 = vsel %vm544, %v8076, %v8400
        %v9101 = vsel %vm544, %v8077, %v8402
        %v9102 = vsel %vm544, %v8078, %v8404
        %v9103 = vsel %vm544, %v8079, %v8406
        %v9104 = vsel %vm544, %v8080, %v8408
        %v9105 = vsel %vm544, %v8081, %v8410
        %v9106 = vsel %vm544, %v8082, %v8412
        %v9107 = vsel %vm544, %v8083, %v8414
        %v9108 = vsel %vm544, %v8084, %v8416
        %v9109 = vsel %vm544, %v8085, %v8418
        %v9110 = vsel %vm544, %v8086, %v8420
        %v9111 = vsel %vm544, %v8087, %v8422
        %v9112 = vsel %vm544, %v8088, %v8424
        %v9113 = vsel %vm544, %v8089, %v8426
        %v9114 = vsel %vm544, %v8090, %v8428
        %v9115 = vsel %vm544, %v8091, %v8430
        %v9116 = vsel %vm544, %v8092, %v8432
        %v9117 = vsel %vm544, %v8093, %v8434
        %v9118 = vsel %vm544, %v8094, %v8436
        %v9119 = vsel %vm544, %v8095, %v8438
        %v9120 = vsel %vm544, %v8096, %v8440
        %v9121 = vsel %vm5198, %v9089, %v8506
        %v9122 = vsel %vm5198, %v9090, %v8508
        %v9123 = vsel %vm5198, %v9091, %v8510
        %v9124 = vsel %vm5198, %v9092, %v8512
        %v9125 = vsel %vm5198, %v9093, %v8514
        %v9126 = vsel %vm5198, %v9094, %v8516
        %v9127 = vsel %vm5198, %v9095, %v8518
        %v9128 = vsel %vm5198, %v9096, %v8520
        %v9129 = vsel %vm5198, %v9097, %v8522
        %v9130 = vsel %vm5198, %v9098, %v8524
        %v9131 = vsel %vm5198, %v9099, %v8526
        %v9132 = vsel %vm5198, %v9100, %v8528
        %v9133 = vsel %vm5198, %v9101, %v8530
        %v9134 = vsel %vm5198, %v9102, %v8532
        %v9135 = vsel %vm5198, %v9103, %v8534
        %v9136 = vsel %vm5198, %v9104, %v8536
        %v9137 = vsel %vm5198, %v9105, %v8538
        %v9138 = vsel %vm5198, %v9106, %v8540
        %v9139 = vsel %vm5198, %v9107, %v8542
        %v9140 = vsel %vm5198, %v9108, %v8544
        %v9141 = vsel %vm5198, %v9109, %v8546
        %v9142 = vsel %vm5198, %v9110, %v8548
        %v9143 = vsel %vm5198, %v9111, %v8550
        %v9144 = vsel %vm5198, %v9112, %v8552
        %v9145 = vsel %vm5198, %v9113, %v8554
        %v9146 = vsel %vm5198, %v9114, %v8556
        %v9147 = vsel %vm5198, %v9115, %v8558
        %v9148 = vsel %vm5198, %v9116, %v8560
        %v9149 = vsel %vm5198, %v9117, %v8562
        %v9150 = vsel %vm5198, %v9118, %v8564
        %v9151 = vsel %vm5198, %v9119, %v8566
        %v9152 = vsel %vm5198, %v9120, %v8568
        %v9153 = vsel %vm3547, %v9121, %v8634
        %v9154 = vsel %vm3547, %v9122, %v8636
        %v9155 = vsel %vm3547, %v9123, %v8638
        %v9156 = vsel %vm3547, %v9124, %v8640
        %v9157 = vsel %vm3547, %v9125, %v8642
        %v9158 = vsel %vm3547, %v9126, %v8644
        %v9159 = vsel %vm3547, %v9127, %v8646
        %v9160 = vsel %vm3547, %v9128, %v8648
        %v9161 = vsel %vm3547, %v9129, %v8650
        %v9162 = vsel %vm3547, %v9130, %v8652
        %v9163 = vsel %vm3547, %v9131, %v8654
        %v9164 = vsel %vm3547, %v9132, %v8656
        %v9165 = vsel %vm3547, %v9133, %v8658
        %v9166 = vsel %vm3547, %v9134, %v8660
        %v9167 = vsel %vm3547, %v9135, %v8662
        %v9168 = vsel %vm3547, %v9136, %v8664
        %v9169 = vsel %vm3547, %v9137, %v8666
        %v9170 = vsel %vm3547, %v9138, %v8668
        %v9171 = vsel %vm3547, %v9139, %v8670
        %v9172 = vsel %vm3547, %v9140, %v8672
        %v9173 = vsel %vm3547, %v9141, %v8674
        %v9174 = vsel %vm3547, %v9142, %v8676
        %v9175 = vsel %vm3547, %v9143, %v8678
        %v9176 = vsel %vm3547, %v9144, %v8680
        %v9177 = vsel %vm3547, %v9145, %v8682
        %v9178 = vsel %vm3547, %v9146, %v8684
        %v9179 = vsel %vm3547, %v9147, %v8686
        %v9180 = vsel %vm3547, %v9148, %v8688
        %v9181 = vsel %vm3547, %v9149, %v8690
        %v9182 = vsel %vm3547, %v9150, %v8692
        %v9183 = vsel %vm3547, %v9151, %v8694
        %v9184 = vsel %vm3547, %v9152, %v8696
        %v9185 = vsel %vm544, %v8098, %v8762
        %v9186 = vsel %vm544, %v8099, %v8764
        %v9187 = vsel %vm544, %v8100, %v8766
        %v9188 = vsel %vm544, %v8101, %v8768
        %v9189 = vsel %vm544, %v8102, %v8770
        %v9190 = vsel %vm544, %v8103, %v8772
        %v9191 = vsel %vm544, %v8104, %v8774
        %v9192 = vsel %vm544, %v8229, %v8776
        %v9193 = vsel %vm544, %v8106, %v8778
        %v9194 = vsel %vm544, %v8107, %v8780
        %v9195 = vsel %vm544, %v8108, %v8782
        %v9196 = vsel %vm544, %v8109, %v8784
        %v9197 = vsel %vm544, %v8110, %v8786
        %v9198 = vsel %vm544, %v8111, %v8788
        %v9199 = vsel %vm544, %v8112, %v8790
        %v9200 = vsel %vm544, %v8230, %v8792
        %v9201 = vsel %vm544, %v8114, %v8794
        %v9202 = vsel %vm544, %v8115, %v8796
        %v9203 = vsel %vm544, %v8116, %v8798
        %v9204 = vsel %vm544, %v8117, %v8800
        %v9205 = vsel %vm544, %v8118, %v8802
        %v9206 = vsel %vm544, %v8119, %v8804
        %v9207 = vsel %vm544, %v8120, %v8806
        %v9208 = vsel %vm544, %v8231, %v8808
        %v9209 = vsel %vm544, %v8122, %v8810
        %v9210 = vsel %vm544, %v8123, %v8812
        %v9211 = vsel %vm544, %v8124, %v8814
        %v9212 = vsel %vm544, %v8125, %v8816
        %v9213 = vsel %vm544, %v8126, %v8818
        %v9214 = vsel %vm544, %v8127, %v8820
        %v9215 = vsel %vm544, %v8128, %v8822
        %v9216 = vsel %vm544, %v8232, %v8824
        %v9217 = vsel %vm5198, %v9185, %v8890
        %v9218 = vsel %vm5198, %v9186, %v8892
        %v9219 = vsel %vm5198, %v9187, %v8894
        %v9220 = vsel %vm5198, %v9188, %v8896
        %v9221 = vsel %vm5198, %v9189, %v8898
        %v9222 = vsel %vm5198, %v9190, %v8900
        %v9223 = vsel %vm5198, %v9191, %v8902
        %v9224 = vsel %vm5198, %v9192, %v8904
        %v9225 = vsel %vm5198, %v9193, %v8906
        %v9226 = vsel %vm5198, %v9194, %v8908
        %v9227 = vsel %vm5198, %v9195, %v8910
        %v9228 = vsel %vm5198, %v9196, %v8912
        %v9229 = vsel %vm5198, %v9197, %v8914
        %v9230 = vsel %vm5198, %v9198, %v8916
        %v9231 = vsel %vm5198, %v9199, %v8918
        %v9232 = vsel %vm5198, %v9200, %v8920
        %v9233 = vsel %vm5198, %v9201, %v8922
        %v9234 = vsel %vm5198, %v9202, %v8924
        %v9235 = vsel %vm5198, %v9203, %v8926
        %v9236 = vsel %vm5198, %v9204, %v8928
        %v9237 = vsel %vm5198, %v9205, %v8930
        %v9238 = vsel %vm5198, %v9206, %v8932
        %v9239 = vsel %vm5198, %v9207, %v8934
        %v9240 = vsel %vm5198, %v9208, %v8936
        %v9241 = vsel %vm5198, %v9209, %v8938
        %v9242 = vsel %vm5198, %v9210, %v8940
        %v9243 = vsel %vm5198, %v9211, %v8942
        %v9244 = vsel %vm5198, %v9212, %v8944
        %v9245 = vsel %vm5198, %v9213, %v8946
        %v9246 = vsel %vm5198, %v9214, %v8948
        %v9247 = vsel %vm5198, %v9215, %v8950
        %v9248 = vsel %vm5198, %v9216, %v8952
        %v9249 = vsel %vm3547, %v9217, %v8994
        %v9250 = vsel %vm3547, %v9218, %v8996
        %v9251 = vsel %vm3547, %v9219, %v8998
        %v9252 = vsel %vm3547, %v9220, %v9000
        %v9253 = vsel %vm3547, %v9221, %v9002
        %v9254 = vsel %vm3547, %v9222, %v9004
        %v9255 = vsel %vm3547, %v9223, %v9006
        %v9256 = vsel %vm3547, %v9224, %v9008
        %v9257 = vsel %vm3547, %v9225, %v9010
        %v9258 = vsel %vm3547, %v9226, %v9012
        %v9259 = vsel %vm3547, %v9227, %v9014
        %v9260 = vsel %vm3547, %v9228, %v9016
        %v9261 = vsel %vm3547, %v9229, %v9018
        %v9262 = vsel %vm3547, %v9230, %v9020
        %v9263 = vsel %vm3547, %v9231, %v9022
        %v9264 = vsel %vm3547, %v9232, %v9024
        %v9265 = vsel %vm3547, %v9233, %v9026
        %v9266 = vsel %vm3547, %v9234, %v9028
        %v9267 = vsel %vm3547, %v9235, %v9030
        %v9268 = vsel %vm3547, %v9236, %v9032
        %v9269 = vsel %vm3547, %v9237, %v9034
        %v9270 = vsel %vm3547, %v9238, %v9036
        %v9271 = vsel %vm3547, %v9239, %v9038
        %v9272 = vsel %vm3547, %v9240, %v9040
        %v9273 = vsel %vm3547, %v9241, %v9042
        %v9274 = vsel %vm3547, %v9242, %v9044
        %v9275 = vsel %vm3547, %v9243, %v9046
        %v9276 = vsel %vm3547, %v9244, %v9048
        %v9277 = vsel %vm3547, %v9245, %v9050
        %v9278 = vsel %vm3547, %v9246, %v9052
        %v9279 = vsel %vm3547, %v9247, %v9054
        %v9280 = vsel %vm3547, %v9248, %v9056
        %v9281 = vpack.c.bf16 %v9154, %v9153
        %v9282 = vpack.c.bf16 %v9250, %v9249
        %v9283 = vpack.c.bf16 %v8314, %v8313
        %v9284 = vpack.c.bf16 %v9156, %v9155
        %v9285 = vpack.c.bf16 %v9252, %v9251
        %v9286 = vpack.c.bf16 %v8316, %v8315
        %v9287 = vpack.c.bf16 %v9158, %v9157
        %v9288 = vpack.c.bf16 %v9254, %v9253
        %v9289 = vpack.c.bf16 %v8318, %v8317
        %v9290 = vpack.c.bf16 %v9160, %v9159
        %v9291 = vpack.c.bf16 %v9256, %v9255
        %v9292 = vpack.c.bf16 %v8320, %v8319
        %v9293 = vpack.c.bf16 %v9162, %v9161
        %v9294 = vpack.c.bf16 %v9258, %v9257
        %v9295 = vpack.c.bf16 %v8322, %v8321
        %v9296 = vpack.c.bf16 %v9164, %v9163
        %v9297 = vpack.c.bf16 %v9260, %v9259
        %v9298 = vpack.c.bf16 %v8324, %v8323
        %v9299 = vpack.c.bf16 %v9166, %v9165
        %v9300 = vpack.c.bf16 %v9262, %v9261
        %v9301 = vpack.c.bf16 %v8326, %v8325
        %v9302 = vpack.c.bf16 %v9168, %v9167
        %v9303 = vpack.c.bf16 %v9264, %v9263
        %v9304 = vpack.c.bf16 %v8328, %v8327
        %v9305 = vpack.c.bf16 %v9170, %v9169
        %v9306 = vpack.c.bf16 %v9266, %v9265
        %v9307 = vpack.c.bf16 %v8330, %v8329
        %v9308 = vpack.c.bf16 %v9172, %v9171
        %v9309 = vpack.c.bf16 %v9268, %v9267
        %v9310 = vpack.c.bf16 %v8332, %v8331
        %v9311 = vpack.c.bf16 %v9174, %v9173
        %v9312 = vpack.c.bf16 %v9270, %v9269
        %v9313 = vpack.c.bf16 %v8334, %v8333
        %v9314 = vpack.c.bf16 %v9176, %v9175
        %v9315 = vpack.c.bf16 %v9272, %v9271
        %v9316 = vpack.c.bf16 %v8336, %v8335
        %v9317 = vpack.c.bf16 %v9178, %v9177
        %v9318 = vpack.c.bf16 %v9274, %v9273
        %v9319 = vpack.c.bf16 %v8338, %v8337
        %v9320 = vpack.c.bf16 %v9180, %v9179
        %v9321 = vpack.c.bf16 %v9276, %v9275
        %v9322 = vpack.c.bf16 %v8340, %v8339
        %v9323 = vpack.c.bf16 %v9182, %v9181
        %v9324 = vpack.c.bf16 %v9278, %v9277
        %v9325 = vpack.c.bf16 %v8342, %v8341
        %v9326 = vpack.c.bf16 %v9184, %v9183
        %v9327 = vpack.c.bf16 %v9280, %v9279
        %v9328 = vpack.c.bf16 %v8344, %v8343
        %v9329 = vld [vmem:[%s14] sm:$0xff]
        %v9330 = vld [vmem:[%s14 + $0x8] sm:$0xff]
        %v9331 = vld [vmem:[%s14 + $0x10] sm:$0xff]
        %v9332 = vld [vmem:[%s14 + $0x18] sm:$0xff]
        %v9333 = vld [vmem:[%s14 + $0x20] sm:$0xff]
        %v9334 = vld [vmem:[%s14 + $0x28] sm:$0xff]
        %v9335 = vld [vmem:[%s14 + $0x30] sm:$0xff]
        %v9336 = vld [vmem:[%s14 + $0x38] sm:$0xff]
        %v9337 = vld [vmem:[%s14 + $0x40] sm:$0xff]
        %v9338 = vld [vmem:[%s14 + $0x48] sm:$0xff]
        %v9339 = vld [vmem:[%s14 + $0x50] sm:$0xff]
        %v9340 = vld [vmem:[%s14 + $0x58] sm:$0xff]
        %v9341 = vld [vmem:[%s14 + $0x60] sm:$0xff]
        %v9342 = vld [vmem:[%s14 + $0x68] sm:$0xff]
        %v9343 = vld [vmem:[%s14 + $0x70] sm:$0xff]
        %v9344 = vld [vmem:[%s14 + $0x78] sm:$0xff]
        %v9345 = vld [vmem:[%s14 + $0x80] sm:$0xff]
        %v9346 = vld [vmem:[%s14 + $0x88] sm:$0xff]
        %v9347 = vld [vmem:[%s14 + $0x90] sm:$0xff]
        %v9348 = vld [vmem:[%s14 + $0x98] sm:$0xff]
        %v9349 = vld [vmem:[%s14 + $0xa0] sm:$0xff]
        %v9350 = vld [vmem:[%s14 + $0xa8] sm:$0xff]
        %v9351 = vld [vmem:[%s14 + $0xb0] sm:$0xff]
        %v9352 = vld [vmem:[%s14 + $0xb8] sm:$0xff]
        %v9353 = vld [vmem:[%s14 + $0xc0] sm:$0xff]
        %v9354 = vld [vmem:[%s14 + $0xc8] sm:$0xff]
        %v9355 = vld [vmem:[%s14 + $0xd0] sm:$0xff]
        %v9356 = vld [vmem:[%s14 + $0xd8] sm:$0xff]
        %v9357 = vld [vmem:[%s14 + $0xe0] sm:$0xff]
        %v9358 = vld [vmem:[%s14 + $0xe8] sm:$0xff]
        %v9359 = vld [vmem:[%s14 + $0xf0] sm:$0xff]
        %v9360 = vld [vmem:[%s14 + $0xf8] sm:$0xff]
        %v9361 = vld [vmem:[%s14 + $0x100] sm:$0xff]
        %v9362 = vld [vmem:[%s14 + $0x108] sm:$0xff]
        %v9363 = vld [vmem:[%s14 + $0x110] sm:$0xff]
        %v9364 = vld [vmem:[%s14 + $0x118] sm:$0xff]
        %v9365 = vld [vmem:[%s15] sm:$0x3]
        %v9367 = vlaneseq
        %v9368 = vshrl.u32 %v9367, 7
        %v9369 = vsub.s32 0, %v9368
        %v9370 = vrot.slane %v9365, %v9369
        %v9371 = vlaneseq
        %v9372 = vshrl.u32 %v9371, 7
        %v9373 = vsub.s32 1, %v9372
        %v9374 = vrot.slane %v9365, %v9373
        %v9413 = vunpack.c.l.b16 %v9329
        %v9414 = vunpack.c.h.b16 %v9329
        %v9415 = vunpack.c.l.b16 %v9330
        %v9416 = vunpack.c.h.b16 %v9330
        %v9417 = vunpack.c.l.b16 %v9331
        %v9418 = vunpack.c.h.b16 %v9331
        %v9419 = vunpack.c.l.b16 %v9332
        %v9420 = vunpack.c.h.b16 %v9332
        %v9421 = vunpack.c.l.b16 %v9333
        %v9422 = vunpack.c.h.b16 %v9333
        %v9423 = vunpack.c.l.b16 %v9334
        %v9424 = vunpack.c.h.b16 %v9334
        %v9425 = vunpack.c.l.b16 %v9335
        %v9426 = vunpack.c.h.b16 %v9335
        %v9427 = vunpack.c.l.b16 %v9336
        %v9428 = vunpack.c.h.b16 %v9336
        %v9429 = vunpack.c.l.b16 %v9337
        %v9430 = vunpack.c.h.b16 %v9337
        %v9431 = vunpack.c.l.b16 %v9338
        %v9432 = vunpack.c.h.b16 %v9338
        %v9433 = vunpack.c.l.b16 %v9339
        %v9434 = vunpack.c.h.b16 %v9339
        %v9435 = vunpack.c.l.b16 %v9340
        %v9436 = vunpack.c.h.b16 %v9340
        %v9437 = vunpack.c.l.b16 %v9341
        %v9438 = vunpack.c.h.b16 %v9341
        %v9439 = vunpack.c.l.b16 %v9342
        %v9440 = vunpack.c.h.b16 %v9342
        %v9441 = vunpack.c.l.b16 %v9343
        %v9442 = vunpack.c.h.b16 %v9343
        %v9443 = vunpack.c.l.b16 %v9344
        %v9444 = vunpack.c.h.b16 %v9344
        %v9445 = vunpack.c.l.b16 %v9345
        %v9446 = vunpack.c.h.b16 %v9345
        %v9447 = vunpack.c.l.b16 %v9346
        %v9448 = vunpack.c.h.b16 %v9346
        %v9449 = vunpack.c.l.b16 %v9347
        %v9450 = vunpack.c.h.b16 %v9347
        %v9451 = vunpack.c.l.b16 %v9348
        %v9452 = vunpack.c.h.b16 %v9348
        %v9453 = vunpack.c.l.b16 %v9349
        %v9454 = vunpack.c.h.b16 %v9349
        %v9455 = vunpack.c.l.b16 %v9350
        %v9456 = vunpack.c.h.b16 %v9350
        %v9457 = vunpack.c.l.b16 %v9351
        %v9458 = vunpack.c.h.b16 %v9351
        %v9459 = vunpack.c.l.b16 %v9352
        %v9460 = vunpack.c.h.b16 %v9352
        %v9461 = vunpack.c.l.b16 %v9353
        %v9462 = vunpack.c.h.b16 %v9353
        %v9463 = vunpack.c.l.b16 %v9354
        %v9464 = vunpack.c.h.b16 %v9354
        %v9465 = vunpack.c.l.b16 %v9355
        %v9466 = vunpack.c.h.b16 %v9355
        %v9467 = vunpack.c.l.b16 %v9356
        %v9468 = vunpack.c.h.b16 %v9356
        %v9469 = vunpack.c.l.b16 %v9357
        %v9470 = vunpack.c.h.b16 %v9357
        %v9471 = vunpack.c.l.b16 %v9358
        %v9472 = vunpack.c.h.b16 %v9358
        %v9473 = vunpack.c.l.b16 %v9359
        %v9474 = vunpack.c.h.b16 %v9359
        %v9475 = vunpack.c.l.b16 %v9360
        %v9476 = vunpack.c.h.b16 %v9360
        %v9477 = vunpack.c.l.b16 %v9361
        %v9478 = vunpack.c.h.b16 %v9361
        %v9479 = vunpack.c.l.b16 %v9362
        %v9480 = vunpack.c.h.b16 %v9362
        %v9481 = vunpack.c.l.b16 %v9363
        %v9482 = vunpack.c.h.b16 %v9363
        %v9483 = vunpack.c.l.b16 %v9364
        %v9484 = vunpack.c.h.b16 %v9364
        %v9485 = vpack.c.b16 %v9415, %v9413
        %v9486 = vpack.c.b16 %v9416, %v9414
        %v9487 = vpack.c.b16 %v9419, %v9417
        %v9488 = vpack.c.b16 %v9420, %v9418
        %v9489 = vpack.c.b16 %v9423, %v9421
        %v9490 = vpack.c.b16 %v9424, %v9422
        %v9491 = vpack.c.b16 %v9427, %v9425
        %v9492 = vpack.c.b16 %v9428, %v9426
        %v9493 = vpack.c.b16 %v9431, %v9429
        %v9494 = vpack.c.b16 %v9432, %v9430
        %v9495 = vpack.c.b16 %v9435, %v9433
        %v9496 = vpack.c.b16 %v9436, %v9434
        %v9497 = vpack.c.b16 %v9439, %v9437
        %v9498 = vpack.c.b16 %v9440, %v9438
        %v9499 = vpack.c.b16 %v9443, %v9441
        %v9500 = vpack.c.b16 %v9444, %v9442
        %v9501 = vpack.c.b16 %v9447, %v9445
        %v9502 = vpack.c.b16 %v9448, %v9446
        %v9503 = vpack.c.b16 %v9451, %v9449
        %v9504 = vpack.c.b16 %v9452, %v9450
        %v9505 = vpack.c.b16 %v9455, %v9453
        %v9506 = vpack.c.b16 %v9456, %v9454
        %v9507 = vpack.c.b16 %v9459, %v9457
        %v9508 = vpack.c.b16 %v9460, %v9458
        %v9509 = vpack.c.b16 %v9463, %v9461
        %v9510 = vpack.c.b16 %v9464, %v9462
        %v9511 = vpack.c.b16 %v9467, %v9465
        %v9512 = vpack.c.b16 %v9468, %v9466
        %v9513 = vpack.c.b16 %v9471, %v9469
        %v9514 = vpack.c.b16 %v9472, %v9470
        %v9515 = vpack.c.b16 %v9475, %v9473
        %v9516 = vpack.c.b16 %v9476, %v9474
        %v9517 = vpack.c.b16 %v9479, %v9477
        %v9518 = vpack.c.b16 %v9480, %v9478
        %v9519 = vpack.c.b16 %v9483, %v9481
        %v9520 = vpack.c.b16 %v9484, %v9482
        %v9558 = vsel %vm544, %v9283, 0
        %v9561 = vsel %vm544, %v9286, 0
        %v9564 = vsel %vm544, %v9289, 0
        %v9567 = vsel %vm544, %v9292, 0
        %v9570 = vsel %vm544, %v9295, 0
        %v9573 = vsel %vm544, %v9298, 0
        %v9576 = vsel %vm544, %v9301, 0
        %v9579 = vsel %vm544, %v9304, 0
        %v9582 = vsel %vm544, %v9307, 0
        %v9585 = vsel %vm544, %v9310, 0
        %v9588 = vsel %vm544, %v9313, 0
        %v9591 = vsel %vm544, %v9316, 0
        %v9594 = vsel %vm544, %v9319, 0
        %v9597 = vsel %vm544, %v9322, 0
        %v9600 = vsel %vm544, %v9325, 0
        %v9603 = vsel %vm544, %v9328, 0
        %9605 = vmatprep.subr.bf16.mxu0 %v9486
        %9606 = vmatpush1.bf16.msra.mxu0 %v9485
        %9607 = vmatprep.subr.bf16.mxu0 %v9488
        %9608 = vmatpush1.bf16.msra.mxu0 %v9487
        %9609 = vmatprep.subr.bf16.mxu0 %v9490
        %9610 = vmatpush1.bf16.msra.mxu0 %v9489
        %9611 = vmatprep.subr.bf16.mxu0 %v9492
        %9612 = vmatpush1.bf16.msra.mxu0 %v9491
        %9613 = vmatprep.subr.bf16.mxu0 %v9494
        %9614 = vmatpush1.bf16.msra.mxu0 %v9493
        %9615 = vmatprep.subr.bf16.mxu0 %v9496
        %9616 = vmatpush1.bf16.msra.mxu0 %v9495
        %9617 = vmatprep.subr.bf16.mxu0 %v9498
        %9618 = vmatpush1.bf16.msra.mxu0 %v9497
        %9619 = vmatprep.subr.bf16.mxu0 %v9500
        %9620 = vmatpush1.bf16.msra.mxu0 %v9499
        %9621 = vmatprep.subr.bf16.mxu0 %v9502
        %9622 = vmatpush1.bf16.msra.mxu0 %v9501
        %9623 = vmatprep.subr.bf16.mxu0 %v9504
        %9624 = vmatpush1.bf16.msra.mxu0 %v9503
        %9625 = vmatprep.subr.bf16.mxu0 %v9506
        %9626 = vmatpush1.bf16.msra.mxu0 %v9505
        %9627 = vmatprep.subr.bf16.mxu0 %v9508
        %9628 = vmatpush1.bf16.msra.mxu0 %v9507
        %9629 = vmatprep.subr.bf16.mxu0 %v9510
        %9630 = vmatpush1.bf16.msra.mxu0 %v9509
        %9631 = vmatprep.subr.bf16.mxu0 %v9512
        %9632 = vmatpush1.bf16.msra.mxu0 %v9511
        %9633 = vmatprep.subr.bf16.mxu0 %v9514
        %9634 = vmatpush1.bf16.msra.mxu0 %v9513
        %9635 = vmatprep.subr.bf16.mxu0 %v9516
        %9636 = vmatpush1.bf16.msra.mxu0 %v9515
        %9637 = vmatprep.mubr.bf16.mxu0 %v9282
        %9638 = vmatmul.mubr.bf16.gmra.mrb[0].mxu0 %v9281
        %v9639 = vpop.f32.mrb[0].mxu0
        %v9640 = vadd.f32 %v9370, %v9639
        %v9641 = vpop.f32.mrb[0].mxu0
        %v9642 = vadd.f32 %v9374, %v9641
        %v9643 = vpop.f32.mrb[0].mxu0
        %v9644 = vadd.f32 %v9370, %v9643
        %v9645 = vpop.f32.mrb[0].mxu0
        %v9646 = vadd.f32 %v9374, %v9645
        %9647 = vmatprep.mubr.bf16.mxu0 %v9285
        %9648 = vmatmul.mubr.bf16.gmra.mrb[0].mxu0 %v9284
        %v9649 = vpop.f32.mrb[0].mxu0
        %v9650 = vadd.f32 %v9370, %v9649
        %v9651 = vpop.f32.mrb[0].mxu0
        %v9652 = vadd.f32 %v9374, %v9651
        %v9653 = vpop.f32.mrb[0].mxu0
        %v9654 = vadd.f32 %v9370, %v9653
        %v9655 = vpop.f32.mrb[0].mxu0
        %v9656 = vadd.f32 %v9374, %v9655
        %9657 = vmatprep.mubr.bf16.mxu0 %v9288
        %9658 = vmatmul.mubr.bf16.gmra.mrb[0].mxu0 %v9287
        %v9659 = vpop.f32.mrb[0].mxu0
        %v9660 = vadd.f32 %v9370, %v9659
        %v9661 = vpop.f32.mrb[0].mxu0
        %v9662 = vadd.f32 %v9374, %v9661
        %v9663 = vpop.f32.mrb[0].mxu0
        %v9664 = vadd.f32 %v9370, %v9663
        %v9665 = vpop.f32.mrb[0].mxu0
        %v9666 = vadd.f32 %v9374, %v9665
        %9667 = vmatprep.mubr.bf16.mxu0 %v9291
        %9668 = vmatmul.mubr.bf16.gmra.mrb[0].mxu0 %v9290
        %v9669 = vpop.f32.mrb[0].mxu0
        %v9670 = vadd.f32 %v9370, %v9669
        %v9671 = vpop.f32.mrb[0].mxu0
        %v9672 = vadd.f32 %v9374, %v9671
        %v9673 = vpop.f32.mrb[0].mxu0
        %v9674 = vadd.f32 %v9370, %v9673
        %v9675 = vpop.f32.mrb[0].mxu0
        %v9676 = vadd.f32 %v9374, %v9675
        %9677 = vmatprep.mubr.bf16.mxu0 %v9294
        %9678 = vmatmul.mubr.bf16.gmra.mrb[0].mxu0 %v9293
        %v9679 = vpop.f32.mrb[0].mxu0
        %v9680 = vadd.f32 %v9370, %v9679
        %v9681 = vpop.f32.mrb[0].mxu0
        %v9682 = vadd.f32 %v9374, %v9681
        %v9683 = vpop.f32.mrb[0].mxu0
        %v9684 = vadd.f32 %v9370, %v9683
        %v9685 = vpop.f32.mrb[0].mxu0
        %v9686 = vadd.f32 %v9374, %v9685
        %9687 = vmatprep.mubr.bf16.mxu0 %v9297
        %9688 = vmatmul.mubr.bf16.gmra.mrb[0].mxu0 %v9296
        %v9689 = vpop.f32.mrb[0].mxu0
        %v9690 = vadd.f32 %v9370, %v9689
        %v9691 = vpop.f32.mrb[0].mxu0
        %v9692 = vadd.f32 %v9374, %v9691
        %v9693 = vpop.f32.mrb[0].mxu0
        %v9694 = vadd.f32 %v9370, %v9693
        %v9695 = vpop.f32.mrb[0].mxu0
        %v9696 = vadd.f32 %v9374, %v9695
        %9697 = vmatprep.mubr.bf16.mxu0 %v9300
        %9698 = vmatmul.mubr.bf16.gmra.mrb[0].mxu0 %v9299
        %v9699 = vpop.f32.mrb[0].mxu0
        %v9700 = vadd.f32 %v9370, %v9699
        %v9701 = vpop.f32.mrb[0].mxu0
        %v9702 = vadd.f32 %v9374, %v9701
        %v9703 = vpop.f32.mrb[0].mxu0
        %v9704 = vadd.f32 %v9370, %v9703
        %v9705 = vpop.f32.mrb[0].mxu0
        %v9706 = vadd.f32 %v9374, %v9705
        %9707 = vmatprep.mubr.bf16.mxu0 %v9303
        %9708 = vmatmul.mubr.bf16.gmra.mrb[0].mxu0 %v9302
        %v9709 = vpop.f32.mrb[0].mxu0
        %v9710 = vadd.f32 %v9370, %v9709
        %v9711 = vpop.f32.mrb[0].mxu0
        %v9712 = vadd.f32 %v9374, %v9711
        %v9713 = vpop.f32.mrb[0].mxu0
        %v9714 = vadd.f32 %v9370, %v9713
        %v9715 = vpop.f32.mrb[0].mxu0
        %v9716 = vadd.f32 %v9374, %v9715
        %9717 = vmatprep.mubr.bf16.mxu0 %v9306
        %9718 = vmatmul.mubr.bf16.gmra.mrb[0].mxu0 %v9305
        %v9719 = vpop.f32.mrb[0].mxu0
        %v9720 = vadd.f32 %v9370, %v9719
        %v9721 = vpop.f32.mrb[0].mxu0
        %v9722 = vadd.f32 %v9374, %v9721
        %v9723 = vpop.f32.mrb[0].mxu0
        %v9724 = vadd.f32 %v9370, %v9723
        %v9725 = vpop.f32.mrb[0].mxu0
        %v9726 = vadd.f32 %v9374, %v9725
        %9727 = vmatprep.mubr.bf16.mxu0 %v9309
        %9728 = vmatmul.mubr.bf16.gmra.mrb[0].mxu0 %v9308
        %v9729 = vpop.f32.mrb[0].mxu0
        %v9730 = vadd.f32 %v9370, %v9729
        %v9731 = vpop.f32.mrb[0].mxu0
        %v9732 = vadd.f32 %v9374, %v9731
        %v9733 = vpop.f32.mrb[0].mxu0
        %v9734 = vadd.f32 %v9370, %v9733
        %v9735 = vpop.f32.mrb[0].mxu0
        %v9736 = vadd.f32 %v9374, %v9735
        %9737 = vmatprep.mubr.bf16.mxu0 %v9312
        %9738 = vmatmul.mubr.bf16.gmra.mrb[0].mxu0 %v9311
        %v9739 = vpop.f32.mrb[0].mxu0
        %v9740 = vadd.f32 %v9370, %v9739
        %v9741 = vpop.f32.mrb[0].mxu0
        %v9742 = vadd.f32 %v9374, %v9741
        %v9743 = vpop.f32.mrb[0].mxu0
        %v9744 = vadd.f32 %v9370, %v9743
        %v9745 = vpop.f32.mrb[0].mxu0
        %v9746 = vadd.f32 %v9374, %v9745
        %9747 = vmatprep.mubr.bf16.mxu0 %v9315
        %9748 = vmatmul.mubr.bf16.gmra.mrb[0].mxu0 %v9314
        %v9749 = vpop.f32.mrb[0].mxu0
        %v9750 = vadd.f32 %v9370, %v9749
        %v9751 = vpop.f32.mrb[0].mxu0
        %v9752 = vadd.f32 %v9374, %v9751
        %v9753 = vpop.f32.mrb[0].mxu0
        %v9754 = vadd.f32 %v9370, %v9753
        %v9755 = vpop.f32.mrb[0].mxu0
        %v9756 = vadd.f32 %v9374, %v9755
        %9757 = vmatprep.mubr.bf16.mxu0 %v9318
        %9758 = vmatmul.mubr.bf16.gmra.mrb[0].mxu0 %v9317
        %v9759 = vpop.f32.mrb[0].mxu0
        %v9760 = vadd.f32 %v9370, %v9759
        %v9761 = vpop.f32.mrb[0].mxu0
        %v9762 = vadd.f32 %v9374, %v9761
        %v9763 = vpop.f32.mrb[0].mxu0
        %v9764 = vadd.f32 %v9370, %v9763
        %v9765 = vpop.f32.mrb[0].mxu0
        %v9766 = vadd.f32 %v9374, %v9765
        %9767 = vmatprep.mubr.bf16.mxu0 %v9321
        %9768 = vmatmul.mubr.bf16.gmra.mrb[0].mxu0 %v9320
        %v9769 = vpop.f32.mrb[0].mxu0
        %v9770 = vadd.f32 %v9370, %v9769
        %v9771 = vpop.f32.mrb[0].mxu0
        %v9772 = vadd.f32 %v9374, %v9771
        %v9773 = vpop.f32.mrb[0].mxu0
        %v9774 = vadd.f32 %v9370, %v9773
        %v9775 = vpop.f32.mrb[0].mxu0
        %v9776 = vadd.f32 %v9374, %v9775
        %9777 = vmatprep.mubr.bf16.mxu0 %v9324
        %9778 = vmatmul.mubr.bf16.gmra.mrb[0].mxu0 %v9323
        %v9779 = vpop.f32.mrb[0].mxu0
        %v9780 = vadd.f32 %v9370, %v9779
        %v9781 = vpop.f32.mrb[0].mxu0
        %v9782 = vadd.f32 %v9374, %v9781
        %v9783 = vpop.f32.mrb[0].mxu0
        %v9784 = vadd.f32 %v9370, %v9783
        %v9785 = vpop.f32.mrb[0].mxu0
        %v9786 = vadd.f32 %v9374, %v9785
        %9787 = vmatprep.mubr.bf16.mxu0 %v9327
        %9788 = vmatmul.mubr.bf16.gmra.mrb[0].mxu0 %v9326
        %v9789 = vpop.f32.mrb[0].mxu0
        %v9790 = vadd.f32 %v9370, %v9789
        %v9791 = vpop.f32.mrb[0].mxu0
        %v9792 = vadd.f32 %v9374, %v9791
        %v9793 = vpop.f32.mrb[0].mxu0
        %v9794 = vadd.f32 %v9370, %v9793
        %v9795 = vpop.f32.mrb[0].mxu0
        %v9796 = vadd.f32 %v9374, %v9795
        %9797 = vdwg.mxu0
        %9798 = vmatprep.subr.bf16.mxu0 %v9518
        %9799 = vmatpush1.bf16.msra.mxu0 %v9517
        %9800 = vmatprep.subr.bf16.mxu0 %v9520
        %9801 = vmatpush1.bf16.msra.mxu0 %v9519
        %9802 = vmatprep.subr.bf16.mxu0 0
        %9803 = vmatpush1.bf16.msra.mxu0 0
        %9804 = vmatprep.subr.bf16.mxu0 0
        %9805 = vmatpush1.bf16.msra.mxu0 0
        %9806 = vmatprep.subr.bf16.mxu0 0
        %9807 = vmatpush1.bf16.msra.mxu0 0
        %9808 = vmatprep.subr.bf16.mxu0 0
        %9809 = vmatpush1.bf16.msra.mxu0 0
        %9810 = vmatprep.subr.bf16.mxu0 0
        %9811 = vmatpush1.bf16.msra.mxu0 0
        %9812 = vmatprep.subr.bf16.mxu0 0
        %9813 = vmatpush1.bf16.msra.mxu0 0
        %9814 = vmatprep.subr.bf16.mxu0 0
        %9815 = vmatpush1.bf16.msra.mxu0 0
        %9816 = vmatprep.subr.bf16.mxu0 0
        %9817 = vmatpush1.bf16.msra.mxu0 0
        %9818 = vmatprep.subr.bf16.mxu0 0
        %9819 = vmatpush1.bf16.msra.mxu0 0
        %9820 = vmatprep.subr.bf16.mxu0 0
        %9821 = vmatpush1.bf16.msra.mxu0 0
        %9822 = vmatprep.subr.bf16.mxu0 0
        %9823 = vmatpush1.bf16.msra.mxu0 0
        %9824 = vmatprep.subr.bf16.mxu0 0
        %9825 = vmatpush1.bf16.msra.mxu0 0
        %9826 = vmatprep.subr.bf16.mxu0 0
        %9827 = vmatpush1.bf16.msra.mxu0 0
        %9828 = vmatprep.subr.bf16.mxu0 0
        %9829 = vmatpush1.bf16.msra.mxu0 0
        %9830 = vmatprep.mubr.bf16.mxu0 0
        %9831 = vmatmul.mubr.bf16.gmra.mrb[0].mxu0 %v9558
        %v9832 = vpop.f32.mrb[0].mxu0
        %v9833 = vadd.f32 %v9640, %v9832
        %v9834 = vpop.f32.mrb[0].mxu0
        %v9835 = vadd.f32 %v9642, %v9834
        %v9836 = vpop.f32.mrb[0].mxu0
        %v9837 = vadd.f32 %v9644, %v9836
        %v9838 = vpop.f32.mrb[0].mxu0
        %v9839 = vadd.f32 %v9646, %v9838
        %9840 = vmatprep.mubr.bf16.mxu0 0
        %9841 = vmatmul.mubr.bf16.gmra.mrb[0].mxu0 %v9561
        %v9842 = vpop.f32.mrb[0].mxu0
        %v9843 = vadd.f32 %v9650, %v9842
        %v9844 = vpop.f32.mrb[0].mxu0
        %v9845 = vadd.f32 %v9652, %v9844
        %v9846 = vpop.f32.mrb[0].mxu0
        %v9847 = vadd.f32 %v9654, %v9846
        %v9848 = vpop.f32.mrb[0].mxu0
        %v9849 = vadd.f32 %v9656, %v9848
        %9850 = vmatprep.mubr.bf16.mxu0 0
        %9851 = vmatmul.mubr.bf16.gmra.mrb[0].mxu0 %v9564
        %v9852 = vpop.f32.mrb[0].mxu0
        %v9853 = vadd.f32 %v9660, %v9852
        %v9854 = vpop.f32.mrb[0].mxu0
        %v9855 = vadd.f32 %v9662, %v9854
        %v9856 = vpop.f32.mrb[0].mxu0
        %v9857 = vadd.f32 %v9664, %v9856
        %v9858 = vpop.f32.mrb[0].mxu0
        %v9859 = vadd.f32 %v9666, %v9858
        %9860 = vmatprep.mubr.bf16.mxu0 0
        %9861 = vmatmul.mubr.bf16.gmra.mrb[0].mxu0 %v9567
        %v9862 = vpop.f32.mrb[0].mxu0
        %v9863 = vadd.f32 %v9670, %v9862
        %v9864 = vpop.f32.mrb[0].mxu0
        %v9865 = vadd.f32 %v9672, %v9864
        %v9866 = vpop.f32.mrb[0].mxu0
        %v9867 = vadd.f32 %v9674, %v9866
        %v9868 = vpop.f32.mrb[0].mxu0
        %v9869 = vadd.f32 %v9676, %v9868
        %9870 = vmatprep.mubr.bf16.mxu0 0
        %9871 = vmatmul.mubr.bf16.gmra.mrb[0].mxu0 %v9570
        %v9872 = vpop.f32.mrb[0].mxu0
        %v9873 = vadd.f32 %v9680, %v9872
        %v9874 = vpop.f32.mrb[0].mxu0
        %v9875 = vadd.f32 %v9682, %v9874
        %v9876 = vpop.f32.mrb[0].mxu0
        %v9877 = vadd.f32 %v9684, %v9876
        %v9878 = vpop.f32.mrb[0].mxu0
        %v9879 = vadd.f32 %v9686, %v9878
        %9880 = vmatprep.mubr.bf16.mxu0 0
        %9881 = vmatmul.mubr.bf16.gmra.mrb[0].mxu0 %v9573
        %v9882 = vpop.f32.mrb[0].mxu0
        %v9883 = vadd.f32 %v9690, %v9882
        %v9884 = vpop.f32.mrb[0].mxu0
        %v9885 = vadd.f32 %v9692, %v9884
        %v9886 = vpop.f32.mrb[0].mxu0
        %v9887 = vadd.f32 %v9694, %v9886
        %v9888 = vpop.f32.mrb[0].mxu0
        %v9889 = vadd.f32 %v9696, %v9888
        %9890 = vmatprep.mubr.bf16.mxu0 0
        %9891 = vmatmul.mubr.bf16.gmra.mrb[0].mxu0 %v9576
        %v9892 = vpop.f32.mrb[0].mxu0
        %v9893 = vadd.f32 %v9700, %v9892
        %v9894 = vpop.f32.mrb[0].mxu0
        %v9895 = vadd.f32 %v9702, %v9894
        %v9896 = vpop.f32.mrb[0].mxu0
        %v9897 = vadd.f32 %v9704, %v9896
        %v9898 = vpop.f32.mrb[0].mxu0
        %v9899 = vadd.f32 %v9706, %v9898
        %9900 = vmatprep.mubr.bf16.mxu0 0
        %9901 = vmatmul.mubr.bf16.gmra.mrb[0].mxu0 %v9579
        %v9902 = vpop.f32.mrb[0].mxu0
        %v9903 = vadd.f32 %v9710, %v9902
        %v9904 = vpop.f32.mrb[0].mxu0
        %v9905 = vadd.f32 %v9712, %v9904
        %v9906 = vpop.f32.mrb[0].mxu0
        %v9907 = vadd.f32 %v9714, %v9906
        %v9908 = vpop.f32.mrb[0].mxu0
        %v9909 = vadd.f32 %v9716, %v9908
        %9910 = vmatprep.mubr.bf16.mxu0 0
        %9911 = vmatmul.mubr.bf16.gmra.mrb[0].mxu0 %v9582
        %v9912 = vpop.f32.mrb[0].mxu0
        %v9913 = vadd.f32 %v9720, %v9912
        %v9914 = vpop.f32.mrb[0].mxu0
        %v9915 = vadd.f32 %v9722, %v9914
        %v9916 = vpop.f32.mrb[0].mxu0
        %v9917 = vadd.f32 %v9724, %v9916
        %v9918 = vpop.f32.mrb[0].mxu0
        %v9919 = vadd.f32 %v9726, %v9918
        %9920 = vmatprep.mubr.bf16.mxu0 0
        %9921 = vmatmul.mubr.bf16.gmra.mrb[0].mxu0 %v9585
        %v9922 = vpop.f32.mrb[0].mxu0
        %v9923 = vadd.f32 %v9730, %v9922
        %v9924 = vpop.f32.mrb[0].mxu0
        %v9925 = vadd.f32 %v9732, %v9924
        %v9926 = vpop.f32.mrb[0].mxu0
        %v9927 = vadd.f32 %v9734, %v9926
        %v9928 = vpop.f32.mrb[0].mxu0
        %v9929 = vadd.f32 %v9736, %v9928
        %9930 = vmatprep.mubr.bf16.mxu0 0
        %9931 = vmatmul.mubr.bf16.gmra.mrb[0].mxu0 %v9588
        %v9932 = vpop.f32.mrb[0].mxu0
        %v9933 = vadd.f32 %v9740, %v9932
        %v9934 = vpop.f32.mrb[0].mxu0
        %v9935 = vadd.f32 %v9742, %v9934
        %v9936 = vpop.f32.mrb[0].mxu0
        %v9937 = vadd.f32 %v9744, %v9936
        %v9938 = vpop.f32.mrb[0].mxu0
        %v9939 = vadd.f32 %v9746, %v9938
        %9940 = vmatprep.mubr.bf16.mxu0 0
        %9941 = vmatmul.mubr.bf16.gmra.mrb[0].mxu0 %v9591
        %v9942 = vpop.f32.mrb[0].mxu0
        %v9943 = vadd.f32 %v9750, %v9942
        %v9944 = vpop.f32.mrb[0].mxu0
        %v9945 = vadd.f32 %v9752, %v9944
        %v9946 = vpop.f32.mrb[0].mxu0
        %v9947 = vadd.f32 %v9754, %v9946
        %v9948 = vpop.f32.mrb[0].mxu0
        %v9949 = vadd.f32 %v9756, %v9948
        %9950 = vmatprep.mubr.bf16.mxu0 0
        %9951 = vmatmul.mubr.bf16.gmra.mrb[0].mxu0 %v9594
        %v9952 = vpop.f32.mrb[0].mxu0
        %v9953 = vadd.f32 %v9760, %v9952
        %v9954 = vpop.f32.mrb[0].mxu0
        %v9955 = vadd.f32 %v9762, %v9954
        %v9956 = vpop.f32.mrb[0].mxu0
        %v9957 = vadd.f32 %v9764, %v9956
        %v9958 = vpop.f32.mrb[0].mxu0
        %v9959 = vadd.f32 %v9766, %v9958
        %9960 = vmatprep.mubr.bf16.mxu0 0
        %9961 = vmatmul.mubr.bf16.gmra.mrb[0].mxu0 %v9597
        %v9962 = vpop.f32.mrb[0].mxu0
        %v9963 = vadd.f32 %v9770, %v9962
        %v9964 = vpop.f32.mrb[0].mxu0
        %v9965 = vadd.f32 %v9772, %v9964
        %v9966 = vpop.f32.mrb[0].mxu0
        %v9967 = vadd.f32 %v9774, %v9966
        %v9968 = vpop.f32.mrb[0].mxu0
        %v9969 = vadd.f32 %v9776, %v9968
        %9970 = vmatprep.mubr.bf16.mxu0 0
        %9971 = vmatmul.mubr.bf16.gmra.mrb[0].mxu0 %v9600
        %v9972 = vpop.f32.mrb[0].mxu0
        %v9973 = vadd.f32 %v9780, %v9972
        %v9974 = vpop.f32.mrb[0].mxu0
        %v9975 = vadd.f32 %v9782, %v9974
        %v9976 = vpop.f32.mrb[0].mxu0
        %v9977 = vadd.f32 %v9784, %v9976
        %v9978 = vpop.f32.mrb[0].mxu0
        %v9979 = vadd.f32 %v9786, %v9978
        %9980 = vmatprep.mubr.bf16.mxu0 0
        %9981 = vmatmul.mubr.bf16.gmra.mrb[0].mxu0 %v9603
        %v9982 = vpop.f32.mrb[0].mxu0
        %v9983 = vadd.f32 %v9790, %v9982
        %v9984 = vpop.f32.mrb[0].mxu0
        %v9985 = vadd.f32 %v9792, %v9984
        %v9986 = vpop.f32.mrb[0].mxu0
        %v9987 = vadd.f32 %v9794, %v9986
        %v9988 = vpop.f32.mrb[0].mxu0
        %v9989 = vadd.f32 %v9796, %v9988
        %9990 = vdwg.mxu0
        %v9991 = vmax.f32 %v9833, 0.0
        %v9992 = vmax.f32 %v9835, 0.0
        %v9993 = vmax.f32 %v9837, 0.0
        %v9994 = vmax.f32 %v9839, 0.0
        %v9995 = vmax.f32 %v9843, 0.0
        %v9996 = vmax.f32 %v9845, 0.0
        %v9997 = vmax.f32 %v9847, 0.0
        %v9998 = vmax.f32 %v9849, 0.0
        %v9999 = vmax.f32 %v9853, 0.0
        %v10000 = vmax.f32 %v9855, 0.0
        %v10001 = vmax.f32 %v9857, 0.0
        %v10002 = vmax.f32 %v9859, 0.0
        %v10003 = vmax.f32 %v9863, 0.0
        %v10004 = vmax.f32 %v9865, 0.0
        %v10005 = vmax.f32 %v9867, 0.0
        %v10006 = vmax.f32 %v9869, 0.0
        %v10007 = vmax.f32 %v9873, 0.0
        %v10008 = vmax.f32 %v9875, 0.0
        %v10009 = vmax.f32 %v9877, 0.0
        %v10010 = vmax.f32 %v9879, 0.0
        %v10011 = vmax.f32 %v9883, 0.0
        %v10012 = vmax.f32 %v9885, 0.0
        %v10013 = vmax.f32 %v9887, 0.0
        %v10014 = vmax.f32 %v9889, 0.0
        %v10015 = vmax.f32 %v9893, 0.0
        %v10016 = vmax.f32 %v9895, 0.0
        %v10017 = vmax.f32 %v9897, 0.0
        %v10018 = vmax.f32 %v9899, 0.0
        %v10019 = vmax.f32 %v9903, 0.0
        %v10020 = vmax.f32 %v9905, 0.0
        %v10021 = vmax.f32 %v9907, 0.0
        %v10022 = vmax.f32 %v9909, 0.0
        %v10023 = vmax.f32 %v9913, 0.0
        %v10024 = vmax.f32 %v9915, 0.0
        %v10025 = vmax.f32 %v9917, 0.0
        %v10026 = vmax.f32 %v9919, 0.0
        %v10027 = vmax.f32 %v9923, 0.0
        %v10028 = vmax.f32 %v9925, 0.0
        %v10029 = vmax.f32 %v9927, 0.0
        %v10030 = vmax.f32 %v9929, 0.0
        %v10031 = vmax.f32 %v9933, 0.0
        %v10032 = vmax.f32 %v9935, 0.0
        %v10033 = vmax.f32 %v9937, 0.0
        %v10034 = vmax.f32 %v9939, 0.0
        %v10035 = vmax.f32 %v9943, 0.0
        %v10036 = vmax.f32 %v9945, 0.0
        %v10037 = vmax.f32 %v9947, 0.0
        %v10038 = vmax.f32 %v9949, 0.0
        %v10039 = vmax.f32 %v9953, 0.0
        %v10040 = vmax.f32 %v9955, 0.0
        %v10041 = vmax.f32 %v9957, 0.0
        %v10042 = vmax.f32 %v9959, 0.0
        %v10043 = vmax.f32 %v9963, 0.0
        %v10044 = vmax.f32 %v9965, 0.0
        %v10045 = vmax.f32 %v9967, 0.0
        %v10046 = vmax.f32 %v9969, 0.0
        %v10047 = vmax.f32 %v9973, 0.0
        %v10048 = vmax.f32 %v9975, 0.0
        %v10049 = vmax.f32 %v9977, 0.0
        %v10050 = vmax.f32 %v9979, 0.0
        %v10051 = vmax.f32 %v9983, 0.0
        %v10052 = vmax.f32 %v9985, 0.0
        %v10053 = vmax.f32 %v9987, 0.0
        %v10054 = vmax.f32 %v9989, 0.0
        %10055 = vst [vmem:[%s517] sm:$0xff] %v9991
        %10056 = vst [vmem:[%s517 + $0x8] sm:$0xff] %v9992
        %10057 = vst [vmem:[%s517 + $0x10] sm:$0xff] %v9993
        %10058 = vst [vmem:[%s517 + $0x18] sm:$0xff] %v9994
        %10059 = vst [vmem:[%s517 + $0x20] sm:$0xff] %v9995
        %10060 = vst [vmem:[%s517 + $0x28] sm:$0xff] %v9996
        %10061 = vst [vmem:[%s517 + $0x30] sm:$0xff] %v9997
        %10062 = vst [vmem:[%s517 + $0x38] sm:$0xff] %v9998
        %10063 = vst [vmem:[%s517 + $0x40] sm:$0xff] %v9999
        %10064 = vst [vmem:[%s517 + $0x48] sm:$0xff] %v10000
        %10065 = vst [vmem:[%s517 + $0x50] sm:$0xff] %v10001
        %10066 = vst [vmem:[%s517 + $0x58] sm:$0xff] %v10002
        %10067 = vst [vmem:[%s517 + $0x60] sm:$0xff] %v10003
        %10068 = vst [vmem:[%s517 + $0x68] sm:$0xff] %v10004
        %10069 = vst [vmem:[%s517 + $0x70] sm:$0xff] %v10005
        %10070 = vst [vmem:[%s517 + $0x78] sm:$0xff] %v10006
        %10071 = vst [vmem:[%s517 + $0x80] sm:$0xff] %v10007
        %10072 = vst [vmem:[%s517 + $0x88] sm:$0xff] %v10008
        %10073 = vst [vmem:[%s517 + $0x90] sm:$0xff] %v10009
        %10074 = vst [vmem:[%s517 + $0x98] sm:$0xff] %v10010
        %10075 = vst [vmem:[%s517 + $0xa0] sm:$0xff] %v10011
        %10076 = vst [vmem:[%s517 + $0xa8] sm:$0xff] %v10012
        %10077 = vst [vmem:[%s517 + $0xb0] sm:$0xff] %v10013
        %10078 = vst [vmem:[%s517 + $0xb8] sm:$0xff] %v10014
        %10079 = vst [vmem:[%s517 + $0xc0] sm:$0xff] %v10015
        %10080 = vst [vmem:[%s517 + $0xc8] sm:$0xff] %v10016
        %10081 = vst [vmem:[%s517 + $0xd0] sm:$0xff] %v10017
        %10082 = vst [vmem:[%s517 + $0xd8] sm:$0xff] %v10018
        %10083 = vst [vmem:[%s517 + $0xe0] sm:$0xff] %v10019
        %10084 = vst [vmem:[%s517 + $0xe8] sm:$0xff] %v10020
        %10085 = vst [vmem:[%s517 + $0xf0] sm:$0xff] %v10021
        %10086 = vst [vmem:[%s517 + $0xf8] sm:$0xff] %v10022
        %10087 = vst [vmem:[%s517 + $0x100] sm:$0xff] %v10023
        %10088 = vst [vmem:[%s517 + $0x108] sm:$0xff] %v10024
        %10089 = vst [vmem:[%s517 + $0x110] sm:$0xff] %v10025
        %10090 = vst [vmem:[%s517 + $0x118] sm:$0xff] %v10026
        %10091 = vst [vmem:[%s517 + $0x120] sm:$0xff] %v10027
        %10092 = vst [vmem:[%s517 + $0x128] sm:$0xff] %v10028
        %10093 = vst [vmem:[%s517 + $0x130] sm:$0xff] %v10029
        %10094 = vst [vmem:[%s517 + $0x138] sm:$0xff] %v10030
        %10095 = vst [vmem:[%s517 + $0x140] sm:$0xff] %v10031
        %10096 = vst [vmem:[%s517 + $0x148] sm:$0xff] %v10032
        %10097 = vst [vmem:[%s517 + $0x150] sm:$0xff] %v10033
        %10098 = vst [vmem:[%s517 + $0x158] sm:$0xff] %v10034
        %10099 = vst [vmem:[%s517 + $0x160] sm:$0xff] %v10035
        %10100 = vst [vmem:[%s517 + $0x168] sm:$0xff] %v10036
        %10101 = vst [vmem:[%s517 + $0x170] sm:$0xff] %v10037
        %10102 = vst [vmem:[%s517 + $0x178] sm:$0xff] %v10038
        %10103 = vst [vmem:[%s517 + $0x180] sm:$0xff] %v10039
        %10104 = vst [vmem:[%s517 + $0x188] sm:$0xff] %v10040
        %10105 = vst [vmem:[%s517 + $0x190] sm:$0xff] %v10041
        %10106 = vst [vmem:[%s517 + $0x198] sm:$0xff] %v10042
        %10107 = vst [vmem:[%s517 + $0x1a0] sm:$0xff] %v10043
        %10108 = vst [vmem:[%s517 + $0x1a8] sm:$0xff] %v10044
        %10109 = vst [vmem:[%s517 + $0x1b0] sm:$0xff] %v10045
        %10110 = vst [vmem:[%s517 + $0x1b8] sm:$0xff] %v10046
        %10111 = vst [vmem:[%s517 + $0x1c0] sm:$0xff] %v10047
        %10112 = vst [vmem:[%s517 + $0x1c8] sm:$0xff] %v10048
        %10113 = vst [vmem:[%s517 + $0x1d0] sm:$0xff] %v10049
        %10114 = vst [vmem:[%s517 + $0x1d8] sm:$0xff] %v10050
        %10115 = vst [vmem:[%s517 + $0x1e0] sm:$0xff] %v10051
        %10116 = vst [vmem:[%s517 + $0x1e8] sm:$0xff] %v10052
        %10117 = vst [vmem:[%s517 + $0x1f0] sm:$0xff] %v10053
        %10118 = vst [vmem:[%s517 + $0x1f8] sm:$0xff] %v10054
        %s10119 = sand.u32 %s379, 1
        %s10120 = scalar_lea.sflag [#allocation5], %s10119
        %s10121 = sand.u32 %s379, 1
        %s10122 = smul.addr %s10121, 512
        %s10123 = scalar_lea.vmem [#allocation4], %s10122
        // Predicated region
        $region85: #{test_forward.1} parent=83 // pred_check
          %p10124 = pneg %p389
        $region86: #{test_forward.1} parent=83 // pred_check_branch
          %10126 = sbr.rel (%p10124) target = $region88
        $region87: #{test_forward.1} parent=83 // pred_region
          %s10127 = smul.u32 4, %s30
          %s10129 = ssub.s32 8192, 8192
          %10130 = vsyncadd %s10120, %s10129
          %s10131 = smul.addr %s10127, 16
          %s10132 = smul.addr %s10131, 128
          %s10133 = scalar_lea.hbm %s16, %s10132
          %s10134 = sshll.u32 %s10123, 4
          %s10135 = int_to_ptr.vmem [resolvable:$true] %s10134
          %10140 = dma.vmem_to_hbm [thread:$0]  %s10135, 8192, %s10133, %s10120, 256, 256, 16
        $region88: #{test_forward.1} parent=83 // pred_fallthru
          _
      $region84: #{test_forward.1} parent=5 // pred_fallthru
        _
      %p10141 = scmp.le.s32.totalorder 2, %s25
      // Predicated region
      $region89: #{test_forward.1} parent=5 // pred_check
        %p10142 = pneg %p10141
      $region90: #{test_forward.1} parent=5 // pred_check_branch
        %10144 = sbr.rel (%p10142) target = $region92
      $region91: #{test_forward.1} parent=5 // pred_region
        %s10145 = ssub.s32 %s25, 2
        // Predicated region
        $region93: #{test_forward.1} parent=91 // pred_check
          %p10146 = pneg %p395
        $region94: #{test_forward.1} parent=91 // pred_check_branch
          %10148 = sbr.rel (%p10146) target = $region96
        $region95: #{test_forward.1} parent=91 // pred_region
          %s10149 = sand.u32 %s380, 1
          %s10150 = scalar_lea.sflag [#allocation5], %s10149
          %s10151 = sand.u32 %s380, 1
          %s10152 = smul.addr %s10151, 512
          %s10153 = scalar_lea.vmem [#allocation4], %s10152
          %10154 = dma.done %s10150, 8192
        $region96: #{test_forward.1} parent=91 // pred_fallthru
          _
      $region92: #{test_forward.1} parent=5 // pred_fallthru
        _
    $region6: #{test_forward.1} parent=1 // loop_footer
      %s29 = sadd.s32 1, %s25
    $region7: #{test_forward.1} parent=1 // loop_footer_branch
      %24 = sbr.rel target = $region3
    $region8: #{test_forward.1} parent=1 // loop_exit
      _
    %10155 = vsyncpa [#allocation5], 1
    %s10156 = scalar_lea.sflag [#allocation5], 1
    %10157 = vsyncpa %s10156, 1

</llo_original>
